<compile_context>
chip_gen: v5e
topology: v5e:2x2
jax: 0.10.0
libtpu: 0.0.40
codegen_flags: <defaults>
</compile_context>

<pallas_src>
import functools

import jax
import jax.numpy as jnp
from jax import lax
from jax.experimental import pallas as pl
from jax.experimental.pallas import tpu as pltpu


# 3x3 taps in (dy, dx) order, dy-major: matches the weight packing below.
_TAPS = tuple((dy, dx) for dy in (-1, 0, 1) for dx in (-1, 0, 1))


# ------------------------------ fused kernel ---------------------------------

def _pidrtn_kernel(coords_ref, x_ref, s_ref, f0_ref,
                   pw_ref, pb_ref, hw_ref, hb_ref,
                   fw_ref, fb_ref,
                   ow1_ref, ob1_ref, ow2_ref, ob2_ref,
                   dw1_ref, db1_ref, dw2_ref, db2_ref,
                   o_ref, *, H, W, P, overlap):
    """One batch element.  All activations are channels-first (C, N=H*W)."""
    N = H * W

    colf = coords_ref[0:1, :]          # (1, N) f32: x coordinate of pixel n
    rowf = coords_ref[1:2, :]          # (1, N) f32: y coordinate of pixel n

    # Per-tap validity masks of a 3x3 'same' conv with zero padding.  Built
    # once, lane-dense (1, N), reused by every conv in the kernel.
    masks = []
    for dy, dx in _TAPS:
        masks.append((colf + dx >= 0.0) & (colf + dx <= W - 1.0) &
                     (rowf + dy >= 0.0) & (rowf + dy <= H - 1.0))

    def shift(a, t):
        # a: (C, N) -> a'[c, n] = a[c, neighbor(n; dy, dx)], zero outside.
        dy, dx = _TAPS[t]
        if dy == 0 and dx == 0:
            return a
        a = pltpu.roll(a, (-(dy * W + dx)) % N, axis=1)   # lane rotate (XLU)
        return jnp.where(masks[t], a, 0.0)

    def conv(a, w_ref_, b_ref_, relu=False):
        # a: (Cin, N); w_ref_: (9, Cout, Cin); b_ref_: (Cout, 1) -> (Cout, N).
        acc = None
        for t in range(9):
            y = jnp.dot(w_ref_[t], shift(a, t),
                        preferred_element_type=jnp.float32)
            acc = y if acc is None else acc + y
        acc = acc + b_ref_[...]
        return jnp.maximum(acc, 0.0) if relu else acc

    # ---- Propagation network: hidden conv + fused (intensity|mx|my) heads ---
    hid = conv(x_ref[...], pw_ref, pb_ref, relu=True)          # (base_c, N)
    heads = conv(hid, hw_ref, hb_ref)                           # (3P, N)

    # ---- Bilinear warp weights for every step (independent of `frames`) -----
    x_iota = lax.broadcasted_iota(jnp.int32, (W, N), 0).astype(jnp.float32)
    y_iota = lax.broadcasted_iota(jnp.int32, (H, N), 0).astype(jnp.float32)
    wx_mats, wy_mats, intens = [], [], []
    for i in range(P):
        intens.append(heads[i:i + 1, :])                        # (1, N)
        mx = heads[P + i:P + i + 1, :]
        my = heads[2 * P + i:2 * P + i + 1, :]
        sx = colf + mx
        sy = rowf + my
        x0 = jnp.floor(sx)
        y0 = jnp.floor(sy)
        wx1 = sx - x0
        wy1 = sy - y0
        wx0 = 1.0 - wx1
        wy0 = 1.0 - wy1
        # grid_sample padding_mode='zeros': out-of-range taps get zero weight.
        wx0 = jnp.where((x0 >= 0.0) & (x0 <= W - 1.0), wx0, 0.0)
        wx1 = jnp.where((x0 >= -1.0) & (x0 <= W - 2.0), wx1, 0.0)
        wy0 = jnp.where((y0 >= 0.0) & (y0 <= H - 1.0), wy0, 0.0)
        wy1 = jnp.where((y0 >= -1.0) & (y0 <= H - 2.0), wy1, 0.0)
        # Separable interpolation matrices: two nonzeros per (lane) column.
        wx_mats.append(jnp.where(x_iota == x0, wx0, 0.0) +
                       jnp.where(x_iota == x0 + 1.0, wx1, 0.0))  # (W, N)
        wy_mats.append(jnp.where(y_iota == y0, wy0, 0.0) +
                       jnp.where(y_iota == y0 + 1.0, wy1, 0.0))  # (H, N)

    # ---- Sequential per-step propagation + fusion ---------------------------
    s_all = s_ref[...]                                           # (P, N)
    frames = f0_ref[...]                                         # (1, N)
    rows = []
    for i in range(P):
        # frames (1, N) -> image (H, W) via static lane slices (small, exact).
        img = jnp.concatenate(
            [frames[:, r * W:(r + 1) * W] for r in range(H)], axis=0)  # (H, W)
        # warped[n] = sum_y WY[y, n] * sum_x img[y, x] * WX[x, n]
        g = jnp.dot(img, wx_mats[i],
                    preferred_element_type=jnp.float32)          # (H, N)
        warped = jnp.sum(wy_mats[i] * g, axis=0, keepdims=True)  # (1, N)

        frames_ = warped + 20.0 * intens[i] - 10.0
        frames = frames_ + frames if overlap else frames_

        # Fusion_Network_2 (2 -> 1 channels, 3x3): 18 broadcast FMAs (VPU).
        s_i = s_all[i:i + 1, :]                                  # (1, N)
        acc = None
        for t in range(9):
            base = 2 * (9 * i + t)
            c = (fw_ref[base:base + 1, :] * shift(frames, t) +
                 fw_ref[base + 1:base + 2, :] * shift(s_i, t))
            acc = c if acc is None else acc + c
        frames = acc + fb_ref[i:i + 1, :]
        rows.append(frames)

    y = jnp.concatenate(rows, axis=0)                            # (P, N)

    # ---- Outc (P->P->P) + Denoise (P->base_c->P) + clamp --------------------
    y = conv(y, ow1_ref, ob1_ref, relu=True)
    y = conv(y, ow2_ref, ob2_ref)
    y = conv(y, dw1_ref, db1_ref, relu=True)
    y = conv(y, dw2_ref, db2_ref)
    o_ref[...] = jnp.clip(y, 0.0, 255.0)        # single lane-dense (P, N) store


# ------------------------------ parameters -----------------------------------

def init_params(key, Cin, P, H, W, base_c=32):
    keys = jax.random.split(key, 20 + 2 * P)
    k = iter(keys)

    def w(shape, scale):
        return scale * jax.random.normal(next(k), shape, jnp.float32)

    return {
        "init_bias": w((H, W), 1.0),
        # Propagation_Network: hidden conv + 3 heads (intensity, mx, my).
        "prop_w0": w((3, 3, Cin, base_c), 0.08),
        "prop_b0": w((base_c,), 0.3),
        "prop_wi": w((3, 3, base_c, P), 0.003),
        "prop_bi": w((P,), 0.1),
        "prop_wx": w((3, 3, base_c, P), 0.001),
        "prop_bx": w((P,), 0.05),
        "prop_wy": w((3, 3, base_c, P), 0.001),
        "prop_by": w((P,), 0.05),
        # Outc (P -> P -> P).
        "outc_w1": w((3, 3, P, P), 0.2),
        "outc_b1": w((P,), 0.3),
        "outc_w2": w((3, 3, P, P), 0.2),
        "outc_b2": w((P,), 0.3),
        # Denoise_Network (P -> base_c -> P).
        "den_w1": w((3, 3, P, base_c), 0.2),
        "den_b1": w((base_c,), 0.3),
        "den_w2": w((3, 3, base_c, P), 0.2),
        "den_b2": w((P,), 0.3),
        # Fusion_Network_2 list (one 2->1 conv per predicted frame).
        "fusion_w": [w((3, 3, 2, 1), 0.15) for _ in range(P)],
        "fusion_b": [w((1,), 0.3) for _ in range(P)],
    }


def _pack_conv(w):
    # (3, 3, Cin, Cout) -> (9, Cout, Cin), tap-major (dy, dx) like _TAPS.
    return jnp.transpose(w, (0, 1, 3, 2)).reshape(9, w.shape[3], w.shape[2])


def _col(b):
    return b.reshape(-1, 1)


def _full_spec(a):
    if a.ndim == 3:
        return pl.BlockSpec(a.shape, lambda b: (0, 0, 0))
    return pl.BlockSpec(a.shape, lambda b: (0, 0))


# ------------------------------ model wrapper ---------------------------------

def pidrtn_a_forward(params, x, s, *, pred_length, is_overlap):
    """x: (B, Cin, H, W), s: (B, P, H, W)  ->  y: (B, P, H, W)."""
    B, Cin, H, W = x.shape
    P = pred_length
    N = H * W
    base_c = params["prop_w0"].shape[-1]

    # Init_Bias (synthetic): initial frame = last observed channel + bias.
    frames0_img = x[:, -1, :, :] + params["init_bias"]           # (B, H, W)
    if P == 1:
        return frames0_img[:, None, :, :]

    # Entry-only layout plumbing: everything lane-dense, channels-first.
    x_cn = x.reshape(B, Cin, N)
    s_cn = s.reshape(B, P, N)
    frames0 = frames0_img.reshape(B, 1, N)
    ys, xs = jnp.meshgrid(jnp.arange(H, dtype=jnp.float32),
                          jnp.arange(W, dtype=jnp.float32), indexing="ij")
    coords = jnp.stack([xs.reshape(-1), ys.reshape(-1)], axis=0)  # (2, N)

    # Weight packing (tap-major, channels-first); fused propagation heads.
    pw = _pack_conv(params["prop_w0"])
    pb = _col(params["prop_b0"])
    hw = _pack_conv(jnp.concatenate(
        [params["prop_wi"], params["prop_wx"], params["prop_wy"]], axis=3))
    hb = _col(jnp.concatenate(
        [params["prop_bi"], params["prop_bx"], params["prop_by"]]))
    fw = jnp.concatenate(
        [w.reshape(-1) for w in params["fusion_w"]]).reshape(-1, 1)  # (P*18, 1)
    fb = jnp.concatenate(
        [b.reshape(-1) for b in params["fusion_b"]]).reshape(-1, 1)  # (P, 1)
    ow1 = _pack_conv(params["outc_w1"]); ob1 = _col(params["outc_b1"])
    ow2 = _pack_conv(params["outc_w2"]); ob2 = _col(params["outc_b2"])
    dw1 = _pack_conv(params["den_w1"]);  db1 = _col(params["den_b1"])
    dw2 = _pack_conv(params["den_w2"]);  db2 = _col(params["den_b2"])
    weights = [pw, pb, hw, hb, fw, fb, ow1, ob1, ow2, ob2, dw1, db1, dw2, db2]

    kern = functools.partial(_pidrtn_kernel, H=H, W=W, P=P, overlap=is_overlap)

    in_specs = [
        pl.BlockSpec((2, N), lambda b: (0, 0)),                  # coords
        pl.BlockSpec((None, Cin, N), lambda b: (b, 0, 0)),        # x
        pl.BlockSpec((None, P, N), lambda b: (b, 0, 0)),          # s
        pl.BlockSpec((None, 1, N), lambda b: (b, 0, 0)),          # frames0
    ] + [_full_spec(a) for a in weights]

    # Rough advisory cost for XLA's scheduler.
    macs = (9 * N * (Cin * base_c + base_c * 3 * P + 2 * P * P
                     + P * base_c + base_c * P)
            + P * (H * W * N + H * N + 18 * N))
    bytes_acc = (4 * B * (Cin + 2 * P + 1) * N
                 + 4 * sum(int(a.size) for a in weights) + 8 * N)
    cost = pl.CostEstimate(flops=int(2 * B * macs), transcendentals=0,
                           bytes_accessed=int(bytes_acc))

    # NOTE(v7x): the batch is the only parallel axis; use an even B >= 2 so
    # both TensorCores stay busy (v5e/v6e have a single TensorCore).
    out = pl.pallas_call(
        kern,
        out_shape=jax.ShapeDtypeStruct((B, P, N), jnp.float32),
        grid=(B,),
        in_specs=in_specs,
        out_specs=pl.BlockSpec((None, P, N), lambda b: (b, 0, 0)),
        compiler_params=pltpu.CompilerParams(
            dimension_semantics=("parallel",)),
        cost_estimate=cost,
    )(coords, x_cn, s_cn, frames0, *weights)

    return out.reshape(B, P, H, W)                 # exit-only reshape


# --------------------- pure-JAX reference (same synthetic model) --------------

def _conv3x3_ref(x, w, b):
    y = lax.conv_general_dilated(
        x, w, window_strides=(1, 1), padding="SAME",
        dimension_numbers=("NCHW", "HWIO", "NCHW"),
        precision=lax.Precision.HIGHEST)
    return y + b.reshape(1, -1, 1, 1)


def _warp_ref(frames, mx, my):
    # frames, mx, my: (B, 1, H, W).  Bilinear sample at (x+mx, y+my), zeros pad.
    B, _, H, W = frames.shape
    xs = jnp.arange(W, dtype=jnp.float32).reshape(1, 1, 1, W)
    ys = jnp.arange(H, dtype=jnp.float32).reshape(1, 1, H, 1)
    sx = xs + mx
    sy = ys + my
    x0 = jnp.floor(sx)
    y0 = jnp.floor(sy)
    wx1 = sx - x0
    wy1 = sy - y0
    wx0 = 1.0 - wx1
    wy0 = 1.0 - wy1
    flat = frames.reshape(B, H * W)

    def tap(yc, xc, wgt):
        valid = (xc >= 0) & (xc <= W - 1) & (yc >= 0) & (yc <= H - 1)
        xi = jnp.clip(xc, 0, W - 1).astype(jnp.int32)
        yi = jnp.clip(yc, 0, H - 1).astype(jnp.int32)
        idx = (yi * W + xi).reshape(B, H * W)
        g = jnp.take_along_axis(flat, idx, axis=1).reshape(B, 1, H, W)
        return jnp.where(valid, wgt, 0.0) * g

    return (tap(y0, x0, wy0 * wx0) + tap(y0, x0 + 1.0, wy0 * wx1)
            + tap(y0 + 1.0, x0, wy1 * wx0) + tap(y0 + 1.0, x0 + 1.0, wy1 * wx1))


def pidrtn_a_reference(params, x, s, *, pred_length, is_overlap):
    B, Cin, H, W = x.shape
    P = pred_length
    frames = x[:, -1:, :, :] + params["init_bias"][None, None]
    if P == 1:
        return frames
    hid = jax.nn.relu(_conv3x3_ref(x, params["prop_w0"], params["prop_b0"]))
    inten = _conv3x3_ref(hid, params["prop_wi"], params["prop_bi"])
    mx = _conv3x3_ref(hid, params["prop_wx"], params["prop_bx"])
    my = _conv3x3_ref(hid, params["prop_wy"], params["prop_by"])
    series = []
    for i in range(P):
        frames_ = _warp_ref(frames, mx[:, i:i + 1], my[:, i:i + 1])
        frames_ = frames_ + 20.0 * inten[:, i:i + 1] - 10.0
        frames = frames_ + frames if is_overlap else frames_
        fused_in = jnp.concatenate([frames, s[:, i:i + 1]], axis=1)
        frames = _conv3x3_ref(fused_in, params["fusion_w"][i],
                              params["fusion_b"][i])
        series.append(frames)
    y = jnp.concatenate(series, axis=1)
    y = jax.nn.relu(_conv3x3_ref(y, params["outc_w1"], params["outc_b1"]))
    y = _conv3x3_ref(y, params["outc_w2"], params["outc_b2"])
    y = jax.nn.relu(_conv3x3_ref(y, params["den_w1"], params["den_b1"]))
    y = _conv3x3_ref(y, params["den_w2"], params["den_b2"])
    return jnp.clip(y, 0.0, 255.0)


# ----------------------------------- main -------------------------------------

if __name__ == "__main__":
    B, Cin, H, W = 2, 4, 16, 16    # batch, input_channel, height, width
    P = 3                          # output_channel == pred_length

    key = jax.random.PRNGKey(0)
    kx, ks, kp = jax.random.split(key, 3)
    x = jax.random.uniform(kx, (B, Cin, H, W), jnp.float32) * 255.0
    s = jax.random.uniform(ks, (B, P, H, W), jnp.float32) * 255.0
    params = init_params(kp, Cin, P, H, W)

    fwd = jax.jit(functools.partial(pidrtn_a_forward,
                                    pred_length=P, is_overlap=True))
    y = jax.block_until_ready(fwd(params, x, s))

    assert y.shape == (B, P, H, W), y.shape
    assert bool(jnp.all(y >= 0.0)) and bool(jnp.all(y <= 255.0))

    # Validate against the pure-JAX reference of the same synthetic model
    # (tolerances allow for MXU precision-mode differences only).
    y_ref = pidrtn_a_reference(params, x, s, pred_length=P, is_overlap=True)
    diff = jnp.abs(y - y_ref)
    mean_err = float(jnp.mean(diff))
    frac_bad = float(jnp.mean((diff > 15.0).astype(jnp.float32)))
    assert mean_err < 2.0, f"mean |diff| vs reference too large: {mean_err}"
    assert frac_bad < 0.02, f"too many pixels off by >15: {frac_bad}"

    print("KERNEL_OK")
</pallas_src>

<mosaic_0001>
module attributes {stable_mosaic.version = 11 : i64} {
  func.func @_pidrtn_kernel(%arg0: i32, %arg1: memref<2x256xf32, #tpu.memory_space<vmem>>, %arg2: memref<1x4x256xf32, #tpu.memory_space<vmem>>, %arg3: memref<1x3x256xf32, #tpu.memory_space<vmem>>, %arg4: memref<1x1x256xf32, #tpu.memory_space<vmem>>, %arg5: memref<9x32x4xf32, #tpu.memory_space<vmem>>, %arg6: memref<32x1xf32, #tpu.memory_space<vmem>>, %arg7: memref<9x9x32xf32, #tpu.memory_space<vmem>>, %arg8: memref<9x1xf32, #tpu.memory_space<vmem>>, %arg9: memref<54x1xf32, #tpu.memory_space<vmem>>, %arg10: memref<3x1xf32, #tpu.memory_space<vmem>>, %arg11: memref<9x3x3xf32, #tpu.memory_space<vmem>>, %arg12: memref<3x1xf32, #tpu.memory_space<vmem>>, %arg13: memref<9x3x3xf32, #tpu.memory_space<vmem>>, %arg14: memref<3x1xf32, #tpu.memory_space<vmem>>, %arg15: memref<9x32x3xf32, #tpu.memory_space<vmem>>, %arg16: memref<32x1xf32, #tpu.memory_space<vmem>>, %arg17: memref<9x3x32xf32, #tpu.memory_space<vmem>>, %arg18: memref<3x1xf32, #tpu.memory_space<vmem>>, %arg19: memref<1x3x256xf32, #tpu.memory_space<vmem>>) attributes {dimension_semantics = [#tpu.dimension_semantics<parallel>], iteration_bounds = array<i64: 2>, scalar_prefetch = 0 : i64, scratch_operands = 0 : i64, tpu.core_type = #tpu.core_type<tc>, window_params = [{pipeline_mode = #tpu.pipeline_mode<synchronous>, transform_indices = @transform_0, window_bounds = array<i64: 2, 256>}, {transform_indices = @transform_1, window_bounds = array<i64: 1, 4, 256>}, {transform_indices = @transform_2, window_bounds = array<i64: 1, 3, 256>}, {transform_indices = @transform_3, window_bounds = array<i64: 1, 1, 256>}, {pipeline_mode = #tpu.pipeline_mode<synchronous>, transform_indices = @transform_4, window_bounds = array<i64: 9, 32, 4>}, {pipeline_mode = #tpu.pipeline_mode<synchronous>, transform_indices = @transform_5, window_bounds = array<i64: 32, 1>}, {pipeline_mode = #tpu.pipeline_mode<synchronous>, transform_indices = @transform_6, window_bounds = array<i64: 9, 9, 32>}, {pipeline_mode = #tpu.pipeline_mode<synchronous>, transform_indices = @transform_7, window_bounds = array<i64: 9, 1>}, {pipeline_mode = #tpu.pipeline_mode<synchronous>, transform_indices = @transform_8, window_bounds = array<i64: 54, 1>}, {pipeline_mode = #tpu.pipeline_mode<synchronous>, transform_indices = @transform_9, window_bounds = array<i64: 3, 1>}, {pipeline_mode = #tpu.pipeline_mode<synchronous>, transform_indices = @transform_10, window_bounds = array<i64: 9, 3, 3>}, {pipeline_mode = #tpu.pipeline_mode<synchronous>, transform_indices = @transform_11, window_bounds = array<i64: 3, 1>}, {pipeline_mode = #tpu.pipeline_mode<synchronous>, transform_indices = @transform_12, window_bounds = array<i64: 9, 3, 3>}, {pipeline_mode = #tpu.pipeline_mode<synchronous>, transform_indices = @transform_13, window_bounds = array<i64: 3, 1>}, {pipeline_mode = #tpu.pipeline_mode<synchronous>, transform_indices = @transform_14, window_bounds = array<i64: 9, 32, 3>}, {pipeline_mode = #tpu.pipeline_mode<synchronous>, transform_indices = @transform_15, window_bounds = array<i64: 32, 1>}, {pipeline_mode = #tpu.pipeline_mode<synchronous>, transform_indices = @transform_16, window_bounds = array<i64: 9, 3, 32>}, {pipeline_mode = #tpu.pipeline_mode<synchronous>, transform_indices = @transform_17, window_bounds = array<i64: 3, 1>}, {transform_indices = @transform_18, window_bounds = array<i64: 1, 3, 256>}]} {
    %c0 = arith.constant 0 : index
    %c0_0 = arith.constant 0 : index
    %0 = vector.load %arg1[%c0, %c0_0] : memref<2x256xf32, #tpu.memory_space<vmem>>, vector<1x256xf32>
    %c1 = arith.constant 1 : index
    %c0_1 = arith.constant 0 : index
    %1 = vector.load %arg1[%c1, %c0_1] : memref<2x256xf32, #tpu.memory_space<vmem>>, vector<1x256xf32>
    %cst = arith.constant -1.000000e+00 : f32
    %2 = vector.broadcast %cst : f32 to vector<1x256xf32>
    %3 = arith.addf %0, %2 : vector<1x256xf32>
    %cst_2 = arith.constant 0.000000e+00 : f32
    %4 = vector.broadcast %cst_2 : f32 to vector<1x256xf32>
    %5 = arith.cmpf oge, %3, %4 : vector<1x256xf32>
    %cst_3 = arith.constant -1.000000e+00 : f32
    %6 = vector.broadcast %cst_3 : f32 to vector<1x256xf32>
    %7 = arith.addf %0, %6 : vector<1x256xf32>
    %cst_4 = arith.constant 1.500000e+01 : f32
    %8 = vector.broadcast %cst_4 : f32 to vector<1x256xf32>
    %9 = arith.cmpf ole, %7, %8 : vector<1x256xf32>
    %10 = arith.andi %5, %9 : vector<1x256xi1>
    %cst_5 = arith.constant -1.000000e+00 : f32
    %11 = vector.broadcast %cst_5 : f32 to vector<1x256xf32>
    %12 = arith.addf %1, %11 : vector<1x256xf32>
    %cst_6 = arith.constant 0.000000e+00 : f32
    %13 = vector.broadcast %cst_6 : f32 to vector<1x256xf32>
    %14 = arith.cmpf oge, %12, %13 : vector<1x256xf32>
    %15 = arith.andi %10, %14 : vector<1x256xi1>
    %cst_7 = arith.constant -1.000000e+00 : f32
    %16 = vector.broadcast %cst_7 : f32 to vector<1x256xf32>
    %17 = arith.addf %1, %16 : vector<1x256xf32>
    %cst_8 = arith.constant 1.500000e+01 : f32
    %18 = vector.broadcast %cst_8 : f32 to vector<1x256xf32>
    %19 = arith.cmpf ole, %17, %18 : vector<1x256xf32>
    %20 = arith.andi %15, %19 : vector<1x256xi1>
    %cst_9 = arith.constant 0.000000e+00 : f32
    %21 = vector.broadcast %cst_9 : f32 to vector<1x256xf32>
    %22 = arith.addf %0, %21 : vector<1x256xf32>
    %cst_10 = arith.constant 0.000000e+00 : f32
    %23 = vector.broadcast %cst_10 : f32 to vector<1x256xf32>
    %24 = arith.cmpf oge, %22, %23 : vector<1x256xf32>
    %cst_11 = arith.constant 0.000000e+00 : f32
    %25 = vector.broadcast %cst_11 : f32 to vector<1x256xf32>
    %26 = arith.addf %0, %25 : vector<1x256xf32>
    %cst_12 = arith.constant 1.500000e+01 : f32
    %27 = vector.broadcast %cst_12 : f32 to vector<1x256xf32>
    %28 = arith.cmpf ole, %26, %27 : vector<1x256xf32>
    %29 = arith.andi %24, %28 : vector<1x256xi1>
    %cst_13 = arith.constant -1.000000e+00 : f32
    %30 = vector.broadcast %cst_13 : f32 to vector<1x256xf32>
    %31 = arith.addf %1, %30 : vector<1x256xf32>
    %cst_14 = arith.constant 0.000000e+00 : f32
    %32 = vector.broadcast %cst_14 : f32 to vector<1x256xf32>
    %33 = arith.cmpf oge, %31, %32 : vector<1x256xf32>
    %34 = arith.andi %29, %33 : vector<1x256xi1>
    %cst_15 = arith.constant -1.000000e+00 : f32
    %35 = vector.broadcast %cst_15 : f32 to vector<1x256xf32>
    %36 = arith.addf %1, %35 : vector<1x256xf32>
    %cst_16 = arith.constant 1.500000e+01 : f32
    %37 = vector.broadcast %cst_16 : f32 to vector<1x256xf32>
    %38 = arith.cmpf ole, %36, %37 : vector<1x256xf32>
    %39 = arith.andi %34, %38 : vector<1x256xi1>
    %cst_17 = arith.constant 1.000000e+00 : f32
    %40 = vector.broadcast %cst_17 : f32 to vector<1x256xf32>
    %41 = arith.addf %0, %40 : vector<1x256xf32>
    %cst_18 = arith.constant 0.000000e+00 : f32
    %42 = vector.broadcast %cst_18 : f32 to vector<1x256xf32>
    %43 = arith.cmpf oge, %41, %42 : vector<1x256xf32>
    %cst_19 = arith.constant 1.000000e+00 : f32
    %44 = vector.broadcast %cst_19 : f32 to vector<1x256xf32>
    %45 = arith.addf %0, %44 : vector<1x256xf32>
    %cst_20 = arith.constant 1.500000e+01 : f32
    %46 = vector.broadcast %cst_20 : f32 to vector<1x256xf32>
    %47 = arith.cmpf ole, %45, %46 : vector<1x256xf32>
    %48 = arith.andi %43, %47 : vector<1x256xi1>
    %cst_21 = arith.constant -1.000000e+00 : f32
    %49 = vector.broadcast %cst_21 : f32 to vector<1x256xf32>
    %50 = arith.addf %1, %49 : vector<1x256xf32>
    %cst_22 = arith.constant 0.000000e+00 : f32
    %51 = vector.broadcast %cst_22 : f32 to vector<1x256xf32>
    %52 = arith.cmpf oge, %50, %51 : vector<1x256xf32>
    %53 = arith.andi %48, %52 : vector<1x256xi1>
    %cst_23 = arith.constant -1.000000e+00 : f32
    %54 = vector.broadcast %cst_23 : f32 to vector<1x256xf32>
    %55 = arith.addf %1, %54 : vector<1x256xf32>
    %cst_24 = arith.constant 1.500000e+01 : f32
    %56 = vector.broadcast %cst_24 : f32 to vector<1x256xf32>
    %57 = arith.cmpf ole, %55, %56 : vector<1x256xf32>
    %58 = arith.andi %53, %57 : vector<1x256xi1>
    %cst_25 = arith.constant -1.000000e+00 : f32
    %59 = vector.broadcast %cst_25 : f32 to vector<1x256xf32>
    %60 = arith.addf %0, %59 : vector<1x256xf32>
    %cst_26 = arith.constant 0.000000e+00 : f32
    %61 = vector.broadcast %cst_26 : f32 to vector<1x256xf32>
    %62 = arith.cmpf oge, %60, %61 : vector<1x256xf32>
    %cst_27 = arith.constant -1.000000e+00 : f32
    %63 = vector.broadcast %cst_27 : f32 to vector<1x256xf32>
    %64 = arith.addf %0, %63 : vector<1x256xf32>
    %cst_28 = arith.constant 1.500000e+01 : f32
    %65 = vector.broadcast %cst_28 : f32 to vector<1x256xf32>
    %66 = arith.cmpf ole, %64, %65 : vector<1x256xf32>
    %67 = arith.andi %62, %66 : vector<1x256xi1>
    %cst_29 = arith.constant 0.000000e+00 : f32
    %68 = vector.broadcast %cst_29 : f32 to vector<1x256xf32>
    %69 = arith.addf %1, %68 : vector<1x256xf32>
    %cst_30 = arith.constant 0.000000e+00 : f32
    %70 = vector.broadcast %cst_30 : f32 to vector<1x256xf32>
    %71 = arith.cmpf oge, %69, %70 : vector<1x256xf32>
    %72 = arith.andi %67, %71 : vector<1x256xi1>
    %cst_31 = arith.constant 0.000000e+00 : f32
    %73 = vector.broadcast %cst_31 : f32 to vector<1x256xf32>
    %74 = arith.addf %1, %73 : vector<1x256xf32>
    %cst_32 = arith.constant 1.500000e+01 : f32
    %75 = vector.broadcast %cst_32 : f32 to vector<1x256xf32>
    %76 = arith.cmpf ole, %74, %75 : vector<1x256xf32>
    %77 = arith.andi %72, %76 : vector<1x256xi1>
    %cst_33 = arith.constant 1.000000e+00 : f32
    %78 = vector.broadcast %cst_33 : f32 to vector<1x256xf32>
    %79 = arith.addf %0, %78 : vector<1x256xf32>
    %cst_34 = arith.constant 0.000000e+00 : f32
    %80 = vector.broadcast %cst_34 : f32 to vector<1x256xf32>
    %81 = arith.cmpf oge, %79, %80 : vector<1x256xf32>
    %cst_35 = arith.constant 1.000000e+00 : f32
    %82 = vector.broadcast %cst_35 : f32 to vector<1x256xf32>
    %83 = arith.addf %0, %82 : vector<1x256xf32>
    %cst_36 = arith.constant 1.500000e+01 : f32
    %84 = vector.broadcast %cst_36 : f32 to vector<1x256xf32>
    %85 = arith.cmpf ole, %83, %84 : vector<1x256xf32>
    %86 = arith.andi %81, %85 : vector<1x256xi1>
    %cst_37 = arith.constant 0.000000e+00 : f32
    %87 = vector.broadcast %cst_37 : f32 to vector<1x256xf32>
    %88 = arith.addf %1, %87 : vector<1x256xf32>
    %cst_38 = arith.constant 0.000000e+00 : f32
    %89 = vector.broadcast %cst_38 : f32 to vector<1x256xf32>
    %90 = arith.cmpf oge, %88, %89 : vector<1x256xf32>
    %91 = arith.andi %86, %90 : vector<1x256xi1>
    %cst_39 = arith.constant 0.000000e+00 : f32
    %92 = vector.broadcast %cst_39 : f32 to vector<1x256xf32>
    %93 = arith.addf %1, %92 : vector<1x256xf32>
    %cst_40 = arith.constant 1.500000e+01 : f32
    %94 = vector.broadcast %cst_40 : f32 to vector<1x256xf32>
    %95 = arith.cmpf ole, %93, %94 : vector<1x256xf32>
    %96 = arith.andi %91, %95 : vector<1x256xi1>
    %cst_41 = arith.constant -1.000000e+00 : f32
    %97 = vector.broadcast %cst_41 : f32 to vector<1x256xf32>
    %98 = arith.addf %0, %97 : vector<1x256xf32>
    %cst_42 = arith.constant 0.000000e+00 : f32
    %99 = vector.broadcast %cst_42 : f32 to vector<1x256xf32>
    %100 = arith.cmpf oge, %98, %99 : vector<1x256xf32>
    %cst_43 = arith.constant -1.000000e+00 : f32
    %101 = vector.broadcast %cst_43 : f32 to vector<1x256xf32>
    %102 = arith.addf %0, %101 : vector<1x256xf32>
    %cst_44 = arith.constant 1.500000e+01 : f32
    %103 = vector.broadcast %cst_44 : f32 to vector<1x256xf32>
    %104 = arith.cmpf ole, %102, %103 : vector<1x256xf32>
    %105 = arith.andi %100, %104 : vector<1x256xi1>
    %cst_45 = arith.constant 1.000000e+00 : f32
    %106 = vector.broadcast %cst_45 : f32 to vector<1x256xf32>
    %107 = arith.addf %1, %106 : vector<1x256xf32>
    %cst_46 = arith.constant 0.000000e+00 : f32
    %108 = vector.broadcast %cst_46 : f32 to vector<1x256xf32>
    %109 = arith.cmpf oge, %107, %108 : vector<1x256xf32>
    %110 = arith.andi %105, %109 : vector<1x256xi1>
    %cst_47 = arith.constant 1.000000e+00 : f32
    %111 = vector.broadcast %cst_47 : f32 to vector<1x256xf32>
    %112 = arith.addf %1, %111 : vector<1x256xf32>
    %cst_48 = arith.constant 1.500000e+01 : f32
    %113 = vector.broadcast %cst_48 : f32 to vector<1x256xf32>
    %114 = arith.cmpf ole, %112, %113 : vector<1x256xf32>
    %115 = arith.andi %110, %114 : vector<1x256xi1>
    %cst_49 = arith.constant 0.000000e+00 : f32
    %116 = vector.broadcast %cst_49 : f32 to vector<1x256xf32>
    %117 = arith.addf %0, %116 : vector<1x256xf32>
    %cst_50 = arith.constant 0.000000e+00 : f32
    %118 = vector.broadcast %cst_50 : f32 to vector<1x256xf32>
    %119 = arith.cmpf oge, %117, %118 : vector<1x256xf32>
    %cst_51 = arith.constant 0.000000e+00 : f32
    %120 = vector.broadcast %cst_51 : f32 to vector<1x256xf32>
    %121 = arith.addf %0, %120 : vector<1x256xf32>
    %cst_52 = arith.constant 1.500000e+01 : f32
    %122 = vector.broadcast %cst_52 : f32 to vector<1x256xf32>
    %123 = arith.cmpf ole, %121, %122 : vector<1x256xf32>
    %124 = arith.andi %119, %123 : vector<1x256xi1>
    %cst_53 = arith.constant 1.000000e+00 : f32
    %125 = vector.broadcast %cst_53 : f32 to vector<1x256xf32>
    %126 = arith.addf %1, %125 : vector<1x256xf32>
    %cst_54 = arith.constant 0.000000e+00 : f32
    %127 = vector.broadcast %cst_54 : f32 to vector<1x256xf32>
    %128 = arith.cmpf oge, %126, %127 : vector<1x256xf32>
    %129 = arith.andi %124, %128 : vector<1x256xi1>
    %cst_55 = arith.constant 1.000000e+00 : f32
    %130 = vector.broadcast %cst_55 : f32 to vector<1x256xf32>
    %131 = arith.addf %1, %130 : vector<1x256xf32>
    %cst_56 = arith.constant 1.500000e+01 : f32
    %132 = vector.broadcast %cst_56 : f32 to vector<1x256xf32>
    %133 = arith.cmpf ole, %131, %132 : vector<1x256xf32>
    %134 = arith.andi %129, %133 : vector<1x256xi1>
    %cst_57 = arith.constant 1.000000e+00 : f32
    %135 = vector.broadcast %cst_57 : f32 to vector<1x256xf32>
    %136 = arith.addf %0, %135 : vector<1x256xf32>
    %cst_58 = arith.constant 0.000000e+00 : f32
    %137 = vector.broadcast %cst_58 : f32 to vector<1x256xf32>
    %138 = arith.cmpf oge, %136, %137 : vector<1x256xf32>
    %cst_59 = arith.constant 1.000000e+00 : f32
    %139 = vector.broadcast %cst_59 : f32 to vector<1x256xf32>
    %140 = arith.addf %0, %139 : vector<1x256xf32>
    %cst_60 = arith.constant 1.500000e+01 : f32
    %141 = vector.broadcast %cst_60 : f32 to vector<1x256xf32>
    %142 = arith.cmpf ole, %140, %141 : vector<1x256xf32>
    %143 = arith.andi %138, %142 : vector<1x256xi1>
    %cst_61 = arith.constant 1.000000e+00 : f32
    %144 = vector.broadcast %cst_61 : f32 to vector<1x256xf32>
    %145 = arith.addf %1, %144 : vector<1x256xf32>
    %cst_62 = arith.constant 0.000000e+00 : f32
    %146 = vector.broadcast %cst_62 : f32 to vector<1x256xf32>
    %147 = arith.cmpf oge, %145, %146 : vector<1x256xf32>
    %148 = arith.andi %143, %147 : vector<1x256xi1>
    %cst_63 = arith.constant 1.000000e+00 : f32
    %149 = vector.broadcast %cst_63 : f32 to vector<1x256xf32>
    %150 = arith.addf %1, %149 : vector<1x256xf32>
    %cst_64 = arith.constant 1.500000e+01 : f32
    %151 = vector.broadcast %cst_64 : f32 to vector<1x256xf32>
    %152 = arith.cmpf ole, %150, %151 : vector<1x256xf32>
    %153 = arith.andi %148, %152 : vector<1x256xi1>
    %c0_65 = arith.constant 0 : index
    %c0_66 = arith.constant 0 : index
    %c0_67 = arith.constant 0 : index
    %154 = vector.load %arg2[%c0_65, %c0_66, %c0_67] : memref<1x4x256xf32, #tpu.memory_space<vmem>>, vector<1x4x256xf32>
    %155 = vector.shape_cast %154 : vector<1x4x256xf32> to vector<4x256xf32>
    %c0_68 = arith.constant 0 : index
    %c0_69 = arith.constant 0 : index
    %c0_70 = arith.constant 0 : index
    %156 = vector.load %arg5[%c0_68, %c0_69, %c0_70] : memref<9x32x4xf32, #tpu.memory_space<vmem>>, vector<1x32x4xf32>
    %157 = vector.shape_cast %156 : vector<1x32x4xf32> to vector<32x4xf32>
    %c17_i32 = arith.constant 17 : i32
    %158 = tpu.dynamic_rotate %155 by %c17_i32 dim 1 : vector<4x256xf32>, i32 -> vector<4x256xf32>
    %cst_71 = arith.constant 0.000000e+00 : f32
    %159 = vector.shape_cast %20 : vector<1x256xi1> to vector<1x256xi1>
    %160 = vector.broadcast %159 : vector<1x256xi1> to vector<4x256xi1>
    %161 = vector.broadcast %cst_71 : f32 to vector<4x256xf32>
    %162 = arith.select %160, %158, %161 : vector<4x256xi1>, vector<4x256xf32>
    %cst_72 = arith.constant dense<0.000000e+00> : vector<32x256xf32>
    %163 = tpu.matmul %157, %162, %cst_72 {dimension_numbers = #tpu.dot_dimension_numbers<[1], [0], [0], [1], [0, 0, 1, 1], [], []>} : vector<32x4xf32>, vector<4x256xf32>, vector<32x256xf32> -> vector<32x256xf32>
    %c1_73 = arith.constant 1 : index
    %c0_74 = arith.constant 0 : index
    %c0_75 = arith.constant 0 : index
    %164 = vector.load %arg5[%c1_73, %c0_74, %c0_75] : memref<9x32x4xf32, #tpu.memory_space<vmem>>, vector<1x32x4xf32>
    %165 = vector.shape_cast %164 : vector<1x32x4xf32> to vector<32x4xf32>
    %c16_i32 = arith.constant 16 : i32
    %166 = tpu.dynamic_rotate %155 by %c16_i32 dim 1 : vector<4x256xf32>, i32 -> vector<4x256xf32>
    %cst_76 = arith.constant 0.000000e+00 : f32
    %167 = vector.shape_cast %39 : vector<1x256xi1> to vector<1x256xi1>
    %168 = vector.broadcast %167 : vector<1x256xi1> to vector<4x256xi1>
    %169 = vector.broadcast %cst_76 : f32 to vector<4x256xf32>
    %170 = arith.select %168, %166, %169 : vector<4x256xi1>, vector<4x256xf32>
    %cst_77 = arith.constant dense<0.000000e+00> : vector<32x256xf32>
    %171 = tpu.matmul %165, %170, %cst_77 {dimension_numbers = #tpu.dot_dimension_numbers<[1], [0], [0], [1], [0, 0, 1, 1], [], []>} : vector<32x4xf32>, vector<4x256xf32>, vector<32x256xf32> -> vector<32x256xf32>
    %172 = arith.addf %163, %171 : vector<32x256xf32>
    %c2 = arith.constant 2 : index
    %c0_78 = arith.constant 0 : index
    %c0_79 = arith.constant 0 : index
    %173 = vector.load %arg5[%c2, %c0_78, %c0_79] : memref<9x32x4xf32, #tpu.memory_space<vmem>>, vector<1x32x4xf32>
    %174 = vector.shape_cast %173 : vector<1x32x4xf32> to vector<32x4xf32>
    %c15_i32 = arith.constant 15 : i32
    %175 = tpu.dynamic_rotate %155 by %c15_i32 dim 1 : vector<4x256xf32>, i32 -> vector<4x256xf32>
    %cst_80 = arith.constant 0.000000e+00 : f32
    %176 = vector.shape_cast %58 : vector<1x256xi1> to vector<1x256xi1>
    %177 = vector.broadcast %176 : vector<1x256xi1> to vector<4x256xi1>
    %178 = vector.broadcast %cst_80 : f32 to vector<4x256xf32>
    %179 = arith.select %177, %175, %178 : vector<4x256xi1>, vector<4x256xf32>
    %cst_81 = arith.constant dense<0.000000e+00> : vector<32x256xf32>
    %180 = tpu.matmul %174, %179, %cst_81 {dimension_numbers = #tpu.dot_dimension_numbers<[1], [0], [0], [1], [0, 0, 1, 1], [], []>} : vector<32x4xf32>, vector<4x256xf32>, vector<32x256xf32> -> vector<32x256xf32>
    %181 = arith.addf %172, %180 : vector<32x256xf32>
    %c3 = arith.constant 3 : index
    %c0_82 = arith.constant 0 : index
    %c0_83 = arith.constant 0 : index
    %182 = vector.load %arg5[%c3, %c0_82, %c0_83] : memref<9x32x4xf32, #tpu.memory_space<vmem>>, vector<1x32x4xf32>
    %183 = vector.shape_cast %182 : vector<1x32x4xf32> to vector<32x4xf32>
    %c1_i32 = arith.constant 1 : i32
    %184 = tpu.dynamic_rotate %155 by %c1_i32 dim 1 : vector<4x256xf32>, i32 -> vector<4x256xf32>
    %cst_84 = arith.constant 0.000000e+00 : f32
    %185 = vector.shape_cast %77 : vector<1x256xi1> to vector<1x256xi1>
    %186 = vector.broadcast %185 : vector<1x256xi1> to vector<4x256xi1>
    %187 = vector.broadcast %cst_84 : f32 to vector<4x256xf32>
    %188 = arith.select %186, %184, %187 : vector<4x256xi1>, vector<4x256xf32>
    %cst_85 = arith.constant dense<0.000000e+00> : vector<32x256xf32>
    %189 = tpu.matmul %183, %188, %cst_85 {dimension_numbers = #tpu.dot_dimension_numbers<[1], [0], [0], [1], [0, 0, 1, 1], [], []>} : vector<32x4xf32>, vector<4x256xf32>, vector<32x256xf32> -> vector<32x256xf32>
    %190 = arith.addf %181, %189 : vector<32x256xf32>
    %c4 = arith.constant 4 : index
    %c0_86 = arith.constant 0 : index
    %c0_87 = arith.constant 0 : index
    %191 = vector.load %arg5[%c4, %c0_86, %c0_87] : memref<9x32x4xf32, #tpu.memory_space<vmem>>, vector<1x32x4xf32>
    %192 = vector.shape_cast %191 : vector<1x32x4xf32> to vector<32x4xf32>
    %cst_88 = arith.constant dense<0.000000e+00> : vector<32x256xf32>
    %193 = tpu.matmul %192, %155, %cst_88 {dimension_numbers = #tpu.dot_dimension_numbers<[1], [0], [0], [1], [0, 0, 1, 1], [], []>} : vector<32x4xf32>, vector<4x256xf32>, vector<32x256xf32> -> vector<32x256xf32>
    %194 = arith.addf %190, %193 : vector<32x256xf32>
    %c5 = arith.constant 5 : index
    %c0_89 = arith.constant 0 : index
    %c0_90 = arith.constant 0 : index
    %195 = vector.load %arg5[%c5, %c0_89, %c0_90] : memref<9x32x4xf32, #tpu.memory_space<vmem>>, vector<1x32x4xf32>
    %196 = vector.shape_cast %195 : vector<1x32x4xf32> to vector<32x4xf32>
    %c255_i32 = arith.constant 255 : i32
    %197 = tpu.dynamic_rotate %155 by %c255_i32 dim 1 : vector<4x256xf32>, i32 -> vector<4x256xf32>
    %cst_91 = arith.constant 0.000000e+00 : f32
    %198 = vector.shape_cast %96 : vector<1x256xi1> to vector<1x256xi1>
    %199 = vector.broadcast %198 : vector<1x256xi1> to vector<4x256xi1>
    %200 = vector.broadcast %cst_91 : f32 to vector<4x256xf32>
    %201 = arith.select %199, %197, %200 : vector<4x256xi1>, vector<4x256xf32>
    %cst_92 = arith.constant dense<0.000000e+00> : vector<32x256xf32>
    %202 = tpu.matmul %196, %201, %cst_92 {dimension_numbers = #tpu.dot_dimension_numbers<[1], [0], [0], [1], [0, 0, 1, 1], [], []>} : vector<32x4xf32>, vector<4x256xf32>, vector<32x256xf32> -> vector<32x256xf32>
    %203 = arith.addf %194, %202 : vector<32x256xf32>
    %c6 = arith.constant 6 : index
    %c0_93 = arith.constant 0 : index
    %c0_94 = arith.constant 0 : index
    %204 = vector.load %arg5[%c6, %c0_93, %c0_94] : memref<9x32x4xf32, #tpu.memory_space<vmem>>, vector<1x32x4xf32>
    %205 = vector.shape_cast %204 : vector<1x32x4xf32> to vector<32x4xf32>
    %c241_i32 = arith.constant 241 : i32
    %206 = tpu.dynamic_rotate %155 by %c241_i32 dim 1 : vector<4x256xf32>, i32 -> vector<4x256xf32>
    %cst_95 = arith.constant 0.000000e+00 : f32
    %207 = vector.shape_cast %115 : vector<1x256xi1> to vector<1x256xi1>
    %208 = vector.broadcast %207 : vector<1x256xi1> to vector<4x256xi1>
    %209 = vector.broadcast %cst_95 : f32 to vector<4x256xf32>
    %210 = arith.select %208, %206, %209 : vector<4x256xi1>, vector<4x256xf32>
    %cst_96 = arith.constant dense<0.000000e+00> : vector<32x256xf32>
    %211 = tpu.matmul %205, %210, %cst_96 {dimension_numbers = #tpu.dot_dimension_numbers<[1], [0], [0], [1], [0, 0, 1, 1], [], []>} : vector<32x4xf32>, vector<4x256xf32>, vector<32x256xf32> -> vector<32x256xf32>
    %212 = arith.addf %203, %211 : vector<32x256xf32>
    %c7 = arith.constant 7 : index
    %c0_97 = arith.constant 0 : index
    %c0_98 = arith.constant 0 : index
    %213 = vector.load %arg5[%c7, %c0_97, %c0_98] : memref<9x32x4xf32, #tpu.memory_space<vmem>>, vector<1x32x4xf32>
    %214 = vector.shape_cast %213 : vector<1x32x4xf32> to vector<32x4xf32>
    %c240_i32 = arith.constant 240 : i32
    %215 = tpu.dynamic_rotate %155 by %c240_i32 dim 1 : vector<4x256xf32>, i32 -> vector<4x256xf32>
    %cst_99 = arith.constant 0.000000e+00 : f32
    %216 = vector.shape_cast %134 : vector<1x256xi1> to vector<1x256xi1>
    %217 = vector.broadcast %216 : vector<1x256xi1> to vector<4x256xi1>
    %218 = vector.broadcast %cst_99 : f32 to vector<4x256xf32>
    %219 = arith.select %217, %215, %218 : vector<4x256xi1>, vector<4x256xf32>
    %cst_100 = arith.constant dense<0.000000e+00> : vector<32x256xf32>
    %220 = tpu.matmul %214, %219, %cst_100 {dimension_numbers = #tpu.dot_dimension_numbers<[1], [0], [0], [1], [0, 0, 1, 1], [], []>} : vector<32x4xf32>, vector<4x256xf32>, vector<32x256xf32> -> vector<32x256xf32>
    %221 = arith.addf %212, %220 : vector<32x256xf32>
    %c8 = arith.constant 8 : index
    %c0_101 = arith.constant 0 : index
    %c0_102 = arith.constant 0 : index
    %222 = vector.load %arg5[%c8, %c0_101, %c0_102] : memref<9x32x4xf32, #tpu.memory_space<vmem>>, vector<1x32x4xf32>
    %223 = vector.shape_cast %222 : vector<1x32x4xf32> to vector<32x4xf32>
    %c239_i32 = arith.constant 239 : i32
    %224 = tpu.dynamic_rotate %155 by %c239_i32 dim 1 : vector<4x256xf32>, i32 -> vector<4x256xf32>
    %cst_103 = arith.constant 0.000000e+00 : f32
    %225 = vector.shape_cast %153 : vector<1x256xi1> to vector<1x256xi1>
    %226 = vector.broadcast %225 : vector<1x256xi1> to vector<4x256xi1>
    %227 = vector.broadcast %cst_103 : f32 to vector<4x256xf32>
    %228 = arith.select %226, %224, %227 : vector<4x256xi1>, vector<4x256xf32>
    %cst_104 = arith.constant dense<0.000000e+00> : vector<32x256xf32>
    %229 = tpu.matmul %223, %228, %cst_104 {dimension_numbers = #tpu.dot_dimension_numbers<[1], [0], [0], [1], [0, 0, 1, 1], [], []>} : vector<32x4xf32>, vector<4x256xf32>, vector<32x256xf32> -> vector<32x256xf32>
    %230 = arith.addf %221, %229 : vector<32x256xf32>
    %c0_105 = arith.constant 0 : index
    %c0_106 = arith.constant 0 : index
    %231 = vector.load %arg6[%c0_105, %c0_106] : memref<32x1xf32, #tpu.memory_space<vmem>>, vector<32x1xf32>
    %232 = vector.broadcast %231 : vector<32x1xf32> to vector<32x256xf32>
    %233 = arith.addf %230, %232 : vector<32x256xf32>
    %cst_107 = arith.constant 0.000000e+00 : f32
    %234 = vector.broadcast %cst_107 : f32 to vector<32x256xf32>
    %235 = arith.maximumf %233, %234 : vector<32x256xf32>
    %c0_108 = arith.constant 0 : index
    %c0_109 = arith.constant 0 : index
    %c0_110 = arith.constant 0 : index
    %236 = vector.load %arg7[%c0_108, %c0_109, %c0_110] : memref<9x9x32xf32, #tpu.memory_space<vmem>>, vector<1x9x32xf32>
    %237 = vector.shape_cast %236 : vector<1x9x32xf32> to vector<9x32xf32>
    %c17_i32_111 = arith.constant 17 : i32
    %238 = tpu.dynamic_rotate %235 by %c17_i32_111 dim 1 : vector<32x256xf32>, i32 -> vector<32x256xf32>
    %cst_112 = arith.constant 0.000000e+00 : f32
    %239 = vector.shape_cast %20 : vector<1x256xi1> to vector<1x256xi1>
    %240 = vector.broadcast %239 : vector<1x256xi1> to vector<32x256xi1>
    %241 = vector.broadcast %cst_112 : f32 to vector<32x256xf32>
    %242 = arith.select %240, %238, %241 : vector<32x256xi1>, vector<32x256xf32>
    %cst_113 = arith.constant dense<0.000000e+00> : vector<9x256xf32>
    %243 = tpu.matmul %237, %242, %cst_113 {dimension_numbers = #tpu.dot_dimension_numbers<[1], [0], [0], [1], [0, 0, 1, 1], [], []>} : vector<9x32xf32>, vector<32x256xf32>, vector<9x256xf32> -> vector<9x256xf32>
    %c1_114 = arith.constant 1 : index
    %c0_115 = arith.constant 0 : index
    %c0_116 = arith.constant 0 : index
    %244 = vector.load %arg7[%c1_114, %c0_115, %c0_116] : memref<9x9x32xf32, #tpu.memory_space<vmem>>, vector<1x9x32xf32>
    %245 = vector.shape_cast %244 : vector<1x9x32xf32> to vector<9x32xf32>
    %c16_i32_117 = arith.constant 16 : i32
    %246 = tpu.dynamic_rotate %235 by %c16_i32_117 dim 1 : vector<32x256xf32>, i32 -> vector<32x256xf32>
    %cst_118 = arith.constant 0.000000e+00 : f32
    %247 = vector.shape_cast %39 : vector<1x256xi1> to vector<1x256xi1>
    %248 = vector.broadcast %247 : vector<1x256xi1> to vector<32x256xi1>
    %249 = vector.broadcast %cst_118 : f32 to vector<32x256xf32>
    %250 = arith.select %248, %246, %249 : vector<32x256xi1>, vector<32x256xf32>
    %cst_119 = arith.constant dense<0.000000e+00> : vector<9x256xf32>
    %251 = tpu.matmul %245, %250, %cst_119 {dimension_numbers = #tpu.dot_dimension_numbers<[1], [0], [0], [1], [0, 0, 1, 1], [], []>} : vector<9x32xf32>, vector<32x256xf32>, vector<9x256xf32> -> vector<9x256xf32>
    %252 = arith.addf %243, %251 : vector<9x256xf32>
    %c2_120 = arith.constant 2 : index
    %c0_121 = arith.constant 0 : index
    %c0_122 = arith.constant 0 : index
    %253 = vector.load %arg7[%c2_120, %c0_121, %c0_122] : memref<9x9x32xf32, #tpu.memory_space<vmem>>, vector<1x9x32xf32>
    %254 = vector.shape_cast %253 : vector<1x9x32xf32> to vector<9x32xf32>
    %c15_i32_123 = arith.constant 15 : i32
    %255 = tpu.dynamic_rotate %235 by %c15_i32_123 dim 1 : vector<32x256xf32>, i32 -> vector<32x256xf32>
    %cst_124 = arith.constant 0.000000e+00 : f32
    %256 = vector.shape_cast %58 : vector<1x256xi1> to vector<1x256xi1>
    %257 = vector.broadcast %256 : vector<1x256xi1> to vector<32x256xi1>
    %258 = vector.broadcast %cst_124 : f32 to vector<32x256xf32>
    %259 = arith.select %257, %255, %258 : vector<32x256xi1>, vector<32x256xf32>
    %cst_125 = arith.constant dense<0.000000e+00> : vector<9x256xf32>
    %260 = tpu.matmul %254, %259, %cst_125 {dimension_numbers = #tpu.dot_dimension_numbers<[1], [0], [0], [1], [0, 0, 1, 1], [], []>} : vector<9x32xf32>, vector<32x256xf32>, vector<9x256xf32> -> vector<9x256xf32>
    %261 = arith.addf %252, %260 : vector<9x256xf32>
    %c3_126 = arith.constant 3 : index
    %c0_127 = arith.constant 0 : index
    %c0_128 = arith.constant 0 : index
    %262 = vector.load %arg7[%c3_126, %c0_127, %c0_128] : memref<9x9x32xf32, #tpu.memory_space<vmem>>, vector<1x9x32xf32>
    %263 = vector.shape_cast %262 : vector<1x9x32xf32> to vector<9x32xf32>
    %c1_i32_129 = arith.constant 1 : i32
    %264 = tpu.dynamic_rotate %235 by %c1_i32_129 dim 1 : vector<32x256xf32>, i32 -> vector<32x256xf32>
    %cst_130 = arith.constant 0.000000e+00 : f32
    %265 = vector.shape_cast %77 : vector<1x256xi1> to vector<1x256xi1>
    %266 = vector.broadcast %265 : vector<1x256xi1> to vector<32x256xi1>
    %267 = vector.broadcast %cst_130 : f32 to vector<32x256xf32>
    %268 = arith.select %266, %264, %267 : vector<32x256xi1>, vector<32x256xf32>
    %cst_131 = arith.constant dense<0.000000e+00> : vector<9x256xf32>
    %269 = tpu.matmul %263, %268, %cst_131 {dimension_numbers = #tpu.dot_dimension_numbers<[1], [0], [0], [1], [0, 0, 1, 1], [], []>} : vector<9x32xf32>, vector<32x256xf32>, vector<9x256xf32> -> vector<9x256xf32>
    %270 = arith.addf %261, %269 : vector<9x256xf32>
    %c4_132 = arith.constant 4 : index
    %c0_133 = arith.constant 0 : index
    %c0_134 = arith.constant 0 : index
    %271 = vector.load %arg7[%c4_132, %c0_133, %c0_134] : memref<9x9x32xf32, #tpu.memory_space<vmem>>, vector<1x9x32xf32>
    %272 = vector.shape_cast %271 : vector<1x9x32xf32> to vector<9x32xf32>
    %cst_135 = arith.constant dense<0.000000e+00> : vector<9x256xf32>
    %273 = tpu.matmul %272, %235, %cst_135 {dimension_numbers = #tpu.dot_dimension_numbers<[1], [0], [0], [1], [0, 0, 1, 1], [], []>} : vector<9x32xf32>, vector<32x256xf32>, vector<9x256xf32> -> vector<9x256xf32>
    %274 = arith.addf %270, %273 : vector<9x256xf32>
    %c5_136 = arith.constant 5 : index
    %c0_137 = arith.constant 0 : index
    %c0_138 = arith.constant 0 : index
    %275 = vector.load %arg7[%c5_136, %c0_137, %c0_138] : memref<9x9x32xf32, #tpu.memory_space<vmem>>, vector<1x9x32xf32>
    %276 = vector.shape_cast %275 : vector<1x9x32xf32> to vector<9x32xf32>
    %c255_i32_139 = arith.constant 255 : i32
    %277 = tpu.dynamic_rotate %235 by %c255_i32_139 dim 1 : vector<32x256xf32>, i32 -> vector<32x256xf32>
    %cst_140 = arith.constant 0.000000e+00 : f32
    %278 = vector.shape_cast %96 : vector<1x256xi1> to vector<1x256xi1>
    %279 = vector.broadcast %278 : vector<1x256xi1> to vector<32x256xi1>
    %280 = vector.broadcast %cst_140 : f32 to vector<32x256xf32>
    %281 = arith.select %279, %277, %280 : vector<32x256xi1>, vector<32x256xf32>
    %cst_141 = arith.constant dense<0.000000e+00> : vector<9x256xf32>
    %282 = tpu.matmul %276, %281, %cst_141 {dimension_numbers = #tpu.dot_dimension_numbers<[1], [0], [0], [1], [0, 0, 1, 1], [], []>} : vector<9x32xf32>, vector<32x256xf32>, vector<9x256xf32> -> vector<9x256xf32>
    %283 = arith.addf %274, %282 : vector<9x256xf32>
    %c6_142 = arith.constant 6 : index
    %c0_143 = arith.constant 0 : index
    %c0_144 = arith.constant 0 : index
    %284 = vector.load %arg7[%c6_142, %c0_143, %c0_144] : memref<9x9x32xf32, #tpu.memory_space<vmem>>, vector<1x9x32xf32>
    %285 = vector.shape_cast %284 : vector<1x9x32xf32> to vector<9x32xf32>
    %c241_i32_145 = arith.constant 241 : i32
    %286 = tpu.dynamic_rotate %235 by %c241_i32_145 dim 1 : vector<32x256xf32>, i32 -> vector<32x256xf32>
    %cst_146 = arith.constant 0.000000e+00 : f32
    %287 = vector.shape_cast %115 : vector<1x256xi1> to vector<1x256xi1>
    %288 = vector.broadcast %287 : vector<1x256xi1> to vector<32x256xi1>
    %289 = vector.broadcast %cst_146 : f32 to vector<32x256xf32>
    %290 = arith.select %288, %286, %289 : vector<32x256xi1>, vector<32x256xf32>
    %cst_147 = arith.constant dense<0.000000e+00> : vector<9x256xf32>
    %291 = tpu.matmul %285, %290, %cst_147 {dimension_numbers = #tpu.dot_dimension_numbers<[1], [0], [0], [1], [0, 0, 1, 1], [], []>} : vector<9x32xf32>, vector<32x256xf32>, vector<9x256xf32> -> vector<9x256xf32>
    %292 = arith.addf %283, %291 : vector<9x256xf32>
    %c7_148 = arith.constant 7 : index
    %c0_149 = arith.constant 0 : index
    %c0_150 = arith.constant 0 : index
    %293 = vector.load %arg7[%c7_148, %c0_149, %c0_150] : memref<9x9x32xf32, #tpu.memory_space<vmem>>, vector<1x9x32xf32>
    %294 = vector.shape_cast %293 : vector<1x9x32xf32> to vector<9x32xf32>
    %c240_i32_151 = arith.constant 240 : i32
    %295 = tpu.dynamic_rotate %235 by %c240_i32_151 dim 1 : vector<32x256xf32>, i32 -> vector<32x256xf32>
    %cst_152 = arith.constant 0.000000e+00 : f32
    %296 = vector.shape_cast %134 : vector<1x256xi1> to vector<1x256xi1>
    %297 = vector.broadcast %296 : vector<1x256xi1> to vector<32x256xi1>
    %298 = vector.broadcast %cst_152 : f32 to vector<32x256xf32>
    %299 = arith.select %297, %295, %298 : vector<32x256xi1>, vector<32x256xf32>
    %cst_153 = arith.constant dense<0.000000e+00> : vector<9x256xf32>
    %300 = tpu.matmul %294, %299, %cst_153 {dimension_numbers = #tpu.dot_dimension_numbers<[1], [0], [0], [1], [0, 0, 1, 1], [], []>} : vector<9x32xf32>, vector<32x256xf32>, vector<9x256xf32> -> vector<9x256xf32>
    %301 = arith.addf %292, %300 : vector<9x256xf32>
    %c8_154 = arith.constant 8 : index
    %c0_155 = arith.constant 0 : index
    %c0_156 = arith.constant 0 : index
    %302 = vector.load %arg7[%c8_154, %c0_155, %c0_156] : memref<9x9x32xf32, #tpu.memory_space<vmem>>, vector<1x9x32xf32>
    %303 = vector.shape_cast %302 : vector<1x9x32xf32> to vector<9x32xf32>
    %c239_i32_157 = arith.constant 239 : i32
    %304 = tpu.dynamic_rotate %235 by %c239_i32_157 dim 1 : vector<32x256xf32>, i32 -> vector<32x256xf32>
    %cst_158 = arith.constant 0.000000e+00 : f32
    %305 = vector.shape_cast %153 : vector<1x256xi1> to vector<1x256xi1>
    %306 = vector.broadcast %305 : vector<1x256xi1> to vector<32x256xi1>
    %307 = vector.broadcast %cst_158 : f32 to vector<32x256xf32>
    %308 = arith.select %306, %304, %307 : vector<32x256xi1>, vector<32x256xf32>
    %cst_159 = arith.constant dense<0.000000e+00> : vector<9x256xf32>
    %309 = tpu.matmul %303, %308, %cst_159 {dimension_numbers = #tpu.dot_dimension_numbers<[1], [0], [0], [1], [0, 0, 1, 1], [], []>} : vector<9x32xf32>, vector<32x256xf32>, vector<9x256xf32> -> vector<9x256xf32>
    %310 = arith.addf %301, %309 : vector<9x256xf32>
    %c0_160 = arith.constant 0 : index
    %c0_161 = arith.constant 0 : index
    %311 = vector.load %arg8[%c0_160, %c0_161] : memref<9x1xf32, #tpu.memory_space<vmem>>, vector<9x1xf32>
    %312 = vector.broadcast %311 : vector<9x1xf32> to vector<9x256xf32>
    %313 = arith.addf %310, %312 : vector<9x256xf32>
    %314 = tpu.iota {dimensions = array<i32: 0>} : vector<16x256xi32>
    %315 = arith.sitofp %314 : vector<16x256xi32> to vector<16x256xf32>
    %316 = tpu.iota {dimensions = array<i32: 0>} : vector<16x256xi32>
    %317 = arith.sitofp %316 : vector<16x256xi32> to vector<16x256xf32>
    %318 = vector.extract_strided_slice %313 {offsets = [0, 0], sizes = [1, 256], strides = [1, 1]} : vector<9x256xf32> to vector<1x256xf32>
    %319 = vector.extract_strided_slice %313 {offsets = [3, 0], sizes = [1, 256], strides = [1, 1]} : vector<9x256xf32> to vector<1x256xf32>
    %320 = vector.extract_strided_slice %313 {offsets = [6, 0], sizes = [1, 256], strides = [1, 1]} : vector<9x256xf32> to vector<1x256xf32>
    %321 = arith.addf %0, %319 : vector<1x256xf32>
    %322 = arith.addf %1, %320 : vector<1x256xf32>
    %323 = math.floor %321 : vector<1x256xf32>
    %324 = math.floor %322 : vector<1x256xf32>
    %325 = arith.subf %321, %323 : vector<1x256xf32>
    %326 = arith.subf %322, %324 : vector<1x256xf32>
    %cst_162 = arith.constant 1.000000e+00 : f32
    %327 = vector.broadcast %cst_162 : f32 to vector<1x256xf32>
    %328 = arith.subf %327, %325 : vector<1x256xf32>
    %cst_163 = arith.constant 1.000000e+00 : f32
    %329 = vector.broadcast %cst_163 : f32 to vector<1x256xf32>
    %330 = arith.subf %329, %326 : vector<1x256xf32>
    %cst_164 = arith.constant 0.000000e+00 : f32
    %331 = vector.broadcast %cst_164 : f32 to vector<1x256xf32>
    %332 = arith.cmpf oge, %323, %331 : vector<1x256xf32>
    %cst_165 = arith.constant 1.500000e+01 : f32
    %333 = vector.broadcast %cst_165 : f32 to vector<1x256xf32>
    %334 = arith.cmpf ole, %323, %333 : vector<1x256xf32>
    %335 = arith.andi %332, %334 : vector<1x256xi1>
    %cst_166 = arith.constant 0.000000e+00 : f32
    %336 = vector.broadcast %cst_166 : f32 to vector<1x256xf32>
    %337 = arith.select %335, %328, %336 : vector<1x256xi1>, vector<1x256xf32>
    %cst_167 = arith.constant -1.000000e+00 : f32
    %338 = vector.broadcast %cst_167 : f32 to vector<1x256xf32>
    %339 = arith.cmpf oge, %323, %338 : vector<1x256xf32>
    %cst_168 = arith.constant 1.400000e+01 : f32
    %340 = vector.broadcast %cst_168 : f32 to vector<1x256xf32>
    %341 = arith.cmpf ole, %323, %340 : vector<1x256xf32>
    %342 = arith.andi %339, %341 : vector<1x256xi1>
    %cst_169 = arith.constant 0.000000e+00 : f32
    %343 = vector.broadcast %cst_169 : f32 to vector<1x256xf32>
    %344 = arith.select %342, %325, %343 : vector<1x256xi1>, vector<1x256xf32>
    %cst_170 = arith.constant 0.000000e+00 : f32
    %345 = vector.broadcast %cst_170 : f32 to vector<1x256xf32>
    %346 = arith.cmpf oge, %324, %345 : vector<1x256xf32>
    %cst_171 = arith.constant 1.500000e+01 : f32
    %347 = vector.broadcast %cst_171 : f32 to vector<1x256xf32>
    %348 = arith.cmpf ole, %324, %347 : vector<1x256xf32>
    %349 = arith.andi %346, %348 : vector<1x256xi1>
    %cst_172 = arith.constant 0.000000e+00 : f32
    %350 = vector.broadcast %cst_172 : f32 to vector<1x256xf32>
    %351 = arith.select %349, %330, %350 : vector<1x256xi1>, vector<1x256xf32>
    %cst_173 = arith.constant -1.000000e+00 : f32
    %352 = vector.broadcast %cst_173 : f32 to vector<1x256xf32>
    %353 = arith.cmpf oge, %324, %352 : vector<1x256xf32>
    %cst_174 = arith.constant 1.400000e+01 : f32
    %354 = vector.broadcast %cst_174 : f32 to vector<1x256xf32>
    %355 = arith.cmpf ole, %324, %354 : vector<1x256xf32>
    %356 = arith.andi %353, %355 : vector<1x256xi1>
    %cst_175 = arith.constant 0.000000e+00 : f32
    %357 = vector.broadcast %cst_175 : f32 to vector<1x256xf32>
    %358 = arith.select %356, %326, %357 : vector<1x256xi1>, vector<1x256xf32>
    %359 = vector.broadcast %323 : vector<1x256xf32> to vector<16x256xf32>
    %360 = arith.cmpf oeq, %315, %359 : vector<16x256xf32>
    %cst_176 = arith.constant 0.000000e+00 : f32
    %361 = vector.shape_cast %337 : vector<1x256xf32> to vector<1x256xf32>
    %362 = vector.broadcast %361 : vector<1x256xf32> to vector<16x256xf32>
    %363 = vector.broadcast %cst_176 : f32 to vector<16x256xf32>
    %364 = arith.select %360, %362, %363 : vector<16x256xi1>, vector<16x256xf32>
    %cst_177 = arith.constant 1.000000e+00 : f32
    %365 = vector.broadcast %cst_177 : f32 to vector<1x256xf32>
    %366 = arith.addf %323, %365 : vector<1x256xf32>
    %367 = vector.broadcast %366 : vector<1x256xf32> to vector<16x256xf32>
    %368 = arith.cmpf oeq, %315, %367 : vector<16x256xf32>
    %cst_178 = arith.constant 0.000000e+00 : f32
    %369 = vector.shape_cast %344 : vector<1x256xf32> to vector<1x256xf32>
    %370 = vector.broadcast %369 : vector<1x256xf32> to vector<16x256xf32>
    %371 = vector.broadcast %cst_178 : f32 to vector<16x256xf32>
    %372 = arith.select %368, %370, %371 : vector<16x256xi1>, vector<16x256xf32>
    %373 = arith.addf %364, %372 : vector<16x256xf32>
    %374 = vector.broadcast %324 : vector<1x256xf32> to vector<16x256xf32>
    %375 = arith.cmpf oeq, %317, %374 : vector<16x256xf32>
    %cst_179 = arith.constant 0.000000e+00 : f32
    %376 = vector.shape_cast %351 : vector<1x256xf32> to vector<1x256xf32>
    %377 = vector.broadcast %376 : vector<1x256xf32> to vector<16x256xf32>
    %378 = vector.broadcast %cst_179 : f32 to vector<16x256xf32>
    %379 = arith.select %375, %377, %378 : vector<16x256xi1>, vector<16x256xf32>
    %cst_180 = arith.constant 1.000000e+00 : f32
    %380 = vector.broadcast %cst_180 : f32 to vector<1x256xf32>
    %381 = arith.addf %324, %380 : vector<1x256xf32>
    %382 = vector.broadcast %381 : vector<1x256xf32> to vector<16x256xf32>
    %383 = arith.cmpf oeq, %317, %382 : vector<16x256xf32>
    %cst_181 = arith.constant 0.000000e+00 : f32
    %384 = vector.shape_cast %358 : vector<1x256xf32> to vector<1x256xf32>
    %385 = vector.broadcast %384 : vector<1x256xf32> to vector<16x256xf32>
    %386 = vector.broadcast %cst_181 : f32 to vector<16x256xf32>
    %387 = arith.select %383, %385, %386 : vector<16x256xi1>, vector<16x256xf32>
    %388 = arith.addf %379, %387 : vector<16x256xf32>
    %389 = vector.extract_strided_slice %313 {offsets = [1, 0], sizes = [1, 256], strides = [1, 1]} : vector<9x256xf32> to vector<1x256xf32>
    %390 = vector.extract_strided_slice %313 {offsets = [4, 0], sizes = [1, 256], strides = [1, 1]} : vector<9x256xf32> to vector<1x256xf32>
    %391 = vector.extract_strided_slice %313 {offsets = [7, 0], sizes = [1, 256], strides = [1, 1]} : vector<9x256xf32> to vector<1x256xf32>
    %392 = arith.addf %0, %390 : vector<1x256xf32>
    %393 = arith.addf %1, %391 : vector<1x256xf32>
    %394 = math.floor %392 : vector<1x256xf32>
    %395 = math.floor %393 : vector<1x256xf32>
    %396 = arith.subf %392, %394 : vector<1x256xf32>
    %397 = arith.subf %393, %395 : vector<1x256xf32>
    %cst_182 = arith.constant 1.000000e+00 : f32
    %398 = vector.broadcast %cst_182 : f32 to vector<1x256xf32>
    %399 = arith.subf %398, %396 : vector<1x256xf32>
    %cst_183 = arith.constant 1.000000e+00 : f32
    %400 = vector.broadcast %cst_183 : f32 to vector<1x256xf32>
    %401 = arith.subf %400, %397 : vector<1x256xf32>
    %cst_184 = arith.constant 0.000000e+00 : f32
    %402 = vector.broadcast %cst_184 : f32 to vector<1x256xf32>
    %403 = arith.cmpf oge, %394, %402 : vector<1x256xf32>
    %cst_185 = arith.constant 1.500000e+01 : f32
    %404 = vector.broadcast %cst_185 : f32 to vector<1x256xf32>
    %405 = arith.cmpf ole, %394, %404 : vector<1x256xf32>
    %406 = arith.andi %403, %405 : vector<1x256xi1>
    %cst_186 = arith.constant 0.000000e+00 : f32
    %407 = vector.broadcast %cst_186 : f32 to vector<1x256xf32>
    %408 = arith.select %406, %399, %407 : vector<1x256xi1>, vector<1x256xf32>
    %cst_187 = arith.constant -1.000000e+00 : f32
    %409 = vector.broadcast %cst_187 : f32 to vector<1x256xf32>
    %410 = arith.cmpf oge, %394, %409 : vector<1x256xf32>
    %cst_188 = arith.constant 1.400000e+01 : f32
    %411 = vector.broadcast %cst_188 : f32 to vector<1x256xf32>
    %412 = arith.cmpf ole, %394, %411 : vector<1x256xf32>
    %413 = arith.andi %410, %412 : vector<1x256xi1>
    %cst_189 = arith.constant 0.000000e+00 : f32
    %414 = vector.broadcast %cst_189 : f32 to vector<1x256xf32>
    %415 = arith.select %413, %396, %414 : vector<1x256xi1>, vector<1x256xf32>
    %cst_190 = arith.constant 0.000000e+00 : f32
    %416 = vector.broadcast %cst_190 : f32 to vector<1x256xf32>
    %417 = arith.cmpf oge, %395, %416 : vector<1x256xf32>
    %cst_191 = arith.constant 1.500000e+01 : f32
    %418 = vector.broadcast %cst_191 : f32 to vector<1x256xf32>
    %419 = arith.cmpf ole, %395, %418 : vector<1x256xf32>
    %420 = arith.andi %417, %419 : vector<1x256xi1>
    %cst_192 = arith.constant 0.000000e+00 : f32
    %421 = vector.broadcast %cst_192 : f32 to vector<1x256xf32>
    %422 = arith.select %420, %401, %421 : vector<1x256xi1>, vector<1x256xf32>
    %cst_193 = arith.constant -1.000000e+00 : f32
    %423 = vector.broadcast %cst_193 : f32 to vector<1x256xf32>
    %424 = arith.cmpf oge, %395, %423 : vector<1x256xf32>
    %cst_194 = arith.constant 1.400000e+01 : f32
    %425 = vector.broadcast %cst_194 : f32 to vector<1x256xf32>
    %426 = arith.cmpf ole, %395, %425 : vector<1x256xf32>
    %427 = arith.andi %424, %426 : vector<1x256xi1>
    %cst_195 = arith.constant 0.000000e+00 : f32
    %428 = vector.broadcast %cst_195 : f32 to vector<1x256xf32>
    %429 = arith.select %427, %397, %428 : vector<1x256xi1>, vector<1x256xf32>
    %430 = vector.broadcast %394 : vector<1x256xf32> to vector<16x256xf32>
    %431 = arith.cmpf oeq, %315, %430 : vector<16x256xf32>
    %cst_196 = arith.constant 0.000000e+00 : f32
    %432 = vector.shape_cast %408 : vector<1x256xf32> to vector<1x256xf32>
    %433 = vector.broadcast %432 : vector<1x256xf32> to vector<16x256xf32>
    %434 = vector.broadcast %cst_196 : f32 to vector<16x256xf32>
    %435 = arith.select %431, %433, %434 : vector<16x256xi1>, vector<16x256xf32>
    %cst_197 = arith.constant 1.000000e+00 : f32
    %436 = vector.broadcast %cst_197 : f32 to vector<1x256xf32>
    %437 = arith.addf %394, %436 : vector<1x256xf32>
    %438 = vector.broadcast %437 : vector<1x256xf32> to vector<16x256xf32>
    %439 = arith.cmpf oeq, %315, %438 : vector<16x256xf32>
    %cst_198 = arith.constant 0.000000e+00 : f32
    %440 = vector.shape_cast %415 : vector<1x256xf32> to vector<1x256xf32>
    %441 = vector.broadcast %440 : vector<1x256xf32> to vector<16x256xf32>
    %442 = vector.broadcast %cst_198 : f32 to vector<16x256xf32>
    %443 = arith.select %439, %441, %442 : vector<16x256xi1>, vector<16x256xf32>
    %444 = arith.addf %435, %443 : vector<16x256xf32>
    %445 = vector.broadcast %395 : vector<1x256xf32> to vector<16x256xf32>
    %446 = arith.cmpf oeq, %317, %445 : vector<16x256xf32>
    %cst_199 = arith.constant 0.000000e+00 : f32
    %447 = vector.shape_cast %422 : vector<1x256xf32> to vector<1x256xf32>
    %448 = vector.broadcast %447 : vector<1x256xf32> to vector<16x256xf32>
    %449 = vector.broadcast %cst_199 : f32 to vector<16x256xf32>
    %450 = arith.select %446, %448, %449 : vector<16x256xi1>, vector<16x256xf32>
    %cst_200 = arith.constant 1.000000e+00 : f32
    %451 = vector.broadcast %cst_200 : f32 to vector<1x256xf32>
    %452 = arith.addf %395, %451 : vector<1x256xf32>
    %453 = vector.broadcast %452 : vector<1x256xf32> to vector<16x256xf32>
    %454 = arith.cmpf oeq, %317, %453 : vector<16x256xf32>
    %cst_201 = arith.constant 0.000000e+00 : f32
    %455 = vector.shape_cast %429 : vector<1x256xf32> to vector<1x256xf32>
    %456 = vector.broadcast %455 : vector<1x256xf32> to vector<16x256xf32>
    %457 = vector.broadcast %cst_201 : f32 to vector<16x256xf32>
    %458 = arith.select %454, %456, %457 : vector<16x256xi1>, vector<16x256xf32>
    %459 = arith.addf %450, %458 : vector<16x256xf32>
    %460 = vector.extract_strided_slice %313 {offsets = [2, 0], sizes = [1, 256], strides = [1, 1]} : vector<9x256xf32> to vector<1x256xf32>
    %461 = vector.extract_strided_slice %313 {offsets = [5, 0], sizes = [1, 256], strides = [1, 1]} : vector<9x256xf32> to vector<1x256xf32>
    %462 = vector.extract_strided_slice %313 {offsets = [8, 0], sizes = [1, 256], strides = [1, 1]} : vector<9x256xf32> to vector<1x256xf32>
    %463 = arith.addf %0, %461 : vector<1x256xf32>
    %464 = arith.addf %1, %462 : vector<1x256xf32>
    %465 = math.floor %463 : vector<1x256xf32>
    %466 = math.floor %464 : vector<1x256xf32>
    %467 = arith.subf %463, %465 : vector<1x256xf32>
    %468 = arith.subf %464, %466 : vector<1x256xf32>
    %cst_202 = arith.constant 1.000000e+00 : f32
    %469 = vector.broadcast %cst_202 : f32 to vector<1x256xf32>
    %470 = arith.subf %469, %467 : vector<1x256xf32>
    %cst_203 = arith.constant 1.000000e+00 : f32
    %471 = vector.broadcast %cst_203 : f32 to vector<1x256xf32>
    %472 = arith.subf %471, %468 : vector<1x256xf32>
    %cst_204 = arith.constant 0.000000e+00 : f32
    %473 = vector.broadcast %cst_204 : f32 to vector<1x256xf32>
    %474 = arith.cmpf oge, %465, %473 : vector<1x256xf32>
    %cst_205 = arith.constant 1.500000e+01 : f32
    %475 = vector.broadcast %cst_205 : f32 to vector<1x256xf32>
    %476 = arith.cmpf ole, %465, %475 : vector<1x256xf32>
    %477 = arith.andi %474, %476 : vector<1x256xi1>
    %cst_206 = arith.constant 0.000000e+00 : f32
    %478 = vector.broadcast %cst_206 : f32 to vector<1x256xf32>
    %479 = arith.select %477, %470, %478 : vector<1x256xi1>, vector<1x256xf32>
    %cst_207 = arith.constant -1.000000e+00 : f32
    %480 = vector.broadcast %cst_207 : f32 to vector<1x256xf32>
    %481 = arith.cmpf oge, %465, %480 : vector<1x256xf32>
    %cst_208 = arith.constant 1.400000e+01 : f32
    %482 = vector.broadcast %cst_208 : f32 to vector<1x256xf32>
    %483 = arith.cmpf ole, %465, %482 : vector<1x256xf32>
    %484 = arith.andi %481, %483 : vector<1x256xi1>
    %cst_209 = arith.constant 0.000000e+00 : f32
    %485 = vector.broadcast %cst_209 : f32 to vector<1x256xf32>
    %486 = arith.select %484, %467, %485 : vector<1x256xi1>, vector<1x256xf32>
    %cst_210 = arith.constant 0.000000e+00 : f32
    %487 = vector.broadcast %cst_210 : f32 to vector<1x256xf32>
    %488 = arith.cmpf oge, %466, %487 : vector<1x256xf32>
    %cst_211 = arith.constant 1.500000e+01 : f32
    %489 = vector.broadcast %cst_211 : f32 to vector<1x256xf32>
    %490 = arith.cmpf ole, %466, %489 : vector<1x256xf32>
    %491 = arith.andi %488, %490 : vector<1x256xi1>
    %cst_212 = arith.constant 0.000000e+00 : f32
    %492 = vector.broadcast %cst_212 : f32 to vector<1x256xf32>
    %493 = arith.select %491, %472, %492 : vector<1x256xi1>, vector<1x256xf32>
    %cst_213 = arith.constant -1.000000e+00 : f32
    %494 = vector.broadcast %cst_213 : f32 to vector<1x256xf32>
    %495 = arith.cmpf oge, %466, %494 : vector<1x256xf32>
    %cst_214 = arith.constant 1.400000e+01 : f32
    %496 = vector.broadcast %cst_214 : f32 to vector<1x256xf32>
    %497 = arith.cmpf ole, %466, %496 : vector<1x256xf32>
    %498 = arith.andi %495, %497 : vector<1x256xi1>
    %cst_215 = arith.constant 0.000000e+00 : f32
    %499 = vector.broadcast %cst_215 : f32 to vector<1x256xf32>
    %500 = arith.select %498, %468, %499 : vector<1x256xi1>, vector<1x256xf32>
    %501 = vector.broadcast %465 : vector<1x256xf32> to vector<16x256xf32>
    %502 = arith.cmpf oeq, %315, %501 : vector<16x256xf32>
    %cst_216 = arith.constant 0.000000e+00 : f32
    %503 = vector.shape_cast %479 : vector<1x256xf32> to vector<1x256xf32>
    %504 = vector.broadcast %503 : vector<1x256xf32> to vector<16x256xf32>
    %505 = vector.broadcast %cst_216 : f32 to vector<16x256xf32>
    %506 = arith.select %502, %504, %505 : vector<16x256xi1>, vector<16x256xf32>
    %cst_217 = arith.constant 1.000000e+00 : f32
    %507 = vector.broadcast %cst_217 : f32 to vector<1x256xf32>
    %508 = arith.addf %465, %507 : vector<1x256xf32>
    %509 = vector.broadcast %508 : vector<1x256xf32> to vector<16x256xf32>
    %510 = arith.cmpf oeq, %315, %509 : vector<16x256xf32>
    %cst_218 = arith.constant 0.000000e+00 : f32
    %511 = vector.shape_cast %486 : vector<1x256xf32> to vector<1x256xf32>
    %512 = vector.broadcast %511 : vector<1x256xf32> to vector<16x256xf32>
    %513 = vector.broadcast %cst_218 : f32 to vector<16x256xf32>
    %514 = arith.select %510, %512, %513 : vector<16x256xi1>, vector<16x256xf32>
    %515 = arith.addf %506, %514 : vector<16x256xf32>
    %516 = vector.broadcast %466 : vector<1x256xf32> to vector<16x256xf32>
    %517 = arith.cmpf oeq, %317, %516 : vector<16x256xf32>
    %cst_219 = arith.constant 0.000000e+00 : f32
    %518 = vector.shape_cast %493 : vector<1x256xf32> to vector<1x256xf32>
    %519 = vector.broadcast %518 : vector<1x256xf32> to vector<16x256xf32>
    %520 = vector.broadcast %cst_219 : f32 to vector<16x256xf32>
    %521 = arith.select %517, %519, %520 : vector<16x256xi1>, vector<16x256xf32>
    %cst_220 = arith.constant 1.000000e+00 : f32
    %522 = vector.broadcast %cst_220 : f32 to vector<1x256xf32>
    %523 = arith.addf %466, %522 : vector<1x256xf32>
    %524 = vector.broadcast %523 : vector<1x256xf32> to vector<16x256xf32>
    %525 = arith.cmpf oeq, %317, %524 : vector<16x256xf32>
    %cst_221 = arith.constant 0.000000e+00 : f32
    %526 = vector.shape_cast %500 : vector<1x256xf32> to vector<1x256xf32>
    %527 = vector.broadcast %526 : vector<1x256xf32> to vector<16x256xf32>
    %528 = vector.broadcast %cst_221 : f32 to vector<16x256xf32>
    %529 = arith.select %525, %527, %528 : vector<16x256xi1>, vector<16x256xf32>
    %530 = arith.addf %521, %529 : vector<16x256xf32>
    %c0_222 = arith.constant 0 : index
    %c0_223 = arith.constant 0 : index
    %c0_224 = arith.constant 0 : index
    %531 = vector.load %arg3[%c0_222, %c0_223, %c0_224] : memref<1x3x256xf32, #tpu.memory_space<vmem>>, vector<1x3x256xf32>
    %532 = vector.shape_cast %531 : vector<1x3x256xf32> to vector<3x256xf32>
    %c0_225 = arith.constant 0 : index
    %c0_226 = arith.constant 0 : index
    %c0_227 = arith.constant 0 : index
    %533 = vector.load %arg4[%c0_225, %c0_226, %c0_227] : memref<1x1x256xf32, #tpu.memory_space<vmem>>, vector<1x1x256xf32>
    %534 = vector.shape_cast %533 : vector<1x1x256xf32> to vector<1x256xf32>
    %535 = vector.extract_strided_slice %534 {offsets = [0, 0], sizes = [1, 16], strides = [1, 1]} : vector<1x256xf32> to vector<1x16xf32>
    %536 = vector.extract_strided_slice %534 {offsets = [0, 16], sizes = [1, 16], strides = [1, 1]} : vector<1x256xf32> to vector<1x16xf32>
    %537 = vector.extract_strided_slice %534 {offsets = [0, 32], sizes = [1, 16], strides = [1, 1]} : vector<1x256xf32> to vector<1x16xf32>
    %538 = vector.extract_strided_slice %534 {offsets = [0, 48], sizes = [1, 16], strides = [1, 1]} : vector<1x256xf32> to vector<1x16xf32>
    %539 = vector.extract_strided_slice %534 {offsets = [0, 64], sizes = [1, 16], strides = [1, 1]} : vector<1x256xf32> to vector<1x16xf32>
    %540 = vector.extract_strided_slice %534 {offsets = [0, 80], sizes = [1, 16], strides = [1, 1]} : vector<1x256xf32> to vector<1x16xf32>
    %541 = vector.extract_strided_slice %534 {offsets = [0, 96], sizes = [1, 16], strides = [1, 1]} : vector<1x256xf32> to vector<1x16xf32>
    %542 = vector.extract_strided_slice %534 {offsets = [0, 112], sizes = [1, 16], strides = [1, 1]} : vector<1x256xf32> to vector<1x16xf32>
    %543 = vector.extract_strided_slice %534 {offsets = [0, 128], sizes = [1, 16], strides = [1, 1]} : vector<1x256xf32> to vector<1x16xf32>
    %544 = vector.extract_strided_slice %534 {offsets = [0, 144], sizes = [1, 16], strides = [1, 1]} : vector<1x256xf32> to vector<1x16xf32>
    %545 = vector.extract_strided_slice %534 {offsets = [0, 160], sizes = [1, 16], strides = [1, 1]} : vector<1x256xf32> to vector<1x16xf32>
    %546 = vector.extract_strided_slice %534 {offsets = [0, 176], sizes = [1, 16], strides = [1, 1]} : vector<1x256xf32> to vector<1x16xf32>
    %547 = vector.extract_strided_slice %534 {offsets = [0, 192], sizes = [1, 16], strides = [1, 1]} : vector<1x256xf32> to vector<1x16xf32>
    %548 = vector.extract_strided_slice %534 {offsets = [0, 208], sizes = [1, 16], strides = [1, 1]} : vector<1x256xf32> to vector<1x16xf32>
    %549 = vector.extract_strided_slice %534 {offsets = [0, 224], sizes = [1, 16], strides = [1, 1]} : vector<1x256xf32> to vector<1x16xf32>
    %550 = vector.extract_strided_slice %534 {offsets = [0, 240], sizes = [1, 16], strides = [1, 1]} : vector<1x256xf32> to vector<1x16xf32>
    %551 = tpu.concatenate %535, %536, %537, %538, %539, %540, %541, %542, %543, %544, %545, %546, %547, %548, %549, %550 in 0 : vector<1x16xf32>, vector<1x16xf32>, vector<1x16xf32>, vector<1x16xf32>, vector<1x16xf32>, vector<1x16xf32>, vector<1x16xf32>, vector<1x16xf32>, vector<1x16xf32>, vector<1x16xf32>, vector<1x16xf32>, vector<1x16xf32>, vector<1x16xf32>, vector<1x16xf32>, vector<1x16xf32>, vector<1x16xf32> -> vector<16x16xf32>
    %cst_228 = arith.constant dense<0.000000e+00> : vector<16x256xf32>
    %552 = tpu.matmul %551, %373, %cst_228 {dimension_numbers = #tpu.dot_dimension_numbers<[1], [0], [0], [1], [0, 0, 1, 1], [], []>} : vector<16x16xf32>, vector<16x256xf32>, vector<16x256xf32> -> vector<16x256xf32>
    %553 = arith.mulf %388, %552 : vector<16x256xf32>
    %cst_229 = arith.constant dense<0.000000e+00> : vector<256xf32>
    %554 = vector.multi_reduction <add>, %553, %cst_229 [0] : vector<16x256xf32> to vector<256xf32>
    %555 = vector.shape_cast %554 : vector<256xf32> to vector<1x256xf32>
    %cst_230 = arith.constant 2.000000e+01 : f32
    %556 = vector.broadcast %cst_230 : f32 to vector<1x256xf32>
    %557 = arith.mulf %556, %318 : vector<1x256xf32>
    %558 = arith.addf %555, %557 : vector<1x256xf32>
    %cst_231 = arith.constant 1.000000e+01 : f32
    %559 = vector.broadcast %cst_231 : f32 to vector<1x256xf32>
    %560 = arith.subf %558, %559 : vector<1x256xf32>
    %561 = arith.addf %560, %534 : vector<1x256xf32>
    %562 = vector.extract_strided_slice %532 {offsets = [0, 0], sizes = [1, 256], strides = [1, 1]} : vector<3x256xf32> to vector<1x256xf32>
    %c0_232 = arith.constant 0 : index
    %c0_233 = arith.constant 0 : index
    %563 = vector.load %arg9[%c0_232, %c0_233] : memref<54x1xf32, #tpu.memory_space<vmem>>, vector<1x1xf32>
    %c17_i32_234 = arith.constant 17 : i32
    %564 = tpu.dynamic_rotate %561 by %c17_i32_234 dim 1 : vector<1x256xf32>, i32 -> vector<1x256xf32>
    %cst_235 = arith.constant 0.000000e+00 : f32
    %565 = vector.broadcast %cst_235 : f32 to vector<1x256xf32>
    %566 = arith.select %20, %564, %565 : vector<1x256xi1>, vector<1x256xf32>
    %567 = vector.broadcast %563 : vector<1x1xf32> to vector<1x256xf32>
    %568 = arith.mulf %567, %566 : vector<1x256xf32>
    %c1_236 = arith.constant 1 : index
    %c0_237 = arith.constant 0 : index
    %569 = vector.load %arg9[%c1_236, %c0_237] : memref<54x1xf32, #tpu.memory_space<vmem>>, vector<1x1xf32>
    %c17_i32_238 = arith.constant 17 : i32
    %570 = tpu.dynamic_rotate %562 by %c17_i32_238 dim 1 : vector<1x256xf32>, i32 -> vector<1x256xf32>
    %cst_239 = arith.constant 0.000000e+00 : f32
    %571 = vector.broadcast %cst_239 : f32 to vector<1x256xf32>
    %572 = arith.select %20, %570, %571 : vector<1x256xi1>, vector<1x256xf32>
    %573 = vector.broadcast %569 : vector<1x1xf32> to vector<1x256xf32>
    %574 = arith.mulf %573, %572 : vector<1x256xf32>
    %575 = arith.addf %568, %574 : vector<1x256xf32>
    %c2_240 = arith.constant 2 : index
    %c0_241 = arith.constant 0 : index
    %576 = vector.load %arg9[%c2_240, %c0_241] : memref<54x1xf32, #tpu.memory_space<vmem>>, vector<1x1xf32>
    %c16_i32_242 = arith.constant 16 : i32
    %577 = tpu.dynamic_rotate %561 by %c16_i32_242 dim 1 : vector<1x256xf32>, i32 -> vector<1x256xf32>
    %cst_243 = arith.constant 0.000000e+00 : f32
    %578 = vector.broadcast %cst_243 : f32 to vector<1x256xf32>
    %579 = arith.select %39, %577, %578 : vector<1x256xi1>, vector<1x256xf32>
    %580 = vector.broadcast %576 : vector<1x1xf32> to vector<1x256xf32>
    %581 = arith.mulf %580, %579 : vector<1x256xf32>
    %c3_244 = arith.constant 3 : index
    %c0_245 = arith.constant 0 : index
    %582 = vector.load %arg9[%c3_244, %c0_245] : memref<54x1xf32, #tpu.memory_space<vmem>>, vector<1x1xf32>
    %c16_i32_246 = arith.constant 16 : i32
    %583 = tpu.dynamic_rotate %562 by %c16_i32_246 dim 1 : vector<1x256xf32>, i32 -> vector<1x256xf32>
    %cst_247 = arith.constant 0.000000e+00 : f32
    %584 = vector.broadcast %cst_247 : f32 to vector<1x256xf32>
    %585 = arith.select %39, %583, %584 : vector<1x256xi1>, vector<1x256xf32>
    %586 = vector.broadcast %582 : vector<1x1xf32> to vector<1x256xf32>
    %587 = arith.mulf %586, %585 : vector<1x256xf32>
    %588 = arith.addf %581, %587 : vector<1x256xf32>
    %589 = arith.addf %575, %588 : vector<1x256xf32>
    %c4_248 = arith.constant 4 : index
    %c0_249 = arith.constant 0 : index
    %590 = vector.load %arg9[%c4_248, %c0_249] : memref<54x1xf32, #tpu.memory_space<vmem>>, vector<1x1xf32>
    %c15_i32_250 = arith.constant 15 : i32
    %591 = tpu.dynamic_rotate %561 by %c15_i32_250 dim 1 : vector<1x256xf32>, i32 -> vector<1x256xf32>
    %cst_251 = arith.constant 0.000000e+00 : f32
    %592 = vector.broadcast %cst_251 : f32 to vector<1x256xf32>
    %593 = arith.select %58, %591, %592 : vector<1x256xi1>, vector<1x256xf32>
    %594 = vector.broadcast %590 : vector<1x1xf32> to vector<1x256xf32>
    %595 = arith.mulf %594, %593 : vector<1x256xf32>
    %c5_252 = arith.constant 5 : index
    %c0_253 = arith.constant 0 : index
    %596 = vector.load %arg9[%c5_252, %c0_253] : memref<54x1xf32, #tpu.memory_space<vmem>>, vector<1x1xf32>
    %c15_i32_254 = arith.constant 15 : i32
    %597 = tpu.dynamic_rotate %562 by %c15_i32_254 dim 1 : vector<1x256xf32>, i32 -> vector<1x256xf32>
    %cst_255 = arith.constant 0.000000e+00 : f32
    %598 = vector.broadcast %cst_255 : f32 to vector<1x256xf32>
    %599 = arith.select %58, %597, %598 : vector<1x256xi1>, vector<1x256xf32>
    %600 = vector.broadcast %596 : vector<1x1xf32> to vector<1x256xf32>
    %601 = arith.mulf %600, %599 : vector<1x256xf32>
    %602 = arith.addf %595, %601 : vector<1x256xf32>
    %603 = arith.addf %589, %602 : vector<1x256xf32>
    %c6_256 = arith.constant 6 : index
    %c0_257 = arith.constant 0 : index
    %604 = vector.load %arg9[%c6_256, %c0_257] : memref<54x1xf32, #tpu.memory_space<vmem>>, vector<1x1xf32>
    %c1_i32_258 = arith.constant 1 : i32
    %605 = tpu.dynamic_rotate %561 by %c1_i32_258 dim 1 : vector<1x256xf32>, i32 -> vector<1x256xf32>
    %cst_259 = arith.constant 0.000000e+00 : f32
    %606 = vector.broadcast %cst_259 : f32 to vector<1x256xf32>
    %607 = arith.select %77, %605, %606 : vector<1x256xi1>, vector<1x256xf32>
    %608 = vector.broadcast %604 : vector<1x1xf32> to vector<1x256xf32>
    %609 = arith.mulf %608, %607 : vector<1x256xf32>
    %c7_260 = arith.constant 7 : index
    %c0_261 = arith.constant 0 : index
    %610 = vector.load %arg9[%c7_260, %c0_261] : memref<54x1xf32, #tpu.memory_space<vmem>>, vector<1x1xf32>
    %c1_i32_262 = arith.constant 1 : i32
    %611 = tpu.dynamic_rotate %562 by %c1_i32_262 dim 1 : vector<1x256xf32>, i32 -> vector<1x256xf32>
    %cst_263 = arith.constant 0.000000e+00 : f32
    %612 = vector.broadcast %cst_263 : f32 to vector<1x256xf32>
    %613 = arith.select %77, %611, %612 : vector<1x256xi1>, vector<1x256xf32>
    %614 = vector.broadcast %610 : vector<1x1xf32> to vector<1x256xf32>
    %615 = arith.mulf %614, %613 : vector<1x256xf32>
    %616 = arith.addf %609, %615 : vector<1x256xf32>
    %617 = arith.addf %603, %616 : vector<1x256xf32>
    %c8_264 = arith.constant 8 : index
    %c0_265 = arith.constant 0 : index
    %618 = vector.load %arg9[%c8_264, %c0_265] : memref<54x1xf32, #tpu.memory_space<vmem>>, vector<1x1xf32>
    %619 = vector.broadcast %618 : vector<1x1xf32> to vector<1x256xf32>
    %620 = arith.mulf %619, %561 : vector<1x256xf32>
    %c9 = arith.constant 9 : index
    %c0_266 = arith.constant 0 : index
    %621 = vector.load %arg9[%c9, %c0_266] : memref<54x1xf32, #tpu.memory_space<vmem>>, vector<1x1xf32>
    %622 = vector.broadcast %621 : vector<1x1xf32> to vector<1x256xf32>
    %623 = arith.mulf %622, %562 : vector<1x256xf32>
    %624 = arith.addf %620, %623 : vector<1x256xf32>
    %625 = arith.addf %617, %624 : vector<1x256xf32>
    %c10 = arith.constant 10 : index
    %c0_267 = arith.constant 0 : index
    %626 = vector.load %arg9[%c10, %c0_267] : memref<54x1xf32, #tpu.memory_space<vmem>>, vector<1x1xf32>
    %c255_i32_268 = arith.constant 255 : i32
    %627 = tpu.dynamic_rotate %561 by %c255_i32_268 dim 1 : vector<1x256xf32>, i32 -> vector<1x256xf32>
    %cst_269 = arith.constant 0.000000e+00 : f32
    %628 = vector.broadcast %cst_269 : f32 to vector<1x256xf32>
    %629 = arith.select %96, %627, %628 : vector<1x256xi1>, vector<1x256xf32>
    %630 = vector.broadcast %626 : vector<1x1xf32> to vector<1x256xf32>
    %631 = arith.mulf %630, %629 : vector<1x256xf32>
    %c11 = arith.constant 11 : index
    %c0_270 = arith.constant 0 : index
    %632 = vector.load %arg9[%c11, %c0_270] : memref<54x1xf32, #tpu.memory_space<vmem>>, vector<1x1xf32>
    %c255_i32_271 = arith.constant 255 : i32
    %633 = tpu.dynamic_rotate %562 by %c255_i32_271 dim 1 : vector<1x256xf32>, i32 -> vector<1x256xf32>
    %cst_272 = arith.constant 0.000000e+00 : f32
    %634 = vector.broadcast %cst_272 : f32 to vector<1x256xf32>
    %635 = arith.select %96, %633, %634 : vector<1x256xi1>, vector<1x256xf32>
    %636 = vector.broadcast %632 : vector<1x1xf32> to vector<1x256xf32>
    %637 = arith.mulf %636, %635 : vector<1x256xf32>
    %638 = arith.addf %631, %637 : vector<1x256xf32>
    %639 = arith.addf %625, %638 : vector<1x256xf32>
    %c12 = arith.constant 12 : index
    %c0_273 = arith.constant 0 : index
    %640 = vector.load %arg9[%c12, %c0_273] : memref<54x1xf32, #tpu.memory_space<vmem>>, vector<1x1xf32>
    %c241_i32_274 = arith.constant 241 : i32
    %641 = tpu.dynamic_rotate %561 by %c241_i32_274 dim 1 : vector<1x256xf32>, i32 -> vector<1x256xf32>
    %cst_275 = arith.constant 0.000000e+00 : f32
    %642 = vector.broadcast %cst_275 : f32 to vector<1x256xf32>
    %643 = arith.select %115, %641, %642 : vector<1x256xi1>, vector<1x256xf32>
    %644 = vector.broadcast %640 : vector<1x1xf32> to vector<1x256xf32>
    %645 = arith.mulf %644, %643 : vector<1x256xf32>
    %c13 = arith.constant 13 : index
    %c0_276 = arith.constant 0 : index
    %646 = vector.load %arg9[%c13, %c0_276] : memref<54x1xf32, #tpu.memory_space<vmem>>, vector<1x1xf32>
    %c241_i32_277 = arith.constant 241 : i32
    %647 = tpu.dynamic_rotate %562 by %c241_i32_277 dim 1 : vector<1x256xf32>, i32 -> vector<1x256xf32>
    %cst_278 = arith.constant 0.000000e+00 : f32
    %648 = vector.broadcast %cst_278 : f32 to vector<1x256xf32>
    %649 = arith.select %115, %647, %648 : vector<1x256xi1>, vector<1x256xf32>
    %650 = vector.broadcast %646 : vector<1x1xf32> to vector<1x256xf32>
    %651 = arith.mulf %650, %649 : vector<1x256xf32>
    %652 = arith.addf %645, %651 : vector<1x256xf32>
    %653 = arith.addf %639, %652 : vector<1x256xf32>
    %c14 = arith.constant 14 : index
    %c0_279 = arith.constant 0 : index
    %654 = vector.load %arg9[%c14, %c0_279] : memref<54x1xf32, #tpu.memory_space<vmem>>, vector<1x1xf32>
    %c240_i32_280 = arith.constant 240 : i32
    %655 = tpu.dynamic_rotate %561 by %c240_i32_280 dim 1 : vector<1x256xf32>, i32 -> vector<1x256xf32>
    %cst_281 = arith.constant 0.000000e+00 : f32
    %656 = vector.broadcast %cst_281 : f32 to vector<1x256xf32>
    %657 = arith.select %134, %655, %656 : vector<1x256xi1>, vector<1x256xf32>
    %658 = vector.broadcast %654 : vector<1x1xf32> to vector<1x256xf32>
    %659 = arith.mulf %658, %657 : vector<1x256xf32>
    %c15 = arith.constant 15 : index
    %c0_282 = arith.constant 0 : index
    %660 = vector.load %arg9[%c15, %c0_282] : memref<54x1xf32, #tpu.memory_space<vmem>>, vector<1x1xf32>
    %c240_i32_283 = arith.constant 240 : i32
    %661 = tpu.dynamic_rotate %562 by %c240_i32_283 dim 1 : vector<1x256xf32>, i32 -> vector<1x256xf32>
    %cst_284 = arith.constant 0.000000e+00 : f32
    %662 = vector.broadcast %cst_284 : f32 to vector<1x256xf32>
    %663 = arith.select %134, %661, %662 : vector<1x256xi1>, vector<1x256xf32>
    %664 = vector.broadcast %660 : vector<1x1xf32> to vector<1x256xf32>
    %665 = arith.mulf %664, %663 : vector<1x256xf32>
    %666 = arith.addf %659, %665 : vector<1x256xf32>
    %667 = arith.addf %653, %666 : vector<1x256xf32>
    %c16 = arith.constant 16 : index
    %c0_285 = arith.constant 0 : index
    %668 = vector.load %arg9[%c16, %c0_285] : memref<54x1xf32, #tpu.memory_space<vmem>>, vector<1x1xf32>
    %c239_i32_286 = arith.constant 239 : i32
    %669 = tpu.dynamic_rotate %561 by %c239_i32_286 dim 1 : vector<1x256xf32>, i32 -> vector<1x256xf32>
    %cst_287 = arith.constant 0.000000e+00 : f32
    %670 = vector.broadcast %cst_287 : f32 to vector<1x256xf32>
    %671 = arith.select %153, %669, %670 : vector<1x256xi1>, vector<1x256xf32>
    %672 = vector.broadcast %668 : vector<1x1xf32> to vector<1x256xf32>
    %673 = arith.mulf %672, %671 : vector<1x256xf32>
    %c17 = arith.constant 17 : index
    %c0_288 = arith.constant 0 : index
    %674 = vector.load %arg9[%c17, %c0_288] : memref<54x1xf32, #tpu.memory_space<vmem>>, vector<1x1xf32>
    %c239_i32_289 = arith.constant 239 : i32
    %675 = tpu.dynamic_rotate %562 by %c239_i32_289 dim 1 : vector<1x256xf32>, i32 -> vector<1x256xf32>
    %cst_290 = arith.constant 0.000000e+00 : f32
    %676 = vector.broadcast %cst_290 : f32 to vector<1x256xf32>
    %677 = arith.select %153, %675, %676 : vector<1x256xi1>, vector<1x256xf32>
    %678 = vector.broadcast %674 : vector<1x1xf32> to vector<1x256xf32>
    %679 = arith.mulf %678, %677 : vector<1x256xf32>
    %680 = arith.addf %673, %679 : vector<1x256xf32>
    %681 = arith.addf %667, %680 : vector<1x256xf32>
    %c0_291 = arith.constant 0 : index
    %c0_292 = arith.constant 0 : index
    %682 = vector.load %arg10[%c0_291, %c0_292] : memref<3x1xf32, #tpu.memory_space<vmem>>, vector<1x1xf32>
    %683 = vector.broadcast %682 : vector<1x1xf32> to vector<1x256xf32>
    %684 = arith.addf %681, %683 : vector<1x256xf32>
    %685 = vector.extract_strided_slice %684 {offsets = [0, 0], sizes = [1, 16], strides = [1, 1]} : vector<1x256xf32> to vector<1x16xf32>
    %686 = vector.extract_strided_slice %684 {offsets = [0, 16], sizes = [1, 16], strides = [1, 1]} : vector<1x256xf32> to vector<1x16xf32>
    %687 = vector.extract_strided_slice %684 {offsets = [0, 32], sizes = [1, 16], strides = [1, 1]} : vector<1x256xf32> to vector<1x16xf32>
    %688 = vector.extract_strided_slice %684 {offsets = [0, 48], sizes = [1, 16], strides = [1, 1]} : vector<1x256xf32> to vector<1x16xf32>
    %689 = vector.extract_strided_slice %684 {offsets = [0, 64], sizes = [1, 16], strides = [1, 1]} : vector<1x256xf32> to vector<1x16xf32>
    %690 = vector.extract_strided_slice %684 {offsets = [0, 80], sizes = [1, 16], strides = [1, 1]} : vector<1x256xf32> to vector<1x16xf32>
    %691 = vector.extract_strided_slice %684 {offsets = [0, 96], sizes = [1, 16], strides = [1, 1]} : vector<1x256xf32> to vector<1x16xf32>
    %692 = vector.extract_strided_slice %684 {offsets = [0, 112], sizes = [1, 16], strides = [1, 1]} : vector<1x256xf32> to vector<1x16xf32>
    %693 = vector.extract_strided_slice %684 {offsets = [0, 128], sizes = [1, 16], strides = [1, 1]} : vector<1x256xf32> to vector<1x16xf32>
    %694 = vector.extract_strided_slice %684 {offsets = [0, 144], sizes = [1, 16], strides = [1, 1]} : vector<1x256xf32> to vector<1x16xf32>
    %695 = vector.extract_strided_slice %684 {offsets = [0, 160], sizes = [1, 16], strides = [1, 1]} : vector<1x256xf32> to vector<1x16xf32>
    %696 = vector.extract_strided_slice %684 {offsets = [0, 176], sizes = [1, 16], strides = [1, 1]} : vector<1x256xf32> to vector<1x16xf32>
    %697 = vector.extract_strided_slice %684 {offsets = [0, 192], sizes = [1, 16], strides = [1, 1]} : vector<1x256xf32> to vector<1x16xf32>
    %698 = vector.extract_strided_slice %684 {offsets = [0, 208], sizes = [1, 16], strides = [1, 1]} : vector<1x256xf32> to vector<1x16xf32>
    %699 = vector.extract_strided_slice %684 {offsets = [0, 224], sizes = [1, 16], strides = [1, 1]} : vector<1x256xf32> to vector<1x16xf32>
    %700 = vector.extract_strided_slice %684 {offsets = [0, 240], sizes = [1, 16], strides = [1, 1]} : vector<1x256xf32> to vector<1x16xf32>
    %701 = tpu.concatenate %685, %686, %687, %688, %689, %690, %691, %692, %693, %694, %695, %696, %697, %698, %699, %700 in 0 : vector<1x16xf32>, vector<1x16xf32>, vector<1x16xf32>, vector<1x16xf32>, vector<1x16xf32>, vector<1x16xf32>, vector<1x16xf32>, vector<1x16xf32>, vector<1x16xf32>, vector<1x16xf32>, vector<1x16xf32>, vector<1x16xf32>, vector<1x16xf32>, vector<1x16xf32>, vector<1x16xf32>, vector<1x16xf32> -> vector<16x16xf32>
    %cst_293 = arith.constant dense<0.000000e+00> : vector<16x256xf32>
    %702 = tpu.matmul %701, %444, %cst_293 {dimension_numbers = #tpu.dot_dimension_numbers<[1], [0], [0], [1], [0, 0, 1, 1], [], []>} : vector<16x16xf32>, vector<16x256xf32>, vector<16x256xf32> -> vector<16x256xf32>
    %703 = arith.mulf %459, %702 : vector<16x256xf32>
    %cst_294 = arith.constant dense<0.000000e+00> : vector<256xf32>
    %704 = vector.multi_reduction <add>, %703, %cst_294 [0] : vector<16x256xf32> to vector<256xf32>
    %705 = vector.shape_cast %704 : vector<256xf32> to vector<1x256xf32>
    %cst_295 = arith.constant 2.000000e+01 : f32
    %706 = vector.broadcast %cst_295 : f32 to vector<1x256xf32>
    %707 = arith.mulf %706, %389 : vector<1x256xf32>
    %708 = arith.addf %705, %707 : vector<1x256xf32>
    %cst_296 = arith.constant 1.000000e+01 : f32
    %709 = vector.broadcast %cst_296 : f32 to vector<1x256xf32>
    %710 = arith.subf %708, %709 : vector<1x256xf32>
    %711 = arith.addf %710, %684 : vector<1x256xf32>
    %712 = vector.extract_strided_slice %532 {offsets = [1, 0], sizes = [1, 256], strides = [1, 1]} : vector<3x256xf32> to vector<1x256xf32>
    %c18 = arith.constant 18 : index
    %c0_297 = arith.constant 0 : index
    %713 = vector.load %arg9[%c18, %c0_297] : memref<54x1xf32, #tpu.memory_space<vmem>>, vector<1x1xf32>
    %c17_i32_298 = arith.constant 17 : i32
    %714 = tpu.dynamic_rotate %711 by %c17_i32_298 dim 1 : vector<1x256xf32>, i32 -> vector<1x256xf32>
    %cst_299 = arith.constant 0.000000e+00 : f32
    %715 = vector.broadcast %cst_299 : f32 to vector<1x256xf32>
    %716 = arith.select %20, %714, %715 : vector<1x256xi1>, vector<1x256xf32>
    %717 = vector.broadcast %713 : vector<1x1xf32> to vector<1x256xf32>
    %718 = arith.mulf %717, %716 : vector<1x256xf32>
    %c19 = arith.constant 19 : index
    %c0_300 = arith.constant 0 : index
    %719 = vector.load %arg9[%c19, %c0_300] : memref<54x1xf32, #tpu.memory_space<vmem>>, vector<1x1xf32>
    %c17_i32_301 = arith.constant 17 : i32
    %720 = tpu.dynamic_rotate %712 by %c17_i32_301 dim 1 : vector<1x256xf32>, i32 -> vector<1x256xf32>
    %cst_302 = arith.constant 0.000000e+00 : f32
    %721 = vector.broadcast %cst_302 : f32 to vector<1x256xf32>
    %722 = arith.select %20, %720, %721 : vector<1x256xi1>, vector<1x256xf32>
    %723 = vector.broadcast %719 : vector<1x1xf32> to vector<1x256xf32>
    %724 = arith.mulf %723, %722 : vector<1x256xf32>
    %725 = arith.addf %718, %724 : vector<1x256xf32>
    %c20 = arith.constant 20 : index
    %c0_303 = arith.constant 0 : index
    %726 = vector.load %arg9[%c20, %c0_303] : memref<54x1xf32, #tpu.memory_space<vmem>>, vector<1x1xf32>
    %c16_i32_304 = arith.constant 16 : i32
    %727 = tpu.dynamic_rotate %711 by %c16_i32_304 dim 1 : vector<1x256xf32>, i32 -> vector<1x256xf32>
    %cst_305 = arith.constant 0.000000e+00 : f32
    %728 = vector.broadcast %cst_305 : f32 to vector<1x256xf32>
    %729 = arith.select %39, %727, %728 : vector<1x256xi1>, vector<1x256xf32>
    %730 = vector.broadcast %726 : vector<1x1xf32> to vector<1x256xf32>
    %731 = arith.mulf %730, %729 : vector<1x256xf32>
    %c21 = arith.constant 21 : index
    %c0_306 = arith.constant 0 : index
    %732 = vector.load %arg9[%c21, %c0_306] : memref<54x1xf32, #tpu.memory_space<vmem>>, vector<1x1xf32>
    %c16_i32_307 = arith.constant 16 : i32
    %733 = tpu.dynamic_rotate %712 by %c16_i32_307 dim 1 : vector<1x256xf32>, i32 -> vector<1x256xf32>
    %cst_308 = arith.constant 0.000000e+00 : f32
    %734 = vector.broadcast %cst_308 : f32 to vector<1x256xf32>
    %735 = arith.select %39, %733, %734 : vector<1x256xi1>, vector<1x256xf32>
    %736 = vector.broadcast %732 : vector<1x1xf32> to vector<1x256xf32>
    %737 = arith.mulf %736, %735 : vector<1x256xf32>
    %738 = arith.addf %731, %737 : vector<1x256xf32>
    %739 = arith.addf %725, %738 : vector<1x256xf32>
    %c22 = arith.constant 22 : index
    %c0_309 = arith.constant 0 : index
    %740 = vector.load %arg9[%c22, %c0_309] : memref<54x1xf32, #tpu.memory_space<vmem>>, vector<1x1xf32>
    %c15_i32_310 = arith.constant 15 : i32
    %741 = tpu.dynamic_rotate %711 by %c15_i32_310 dim 1 : vector<1x256xf32>, i32 -> vector<1x256xf32>
    %cst_311 = arith.constant 0.000000e+00 : f32
    %742 = vector.broadcast %cst_311 : f32 to vector<1x256xf32>
    %743 = arith.select %58, %741, %742 : vector<1x256xi1>, vector<1x256xf32>
    %744 = vector.broadcast %740 : vector<1x1xf32> to vector<1x256xf32>
    %745 = arith.mulf %744, %743 : vector<1x256xf32>
    %c23 = arith.constant 23 : index
    %c0_312 = arith.constant 0 : index
    %746 = vector.load %arg9[%c23, %c0_312] : memref<54x1xf32, #tpu.memory_space<vmem>>, vector<1x1xf32>
    %c15_i32_313 = arith.constant 15 : i32
    %747 = tpu.dynamic_rotate %712 by %c15_i32_313 dim 1 : vector<1x256xf32>, i32 -> vector<1x256xf32>
    %cst_314 = arith.constant 0.000000e+00 : f32
    %748 = vector.broadcast %cst_314 : f32 to vector<1x256xf32>
    %749 = arith.select %58, %747, %748 : vector<1x256xi1>, vector<1x256xf32>
    %750 = vector.broadcast %746 : vector<1x1xf32> to vector<1x256xf32>
    %751 = arith.mulf %750, %749 : vector<1x256xf32>
    %752 = arith.addf %745, %751 : vector<1x256xf32>
    %753 = arith.addf %739, %752 : vector<1x256xf32>
    %c24 = arith.constant 24 : index
    %c0_315 = arith.constant 0 : index
    %754 = vector.load %arg9[%c24, %c0_315] : memref<54x1xf32, #tpu.memory_space<vmem>>, vector<1x1xf32>
    %c1_i32_316 = arith.constant 1 : i32
    %755 = tpu.dynamic_rotate %711 by %c1_i32_316 dim 1 : vector<1x256xf32>, i32 -> vector<1x256xf32>
    %cst_317 = arith.constant 0.000000e+00 : f32
    %756 = vector.broadcast %cst_317 : f32 to vector<1x256xf32>
    %757 = arith.select %77, %755, %756 : vector<1x256xi1>, vector<1x256xf32>
    %758 = vector.broadcast %754 : vector<1x1xf32> to vector<1x256xf32>
    %759 = arith.mulf %758, %757 : vector<1x256xf32>
    %c25 = arith.constant 25 : index
    %c0_318 = arith.constant 0 : index
    %760 = vector.load %arg9[%c25, %c0_318] : memref<54x1xf32, #tpu.memory_space<vmem>>, vector<1x1xf32>
    %c1_i32_319 = arith.constant 1 : i32
    %761 = tpu.dynamic_rotate %712 by %c1_i32_319 dim 1 : vector<1x256xf32>, i32 -> vector<1x256xf32>
    %cst_320 = arith.constant 0.000000e+00 : f32
    %762 = vector.broadcast %cst_320 : f32 to vector<1x256xf32>
    %763 = arith.select %77, %761, %762 : vector<1x256xi1>, vector<1x256xf32>
    %764 = vector.broadcast %760 : vector<1x1xf32> to vector<1x256xf32>
    %765 = arith.mulf %764, %763 : vector<1x256xf32>
    %766 = arith.addf %759, %765 : vector<1x256xf32>
    %767 = arith.addf %753, %766 : vector<1x256xf32>
    %c26 = arith.constant 26 : index
    %c0_321 = arith.constant 0 : index
    %768 = vector.load %arg9[%c26, %c0_321] : memref<54x1xf32, #tpu.memory_space<vmem>>, vector<1x1xf32>
    %769 = vector.broadcast %768 : vector<1x1xf32> to vector<1x256xf32>
    %770 = arith.mulf %769, %711 : vector<1x256xf32>
    %c27 = arith.constant 27 : index
    %c0_322 = arith.constant 0 : index
    %771 = vector.load %arg9[%c27, %c0_322] : memref<54x1xf32, #tpu.memory_space<vmem>>, vector<1x1xf32>
    %772 = vector.broadcast %771 : vector<1x1xf32> to vector<1x256xf32>
    %773 = arith.mulf %772, %712 : vector<1x256xf32>
    %774 = arith.addf %770, %773 : vector<1x256xf32>
    %775 = arith.addf %767, %774 : vector<1x256xf32>
    %c28 = arith.constant 28 : index
    %c0_323 = arith.constant 0 : index
    %776 = vector.load %arg9[%c28, %c0_323] : memref<54x1xf32, #tpu.memory_space<vmem>>, vector<1x1xf32>
    %c255_i32_324 = arith.constant 255 : i32
    %777 = tpu.dynamic_rotate %711 by %c255_i32_324 dim 1 : vector<1x256xf32>, i32 -> vector<1x256xf32>
    %cst_325 = arith.constant 0.000000e+00 : f32
    %778 = vector.broadcast %cst_325 : f32 to vector<1x256xf32>
    %779 = arith.select %96, %777, %778 : vector<1x256xi1>, vector<1x256xf32>
    %780 = vector.broadcast %776 : vector<1x1xf32> to vector<1x256xf32>
    %781 = arith.mulf %780, %779 : vector<1x256xf32>
    %c29 = arith.constant 29 : index
    %c0_326 = arith.constant 0 : index
    %782 = vector.load %arg9[%c29, %c0_326] : memref<54x1xf32, #tpu.memory_space<vmem>>, vector<1x1xf32>
    %c255_i32_327 = arith.constant 255 : i32
    %783 = tpu.dynamic_rotate %712 by %c255_i32_327 dim 1 : vector<1x256xf32>, i32 -> vector<1x256xf32>
    %cst_328 = arith.constant 0.000000e+00 : f32
    %784 = vector.broadcast %cst_328 : f32 to vector<1x256xf32>
    %785 = arith.select %96, %783, %784 : vector<1x256xi1>, vector<1x256xf32>
    %786 = vector.broadcast %782 : vector<1x1xf32> to vector<1x256xf32>
    %787 = arith.mulf %786, %785 : vector<1x256xf32>
    %788 = arith.addf %781, %787 : vector<1x256xf32>
    %789 = arith.addf %775, %788 : vector<1x256xf32>
    %c30 = arith.constant 30 : index
    %c0_329 = arith.constant 0 : index
    %790 = vector.load %arg9[%c30, %c0_329] : memref<54x1xf32, #tpu.memory_space<vmem>>, vector<1x1xf32>
    %c241_i32_330 = arith.constant 241 : i32
    %791 = tpu.dynamic_rotate %711 by %c241_i32_330 dim 1 : vector<1x256xf32>, i32 -> vector<1x256xf32>
    %cst_331 = arith.constant 0.000000e+00 : f32
    %792 = vector.broadcast %cst_331 : f32 to vector<1x256xf32>
    %793 = arith.select %115, %791, %792 : vector<1x256xi1>, vector<1x256xf32>
    %794 = vector.broadcast %790 : vector<1x1xf32> to vector<1x256xf32>
    %795 = arith.mulf %794, %793 : vector<1x256xf32>
    %c31 = arith.constant 31 : index
    %c0_332 = arith.constant 0 : index
    %796 = vector.load %arg9[%c31, %c0_332] : memref<54x1xf32, #tpu.memory_space<vmem>>, vector<1x1xf32>
    %c241_i32_333 = arith.constant 241 : i32
    %797 = tpu.dynamic_rotate %712 by %c241_i32_333 dim 1 : vector<1x256xf32>, i32 -> vector<1x256xf32>
    %cst_334 = arith.constant 0.000000e+00 : f32
    %798 = vector.broadcast %cst_334 : f32 to vector<1x256xf32>
    %799 = arith.select %115, %797, %798 : vector<1x256xi1>, vector<1x256xf32>
    %800 = vector.broadcast %796 : vector<1x1xf32> to vector<1x256xf32>
    %801 = arith.mulf %800, %799 : vector<1x256xf32>
    %802 = arith.addf %795, %801 : vector<1x256xf32>
    %803 = arith.addf %789, %802 : vector<1x256xf32>
    %c32 = arith.constant 32 : index
    %c0_335 = arith.constant 0 : index
    %804 = vector.load %arg9[%c32, %c0_335] : memref<54x1xf32, #tpu.memory_space<vmem>>, vector<1x1xf32>
    %c240_i32_336 = arith.constant 240 : i32
    %805 = tpu.dynamic_rotate %711 by %c240_i32_336 dim 1 : vector<1x256xf32>, i32 -> vector<1x256xf32>
    %cst_337 = arith.constant 0.000000e+00 : f32
    %806 = vector.broadcast %cst_337 : f32 to vector<1x256xf32>
    %807 = arith.select %134, %805, %806 : vector<1x256xi1>, vector<1x256xf32>
    %808 = vector.broadcast %804 : vector<1x1xf32> to vector<1x256xf32>
    %809 = arith.mulf %808, %807 : vector<1x256xf32>
    %c33 = arith.constant 33 : index
    %c0_338 = arith.constant 0 : index
    %810 = vector.load %arg9[%c33, %c0_338] : memref<54x1xf32, #tpu.memory_space<vmem>>, vector<1x1xf32>
    %c240_i32_339 = arith.constant 240 : i32
    %811 = tpu.dynamic_rotate %712 by %c240_i32_339 dim 1 : vector<1x256xf32>, i32 -> vector<1x256xf32>
    %cst_340 = arith.constant 0.000000e+00 : f32
    %812 = vector.broadcast %cst_340 : f32 to vector<1x256xf32>
    %813 = arith.select %134, %811, %812 : vector<1x256xi1>, vector<1x256xf32>
    %814 = vector.broadcast %810 : vector<1x1xf32> to vector<1x256xf32>
    %815 = arith.mulf %814, %813 : vector<1x256xf32>
    %816 = arith.addf %809, %815 : vector<1x256xf32>
    %817 = arith.addf %803, %816 : vector<1x256xf32>
    %c34 = arith.constant 34 : index
    %c0_341 = arith.constant 0 : index
    %818 = vector.load %arg9[%c34, %c0_341] : memref<54x1xf32, #tpu.memory_space<vmem>>, vector<1x1xf32>
    %c239_i32_342 = arith.constant 239 : i32
    %819 = tpu.dynamic_rotate %711 by %c239_i32_342 dim 1 : vector<1x256xf32>, i32 -> vector<1x256xf32>
    %cst_343 = arith.constant 0.000000e+00 : f32
    %820 = vector.broadcast %cst_343 : f32 to vector<1x256xf32>
    %821 = arith.select %153, %819, %820 : vector<1x256xi1>, vector<1x256xf32>
    %822 = vector.broadcast %818 : vector<1x1xf32> to vector<1x256xf32>
    %823 = arith.mulf %822, %821 : vector<1x256xf32>
    %c35 = arith.constant 35 : index
    %c0_344 = arith.constant 0 : index
    %824 = vector.load %arg9[%c35, %c0_344] : memref<54x1xf32, #tpu.memory_space<vmem>>, vector<1x1xf32>
    %c239_i32_345 = arith.constant 239 : i32
    %825 = tpu.dynamic_rotate %712 by %c239_i32_345 dim 1 : vector<1x256xf32>, i32 -> vector<1x256xf32>
    %cst_346 = arith.constant 0.000000e+00 : f32
    %826 = vector.broadcast %cst_346 : f32 to vector<1x256xf32>
    %827 = arith.select %153, %825, %826 : vector<1x256xi1>, vector<1x256xf32>
    %828 = vector.broadcast %824 : vector<1x1xf32> to vector<1x256xf32>
    %829 = arith.mulf %828, %827 : vector<1x256xf32>
    %830 = arith.addf %823, %829 : vector<1x256xf32>
    %831 = arith.addf %817, %830 : vector<1x256xf32>
    %c1_347 = arith.constant 1 : index
    %c0_348 = arith.constant 0 : index
    %832 = vector.load %arg10[%c1_347, %c0_348] : memref<3x1xf32, #tpu.memory_space<vmem>>, vector<1x1xf32>
    %833 = vector.broadcast %832 : vector<1x1xf32> to vector<1x256xf32>
    %834 = arith.addf %831, %833 : vector<1x256xf32>
    %835 = vector.extract_strided_slice %834 {offsets = [0, 0], sizes = [1, 16], strides = [1, 1]} : vector<1x256xf32> to vector<1x16xf32>
    %836 = vector.extract_strided_slice %834 {offsets = [0, 16], sizes = [1, 16], strides = [1, 1]} : vector<1x256xf32> to vector<1x16xf32>
    %837 = vector.extract_strided_slice %834 {offsets = [0, 32], sizes = [1, 16], strides = [1, 1]} : vector<1x256xf32> to vector<1x16xf32>
    %838 = vector.extract_strided_slice %834 {offsets = [0, 48], sizes = [1, 16], strides = [1, 1]} : vector<1x256xf32> to vector<1x16xf32>
    %839 = vector.extract_strided_slice %834 {offsets = [0, 64], sizes = [1, 16], strides = [1, 1]} : vector<1x256xf32> to vector<1x16xf32>
    %840 = vector.extract_strided_slice %834 {offsets = [0, 80], sizes = [1, 16], strides = [1, 1]} : vector<1x256xf32> to vector<1x16xf32>
    %841 = vector.extract_strided_slice %834 {offsets = [0, 96], sizes = [1, 16], strides = [1, 1]} : vector<1x256xf32> to vector<1x16xf32>
    %842 = vector.extract_strided_slice %834 {offsets = [0, 112], sizes = [1, 16], strides = [1, 1]} : vector<1x256xf32> to vector<1x16xf32>
    %843 = vector.extract_strided_slice %834 {offsets = [0, 128], sizes = [1, 16], strides = [1, 1]} : vector<1x256xf32> to vector<1x16xf32>
    %844 = vector.extract_strided_slice %834 {offsets = [0, 144], sizes = [1, 16], strides = [1, 1]} : vector<1x256xf32> to vector<1x16xf32>
    %845 = vector.extract_strided_slice %834 {offsets = [0, 160], sizes = [1, 16], strides = [1, 1]} : vector<1x256xf32> to vector<1x16xf32>
    %846 = vector.extract_strided_slice %834 {offsets = [0, 176], sizes = [1, 16], strides = [1, 1]} : vector<1x256xf32> to vector<1x16xf32>
    %847 = vector.extract_strided_slice %834 {offsets = [0, 192], sizes = [1, 16], strides = [1, 1]} : vector<1x256xf32> to vector<1x16xf32>
    %848 = vector.extract_strided_slice %834 {offsets = [0, 208], sizes = [1, 16], strides = [1, 1]} : vector<1x256xf32> to vector<1x16xf32>
    %849 = vector.extract_strided_slice %834 {offsets = [0, 224], sizes = [1, 16], strides = [1, 1]} : vector<1x256xf32> to vector<1x16xf32>
    %850 = vector.extract_strided_slice %834 {offsets = [0, 240], sizes = [1, 16], strides = [1, 1]} : vector<1x256xf32> to vector<1x16xf32>
    %851 = tpu.concatenate %835, %836, %837, %838, %839, %840, %841, %842, %843, %844, %845, %846, %847, %848, %849, %850 in 0 : vector<1x16xf32>, vector<1x16xf32>, vector<1x16xf32>, vector<1x16xf32>, vector<1x16xf32>, vector<1x16xf32>, vector<1x16xf32>, vector<1x16xf32>, vector<1x16xf32>, vector<1x16xf32>, vector<1x16xf32>, vector<1x16xf32>, vector<1x16xf32>, vector<1x16xf32>, vector<1x16xf32>, vector<1x16xf32> -> vector<16x16xf32>
    %cst_349 = arith.constant dense<0.000000e+00> : vector<16x256xf32>
    %852 = tpu.matmul %851, %515, %cst_349 {dimension_numbers = #tpu.dot_dimension_numbers<[1], [0], [0], [1], [0, 0, 1, 1], [], []>} : vector<16x16xf32>, vector<16x256xf32>, vector<16x256xf32> -> vector<16x256xf32>
    %853 = arith.mulf %530, %852 : vector<16x256xf32>
    %cst_350 = arith.constant dense<0.000000e+00> : vector<256xf32>
    %854 = vector.multi_reduction <add>, %853, %cst_350 [0] : vector<16x256xf32> to vector<256xf32>
    %855 = vector.shape_cast %854 : vector<256xf32> to vector<1x256xf32>
    %cst_351 = arith.constant 2.000000e+01 : f32
    %856 = vector.broadcast %cst_351 : f32 to vector<1x256xf32>
    %857 = arith.mulf %856, %460 : vector<1x256xf32>
    %858 = arith.addf %855, %857 : vector<1x256xf32>
    %cst_352 = arith.constant 1.000000e+01 : f32
    %859 = vector.broadcast %cst_352 : f32 to vector<1x256xf32>
    %860 = arith.subf %858, %859 : vector<1x256xf32>
    %861 = arith.addf %860, %834 : vector<1x256xf32>
    %862 = vector.extract_strided_slice %532 {offsets = [2, 0], sizes = [1, 256], strides = [1, 1]} : vector<3x256xf32> to vector<1x256xf32>
    %c36 = arith.constant 36 : index
    %c0_353 = arith.constant 0 : index
    %863 = vector.load %arg9[%c36, %c0_353] : memref<54x1xf32, #tpu.memory_space<vmem>>, vector<1x1xf32>
    %c17_i32_354 = arith.constant 17 : i32
    %864 = tpu.dynamic_rotate %861 by %c17_i32_354 dim 1 : vector<1x256xf32>, i32 -> vector<1x256xf32>
    %cst_355 = arith.constant 0.000000e+00 : f32
    %865 = vector.broadcast %cst_355 : f32 to vector<1x256xf32>
    %866 = arith.select %20, %864, %865 : vector<1x256xi1>, vector<1x256xf32>
    %867 = vector.broadcast %863 : vector<1x1xf32> to vector<1x256xf32>
    %868 = arith.mulf %867, %866 : vector<1x256xf32>
    %c37 = arith.constant 37 : index
    %c0_356 = arith.constant 0 : index
    %869 = vector.load %arg9[%c37, %c0_356] : memref<54x1xf32, #tpu.memory_space<vmem>>, vector<1x1xf32>
    %c17_i32_357 = arith.constant 17 : i32
    %870 = tpu.dynamic_rotate %862 by %c17_i32_357 dim 1 : vector<1x256xf32>, i32 -> vector<1x256xf32>
    %cst_358 = arith.constant 0.000000e+00 : f32
    %871 = vector.broadcast %cst_358 : f32 to vector<1x256xf32>
    %872 = arith.select %20, %870, %871 : vector<1x256xi1>, vector<1x256xf32>
    %873 = vector.broadcast %869 : vector<1x1xf32> to vector<1x256xf32>
    %874 = arith.mulf %873, %872 : vector<1x256xf32>
    %875 = arith.addf %868, %874 : vector<1x256xf32>
    %c38 = arith.constant 38 : index
    %c0_359 = arith.constant 0 : index
    %876 = vector.load %arg9[%c38, %c0_359] : memref<54x1xf32, #tpu.memory_space<vmem>>, vector<1x1xf32>
    %c16_i32_360 = arith.constant 16 : i32
    %877 = tpu.dynamic_rotate %861 by %c16_i32_360 dim 1 : vector<1x256xf32>, i32 -> vector<1x256xf32>
    %cst_361 = arith.constant 0.000000e+00 : f32
    %878 = vector.broadcast %cst_361 : f32 to vector<1x256xf32>
    %879 = arith.select %39, %877, %878 : vector<1x256xi1>, vector<1x256xf32>
    %880 = vector.broadcast %876 : vector<1x1xf32> to vector<1x256xf32>
    %881 = arith.mulf %880, %879 : vector<1x256xf32>
    %c39 = arith.constant 39 : index
    %c0_362 = arith.constant 0 : index
    %882 = vector.load %arg9[%c39, %c0_362] : memref<54x1xf32, #tpu.memory_space<vmem>>, vector<1x1xf32>
    %c16_i32_363 = arith.constant 16 : i32
    %883 = tpu.dynamic_rotate %862 by %c16_i32_363 dim 1 : vector<1x256xf32>, i32 -> vector<1x256xf32>
    %cst_364 = arith.constant 0.000000e+00 : f32
    %884 = vector.broadcast %cst_364 : f32 to vector<1x256xf32>
    %885 = arith.select %39, %883, %884 : vector<1x256xi1>, vector<1x256xf32>
    %886 = vector.broadcast %882 : vector<1x1xf32> to vector<1x256xf32>
    %887 = arith.mulf %886, %885 : vector<1x256xf32>
    %888 = arith.addf %881, %887 : vector<1x256xf32>
    %889 = arith.addf %875, %888 : vector<1x256xf32>
    %c40 = arith.constant 40 : index
    %c0_365 = arith.constant 0 : index
    %890 = vector.load %arg9[%c40, %c0_365] : memref<54x1xf32, #tpu.memory_space<vmem>>, vector<1x1xf32>
    %c15_i32_366 = arith.constant 15 : i32
    %891 = tpu.dynamic_rotate %861 by %c15_i32_366 dim 1 : vector<1x256xf32>, i32 -> vector<1x256xf32>
    %cst_367 = arith.constant 0.000000e+00 : f32
    %892 = vector.broadcast %cst_367 : f32 to vector<1x256xf32>
    %893 = arith.select %58, %891, %892 : vector<1x256xi1>, vector<1x256xf32>
    %894 = vector.broadcast %890 : vector<1x1xf32> to vector<1x256xf32>
    %895 = arith.mulf %894, %893 : vector<1x256xf32>
    %c41 = arith.constant 41 : index
    %c0_368 = arith.constant 0 : index
    %896 = vector.load %arg9[%c41, %c0_368] : memref<54x1xf32, #tpu.memory_space<vmem>>, vector<1x1xf32>
    %c15_i32_369 = arith.constant 15 : i32
    %897 = tpu.dynamic_rotate %862 by %c15_i32_369 dim 1 : vector<1x256xf32>, i32 -> vector<1x256xf32>
    %cst_370 = arith.constant 0.000000e+00 : f32
    %898 = vector.broadcast %cst_370 : f32 to vector<1x256xf32>
    %899 = arith.select %58, %897, %898 : vector<1x256xi1>, vector<1x256xf32>
    %900 = vector.broadcast %896 : vector<1x1xf32> to vector<1x256xf32>
    %901 = arith.mulf %900, %899 : vector<1x256xf32>
    %902 = arith.addf %895, %901 : vector<1x256xf32>
    %903 = arith.addf %889, %902 : vector<1x256xf32>
    %c42 = arith.constant 42 : index
    %c0_371 = arith.constant 0 : index
    %904 = vector.load %arg9[%c42, %c0_371] : memref<54x1xf32, #tpu.memory_space<vmem>>, vector<1x1xf32>
    %c1_i32_372 = arith.constant 1 : i32
    %905 = tpu.dynamic_rotate %861 by %c1_i32_372 dim 1 : vector<1x256xf32>, i32 -> vector<1x256xf32>
    %cst_373 = arith.constant 0.000000e+00 : f32
    %906 = vector.broadcast %cst_373 : f32 to vector<1x256xf32>
    %907 = arith.select %77, %905, %906 : vector<1x256xi1>, vector<1x256xf32>
    %908 = vector.broadcast %904 : vector<1x1xf32> to vector<1x256xf32>
    %909 = arith.mulf %908, %907 : vector<1x256xf32>
    %c43 = arith.constant 43 : index
    %c0_374 = arith.constant 0 : index
    %910 = vector.load %arg9[%c43, %c0_374] : memref<54x1xf32, #tpu.memory_space<vmem>>, vector<1x1xf32>
    %c1_i32_375 = arith.constant 1 : i32
    %911 = tpu.dynamic_rotate %862 by %c1_i32_375 dim 1 : vector<1x256xf32>, i32 -> vector<1x256xf32>
    %cst_376 = arith.constant 0.000000e+00 : f32
    %912 = vector.broadcast %cst_376 : f32 to vector<1x256xf32>
    %913 = arith.select %77, %911, %912 : vector<1x256xi1>, vector<1x256xf32>
    %914 = vector.broadcast %910 : vector<1x1xf32> to vector<1x256xf32>
    %915 = arith.mulf %914, %913 : vector<1x256xf32>
    %916 = arith.addf %909, %915 : vector<1x256xf32>
    %917 = arith.addf %903, %916 : vector<1x256xf32>
    %c44 = arith.constant 44 : index
    %c0_377 = arith.constant 0 : index
    %918 = vector.load %arg9[%c44, %c0_377] : memref<54x1xf32, #tpu.memory_space<vmem>>, vector<1x1xf32>
    %919 = vector.broadcast %918 : vector<1x1xf32> to vector<1x256xf32>
    %920 = arith.mulf %919, %861 : vector<1x256xf32>
    %c45 = arith.constant 45 : index
    %c0_378 = arith.constant 0 : index
    %921 = vector.load %arg9[%c45, %c0_378] : memref<54x1xf32, #tpu.memory_space<vmem>>, vector<1x1xf32>
    %922 = vector.broadcast %921 : vector<1x1xf32> to vector<1x256xf32>
    %923 = arith.mulf %922, %862 : vector<1x256xf32>
    %924 = arith.addf %920, %923 : vector<1x256xf32>
    %925 = arith.addf %917, %924 : vector<1x256xf32>
    %c46 = arith.constant 46 : index
    %c0_379 = arith.constant 0 : index
    %926 = vector.load %arg9[%c46, %c0_379] : memref<54x1xf32, #tpu.memory_space<vmem>>, vector<1x1xf32>
    %c255_i32_380 = arith.constant 255 : i32
    %927 = tpu.dynamic_rotate %861 by %c255_i32_380 dim 1 : vector<1x256xf32>, i32 -> vector<1x256xf32>
    %cst_381 = arith.constant 0.000000e+00 : f32
    %928 = vector.broadcast %cst_381 : f32 to vector<1x256xf32>
    %929 = arith.select %96, %927, %928 : vector<1x256xi1>, vector<1x256xf32>
    %930 = vector.broadcast %926 : vector<1x1xf32> to vector<1x256xf32>
    %931 = arith.mulf %930, %929 : vector<1x256xf32>
    %c47 = arith.constant 47 : index
    %c0_382 = arith.constant 0 : index
    %932 = vector.load %arg9[%c47, %c0_382] : memref<54x1xf32, #tpu.memory_space<vmem>>, vector<1x1xf32>
    %c255_i32_383 = arith.constant 255 : i32
    %933 = tpu.dynamic_rotate %862 by %c255_i32_383 dim 1 : vector<1x256xf32>, i32 -> vector<1x256xf32>
    %cst_384 = arith.constant 0.000000e+00 : f32
    %934 = vector.broadcast %cst_384 : f32 to vector<1x256xf32>
    %935 = arith.select %96, %933, %934 : vector<1x256xi1>, vector<1x256xf32>
    %936 = vector.broadcast %932 : vector<1x1xf32> to vector<1x256xf32>
    %937 = arith.mulf %936, %935 : vector<1x256xf32>
    %938 = arith.addf %931, %937 : vector<1x256xf32>
    %939 = arith.addf %925, %938 : vector<1x256xf32>
    %c48 = arith.constant 48 : index
    %c0_385 = arith.constant 0 : index
    %940 = vector.load %arg9[%c48, %c0_385] : memref<54x1xf32, #tpu.memory_space<vmem>>, vector<1x1xf32>
    %c241_i32_386 = arith.constant 241 : i32
    %941 = tpu.dynamic_rotate %861 by %c241_i32_386 dim 1 : vector<1x256xf32>, i32 -> vector<1x256xf32>
    %cst_387 = arith.constant 0.000000e+00 : f32
    %942 = vector.broadcast %cst_387 : f32 to vector<1x256xf32>
    %943 = arith.select %115, %941, %942 : vector<1x256xi1>, vector<1x256xf32>
    %944 = vector.broadcast %940 : vector<1x1xf32> to vector<1x256xf32>
    %945 = arith.mulf %944, %943 : vector<1x256xf32>
    %c49 = arith.constant 49 : index
    %c0_388 = arith.constant 0 : index
    %946 = vector.load %arg9[%c49, %c0_388] : memref<54x1xf32, #tpu.memory_space<vmem>>, vector<1x1xf32>
    %c241_i32_389 = arith.constant 241 : i32
    %947 = tpu.dynamic_rotate %862 by %c241_i32_389 dim 1 : vector<1x256xf32>, i32 -> vector<1x256xf32>
    %cst_390 = arith.constant 0.000000e+00 : f32
    %948 = vector.broadcast %cst_390 : f32 to vector<1x256xf32>
    %949 = arith.select %115, %947, %948 : vector<1x256xi1>, vector<1x256xf32>
    %950 = vector.broadcast %946 : vector<1x1xf32> to vector<1x256xf32>
    %951 = arith.mulf %950, %949 : vector<1x256xf32>
    %952 = arith.addf %945, %951 : vector<1x256xf32>
    %953 = arith.addf %939, %952 : vector<1x256xf32>
    %c50 = arith.constant 50 : index
    %c0_391 = arith.constant 0 : index
    %954 = vector.load %arg9[%c50, %c0_391] : memref<54x1xf32, #tpu.memory_space<vmem>>, vector<1x1xf32>
    %c240_i32_392 = arith.constant 240 : i32
    %955 = tpu.dynamic_rotate %861 by %c240_i32_392 dim 1 : vector<1x256xf32>, i32 -> vector<1x256xf32>
    %cst_393 = arith.constant 0.000000e+00 : f32
    %956 = vector.broadcast %cst_393 : f32 to vector<1x256xf32>
    %957 = arith.select %134, %955, %956 : vector<1x256xi1>, vector<1x256xf32>
    %958 = vector.broadcast %954 : vector<1x1xf32> to vector<1x256xf32>
    %959 = arith.mulf %958, %957 : vector<1x256xf32>
    %c51 = arith.constant 51 : index
    %c0_394 = arith.constant 0 : index
    %960 = vector.load %arg9[%c51, %c0_394] : memref<54x1xf32, #tpu.memory_space<vmem>>, vector<1x1xf32>
    %c240_i32_395 = arith.constant 240 : i32
    %961 = tpu.dynamic_rotate %862 by %c240_i32_395 dim 1 : vector<1x256xf32>, i32 -> vector<1x256xf32>
    %cst_396 = arith.constant 0.000000e+00 : f32
    %962 = vector.broadcast %cst_396 : f32 to vector<1x256xf32>
    %963 = arith.select %134, %961, %962 : vector<1x256xi1>, vector<1x256xf32>
    %964 = vector.broadcast %960 : vector<1x1xf32> to vector<1x256xf32>
    %965 = arith.mulf %964, %963 : vector<1x256xf32>
    %966 = arith.addf %959, %965 : vector<1x256xf32>
    %967 = arith.addf %953, %966 : vector<1x256xf32>
    %c52 = arith.constant 52 : index
    %c0_397 = arith.constant 0 : index
    %968 = vector.load %arg9[%c52, %c0_397] : memref<54x1xf32, #tpu.memory_space<vmem>>, vector<1x1xf32>
    %c239_i32_398 = arith.constant 239 : i32
    %969 = tpu.dynamic_rotate %861 by %c239_i32_398 dim 1 : vector<1x256xf32>, i32 -> vector<1x256xf32>
    %cst_399 = arith.constant 0.000000e+00 : f32
    %970 = vector.broadcast %cst_399 : f32 to vector<1x256xf32>
    %971 = arith.select %153, %969, %970 : vector<1x256xi1>, vector<1x256xf32>
    %972 = vector.broadcast %968 : vector<1x1xf32> to vector<1x256xf32>
    %973 = arith.mulf %972, %971 : vector<1x256xf32>
    %c53 = arith.constant 53 : index
    %c0_400 = arith.constant 0 : index
    %974 = vector.load %arg9[%c53, %c0_400] : memref<54x1xf32, #tpu.memory_space<vmem>>, vector<1x1xf32>
    %c239_i32_401 = arith.constant 239 : i32
    %975 = tpu.dynamic_rotate %862 by %c239_i32_401 dim 1 : vector<1x256xf32>, i32 -> vector<1x256xf32>
    %cst_402 = arith.constant 0.000000e+00 : f32
    %976 = vector.broadcast %cst_402 : f32 to vector<1x256xf32>
    %977 = arith.select %153, %975, %976 : vector<1x256xi1>, vector<1x256xf32>
    %978 = vector.broadcast %974 : vector<1x1xf32> to vector<1x256xf32>
    %979 = arith.mulf %978, %977 : vector<1x256xf32>
    %980 = arith.addf %973, %979 : vector<1x256xf32>
    %981 = arith.addf %967, %980 : vector<1x256xf32>
    %c2_403 = arith.constant 2 : index
    %c0_404 = arith.constant 0 : index
    %982 = vector.load %arg10[%c2_403, %c0_404] : memref<3x1xf32, #tpu.memory_space<vmem>>, vector<1x1xf32>
    %983 = vector.broadcast %982 : vector<1x1xf32> to vector<1x256xf32>
    %984 = arith.addf %981, %983 : vector<1x256xf32>
    %985 = tpu.concatenate %684, %834, %984 in 0 : vector<1x256xf32>, vector<1x256xf32>, vector<1x256xf32> -> vector<3x256xf32>
    %c0_405 = arith.constant 0 : index
    %c0_406 = arith.constant 0 : index
    %c0_407 = arith.constant 0 : index
    %986 = vector.load %arg11[%c0_405, %c0_406, %c0_407] : memref<9x3x3xf32, #tpu.memory_space<vmem>>, vector<1x3x3xf32>
    %987 = vector.shape_cast %986 : vector<1x3x3xf32> to vector<3x3xf32>
    %c17_i32_408 = arith.constant 17 : i32
    %988 = tpu.dynamic_rotate %985 by %c17_i32_408 dim 1 : vector<3x256xf32>, i32 -> vector<3x256xf32>
    %cst_409 = arith.constant 0.000000e+00 : f32
    %989 = vector.shape_cast %20 : vector<1x256xi1> to vector<1x256xi1>
    %990 = vector.broadcast %989 : vector<1x256xi1> to vector<3x256xi1>
    %991 = vector.broadcast %cst_409 : f32 to vector<3x256xf32>
    %992 = arith.select %990, %988, %991 : vector<3x256xi1>, vector<3x256xf32>
    %cst_410 = arith.constant dense<0.000000e+00> : vector<3x256xf32>
    %993 = tpu.matmul %987, %992, %cst_410 {dimension_numbers = #tpu.dot_dimension_numbers<[1], [0], [0], [1], [0, 0, 1, 1], [], []>} : vector<3x3xf32>, vector<3x256xf32>, vector<3x256xf32> -> vector<3x256xf32>
    %c1_411 = arith.constant 1 : index
    %c0_412 = arith.constant 0 : index
    %c0_413 = arith.constant 0 : index
    %994 = vector.load %arg11[%c1_411, %c0_412, %c0_413] : memref<9x3x3xf32, #tpu.memory_space<vmem>>, vector<1x3x3xf32>
    %995 = vector.shape_cast %994 : vector<1x3x3xf32> to vector<3x3xf32>
    %c16_i32_414 = arith.constant 16 : i32
    %996 = tpu.dynamic_rotate %985 by %c16_i32_414 dim 1 : vector<3x256xf32>, i32 -> vector<3x256xf32>
    %cst_415 = arith.constant 0.000000e+00 : f32
    %997 = vector.shape_cast %39 : vector<1x256xi1> to vector<1x256xi1>
    %998 = vector.broadcast %997 : vector<1x256xi1> to vector<3x256xi1>
    %999 = vector.broadcast %cst_415 : f32 to vector<3x256xf32>
    %1000 = arith.select %998, %996, %999 : vector<3x256xi1>, vector<3x256xf32>
    %cst_416 = arith.constant dense<0.000000e+00> : vector<3x256xf32>
    %1001 = tpu.matmul %995, %1000, %cst_416 {dimension_numbers = #tpu.dot_dimension_numbers<[1], [0], [0], [1], [0, 0, 1, 1], [], []>} : vector<3x3xf32>, vector<3x256xf32>, vector<3x256xf32> -> vector<3x256xf32>
    %1002 = arith.addf %993, %1001 : vector<3x256xf32>
    %c2_417 = arith.constant 2 : index
    %c0_418 = arith.constant 0 : index
    %c0_419 = arith.constant 0 : index
    %1003 = vector.load %arg11[%c2_417, %c0_418, %c0_419] : memref<9x3x3xf32, #tpu.memory_space<vmem>>, vector<1x3x3xf32>
    %1004 = vector.shape_cast %1003 : vector<1x3x3xf32> to vector<3x3xf32>
    %c15_i32_420 = arith.constant 15 : i32
    %1005 = tpu.dynamic_rotate %985 by %c15_i32_420 dim 1 : vector<3x256xf32>, i32 -> vector<3x256xf32>
    %cst_421 = arith.constant 0.000000e+00 : f32
    %1006 = vector.shape_cast %58 : vector<1x256xi1> to vector<1x256xi1>
    %1007 = vector.broadcast %1006 : vector<1x256xi1> to vector<3x256xi1>
    %1008 = vector.broadcast %cst_421 : f32 to vector<3x256xf32>
    %1009 = arith.select %1007, %1005, %1008 : vector<3x256xi1>, vector<3x256xf32>
    %cst_422 = arith.constant dense<0.000000e+00> : vector<3x256xf32>
    %1010 = tpu.matmul %1004, %1009, %cst_422 {dimension_numbers = #tpu.dot_dimension_numbers<[1], [0], [0], [1], [0, 0, 1, 1], [], []>} : vector<3x3xf32>, vector<3x256xf32>, vector<3x256xf32> -> vector<3x256xf32>
    %1011 = arith.addf %1002, %1010 : vector<3x256xf32>
    %c3_423 = arith.constant 3 : index
    %c0_424 = arith.constant 0 : index
    %c0_425 = arith.constant 0 : index
    %1012 = vector.load %arg11[%c3_423, %c0_424, %c0_425] : memref<9x3x3xf32, #tpu.memory_space<vmem>>, vector<1x3x3xf32>
    %1013 = vector.shape_cast %1012 : vector<1x3x3xf32> to vector<3x3xf32>
    %c1_i32_426 = arith.constant 1 : i32
    %1014 = tpu.dynamic_rotate %985 by %c1_i32_426 dim 1 : vector<3x256xf32>, i32 -> vector<3x256xf32>
    %cst_427 = arith.constant 0.000000e+00 : f32
    %1015 = vector.shape_cast %77 : vector<1x256xi1> to vector<1x256xi1>
    %1016 = vector.broadcast %1015 : vector<1x256xi1> to vector<3x256xi1>
    %1017 = vector.broadcast %cst_427 : f32 to vector<3x256xf32>
    %1018 = arith.select %1016, %1014, %1017 : vector<3x256xi1>, vector<3x256xf32>
    %cst_428 = arith.constant dense<0.000000e+00> : vector<3x256xf32>
    %1019 = tpu.matmul %1013, %1018, %cst_428 {dimension_numbers = #tpu.dot_dimension_numbers<[1], [0], [0], [1], [0, 0, 1, 1], [], []>} : vector<3x3xf32>, vector<3x256xf32>, vector<3x256xf32> -> vector<3x256xf32>
    %1020 = arith.addf %1011, %1019 : vector<3x256xf32>
    %c4_429 = arith.constant 4 : index
    %c0_430 = arith.constant 0 : index
    %c0_431 = arith.constant 0 : index
    %1021 = vector.load %arg11[%c4_429, %c0_430, %c0_431] : memref<9x3x3xf32, #tpu.memory_space<vmem>>, vector<1x3x3xf32>
    %1022 = vector.shape_cast %1021 : vector<1x3x3xf32> to vector<3x3xf32>
    %cst_432 = arith.constant dense<0.000000e+00> : vector<3x256xf32>
    %1023 = tpu.matmul %1022, %985, %cst_432 {dimension_numbers = #tpu.dot_dimension_numbers<[1], [0], [0], [1], [0, 0, 1, 1], [], []>} : vector<3x3xf32>, vector<3x256xf32>, vector<3x256xf32> -> vector<3x256xf32>
    %1024 = arith.addf %1020, %1023 : vector<3x256xf32>
    %c5_433 = arith.constant 5 : index
    %c0_434 = arith.constant 0 : index
    %c0_435 = arith.constant 0 : index
    %1025 = vector.load %arg11[%c5_433, %c0_434, %c0_435] : memref<9x3x3xf32, #tpu.memory_space<vmem>>, vector<1x3x3xf32>
    %1026 = vector.shape_cast %1025 : vector<1x3x3xf32> to vector<3x3xf32>
    %c255_i32_436 = arith.constant 255 : i32
    %1027 = tpu.dynamic_rotate %985 by %c255_i32_436 dim 1 : vector<3x256xf32>, i32 -> vector<3x256xf32>
    %cst_437 = arith.constant 0.000000e+00 : f32
    %1028 = vector.shape_cast %96 : vector<1x256xi1> to vector<1x256xi1>
    %1029 = vector.broadcast %1028 : vector<1x256xi1> to vector<3x256xi1>
    %1030 = vector.broadcast %cst_437 : f32 to vector<3x256xf32>
    %1031 = arith.select %1029, %1027, %1030 : vector<3x256xi1>, vector<3x256xf32>
    %cst_438 = arith.constant dense<0.000000e+00> : vector<3x256xf32>
    %1032 = tpu.matmul %1026, %1031, %cst_438 {dimension_numbers = #tpu.dot_dimension_numbers<[1], [0], [0], [1], [0, 0, 1, 1], [], []>} : vector<3x3xf32>, vector<3x256xf32>, vector<3x256xf32> -> vector<3x256xf32>
    %1033 = arith.addf %1024, %1032 : vector<3x256xf32>
    %c6_439 = arith.constant 6 : index
    %c0_440 = arith.constant 0 : index
    %c0_441 = arith.constant 0 : index
    %1034 = vector.load %arg11[%c6_439, %c0_440, %c0_441] : memref<9x3x3xf32, #tpu.memory_space<vmem>>, vector<1x3x3xf32>
    %1035 = vector.shape_cast %1034 : vector<1x3x3xf32> to vector<3x3xf32>
    %c241_i32_442 = arith.constant 241 : i32
    %1036 = tpu.dynamic_rotate %985 by %c241_i32_442 dim 1 : vector<3x256xf32>, i32 -> vector<3x256xf32>
    %cst_443 = arith.constant 0.000000e+00 : f32
    %1037 = vector.shape_cast %115 : vector<1x256xi1> to vector<1x256xi1>
    %1038 = vector.broadcast %1037 : vector<1x256xi1> to vector<3x256xi1>
    %1039 = vector.broadcast %cst_443 : f32 to vector<3x256xf32>
    %1040 = arith.select %1038, %1036, %1039 : vector<3x256xi1>, vector<3x256xf32>
    %cst_444 = arith.constant dense<0.000000e+00> : vector<3x256xf32>
    %1041 = tpu.matmul %1035, %1040, %cst_444 {dimension_numbers = #tpu.dot_dimension_numbers<[1], [0], [0], [1], [0, 0, 1, 1], [], []>} : vector<3x3xf32>, vector<3x256xf32>, vector<3x256xf32> -> vector<3x256xf32>
    %1042 = arith.addf %1033, %1041 : vector<3x256xf32>
    %c7_445 = arith.constant 7 : index
    %c0_446 = arith.constant 0 : index
    %c0_447 = arith.constant 0 : index
    %1043 = vector.load %arg11[%c7_445, %c0_446, %c0_447] : memref<9x3x3xf32, #tpu.memory_space<vmem>>, vector<1x3x3xf32>
    %1044 = vector.shape_cast %1043 : vector<1x3x3xf32> to vector<3x3xf32>
    %c240_i32_448 = arith.constant 240 : i32
    %1045 = tpu.dynamic_rotate %985 by %c240_i32_448 dim 1 : vector<3x256xf32>, i32 -> vector<3x256xf32>
    %cst_449 = arith.constant 0.000000e+00 : f32
    %1046 = vector.shape_cast %134 : vector<1x256xi1> to vector<1x256xi1>
    %1047 = vector.broadcast %1046 : vector<1x256xi1> to vector<3x256xi1>
    %1048 = vector.broadcast %cst_449 : f32 to vector<3x256xf32>
    %1049 = arith.select %1047, %1045, %1048 : vector<3x256xi1>, vector<3x256xf32>
    %cst_450 = arith.constant dense<0.000000e+00> : vector<3x256xf32>
    %1050 = tpu.matmul %1044, %1049, %cst_450 {dimension_numbers = #tpu.dot_dimension_numbers<[1], [0], [0], [1], [0, 0, 1, 1], [], []>} : vector<3x3xf32>, vector<3x256xf32>, vector<3x256xf32> -> vector<3x256xf32>
    %1051 = arith.addf %1042, %1050 : vector<3x256xf32>
    %c8_451 = arith.constant 8 : index
    %c0_452 = arith.constant 0 : index
    %c0_453 = arith.constant 0 : index
    %1052 = vector.load %arg11[%c8_451, %c0_452, %c0_453] : memref<9x3x3xf32, #tpu.memory_space<vmem>>, vector<1x3x3xf32>
    %1053 = vector.shape_cast %1052 : vector<1x3x3xf32> to vector<3x3xf32>
    %c239_i32_454 = arith.constant 239 : i32
    %1054 = tpu.dynamic_rotate %985 by %c239_i32_454 dim 1 : vector<3x256xf32>, i32 -> vector<3x256xf32>
    %cst_455 = arith.constant 0.000000e+00 : f32
    %1055 = vector.shape_cast %153 : vector<1x256xi1> to vector<1x256xi1>
    %1056 = vector.broadcast %1055 : vector<1x256xi1> to vector<3x256xi1>
    %1057 = vector.broadcast %cst_455 : f32 to vector<3x256xf32>
    %1058 = arith.select %1056, %1054, %1057 : vector<3x256xi1>, vector<3x256xf32>
    %cst_456 = arith.constant dense<0.000000e+00> : vector<3x256xf32>
    %1059 = tpu.matmul %1053, %1058, %cst_456 {dimension_numbers = #tpu.dot_dimension_numbers<[1], [0], [0], [1], [0, 0, 1, 1], [], []>} : vector<3x3xf32>, vector<3x256xf32>, vector<3x256xf32> -> vector<3x256xf32>
    %1060 = arith.addf %1051, %1059 : vector<3x256xf32>
    %c0_457 = arith.constant 0 : index
    %c0_458 = arith.constant 0 : index
    %1061 = vector.load %arg12[%c0_457, %c0_458] : memref<3x1xf32, #tpu.memory_space<vmem>>, vector<3x1xf32>
    %1062 = vector.broadcast %1061 : vector<3x1xf32> to vector<3x256xf32>
    %1063 = arith.addf %1060, %1062 : vector<3x256xf32>
    %cst_459 = arith.constant 0.000000e+00 : f32
    %1064 = vector.broadcast %cst_459 : f32 to vector<3x256xf32>
    %1065 = arith.maximumf %1063, %1064 : vector<3x256xf32>
    %c0_460 = arith.constant 0 : index
    %c0_461 = arith.constant 0 : index
    %c0_462 = arith.constant 0 : index
    %1066 = vector.load %arg13[%c0_460, %c0_461, %c0_462] : memref<9x3x3xf32, #tpu.memory_space<vmem>>, vector<1x3x3xf32>
    %1067 = vector.shape_cast %1066 : vector<1x3x3xf32> to vector<3x3xf32>
    %c17_i32_463 = arith.constant 17 : i32
    %1068 = tpu.dynamic_rotate %1065 by %c17_i32_463 dim 1 : vector<3x256xf32>, i32 -> vector<3x256xf32>
    %cst_464 = arith.constant 0.000000e+00 : f32
    %1069 = vector.shape_cast %20 : vector<1x256xi1> to vector<1x256xi1>
    %1070 = vector.broadcast %1069 : vector<1x256xi1> to vector<3x256xi1>
    %1071 = vector.broadcast %cst_464 : f32 to vector<3x256xf32>
    %1072 = arith.select %1070, %1068, %1071 : vector<3x256xi1>, vector<3x256xf32>
    %cst_465 = arith.constant dense<0.000000e+00> : vector<3x256xf32>
    %1073 = tpu.matmul %1067, %1072, %cst_465 {dimension_numbers = #tpu.dot_dimension_numbers<[1], [0], [0], [1], [0, 0, 1, 1], [], []>} : vector<3x3xf32>, vector<3x256xf32>, vector<3x256xf32> -> vector<3x256xf32>
    %c1_466 = arith.constant 1 : index
    %c0_467 = arith.constant 0 : index
    %c0_468 = arith.constant 0 : index
    %1074 = vector.load %arg13[%c1_466, %c0_467, %c0_468] : memref<9x3x3xf32, #tpu.memory_space<vmem>>, vector<1x3x3xf32>
    %1075 = vector.shape_cast %1074 : vector<1x3x3xf32> to vector<3x3xf32>
    %c16_i32_469 = arith.constant 16 : i32
    %1076 = tpu.dynamic_rotate %1065 by %c16_i32_469 dim 1 : vector<3x256xf32>, i32 -> vector<3x256xf32>
    %cst_470 = arith.constant 0.000000e+00 : f32
    %1077 = vector.shape_cast %39 : vector<1x256xi1> to vector<1x256xi1>
    %1078 = vector.broadcast %1077 : vector<1x256xi1> to vector<3x256xi1>
    %1079 = vector.broadcast %cst_470 : f32 to vector<3x256xf32>
    %1080 = arith.select %1078, %1076, %1079 : vector<3x256xi1>, vector<3x256xf32>
    %cst_471 = arith.constant dense<0.000000e+00> : vector<3x256xf32>
    %1081 = tpu.matmul %1075, %1080, %cst_471 {dimension_numbers = #tpu.dot_dimension_numbers<[1], [0], [0], [1], [0, 0, 1, 1], [], []>} : vector<3x3xf32>, vector<3x256xf32>, vector<3x256xf32> -> vector<3x256xf32>
    %1082 = arith.addf %1073, %1081 : vector<3x256xf32>
    %c2_472 = arith.constant 2 : index
    %c0_473 = arith.constant 0 : index
    %c0_474 = arith.constant 0 : index
    %1083 = vector.load %arg13[%c2_472, %c0_473, %c0_474] : memref<9x3x3xf32, #tpu.memory_space<vmem>>, vector<1x3x3xf32>
    %1084 = vector.shape_cast %1083 : vector<1x3x3xf32> to vector<3x3xf32>
    %c15_i32_475 = arith.constant 15 : i32
    %1085 = tpu.dynamic_rotate %1065 by %c15_i32_475 dim 1 : vector<3x256xf32>, i32 -> vector<3x256xf32>
    %cst_476 = arith.constant 0.000000e+00 : f32
    %1086 = vector.shape_cast %58 : vector<1x256xi1> to vector<1x256xi1>
    %1087 = vector.broadcast %1086 : vector<1x256xi1> to vector<3x256xi1>
    %1088 = vector.broadcast %cst_476 : f32 to vector<3x256xf32>
    %1089 = arith.select %1087, %1085, %1088 : vector<3x256xi1>, vector<3x256xf32>
    %cst_477 = arith.constant dense<0.000000e+00> : vector<3x256xf32>
    %1090 = tpu.matmul %1084, %1089, %cst_477 {dimension_numbers = #tpu.dot_dimension_numbers<[1], [0], [0], [1], [0, 0, 1, 1], [], []>} : vector<3x3xf32>, vector<3x256xf32>, vector<3x256xf32> -> vector<3x256xf32>
    %1091 = arith.addf %1082, %1090 : vector<3x256xf32>
    %c3_478 = arith.constant 3 : index
    %c0_479 = arith.constant 0 : index
    %c0_480 = arith.constant 0 : index
    %1092 = vector.load %arg13[%c3_478, %c0_479, %c0_480] : memref<9x3x3xf32, #tpu.memory_space<vmem>>, vector<1x3x3xf32>
    %1093 = vector.shape_cast %1092 : vector<1x3x3xf32> to vector<3x3xf32>
    %c1_i32_481 = arith.constant 1 : i32
    %1094 = tpu.dynamic_rotate %1065 by %c1_i32_481 dim 1 : vector<3x256xf32>, i32 -> vector<3x256xf32>
    %cst_482 = arith.constant 0.000000e+00 : f32
    %1095 = vector.shape_cast %77 : vector<1x256xi1> to vector<1x256xi1>
    %1096 = vector.broadcast %1095 : vector<1x256xi1> to vector<3x256xi1>
    %1097 = vector.broadcast %cst_482 : f32 to vector<3x256xf32>
    %1098 = arith.select %1096, %1094, %1097 : vector<3x256xi1>, vector<3x256xf32>
    %cst_483 = arith.constant dense<0.000000e+00> : vector<3x256xf32>
    %1099 = tpu.matmul %1093, %1098, %cst_483 {dimension_numbers = #tpu.dot_dimension_numbers<[1], [0], [0], [1], [0, 0, 1, 1], [], []>} : vector<3x3xf32>, vector<3x256xf32>, vector<3x256xf32> -> vector<3x256xf32>
    %1100 = arith.addf %1091, %1099 : vector<3x256xf32>
    %c4_484 = arith.constant 4 : index
    %c0_485 = arith.constant 0 : index
    %c0_486 = arith.constant 0 : index
    %1101 = vector.load %arg13[%c4_484, %c0_485, %c0_486] : memref<9x3x3xf32, #tpu.memory_space<vmem>>, vector<1x3x3xf32>
    %1102 = vector.shape_cast %1101 : vector<1x3x3xf32> to vector<3x3xf32>
    %cst_487 = arith.constant dense<0.000000e+00> : vector<3x256xf32>
    %1103 = tpu.matmul %1102, %1065, %cst_487 {dimension_numbers = #tpu.dot_dimension_numbers<[1], [0], [0], [1], [0, 0, 1, 1], [], []>} : vector<3x3xf32>, vector<3x256xf32>, vector<3x256xf32> -> vector<3x256xf32>
    %1104 = arith.addf %1100, %1103 : vector<3x256xf32>
    %c5_488 = arith.constant 5 : index
    %c0_489 = arith.constant 0 : index
    %c0_490 = arith.constant 0 : index
    %1105 = vector.load %arg13[%c5_488, %c0_489, %c0_490] : memref<9x3x3xf32, #tpu.memory_space<vmem>>, vector<1x3x3xf32>
    %1106 = vector.shape_cast %1105 : vector<1x3x3xf32> to vector<3x3xf32>
    %c255_i32_491 = arith.constant 255 : i32
    %1107 = tpu.dynamic_rotate %1065 by %c255_i32_491 dim 1 : vector<3x256xf32>, i32 -> vector<3x256xf32>
    %cst_492 = arith.constant 0.000000e+00 : f32
    %1108 = vector.shape_cast %96 : vector<1x256xi1> to vector<1x256xi1>
    %1109 = vector.broadcast %1108 : vector<1x256xi1> to vector<3x256xi1>
    %1110 = vector.broadcast %cst_492 : f32 to vector<3x256xf32>
    %1111 = arith.select %1109, %1107, %1110 : vector<3x256xi1>, vector<3x256xf32>
    %cst_493 = arith.constant dense<0.000000e+00> : vector<3x256xf32>
    %1112 = tpu.matmul %1106, %1111, %cst_493 {dimension_numbers = #tpu.dot_dimension_numbers<[1], [0], [0], [1], [0, 0, 1, 1], [], []>} : vector<3x3xf32>, vector<3x256xf32>, vector<3x256xf32> -> vector<3x256xf32>
    %1113 = arith.addf %1104, %1112 : vector<3x256xf32>
    %c6_494 = arith.constant 6 : index
    %c0_495 = arith.constant 0 : index
    %c0_496 = arith.constant 0 : index
    %1114 = vector.load %arg13[%c6_494, %c0_495, %c0_496] : memref<9x3x3xf32, #tpu.memory_space<vmem>>, vector<1x3x3xf32>
    %1115 = vector.shape_cast %1114 : vector<1x3x3xf32> to vector<3x3xf32>
    %c241_i32_497 = arith.constant 241 : i32
    %1116 = tpu.dynamic_rotate %1065 by %c241_i32_497 dim 1 : vector<3x256xf32>, i32 -> vector<3x256xf32>
    %cst_498 = arith.constant 0.000000e+00 : f32
    %1117 = vector.shape_cast %115 : vector<1x256xi1> to vector<1x256xi1>
    %1118 = vector.broadcast %1117 : vector<1x256xi1> to vector<3x256xi1>
    %1119 = vector.broadcast %cst_498 : f32 to vector<3x256xf32>
    %1120 = arith.select %1118, %1116, %1119 : vector<3x256xi1>, vector<3x256xf32>
    %cst_499 = arith.constant dense<0.000000e+00> : vector<3x256xf32>
    %1121 = tpu.matmul %1115, %1120, %cst_499 {dimension_numbers = #tpu.dot_dimension_numbers<[1], [0], [0], [1], [0, 0, 1, 1], [], []>} : vector<3x3xf32>, vector<3x256xf32>, vector<3x256xf32> -> vector<3x256xf32>
    %1122 = arith.addf %1113, %1121 : vector<3x256xf32>
    %c7_500 = arith.constant 7 : index
    %c0_501 = arith.constant 0 : index
    %c0_502 = arith.constant 0 : index
    %1123 = vector.load %arg13[%c7_500, %c0_501, %c0_502] : memref<9x3x3xf32, #tpu.memory_space<vmem>>, vector<1x3x3xf32>
    %1124 = vector.shape_cast %1123 : vector<1x3x3xf32> to vector<3x3xf32>
    %c240_i32_503 = arith.constant 240 : i32
    %1125 = tpu.dynamic_rotate %1065 by %c240_i32_503 dim 1 : vector<3x256xf32>, i32 -> vector<3x256xf32>
    %cst_504 = arith.constant 0.000000e+00 : f32
    %1126 = vector.shape_cast %134 : vector<1x256xi1> to vector<1x256xi1>
    %1127 = vector.broadcast %1126 : vector<1x256xi1> to vector<3x256xi1>
    %1128 = vector.broadcast %cst_504 : f32 to vector<3x256xf32>
    %1129 = arith.select %1127, %1125, %1128 : vector<3x256xi1>, vector<3x256xf32>
    %cst_505 = arith.constant dense<0.000000e+00> : vector<3x256xf32>
    %1130 = tpu.matmul %1124, %1129, %cst_505 {dimension_numbers = #tpu.dot_dimension_numbers<[1], [0], [0], [1], [0, 0, 1, 1], [], []>} : vector<3x3xf32>, vector<3x256xf32>, vector<3x256xf32> -> vector<3x256xf32>
    %1131 = arith.addf %1122, %1130 : vector<3x256xf32>
    %c8_506 = arith.constant 8 : index
    %c0_507 = arith.constant 0 : index
    %c0_508 = arith.constant 0 : index
    %1132 = vector.load %arg13[%c8_506, %c0_507, %c0_508] : memref<9x3x3xf32, #tpu.memory_space<vmem>>, vector<1x3x3xf32>
    %1133 = vector.shape_cast %1132 : vector<1x3x3xf32> to vector<3x3xf32>
    %c239_i32_509 = arith.constant 239 : i32
    %1134 = tpu.dynamic_rotate %1065 by %c239_i32_509 dim 1 : vector<3x256xf32>, i32 -> vector<3x256xf32>
    %cst_510 = arith.constant 0.000000e+00 : f32
    %1135 = vector.shape_cast %153 : vector<1x256xi1> to vector<1x256xi1>
    %1136 = vector.broadcast %1135 : vector<1x256xi1> to vector<3x256xi1>
    %1137 = vector.broadcast %cst_510 : f32 to vector<3x256xf32>
    %1138 = arith.select %1136, %1134, %1137 : vector<3x256xi1>, vector<3x256xf32>
    %cst_511 = arith.constant dense<0.000000e+00> : vector<3x256xf32>
    %1139 = tpu.matmul %1133, %1138, %cst_511 {dimension_numbers = #tpu.dot_dimension_numbers<[1], [0], [0], [1], [0, 0, 1, 1], [], []>} : vector<3x3xf32>, vector<3x256xf32>, vector<3x256xf32> -> vector<3x256xf32>
    %1140 = arith.addf %1131, %1139 : vector<3x256xf32>
    %c0_512 = arith.constant 0 : index
    %c0_513 = arith.constant 0 : index
    %1141 = vector.load %arg14[%c0_512, %c0_513] : memref<3x1xf32, #tpu.memory_space<vmem>>, vector<3x1xf32>
    %1142 = vector.broadcast %1141 : vector<3x1xf32> to vector<3x256xf32>
    %1143 = arith.addf %1140, %1142 : vector<3x256xf32>
    %c0_514 = arith.constant 0 : index
    %c0_515 = arith.constant 0 : index
    %c0_516 = arith.constant 0 : index
    %1144 = vector.load %arg15[%c0_514, %c0_515, %c0_516] : memref<9x32x3xf32, #tpu.memory_space<vmem>>, vector<1x32x3xf32>
    %1145 = vector.shape_cast %1144 : vector<1x32x3xf32> to vector<32x3xf32>
    %c17_i32_517 = arith.constant 17 : i32
    %1146 = tpu.dynamic_rotate %1143 by %c17_i32_517 dim 1 : vector<3x256xf32>, i32 -> vector<3x256xf32>
    %cst_518 = arith.constant 0.000000e+00 : f32
    %1147 = vector.shape_cast %20 : vector<1x256xi1> to vector<1x256xi1>
    %1148 = vector.broadcast %1147 : vector<1x256xi1> to vector<3x256xi1>
    %1149 = vector.broadcast %cst_518 : f32 to vector<3x256xf32>
    %1150 = arith.select %1148, %1146, %1149 : vector<3x256xi1>, vector<3x256xf32>
    %cst_519 = arith.constant dense<0.000000e+00> : vector<32x256xf32>
    %1151 = tpu.matmul %1145, %1150, %cst_519 {dimension_numbers = #tpu.dot_dimension_numbers<[1], [0], [0], [1], [0, 0, 1, 1], [], []>} : vector<32x3xf32>, vector<3x256xf32>, vector<32x256xf32> -> vector<32x256xf32>
    %c1_520 = arith.constant 1 : index
    %c0_521 = arith.constant 0 : index
    %c0_522 = arith.constant 0 : index
    %1152 = vector.load %arg15[%c1_520, %c0_521, %c0_522] : memref<9x32x3xf32, #tpu.memory_space<vmem>>, vector<1x32x3xf32>
    %1153 = vector.shape_cast %1152 : vector<1x32x3xf32> to vector<32x3xf32>
    %c16_i32_523 = arith.constant 16 : i32
    %1154 = tpu.dynamic_rotate %1143 by %c16_i32_523 dim 1 : vector<3x256xf32>, i32 -> vector<3x256xf32>
    %cst_524 = arith.constant 0.000000e+00 : f32
    %1155 = vector.shape_cast %39 : vector<1x256xi1> to vector<1x256xi1>
    %1156 = vector.broadcast %1155 : vector<1x256xi1> to vector<3x256xi1>
    %1157 = vector.broadcast %cst_524 : f32 to vector<3x256xf32>
    %1158 = arith.select %1156, %1154, %1157 : vector<3x256xi1>, vector<3x256xf32>
    %cst_525 = arith.constant dense<0.000000e+00> : vector<32x256xf32>
    %1159 = tpu.matmul %1153, %1158, %cst_525 {dimension_numbers = #tpu.dot_dimension_numbers<[1], [0], [0], [1], [0, 0, 1, 1], [], []>} : vector<32x3xf32>, vector<3x256xf32>, vector<32x256xf32> -> vector<32x256xf32>
    %1160 = arith.addf %1151, %1159 : vector<32x256xf32>
    %c2_526 = arith.constant 2 : index
    %c0_527 = arith.constant 0 : index
    %c0_528 = arith.constant 0 : index
    %1161 = vector.load %arg15[%c2_526, %c0_527, %c0_528] : memref<9x32x3xf32, #tpu.memory_space<vmem>>, vector<1x32x3xf32>
    %1162 = vector.shape_cast %1161 : vector<1x32x3xf32> to vector<32x3xf32>
    %c15_i32_529 = arith.constant 15 : i32
    %1163 = tpu.dynamic_rotate %1143 by %c15_i32_529 dim 1 : vector<3x256xf32>, i32 -> vector<3x256xf32>
    %cst_530 = arith.constant 0.000000e+00 : f32
    %1164 = vector.shape_cast %58 : vector<1x256xi1> to vector<1x256xi1>
    %1165 = vector.broadcast %1164 : vector<1x256xi1> to vector<3x256xi1>
    %1166 = vector.broadcast %cst_530 : f32 to vector<3x256xf32>
    %1167 = arith.select %1165, %1163, %1166 : vector<3x256xi1>, vector<3x256xf32>
    %cst_531 = arith.constant dense<0.000000e+00> : vector<32x256xf32>
    %1168 = tpu.matmul %1162, %1167, %cst_531 {dimension_numbers = #tpu.dot_dimension_numbers<[1], [0], [0], [1], [0, 0, 1, 1], [], []>} : vector<32x3xf32>, vector<3x256xf32>, vector<32x256xf32> -> vector<32x256xf32>
    %1169 = arith.addf %1160, %1168 : vector<32x256xf32>
    %c3_532 = arith.constant 3 : index
    %c0_533 = arith.constant 0 : index
    %c0_534 = arith.constant 0 : index
    %1170 = vector.load %arg15[%c3_532, %c0_533, %c0_534] : memref<9x32x3xf32, #tpu.memory_space<vmem>>, vector<1x32x3xf32>
    %1171 = vector.shape_cast %1170 : vector<1x32x3xf32> to vector<32x3xf32>
    %c1_i32_535 = arith.constant 1 : i32
    %1172 = tpu.dynamic_rotate %1143 by %c1_i32_535 dim 1 : vector<3x256xf32>, i32 -> vector<3x256xf32>
    %cst_536 = arith.constant 0.000000e+00 : f32
    %1173 = vector.shape_cast %77 : vector<1x256xi1> to vector<1x256xi1>
    %1174 = vector.broadcast %1173 : vector<1x256xi1> to vector<3x256xi1>
    %1175 = vector.broadcast %cst_536 : f32 to vector<3x256xf32>
    %1176 = arith.select %1174, %1172, %1175 : vector<3x256xi1>, vector<3x256xf32>
    %cst_537 = arith.constant dense<0.000000e+00> : vector<32x256xf32>
    %1177 = tpu.matmul %1171, %1176, %cst_537 {dimension_numbers = #tpu.dot_dimension_numbers<[1], [0], [0], [1], [0, 0, 1, 1], [], []>} : vector<32x3xf32>, vector<3x256xf32>, vector<32x256xf32> -> vector<32x256xf32>
    %1178 = arith.addf %1169, %1177 : vector<32x256xf32>
    %c4_538 = arith.constant 4 : index
    %c0_539 = arith.constant 0 : index
    %c0_540 = arith.constant 0 : index
    %1179 = vector.load %arg15[%c4_538, %c0_539, %c0_540] : memref<9x32x3xf32, #tpu.memory_space<vmem>>, vector<1x32x3xf32>
    %1180 = vector.shape_cast %1179 : vector<1x32x3xf32> to vector<32x3xf32>
    %cst_541 = arith.constant dense<0.000000e+00> : vector<32x256xf32>
    %1181 = tpu.matmul %1180, %1143, %cst_541 {dimension_numbers = #tpu.dot_dimension_numbers<[1], [0], [0], [1], [0, 0, 1, 1], [], []>} : vector<32x3xf32>, vector<3x256xf32>, vector<32x256xf32> -> vector<32x256xf32>
    %1182 = arith.addf %1178, %1181 : vector<32x256xf32>
    %c5_542 = arith.constant 5 : index
    %c0_543 = arith.constant 0 : index
    %c0_544 = arith.constant 0 : index
    %1183 = vector.load %arg15[%c5_542, %c0_543, %c0_544] : memref<9x32x3xf32, #tpu.memory_space<vmem>>, vector<1x32x3xf32>
    %1184 = vector.shape_cast %1183 : vector<1x32x3xf32> to vector<32x3xf32>
    %c255_i32_545 = arith.constant 255 : i32
    %1185 = tpu.dynamic_rotate %1143 by %c255_i32_545 dim 1 : vector<3x256xf32>, i32 -> vector<3x256xf32>
    %cst_546 = arith.constant 0.000000e+00 : f32
    %1186 = vector.shape_cast %96 : vector<1x256xi1> to vector<1x256xi1>
    %1187 = vector.broadcast %1186 : vector<1x256xi1> to vector<3x256xi1>
    %1188 = vector.broadcast %cst_546 : f32 to vector<3x256xf32>
    %1189 = arith.select %1187, %1185, %1188 : vector<3x256xi1>, vector<3x256xf32>
    %cst_547 = arith.constant dense<0.000000e+00> : vector<32x256xf32>
    %1190 = tpu.matmul %1184, %1189, %cst_547 {dimension_numbers = #tpu.dot_dimension_numbers<[1], [0], [0], [1], [0, 0, 1, 1], [], []>} : vector<32x3xf32>, vector<3x256xf32>, vector<32x256xf32> -> vector<32x256xf32>
    %1191 = arith.addf %1182, %1190 : vector<32x256xf32>
    %c6_548 = arith.constant 6 : index
    %c0_549 = arith.constant 0 : index
    %c0_550 = arith.constant 0 : index
    %1192 = vector.load %arg15[%c6_548, %c0_549, %c0_550] : memref<9x32x3xf32, #tpu.memory_space<vmem>>, vector<1x32x3xf32>
    %1193 = vector.shape_cast %1192 : vector<1x32x3xf32> to vector<32x3xf32>
    %c241_i32_551 = arith.constant 241 : i32
    %1194 = tpu.dynamic_rotate %1143 by %c241_i32_551 dim 1 : vector<3x256xf32>, i32 -> vector<3x256xf32>
    %cst_552 = arith.constant 0.000000e+00 : f32
    %1195 = vector.shape_cast %115 : vector<1x256xi1> to vector<1x256xi1>
    %1196 = vector.broadcast %1195 : vector<1x256xi1> to vector<3x256xi1>
    %1197 = vector.broadcast %cst_552 : f32 to vector<3x256xf32>
    %1198 = arith.select %1196, %1194, %1197 : vector<3x256xi1>, vector<3x256xf32>
    %cst_553 = arith.constant dense<0.000000e+00> : vector<32x256xf32>
    %1199 = tpu.matmul %1193, %1198, %cst_553 {dimension_numbers = #tpu.dot_dimension_numbers<[1], [0], [0], [1], [0, 0, 1, 1], [], []>} : vector<32x3xf32>, vector<3x256xf32>, vector<32x256xf32> -> vector<32x256xf32>
    %1200 = arith.addf %1191, %1199 : vector<32x256xf32>
    %c7_554 = arith.constant 7 : index
    %c0_555 = arith.constant 0 : index
    %c0_556 = arith.constant 0 : index
    %1201 = vector.load %arg15[%c7_554, %c0_555, %c0_556] : memref<9x32x3xf32, #tpu.memory_space<vmem>>, vector<1x32x3xf32>
    %1202 = vector.shape_cast %1201 : vector<1x32x3xf32> to vector<32x3xf32>
    %c240_i32_557 = arith.constant 240 : i32
    %1203 = tpu.dynamic_rotate %1143 by %c240_i32_557 dim 1 : vector<3x256xf32>, i32 -> vector<3x256xf32>
    %cst_558 = arith.constant 0.000000e+00 : f32
    %1204 = vector.shape_cast %134 : vector<1x256xi1> to vector<1x256xi1>
    %1205 = vector.broadcast %1204 : vector<1x256xi1> to vector<3x256xi1>
    %1206 = vector.broadcast %cst_558 : f32 to vector<3x256xf32>
    %1207 = arith.select %1205, %1203, %1206 : vector<3x256xi1>, vector<3x256xf32>
    %cst_559 = arith.constant dense<0.000000e+00> : vector<32x256xf32>
    %1208 = tpu.matmul %1202, %1207, %cst_559 {dimension_numbers = #tpu.dot_dimension_numbers<[1], [0], [0], [1], [0, 0, 1, 1], [], []>} : vector<32x3xf32>, vector<3x256xf32>, vector<32x256xf32> -> vector<32x256xf32>
    %1209 = arith.addf %1200, %1208 : vector<32x256xf32>
    %c8_560 = arith.constant 8 : index
    %c0_561 = arith.constant 0 : index
    %c0_562 = arith.constant 0 : index
    %1210 = vector.load %arg15[%c8_560, %c0_561, %c0_562] : memref<9x32x3xf32, #tpu.memory_space<vmem>>, vector<1x32x3xf32>
    %1211 = vector.shape_cast %1210 : vector<1x32x3xf32> to vector<32x3xf32>
    %c239_i32_563 = arith.constant 239 : i32
    %1212 = tpu.dynamic_rotate %1143 by %c239_i32_563 dim 1 : vector<3x256xf32>, i32 -> vector<3x256xf32>
    %cst_564 = arith.constant 0.000000e+00 : f32
    %1213 = vector.shape_cast %153 : vector<1x256xi1> to vector<1x256xi1>
    %1214 = vector.broadcast %1213 : vector<1x256xi1> to vector<3x256xi1>
    %1215 = vector.broadcast %cst_564 : f32 to vector<3x256xf32>
    %1216 = arith.select %1214, %1212, %1215 : vector<3x256xi1>, vector<3x256xf32>
    %cst_565 = arith.constant dense<0.000000e+00> : vector<32x256xf32>
    %1217 = tpu.matmul %1211, %1216, %cst_565 {dimension_numbers = #tpu.dot_dimension_numbers<[1], [0], [0], [1], [0, 0, 1, 1], [], []>} : vector<32x3xf32>, vector<3x256xf32>, vector<32x256xf32> -> vector<32x256xf32>
    %1218 = arith.addf %1209, %1217 : vector<32x256xf32>
    %c0_566 = arith.constant 0 : index
    %c0_567 = arith.constant 0 : index
    %1219 = vector.load %arg16[%c0_566, %c0_567] : memref<32x1xf32, #tpu.memory_space<vmem>>, vector<32x1xf32>
    %1220 = vector.broadcast %1219 : vector<32x1xf32> to vector<32x256xf32>
    %1221 = arith.addf %1218, %1220 : vector<32x256xf32>
    %cst_568 = arith.constant 0.000000e+00 : f32
    %1222 = vector.broadcast %cst_568 : f32 to vector<32x256xf32>
    %1223 = arith.maximumf %1221, %1222 : vector<32x256xf32>
    %c0_569 = arith.constant 0 : index
    %c0_570 = arith.constant 0 : index
    %c0_571 = arith.constant 0 : index
    %1224 = vector.load %arg17[%c0_569, %c0_570, %c0_571] : memref<9x3x32xf32, #tpu.memory_space<vmem>>, vector<1x3x32xf32>
    %1225 = vector.shape_cast %1224 : vector<1x3x32xf32> to vector<3x32xf32>
    %c17_i32_572 = arith.constant 17 : i32
    %1226 = tpu.dynamic_rotate %1223 by %c17_i32_572 dim 1 : vector<32x256xf32>, i32 -> vector<32x256xf32>
    %cst_573 = arith.constant 0.000000e+00 : f32
    %1227 = vector.shape_cast %20 : vector<1x256xi1> to vector<1x256xi1>
    %1228 = vector.broadcast %1227 : vector<1x256xi1> to vector<32x256xi1>
    %1229 = vector.broadcast %cst_573 : f32 to vector<32x256xf32>
    %1230 = arith.select %1228, %1226, %1229 : vector<32x256xi1>, vector<32x256xf32>
    %cst_574 = arith.constant dense<0.000000e+00> : vector<3x256xf32>
    %1231 = tpu.matmul %1225, %1230, %cst_574 {dimension_numbers = #tpu.dot_dimension_numbers<[1], [0], [0], [1], [0, 0, 1, 1], [], []>} : vector<3x32xf32>, vector<32x256xf32>, vector<3x256xf32> -> vector<3x256xf32>
    %c1_575 = arith.constant 1 : index
    %c0_576 = arith.constant 0 : index
    %c0_577 = arith.constant 0 : index
    %1232 = vector.load %arg17[%c1_575, %c0_576, %c0_577] : memref<9x3x32xf32, #tpu.memory_space<vmem>>, vector<1x3x32xf32>
    %1233 = vector.shape_cast %1232 : vector<1x3x32xf32> to vector<3x32xf32>
    %c16_i32_578 = arith.constant 16 : i32
    %1234 = tpu.dynamic_rotate %1223 by %c16_i32_578 dim 1 : vector<32x256xf32>, i32 -> vector<32x256xf32>
    %cst_579 = arith.constant 0.000000e+00 : f32
    %1235 = vector.shape_cast %39 : vector<1x256xi1> to vector<1x256xi1>
    %1236 = vector.broadcast %1235 : vector<1x256xi1> to vector<32x256xi1>
    %1237 = vector.broadcast %cst_579 : f32 to vector<32x256xf32>
    %1238 = arith.select %1236, %1234, %1237 : vector<32x256xi1>, vector<32x256xf32>
    %cst_580 = arith.constant dense<0.000000e+00> : vector<3x256xf32>
    %1239 = tpu.matmul %1233, %1238, %cst_580 {dimension_numbers = #tpu.dot_dimension_numbers<[1], [0], [0], [1], [0, 0, 1, 1], [], []>} : vector<3x32xf32>, vector<32x256xf32>, vector<3x256xf32> -> vector<3x256xf32>
    %1240 = arith.addf %1231, %1239 : vector<3x256xf32>
    %c2_581 = arith.constant 2 : index
    %c0_582 = arith.constant 0 : index
    %c0_583 = arith.constant 0 : index
    %1241 = vector.load %arg17[%c2_581, %c0_582, %c0_583] : memref<9x3x32xf32, #tpu.memory_space<vmem>>, vector<1x3x32xf32>
    %1242 = vector.shape_cast %1241 : vector<1x3x32xf32> to vector<3x32xf32>
    %c15_i32_584 = arith.constant 15 : i32
    %1243 = tpu.dynamic_rotate %1223 by %c15_i32_584 dim 1 : vector<32x256xf32>, i32 -> vector<32x256xf32>
    %cst_585 = arith.constant 0.000000e+00 : f32
    %1244 = vector.shape_cast %58 : vector<1x256xi1> to vector<1x256xi1>
    %1245 = vector.broadcast %1244 : vector<1x256xi1> to vector<32x256xi1>
    %1246 = vector.broadcast %cst_585 : f32 to vector<32x256xf32>
    %1247 = arith.select %1245, %1243, %1246 : vector<32x256xi1>, vector<32x256xf32>
    %cst_586 = arith.constant dense<0.000000e+00> : vector<3x256xf32>
    %1248 = tpu.matmul %1242, %1247, %cst_586 {dimension_numbers = #tpu.dot_dimension_numbers<[1], [0], [0], [1], [0, 0, 1, 1], [], []>} : vector<3x32xf32>, vector<32x256xf32>, vector<3x256xf32> -> vector<3x256xf32>
    %1249 = arith.addf %1240, %1248 : vector<3x256xf32>
    %c3_587 = arith.constant 3 : index
    %c0_588 = arith.constant 0 : index
    %c0_589 = arith.constant 0 : index
    %1250 = vector.load %arg17[%c3_587, %c0_588, %c0_589] : memref<9x3x32xf32, #tpu.memory_space<vmem>>, vector<1x3x32xf32>
    %1251 = vector.shape_cast %1250 : vector<1x3x32xf32> to vector<3x32xf32>
    %c1_i32_590 = arith.constant 1 : i32
    %1252 = tpu.dynamic_rotate %1223 by %c1_i32_590 dim 1 : vector<32x256xf32>, i32 -> vector<32x256xf32>
    %cst_591 = arith.constant 0.000000e+00 : f32
    %1253 = vector.shape_cast %77 : vector<1x256xi1> to vector<1x256xi1>
    %1254 = vector.broadcast %1253 : vector<1x256xi1> to vector<32x256xi1>
    %1255 = vector.broadcast %cst_591 : f32 to vector<32x256xf32>
    %1256 = arith.select %1254, %1252, %1255 : vector<32x256xi1>, vector<32x256xf32>
    %cst_592 = arith.constant dense<0.000000e+00> : vector<3x256xf32>
    %1257 = tpu.matmul %1251, %1256, %cst_592 {dimension_numbers = #tpu.dot_dimension_numbers<[1], [0], [0], [1], [0, 0, 1, 1], [], []>} : vector<3x32xf32>, vector<32x256xf32>, vector<3x256xf32> -> vector<3x256xf32>
    %1258 = arith.addf %1249, %1257 : vector<3x256xf32>
    %c4_593 = arith.constant 4 : index
    %c0_594 = arith.constant 0 : index
    %c0_595 = arith.constant 0 : index
    %1259 = vector.load %arg17[%c4_593, %c0_594, %c0_595] : memref<9x3x32xf32, #tpu.memory_space<vmem>>, vector<1x3x32xf32>
    %1260 = vector.shape_cast %1259 : vector<1x3x32xf32> to vector<3x32xf32>
    %cst_596 = arith.constant dense<0.000000e+00> : vector<3x256xf32>
    %1261 = tpu.matmul %1260, %1223, %cst_596 {dimension_numbers = #tpu.dot_dimension_numbers<[1], [0], [0], [1], [0, 0, 1, 1], [], []>} : vector<3x32xf32>, vector<32x256xf32>, vector<3x256xf32> -> vector<3x256xf32>
    %1262 = arith.addf %1258, %1261 : vector<3x256xf32>
    %c5_597 = arith.constant 5 : index
    %c0_598 = arith.constant 0 : index
    %c0_599 = arith.constant 0 : index
    %1263 = vector.load %arg17[%c5_597, %c0_598, %c0_599] : memref<9x3x32xf32, #tpu.memory_space<vmem>>, vector<1x3x32xf32>
    %1264 = vector.shape_cast %1263 : vector<1x3x32xf32> to vector<3x32xf32>
    %c255_i32_600 = arith.constant 255 : i32
    %1265 = tpu.dynamic_rotate %1223 by %c255_i32_600 dim 1 : vector<32x256xf32>, i32 -> vector<32x256xf32>
    %cst_601 = arith.constant 0.000000e+00 : f32
    %1266 = vector.shape_cast %96 : vector<1x256xi1> to vector<1x256xi1>
    %1267 = vector.broadcast %1266 : vector<1x256xi1> to vector<32x256xi1>
    %1268 = vector.broadcast %cst_601 : f32 to vector<32x256xf32>
    %1269 = arith.select %1267, %1265, %1268 : vector<32x256xi1>, vector<32x256xf32>
    %cst_602 = arith.constant dense<0.000000e+00> : vector<3x256xf32>
    %1270 = tpu.matmul %1264, %1269, %cst_602 {dimension_numbers = #tpu.dot_dimension_numbers<[1], [0], [0], [1], [0, 0, 1, 1], [], []>} : vector<3x32xf32>, vector<32x256xf32>, vector<3x256xf32> -> vector<3x256xf32>
    %1271 = arith.addf %1262, %1270 : vector<3x256xf32>
    %c6_603 = arith.constant 6 : index
    %c0_604 = arith.constant 0 : index
    %c0_605 = arith.constant 0 : index
    %1272 = vector.load %arg17[%c6_603, %c0_604, %c0_605] : memref<9x3x32xf32, #tpu.memory_space<vmem>>, vector<1x3x32xf32>
    %1273 = vector.shape_cast %1272 : vector<1x3x32xf32> to vector<3x32xf32>
    %c241_i32_606 = arith.constant 241 : i32
    %1274 = tpu.dynamic_rotate %1223 by %c241_i32_606 dim 1 : vector<32x256xf32>, i32 -> vector<32x256xf32>
    %cst_607 = arith.constant 0.000000e+00 : f32
    %1275 = vector.shape_cast %115 : vector<1x256xi1> to vector<1x256xi1>
    %1276 = vector.broadcast %1275 : vector<1x256xi1> to vector<32x256xi1>
    %1277 = vector.broadcast %cst_607 : f32 to vector<32x256xf32>
    %1278 = arith.select %1276, %1274, %1277 : vector<32x256xi1>, vector<32x256xf32>
    %cst_608 = arith.constant dense<0.000000e+00> : vector<3x256xf32>
    %1279 = tpu.matmul %1273, %1278, %cst_608 {dimension_numbers = #tpu.dot_dimension_numbers<[1], [0], [0], [1], [0, 0, 1, 1], [], []>} : vector<3x32xf32>, vector<32x256xf32>, vector<3x256xf32> -> vector<3x256xf32>
    %1280 = arith.addf %1271, %1279 : vector<3x256xf32>
    %c7_609 = arith.constant 7 : index
    %c0_610 = arith.constant 0 : index
    %c0_611 = arith.constant 0 : index
    %1281 = vector.load %arg17[%c7_609, %c0_610, %c0_611] : memref<9x3x32xf32, #tpu.memory_space<vmem>>, vector<1x3x32xf32>
    %1282 = vector.shape_cast %1281 : vector<1x3x32xf32> to vector<3x32xf32>
    %c240_i32_612 = arith.constant 240 : i32
    %1283 = tpu.dynamic_rotate %1223 by %c240_i32_612 dim 1 : vector<32x256xf32>, i32 -> vector<32x256xf32>
    %cst_613 = arith.constant 0.000000e+00 : f32
    %1284 = vector.shape_cast %134 : vector<1x256xi1> to vector<1x256xi1>
    %1285 = vector.broadcast %1284 : vector<1x256xi1> to vector<32x256xi1>
    %1286 = vector.broadcast %cst_613 : f32 to vector<32x256xf32>
    %1287 = arith.select %1285, %1283, %1286 : vector<32x256xi1>, vector<32x256xf32>
    %cst_614 = arith.constant dense<0.000000e+00> : vector<3x256xf32>
    %1288 = tpu.matmul %1282, %1287, %cst_614 {dimension_numbers = #tpu.dot_dimension_numbers<[1], [0], [0], [1], [0, 0, 1, 1], [], []>} : vector<3x32xf32>, vector<32x256xf32>, vector<3x256xf32> -> vector<3x256xf32>
    %1289 = arith.addf %1280, %1288 : vector<3x256xf32>
    %c8_615 = arith.constant 8 : index
    %c0_616 = arith.constant 0 : index
    %c0_617 = arith.constant 0 : index
    %1290 = vector.load %arg17[%c8_615, %c0_616, %c0_617] : memref<9x3x32xf32, #tpu.memory_space<vmem>>, vector<1x3x32xf32>
    %1291 = vector.shape_cast %1290 : vector<1x3x32xf32> to vector<3x32xf32>
    %c239_i32_618 = arith.constant 239 : i32
    %1292 = tpu.dynamic_rotate %1223 by %c239_i32_618 dim 1 : vector<32x256xf32>, i32 -> vector<32x256xf32>
    %cst_619 = arith.constant 0.000000e+00 : f32
    %1293 = vector.shape_cast %153 : vector<1x256xi1> to vector<1x256xi1>
    %1294 = vector.broadcast %1293 : vector<1x256xi1> to vector<32x256xi1>
    %1295 = vector.broadcast %cst_619 : f32 to vector<32x256xf32>
    %1296 = arith.select %1294, %1292, %1295 : vector<32x256xi1>, vector<32x256xf32>
    %cst_620 = arith.constant dense<0.000000e+00> : vector<3x256xf32>
    %1297 = tpu.matmul %1291, %1296, %cst_620 {dimension_numbers = #tpu.dot_dimension_numbers<[1], [0], [0], [1], [0, 0, 1, 1], [], []>} : vector<3x32xf32>, vector<32x256xf32>, vector<3x256xf32> -> vector<3x256xf32>
    %1298 = arith.addf %1289, %1297 : vector<3x256xf32>
    %c0_621 = arith.constant 0 : index
    %c0_622 = arith.constant 0 : index
    %1299 = vector.load %arg18[%c0_621, %c0_622] : memref<3x1xf32, #tpu.memory_space<vmem>>, vector<3x1xf32>
    %1300 = vector.broadcast %1299 : vector<3x1xf32> to vector<3x256xf32>
    %1301 = arith.addf %1298, %1300 : vector<3x256xf32>
    %cst_623 = arith.constant 0.000000e+00 : f32
    %cst_624 = arith.constant 2.550000e+02 : f32
    %1302 = vector.broadcast %cst_623 : f32 to vector<3x256xf32>
    %1303 = arith.maximumf %1302, %1301 : vector<3x256xf32>
    %1304 = vector.broadcast %cst_624 : f32 to vector<3x256xf32>
    %1305 = arith.minimumf %1304, %1303 : vector<3x256xf32>
    %c0_625 = arith.constant 0 : index
    %c0_626 = arith.constant 0 : index
    %c0_627 = arith.constant 0 : index
    %1306 = vector.load %arg19[%c0_625, %c0_626, %c0_627] : memref<1x3x256xf32, #tpu.memory_space<vmem>>, vector<1x3x256xf32>
    %1307 = vector.shape_cast %1306 : vector<1x3x256xf32> to vector<3x256xf32>
    %1308 = vector.shape_cast %1305 : vector<3x256xf32> to vector<1x3x256xf32>
    tpu.vector_store %arg19[%c0_625, %c0_626, %c0_627], %1308 {strides = array<i32>} : memref<1x3x256xf32, #tpu.memory_space<vmem>>, vector<1x3x256xf32>,
    return
  }
  func.func @transform_0(%arg0: i32) -> (i32, i32) {
    %c0_i32 = arith.constant 0 : i32
    %c0_i32_0 = arith.constant 0 : i32
    %c0_i32_1 = arith.constant 0 : i32
    return %c0_i32, %c0_i32_0 : i32, i32
  }
  func.func @transform_1(%arg0: i32) -> (i32, i32, i32) {
    %c0_i32 = arith.constant 0 : i32
    %c0_i32_0 = arith.constant 0 : i32
    %c0_i32_1 = arith.constant 0 : i32
    return %arg0, %c0_i32, %c0_i32_0 : i32, i32, i32
  }
  func.func @transform_2(%arg0: i32) -> (i32, i32, i32) {
    %c0_i32 = arith.constant 0 : i32
    %c0_i32_0 = arith.constant 0 : i32
    %c0_i32_1 = arith.constant 0 : i32
    return %arg0, %c0_i32, %c0_i32_0 : i32, i32, i32
  }
  func.func @transform_3(%arg0: i32) -> (i32, i32, i32) {
    %c0_i32 = arith.constant 0 : i32
    %c0_i32_0 = arith.constant 0 : i32
    %c0_i32_1 = arith.constant 0 : i32
    return %arg0, %c0_i32, %c0_i32_0 : i32, i32, i32
  }
  func.func @transform_4(%arg0: i32) -> (i32, i32, i32) {
    %c0_i32 = arith.constant 0 : i32
    %c0_i32_0 = arith.constant 0 : i32
    %c0_i32_1 = arith.constant 0 : i32
    %c0_i32_2 = arith.constant 0 : i32
    return %c0_i32, %c0_i32_0, %c0_i32_1 : i32, i32, i32
  }
  func.func @transform_5(%arg0: i32) -> (i32, i32) {
    %c0_i32 = arith.constant 0 : i32
    %c0_i32_0 = arith.constant 0 : i32
    %c0_i32_1 = arith.constant 0 : i32
    return %c0_i32, %c0_i32_0 : i32, i32
  }
  func.func @transform_6(%arg0: i32) -> (i32, i32, i32) {
    %c0_i32 = arith.constant 0 : i32
    %c0_i32_0 = arith.constant 0 : i32
    %c0_i32_1 = arith.constant 0 : i32
    %c0_i32_2 = arith.constant 0 : i32
    return %c0_i32, %c0_i32_0, %c0_i32_1 : i32, i32, i32
  }
  func.func @transform_7(%arg0: i32) -> (i32, i32) {
    %c0_i32 = arith.constant 0 : i32
    %c0_i32_0 = arith.constant 0 : i32
    %c0_i32_1 = arith.constant 0 : i32
    return %c0_i32, %c0_i32_0 : i32, i32
  }
  func.func @transform_8(%arg0: i32) -> (i32, i32) {
    %c0_i32 = arith.constant 0 : i32
    %c0_i32_0 = arith.constant 0 : i32
    %c0_i32_1 = arith.constant 0 : i32
    return %c0_i32, %c0_i32_0 : i32, i32
  }
  func.func @transform_9(%arg0: i32) -> (i32, i32) {
    %c0_i32 = arith.constant 0 : i32
    %c0_i32_0 = arith.constant 0 : i32
    %c0_i32_1 = arith.constant 0 : i32
    return %c0_i32, %c0_i32_0 : i32, i32
  }
  func.func @transform_10(%arg0: i32) -> (i32, i32, i32) {
    %c0_i32 = arith.constant 0 : i32
    %c0_i32_0 = arith.constant 0 : i32
    %c0_i32_1 = arith.constant 0 : i32
    %c0_i32_2 = arith.constant 0 : i32
    return %c0_i32, %c0_i32_0, %c0_i32_1 : i32, i32, i32
  }
  func.func @transform_11(%arg0: i32) -> (i32, i32) {
    %c0_i32 = arith.constant 0 : i32
    %c0_i32_0 = arith.constant 0 : i32
    %c0_i32_1 = arith.constant 0 : i32
    return %c0_i32, %c0_i32_0 : i32, i32
  }
  func.func @transform_12(%arg0: i32) -> (i32, i32, i32) {
    %c0_i32 = arith.constant 0 : i32
    %c0_i32_0 = arith.constant 0 : i32
    %c0_i32_1 = arith.constant 0 : i32
    %c0_i32_2 = arith.constant 0 : i32
    return %c0_i32, %c0_i32_0, %c0_i32_1 : i32, i32, i32
  }
  func.func @transform_13(%arg0: i32) -> (i32, i32) {
    %c0_i32 = arith.constant 0 : i32
    %c0_i32_0 = arith.constant 0 : i32
    %c0_i32_1 = arith.constant 0 : i32
    return %c0_i32, %c0_i32_0 : i32, i32
  }
  func.func @transform_14(%arg0: i32) -> (i32, i32, i32) {
    %c0_i32 = arith.constant 0 : i32
    %c0_i32_0 = arith.constant 0 : i32
    %c0_i32_1 = arith.constant 0 : i32
    %c0_i32_2 = arith.constant 0 : i32
    return %c0_i32, %c0_i32_0, %c0_i32_1 : i32, i32, i32
  }
  func.func @transform_15(%arg0: i32) -> (i32, i32) {
    %c0_i32 = arith.constant 0 : i32
    %c0_i32_0 = arith.constant 0 : i32
    %c0_i32_1 = arith.constant 0 : i32
    return %c0_i32, %c0_i32_0 : i32, i32
  }
  func.func @transform_16(%arg0: i32) -> (i32, i32, i32) {
    %c0_i32 = arith.constant 0 : i32
    %c0_i32_0 = arith.constant 0 : i32
    %c0_i32_1 = arith.constant 0 : i32
    %c0_i32_2 = arith.constant 0 : i32
    return %c0_i32, %c0_i32_0, %c0_i32_1 : i32, i32, i32
  }
  func.func @transform_17(%arg0: i32) -> (i32, i32) {
    %c0_i32 = arith.constant 0 : i32
    %c0_i32_0 = arith.constant 0 : i32
    %c0_i32_1 = arith.constant 0 : i32
    return %c0_i32, %c0_i32_0 : i32, i32
  }
  func.func @transform_18(%arg0: i32) -> (i32, i32, i32) {
    %c0_i32 = arith.constant 0 : i32
    %c0_i32_0 = arith.constant 0 : i32
    %c0_i32_1 = arith.constant 0 : i32
    return %arg0, %c0_i32, %c0_i32_0 : i32, i32, i32
  }
}

</mosaic_0001>

<llo_original>
// kernel: pidrtn_a_forward.1
$region0: #{pidrtn_a_forward.1}
  #allocation0 [shape = 'u32[]', space=smem, size = 0x4, offset = 0x4, fixed_abs, tag = 'smem constant byte address 0x4 - core index']
  #allocation1 [shape = 'u32[72,128]{1,0:T(1,128)}', space=vmem, size = 0x9000, scoped, tag = 'internal scratch']
  %s0 = inlined_call_operand.vmem [shape: f32[2,256], index: 0, kind: input, shape index: {}]
  %s1 = inlined_call_operand.vmem [shape: f32[2,4,256], index: 1, kind: input, shape index: {}]
  %s2 = inlined_call_operand.vmem [shape: f32[2,3,256], index: 2, kind: input, shape index: {}]
  %s3 = inlined_call_operand.vmem [shape: f32[2,1,256], index: 3, kind: input, shape index: {}]
  %s4 = inlined_call_operand.vmem [shape: f32[9,32,4], index: 4, kind: input, shape index: {}]
  %s5 = inlined_call_operand.vmem [shape: f32[32,1], index: 5, kind: input, shape index: {}]
  %s6 = inlined_call_operand.vmem [shape: f32[9,9,32], index: 6, kind: input, shape index: {}]
  %s7 = inlined_call_operand.vmem [shape: f32[9,1], index: 7, kind: input, shape index: {}]
  %s8 = inlined_call_operand.vmem [shape: f32[54,1], index: 8, kind: input, shape index: {}]
  %s9 = inlined_call_operand.vmem [shape: f32[3,1], index: 9, kind: input, shape index: {}]
  %s10 = inlined_call_operand.vmem [shape: f32[9,3,3], index: 10, kind: input, shape index: {}]
  %s11 = inlined_call_operand.vmem [shape: f32[3,1], index: 11, kind: input, shape index: {}]
  %s12 = inlined_call_operand.vmem [shape: f32[9,3,3], index: 12, kind: input, shape index: {}]
  %s13 = inlined_call_operand.vmem [shape: f32[3,1], index: 13, kind: input, shape index: {}]
  %s14 = inlined_call_operand.vmem [shape: f32[9,32,3], index: 14, kind: input, shape index: {}]
  %s15 = inlined_call_operand.vmem [shape: f32[32,1], index: 15, kind: input, shape index: {}]
  %s16 = inlined_call_operand.vmem [shape: f32[9,3,32], index: 16, kind: input, shape index: {}]
  %s17 = inlined_call_operand.vmem [shape: f32[3,1], index: 17, kind: input, shape index: {}]
  %s18 = inlined_call_operand.vmem [shape: f32[2,3,256], index: 18, kind: output, shape index: {}]
  %s19 = sld [smem:[#allocation0]]
  $region105: #{pidrtn_a_forward.1} parent=0
    _
  %s21 = ssub.s32 1, %s19
  %s22 = scalar_select 0, %s21, %s19
  loop: start=0, step=1, limit=4
  $region2: #{pidrtn_a_forward.1} parent=0 // loop_pre_header
    _
  $region3: #{pidrtn_a_forward.1} parent=0 // loop_header
    %s24 = sphi 0, %s28
    %p25 = scmp.ge.s32.totalorder %s24, 4
    %s32 = sphi 0, %s32
    %s34 = sphi 0, %s32
    %s35 = sphi 0, %s34
    %s49 = sphi 0, %s35
    %s55 = sphi 0, %s57
    %s58 = sphi 0, %s55
    %s59 = sphi 0, %s58
    %s75 = sphi 0, %s59
    %s81 = sphi 0, %s83
    %s84 = sphi 0, %s81
    %s85 = sphi 0, %s84
    %s101 = sphi 0, %s85
    %s107 = sphi 0, %s109
    %s110 = sphi 0, %s107
    %s111 = sphi 0, %s110
    %s127 = sphi 0, %s111
    %s131 = sphi 0, %s131
    %s133 = sphi 0, %s131
    %s134 = sphi 0, %s133
    %s148 = sphi 0, %s134
    %s152 = sphi 0, %s152
    %s154 = sphi 0, %s152
    %s155 = sphi 0, %s154
    %s169 = sphi 0, %s155
    %s173 = sphi 0, %s173
    %s175 = sphi 0, %s173
    %s176 = sphi 0, %s175
    %s190 = sphi 0, %s176
    %s194 = sphi 0, %s194
    %s196 = sphi 0, %s194
    %s197 = sphi 0, %s196
    %s211 = sphi 0, %s197
    %s215 = sphi 0, %s215
    %s217 = sphi 0, %s215
    %s218 = sphi 0, %s217
    %s232 = sphi 0, %s218
    %s236 = sphi 0, %s236
    %s238 = sphi 0, %s236
    %s239 = sphi 0, %s238
    %s253 = sphi 0, %s239
    %s257 = sphi 0, %s257
    %s259 = sphi 0, %s257
    %s260 = sphi 0, %s259
    %s274 = sphi 0, %s260
    %s278 = sphi 0, %s278
    %s280 = sphi 0, %s278
    %s281 = sphi 0, %s280
    %s295 = sphi 0, %s281
    %s299 = sphi 0, %s299
    %s301 = sphi 0, %s299
    %s302 = sphi 0, %s301
    %s316 = sphi 0, %s302
    %s320 = sphi 0, %s320
    %s322 = sphi 0, %s320
    %s323 = sphi 0, %s322
    %s337 = sphi 0, %s323
    %s341 = sphi 0, %s341
    %s343 = sphi 0, %s341
    %s344 = sphi 0, %s343
    %s358 = sphi 0, %s344
    %s362 = sphi 0, %s362
    %s364 = sphi 0, %s362
    %s365 = sphi 0, %s364
    %s379 = sphi 0, %s365
    %s383 = sphi 0, %s383
    %s385 = sphi 0, %s383
    %s386 = sphi 0, %s385
    %s400 = sphi 0, %s386
    %s404 = sphi 0, %s404
    %s406 = sphi 0, %s404
    %s407 = sphi 0, %s406
    %s421 = sphi 0, %s407
    %s427 = sphi 0, %s429
    %s430 = sphi 0, %s427
    %s431 = sphi 0, %s430
    %s447 = sphi 0, %s431
  $region4: #{pidrtn_a_forward.1} parent=0 // loop_header_branch
    %27 = sbr.rel (%p25) target = $region8
  $region5: #{pidrtn_a_forward.1} parent=0 // loop_body
    %s29 = ssub.s32 %s24, 1
    %s30 = ssub.s32 %s24, 2
    %s31 = sadd.s32 %s24, 1
    %s33 = sadd.s32 %s32, 1
    %p36 = scmp.eq.s32.totalorder %s24, 1
    %p37 = scmp.ne.s32.totalorder %s32, %s34
    %p38 = scmp.eq.s32.totalorder %s24, 0
    %p39 = por %p37, %p38
    %p40 = scmp.ne.s32.totalorder %s32, %s34
    %p41 = scmp.eq.s32.totalorder %s29, 1
    %p42 = por %p40, %p41
    %p43 = scmp.ne.s32.totalorder %s34, %s35
    %p44 = scmp.eq.s32.totalorder %s29, 0
    %p45 = por %p43, %p44
    %p46 = scmp.ne.s32.totalorder %s34, %s35
    %p47 = scmp.eq.s32.totalorder %s30, 1
    %p48 = por %p46, %p47
    %p50 = scmp.ne.s32.totalorder %s35, %s49
    %p51 = scmp.eq.s32.totalorder %s30, 0
    %p52 = por %p50, %p51
    %s53 = ssub.s32 %s24, %s31
    %p54 = scmp.eq.s32.totalorder %s53, 0
    %s56 = sadd.s32 %s55, 1
    %s57 = scalar_select %p54, %s55, %s56
    %p60 = pneg %p54
    %p61 = scmp.eq.s32.totalorder %s24, 1
    %p62 = por %p60, %p61
    %p63 = scmp.ne.s32.totalorder %s55, %s58
    %p64 = scmp.eq.s32.totalorder %s24, 0
    %p65 = por %p63, %p64
    %p66 = scmp.ne.s32.totalorder %s55, %s58
    %p67 = scmp.eq.s32.totalorder %s29, 1
    %p68 = por %p66, %p67
    %p69 = scmp.ne.s32.totalorder %s58, %s59
    %p70 = scmp.eq.s32.totalorder %s29, 0
    %p71 = por %p69, %p70
    %p72 = scmp.ne.s32.totalorder %s58, %s59
    %p73 = scmp.eq.s32.totalorder %s30, 1
    %p74 = por %p72, %p73
    %p76 = scmp.ne.s32.totalorder %s59, %s75
    %p77 = scmp.eq.s32.totalorder %s30, 0
    %p78 = por %p76, %p77
    %s79 = ssub.s32 %s24, %s31
    %p80 = scmp.eq.s32.totalorder %s79, 0
    %s82 = sadd.s32 %s81, 1
    %s83 = scalar_select %p80, %s81, %s82
    %p86 = pneg %p80
    %p87 = scmp.eq.s32.totalorder %s24, 1
    %p88 = por %p86, %p87
    %p89 = scmp.ne.s32.totalorder %s81, %s84
    %p90 = scmp.eq.s32.totalorder %s24, 0
    %p91 = por %p89, %p90
    %p92 = scmp.ne.s32.totalorder %s81, %s84
    %p93 = scmp.eq.s32.totalorder %s29, 1
    %p94 = por %p92, %p93
    %p95 = scmp.ne.s32.totalorder %s84, %s85
    %p96 = scmp.eq.s32.totalorder %s29, 0
    %p97 = por %p95, %p96
    %p98 = scmp.ne.s32.totalorder %s84, %s85
    %p99 = scmp.eq.s32.totalorder %s30, 1
    %p100 = por %p98, %p99
    %p102 = scmp.ne.s32.totalorder %s85, %s101
    %p103 = scmp.eq.s32.totalorder %s30, 0
    %p104 = por %p102, %p103
    %s105 = ssub.s32 %s24, %s31
    %p106 = scmp.eq.s32.totalorder %s105, 0
    %s108 = sadd.s32 %s107, 1
    %s109 = scalar_select %p106, %s107, %s108
    %p112 = pneg %p106
    %p113 = scmp.eq.s32.totalorder %s24, 1
    %p114 = por %p112, %p113
    %p115 = scmp.ne.s32.totalorder %s107, %s110
    %p116 = scmp.eq.s32.totalorder %s24, 0
    %p117 = por %p115, %p116
    %p118 = scmp.ne.s32.totalorder %s107, %s110
    %p119 = scmp.eq.s32.totalorder %s29, 1
    %p120 = por %p118, %p119
    %p121 = scmp.ne.s32.totalorder %s110, %s111
    %p122 = scmp.eq.s32.totalorder %s29, 0
    %p123 = por %p121, %p122
    %p124 = scmp.ne.s32.totalorder %s110, %s111
    %p125 = scmp.eq.s32.totalorder %s30, 1
    %p126 = por %p124, %p125
    %p128 = scmp.ne.s32.totalorder %s111, %s127
    %p129 = scmp.eq.s32.totalorder %s30, 0
    %p130 = por %p128, %p129
    %s132 = sadd.s32 %s131, 1
    %p135 = scmp.eq.s32.totalorder %s24, 1
    %p136 = scmp.ne.s32.totalorder %s131, %s133
    %p137 = scmp.eq.s32.totalorder %s24, 0
    %p138 = por %p136, %p137
    %p139 = scmp.ne.s32.totalorder %s131, %s133
    %p140 = scmp.eq.s32.totalorder %s29, 1
    %p141 = por %p139, %p140
    %p142 = scmp.ne.s32.totalorder %s133, %s134
    %p143 = scmp.eq.s32.totalorder %s29, 0
    %p144 = por %p142, %p143
    %p145 = scmp.ne.s32.totalorder %s133, %s134
    %p146 = scmp.eq.s32.totalorder %s30, 1
    %p147 = por %p145, %p146
    %p149 = scmp.ne.s32.totalorder %s134, %s148
    %p150 = scmp.eq.s32.totalorder %s30, 0
    %p151 = por %p149, %p150
    %s153 = sadd.s32 %s152, 1
    %p156 = scmp.eq.s32.totalorder %s24, 1
    %p157 = scmp.ne.s32.totalorder %s152, %s154
    %p158 = scmp.eq.s32.totalorder %s24, 0
    %p159 = por %p157, %p158
    %p160 = scmp.ne.s32.totalorder %s152, %s154
    %p161 = scmp.eq.s32.totalorder %s29, 1
    %p162 = por %p160, %p161
    %p163 = scmp.ne.s32.totalorder %s154, %s155
    %p164 = scmp.eq.s32.totalorder %s29, 0
    %p165 = por %p163, %p164
    %p166 = scmp.ne.s32.totalorder %s154, %s155
    %p167 = scmp.eq.s32.totalorder %s30, 1
    %p168 = por %p166, %p167
    %p170 = scmp.ne.s32.totalorder %s155, %s169
    %p171 = scmp.eq.s32.totalorder %s30, 0
    %p172 = por %p170, %p171
    %s174 = sadd.s32 %s173, 1
    %p177 = scmp.eq.s32.totalorder %s24, 1
    %p178 = scmp.ne.s32.totalorder %s173, %s175
    %p179 = scmp.eq.s32.totalorder %s24, 0
    %p180 = por %p178, %p179
    %p181 = scmp.ne.s32.totalorder %s173, %s175
    %p182 = scmp.eq.s32.totalorder %s29, 1
    %p183 = por %p181, %p182
    %p184 = scmp.ne.s32.totalorder %s175, %s176
    %p185 = scmp.eq.s32.totalorder %s29, 0
    %p186 = por %p184, %p185
    %p187 = scmp.ne.s32.totalorder %s175, %s176
    %p188 = scmp.eq.s32.totalorder %s30, 1
    %p189 = por %p187, %p188
    %p191 = scmp.ne.s32.totalorder %s176, %s190
    %p192 = scmp.eq.s32.totalorder %s30, 0
    %p193 = por %p191, %p192
    %s195 = sadd.s32 %s194, 1
    %p198 = scmp.eq.s32.totalorder %s24, 1
    %p199 = scmp.ne.s32.totalorder %s194, %s196
    %p200 = scmp.eq.s32.totalorder %s24, 0
    %p201 = por %p199, %p200
    %p202 = scmp.ne.s32.totalorder %s194, %s196
    %p203 = scmp.eq.s32.totalorder %s29, 1
    %p204 = por %p202, %p203
    %p205 = scmp.ne.s32.totalorder %s196, %s197
    %p206 = scmp.eq.s32.totalorder %s29, 0
    %p207 = por %p205, %p206
    %p208 = scmp.ne.s32.totalorder %s196, %s197
    %p209 = scmp.eq.s32.totalorder %s30, 1
    %p210 = por %p208, %p209
    %p212 = scmp.ne.s32.totalorder %s197, %s211
    %p213 = scmp.eq.s32.totalorder %s30, 0
    %p214 = por %p212, %p213
    %s216 = sadd.s32 %s215, 1
    %p219 = scmp.eq.s32.totalorder %s24, 1
    %p220 = scmp.ne.s32.totalorder %s215, %s217
    %p221 = scmp.eq.s32.totalorder %s24, 0
    %p222 = por %p220, %p221
    %p223 = scmp.ne.s32.totalorder %s215, %s217
    %p224 = scmp.eq.s32.totalorder %s29, 1
    %p225 = por %p223, %p224
    %p226 = scmp.ne.s32.totalorder %s217, %s218
    %p227 = scmp.eq.s32.totalorder %s29, 0
    %p228 = por %p226, %p227
    %p229 = scmp.ne.s32.totalorder %s217, %s218
    %p230 = scmp.eq.s32.totalorder %s30, 1
    %p231 = por %p229, %p230
    %p233 = scmp.ne.s32.totalorder %s218, %s232
    %p234 = scmp.eq.s32.totalorder %s30, 0
    %p235 = por %p233, %p234
    %s237 = sadd.s32 %s236, 1
    %p240 = scmp.eq.s32.totalorder %s24, 1
    %p241 = scmp.ne.s32.totalorder %s236, %s238
    %p242 = scmp.eq.s32.totalorder %s24, 0
    %p243 = por %p241, %p242
    %p244 = scmp.ne.s32.totalorder %s236, %s238
    %p245 = scmp.eq.s32.totalorder %s29, 1
    %p246 = por %p244, %p245
    %p247 = scmp.ne.s32.totalorder %s238, %s239
    %p248 = scmp.eq.s32.totalorder %s29, 0
    %p249 = por %p247, %p248
    %p250 = scmp.ne.s32.totalorder %s238, %s239
    %p251 = scmp.eq.s32.totalorder %s30, 1
    %p252 = por %p250, %p251
    %p254 = scmp.ne.s32.totalorder %s239, %s253
    %p255 = scmp.eq.s32.totalorder %s30, 0
    %p256 = por %p254, %p255
    %s258 = sadd.s32 %s257, 1
    %p261 = scmp.eq.s32.totalorder %s24, 1
    %p262 = scmp.ne.s32.totalorder %s257, %s259
    %p263 = scmp.eq.s32.totalorder %s24, 0
    %p264 = por %p262, %p263
    %p265 = scmp.ne.s32.totalorder %s257, %s259
    %p266 = scmp.eq.s32.totalorder %s29, 1
    %p267 = por %p265, %p266
    %p268 = scmp.ne.s32.totalorder %s259, %s260
    %p269 = scmp.eq.s32.totalorder %s29, 0
    %p270 = por %p268, %p269
    %p271 = scmp.ne.s32.totalorder %s259, %s260
    %p272 = scmp.eq.s32.totalorder %s30, 1
    %p273 = por %p271, %p272
    %p275 = scmp.ne.s32.totalorder %s260, %s274
    %p276 = scmp.eq.s32.totalorder %s30, 0
    %p277 = por %p275, %p276
    %s279 = sadd.s32 %s278, 1
    %p282 = scmp.eq.s32.totalorder %s24, 1
    %p283 = scmp.ne.s32.totalorder %s278, %s280
    %p284 = scmp.eq.s32.totalorder %s24, 0
    %p285 = por %p283, %p284
    %p286 = scmp.ne.s32.totalorder %s278, %s280
    %p287 = scmp.eq.s32.totalorder %s29, 1
    %p288 = por %p286, %p287
    %p289 = scmp.ne.s32.totalorder %s280, %s281
    %p290 = scmp.eq.s32.totalorder %s29, 0
    %p291 = por %p289, %p290
    %p292 = scmp.ne.s32.totalorder %s280, %s281
    %p293 = scmp.eq.s32.totalorder %s30, 1
    %p294 = por %p292, %p293
    %p296 = scmp.ne.s32.totalorder %s281, %s295
    %p297 = scmp.eq.s32.totalorder %s30, 0
    %p298 = por %p296, %p297
    %s300 = sadd.s32 %s299, 1
    %p303 = scmp.eq.s32.totalorder %s24, 1
    %p304 = scmp.ne.s32.totalorder %s299, %s301
    %p305 = scmp.eq.s32.totalorder %s24, 0
    %p306 = por %p304, %p305
    %p307 = scmp.ne.s32.totalorder %s299, %s301
    %p308 = scmp.eq.s32.totalorder %s29, 1
    %p309 = por %p307, %p308
    %p310 = scmp.ne.s32.totalorder %s301, %s302
    %p311 = scmp.eq.s32.totalorder %s29, 0
    %p312 = por %p310, %p311
    %p313 = scmp.ne.s32.totalorder %s301, %s302
    %p314 = scmp.eq.s32.totalorder %s30, 1
    %p315 = por %p313, %p314
    %p317 = scmp.ne.s32.totalorder %s302, %s316
    %p318 = scmp.eq.s32.totalorder %s30, 0
    %p319 = por %p317, %p318
    %s321 = sadd.s32 %s320, 1
    %p324 = scmp.eq.s32.totalorder %s24, 1
    %p325 = scmp.ne.s32.totalorder %s320, %s322
    %p326 = scmp.eq.s32.totalorder %s24, 0
    %p327 = por %p325, %p326
    %p328 = scmp.ne.s32.totalorder %s320, %s322
    %p329 = scmp.eq.s32.totalorder %s29, 1
    %p330 = por %p328, %p329
    %p331 = scmp.ne.s32.totalorder %s322, %s323
    %p332 = scmp.eq.s32.totalorder %s29, 0
    %p333 = por %p331, %p332
    %p334 = scmp.ne.s32.totalorder %s322, %s323
    %p335 = scmp.eq.s32.totalorder %s30, 1
    %p336 = por %p334, %p335
    %p338 = scmp.ne.s32.totalorder %s323, %s337
    %p339 = scmp.eq.s32.totalorder %s30, 0
    %p340 = por %p338, %p339
    %s342 = sadd.s32 %s341, 1
    %p345 = scmp.eq.s32.totalorder %s24, 1
    %p346 = scmp.ne.s32.totalorder %s341, %s343
    %p347 = scmp.eq.s32.totalorder %s24, 0
    %p348 = por %p346, %p347
    %p349 = scmp.ne.s32.totalorder %s341, %s343
    %p350 = scmp.eq.s32.totalorder %s29, 1
    %p351 = por %p349, %p350
    %p352 = scmp.ne.s32.totalorder %s343, %s344
    %p353 = scmp.eq.s32.totalorder %s29, 0
    %p354 = por %p352, %p353
    %p355 = scmp.ne.s32.totalorder %s343, %s344
    %p356 = scmp.eq.s32.totalorder %s30, 1
    %p357 = por %p355, %p356
    %p359 = scmp.ne.s32.totalorder %s344, %s358
    %p360 = scmp.eq.s32.totalorder %s30, 0
    %p361 = por %p359, %p360
    %s363 = sadd.s32 %s362, 1
    %p366 = scmp.eq.s32.totalorder %s24, 1
    %p367 = scmp.ne.s32.totalorder %s362, %s364
    %p368 = scmp.eq.s32.totalorder %s24, 0
    %p369 = por %p367, %p368
    %p370 = scmp.ne.s32.totalorder %s362, %s364
    %p371 = scmp.eq.s32.totalorder %s29, 1
    %p372 = por %p370, %p371
    %p373 = scmp.ne.s32.totalorder %s364, %s365
    %p374 = scmp.eq.s32.totalorder %s29, 0
    %p375 = por %p373, %p374
    %p376 = scmp.ne.s32.totalorder %s364, %s365
    %p377 = scmp.eq.s32.totalorder %s30, 1
    %p378 = por %p376, %p377
    %p380 = scmp.ne.s32.totalorder %s365, %s379
    %p381 = scmp.eq.s32.totalorder %s30, 0
    %p382 = por %p380, %p381
    %s384 = sadd.s32 %s383, 1
    %p387 = scmp.eq.s32.totalorder %s24, 1
    %p388 = scmp.ne.s32.totalorder %s383, %s385
    %p389 = scmp.eq.s32.totalorder %s24, 0
    %p390 = por %p388, %p389
    %p391 = scmp.ne.s32.totalorder %s383, %s385
    %p392 = scmp.eq.s32.totalorder %s29, 1
    %p393 = por %p391, %p392
    %p394 = scmp.ne.s32.totalorder %s385, %s386
    %p395 = scmp.eq.s32.totalorder %s29, 0
    %p396 = por %p394, %p395
    %p397 = scmp.ne.s32.totalorder %s385, %s386
    %p398 = scmp.eq.s32.totalorder %s30, 1
    %p399 = por %p397, %p398
    %p401 = scmp.ne.s32.totalorder %s386, %s400
    %p402 = scmp.eq.s32.totalorder %s30, 0
    %p403 = por %p401, %p402
    %s405 = sadd.s32 %s404, 1
    %p408 = scmp.eq.s32.totalorder %s24, 1
    %p409 = scmp.ne.s32.totalorder %s404, %s406
    %p410 = scmp.eq.s32.totalorder %s24, 0
    %p411 = por %p409, %p410
    %p412 = scmp.ne.s32.totalorder %s404, %s406
    %p413 = scmp.eq.s32.totalorder %s29, 1
    %p414 = por %p412, %p413
    %p415 = scmp.ne.s32.totalorder %s406, %s407
    %p416 = scmp.eq.s32.totalorder %s29, 0
    %p417 = por %p415, %p416
    %p418 = scmp.ne.s32.totalorder %s406, %s407
    %p419 = scmp.eq.s32.totalorder %s30, 1
    %p420 = por %p418, %p419
    %p422 = scmp.ne.s32.totalorder %s407, %s421
    %p423 = scmp.eq.s32.totalorder %s30, 0
    %p424 = por %p422, %p423
    %s425 = ssub.s32 %s24, %s31
    %p426 = scmp.eq.s32.totalorder %s425, 0
    %s428 = sadd.s32 %s427, 1
    %s429 = scalar_select %p426, %s427, %s428
    %p432 = pneg %p426
    %p433 = scmp.eq.s32.totalorder %s24, 1
    %p434 = por %p432, %p433
    %p435 = scmp.ne.s32.totalorder %s427, %s430
    %p436 = scmp.eq.s32.totalorder %s24, 0
    %p437 = por %p435, %p436
    %p438 = scmp.ne.s32.totalorder %s427, %s430
    %p439 = scmp.eq.s32.totalorder %s29, 1
    %p440 = por %p438, %p439
    %p441 = scmp.ne.s32.totalorder %s430, %s431
    %p442 = scmp.eq.s32.totalorder %s29, 0
    %p443 = por %p441, %p442
    %p444 = scmp.ne.s32.totalorder %s430, %s431
    %p445 = scmp.eq.s32.totalorder %s30, 1
    %p446 = por %p444, %p445
    %p448 = scmp.ne.s32.totalorder %s431, %s447
    %p449 = scmp.eq.s32.totalorder %s30, 0
    %p450 = por %p448, %p449
    %p451 = scmp.le.s32.totalorder 1, %s24
    %p452 = scmp.lt.s32.totalorder %s24, 3
    %p453 = pnand %p451, %p452
    %p454 = pneg %p453
    // Predicated region
    $region9: #{pidrtn_a_forward.1} parent=5 // pred_check
      _
    $region10: #{pidrtn_a_forward.1} parent=5 // pred_check_branch
      %456 = sbr.rel (%p453) target = $region12
    $region11: #{pidrtn_a_forward.1} parent=5 // pred_region
      %s457 = ssub.s32 %s24, 1
      // Predicated region
      $region13: #{pidrtn_a_forward.1} parent=11 // pred_check
        %p458 = pneg %p45
      $region14: #{pidrtn_a_forward.1} parent=11 // pred_check_branch
        %460 = sbr.rel (%p458) target = $region16
      $region15: #{pidrtn_a_forward.1} parent=11 // pred_region
        _
      $region16: #{pidrtn_a_forward.1} parent=11 // pred_fallthru
        _
      // Predicated region
      $region17: #{pidrtn_a_forward.1} parent=11 // pred_check
        %p461 = pneg %p144
      $region18: #{pidrtn_a_forward.1} parent=11 // pred_check_branch
        %463 = sbr.rel (%p461) target = $region20
      $region19: #{pidrtn_a_forward.1} parent=11 // pred_region
        _
      $region20: #{pidrtn_a_forward.1} parent=11 // pred_fallthru
        _
      // Predicated region
      $region21: #{pidrtn_a_forward.1} parent=11 // pred_check
        %p464 = pneg %p165
      $region22: #{pidrtn_a_forward.1} parent=11 // pred_check_branch
        %466 = sbr.rel (%p464) target = $region24
      $region23: #{pidrtn_a_forward.1} parent=11 // pred_region
        _
      $region24: #{pidrtn_a_forward.1} parent=11 // pred_fallthru
        _
      // Predicated region
      $region25: #{pidrtn_a_forward.1} parent=11 // pred_check
        %p467 = pneg %p186
      $region26: #{pidrtn_a_forward.1} parent=11 // pred_check_branch
        %469 = sbr.rel (%p467) target = $region28
      $region27: #{pidrtn_a_forward.1} parent=11 // pred_region
        _
      $region28: #{pidrtn_a_forward.1} parent=11 // pred_fallthru
        _
      // Predicated region
      $region29: #{pidrtn_a_forward.1} parent=11 // pred_check
        %p470 = pneg %p207
      $region30: #{pidrtn_a_forward.1} parent=11 // pred_check_branch
        %472 = sbr.rel (%p470) target = $region32
      $region31: #{pidrtn_a_forward.1} parent=11 // pred_region
        _
      $region32: #{pidrtn_a_forward.1} parent=11 // pred_fallthru
        _
      // Predicated region
      $region33: #{pidrtn_a_forward.1} parent=11 // pred_check
        %p473 = pneg %p228
      $region34: #{pidrtn_a_forward.1} parent=11 // pred_check_branch
        %475 = sbr.rel (%p473) target = $region36
      $region35: #{pidrtn_a_forward.1} parent=11 // pred_region
        _
      $region36: #{pidrtn_a_forward.1} parent=11 // pred_fallthru
        _
      // Predicated region
      $region37: #{pidrtn_a_forward.1} parent=11 // pred_check
        %p476 = pneg %p249
      $region38: #{pidrtn_a_forward.1} parent=11 // pred_check_branch
        %478 = sbr.rel (%p476) target = $region40
      $region39: #{pidrtn_a_forward.1} parent=11 // pred_region
        _
      $region40: #{pidrtn_a_forward.1} parent=11 // pred_fallthru
        _
      // Predicated region
      $region41: #{pidrtn_a_forward.1} parent=11 // pred_check
        %p479 = pneg %p270
      $region42: #{pidrtn_a_forward.1} parent=11 // pred_check_branch
        %481 = sbr.rel (%p479) target = $region44
      $region43: #{pidrtn_a_forward.1} parent=11 // pred_region
        _
      $region44: #{pidrtn_a_forward.1} parent=11 // pred_fallthru
        _
      // Predicated region
      $region45: #{pidrtn_a_forward.1} parent=11 // pred_check
        %p482 = pneg %p291
      $region46: #{pidrtn_a_forward.1} parent=11 // pred_check_branch
        %484 = sbr.rel (%p482) target = $region48
      $region47: #{pidrtn_a_forward.1} parent=11 // pred_region
        _
      $region48: #{pidrtn_a_forward.1} parent=11 // pred_fallthru
        _
      // Predicated region
      $region49: #{pidrtn_a_forward.1} parent=11 // pred_check
        %p485 = pneg %p312
      $region50: #{pidrtn_a_forward.1} parent=11 // pred_check_branch
        %487 = sbr.rel (%p485) target = $region52
      $region51: #{pidrtn_a_forward.1} parent=11 // pred_region
        _
      $region52: #{pidrtn_a_forward.1} parent=11 // pred_fallthru
        _
      // Predicated region
      $region53: #{pidrtn_a_forward.1} parent=11 // pred_check
        %p488 = pneg %p333
      $region54: #{pidrtn_a_forward.1} parent=11 // pred_check_branch
        %490 = sbr.rel (%p488) target = $region56
      $region55: #{pidrtn_a_forward.1} parent=11 // pred_region
        _
      $region56: #{pidrtn_a_forward.1} parent=11 // pred_fallthru
        _
      // Predicated region
      $region57: #{pidrtn_a_forward.1} parent=11 // pred_check
        %p491 = pneg %p354
      $region58: #{pidrtn_a_forward.1} parent=11 // pred_check_branch
        %493 = sbr.rel (%p491) target = $region60
      $region59: #{pidrtn_a_forward.1} parent=11 // pred_region
        _
      $region60: #{pidrtn_a_forward.1} parent=11 // pred_fallthru
        _
      // Predicated region
      $region61: #{pidrtn_a_forward.1} parent=11 // pred_check
        %p494 = pneg %p375
      $region62: #{pidrtn_a_forward.1} parent=11 // pred_check_branch
        %496 = sbr.rel (%p494) target = $region64
      $region63: #{pidrtn_a_forward.1} parent=11 // pred_region
        _
      $region64: #{pidrtn_a_forward.1} parent=11 // pred_fallthru
        _
      // Predicated region
      $region65: #{pidrtn_a_forward.1} parent=11 // pred_check
        %p497 = pneg %p396
      $region66: #{pidrtn_a_forward.1} parent=11 // pred_check_branch
        %499 = sbr.rel (%p497) target = $region68
      $region67: #{pidrtn_a_forward.1} parent=11 // pred_region
        _
      $region68: #{pidrtn_a_forward.1} parent=11 // pred_fallthru
        _
      // Predicated region
      $region69: #{pidrtn_a_forward.1} parent=11 // pred_check
        %p500 = pneg %p417
      $region70: #{pidrtn_a_forward.1} parent=11 // pred_check_branch
        %502 = sbr.rel (%p500) target = $region72
      $region71: #{pidrtn_a_forward.1} parent=11 // pred_region
        _
      $region72: #{pidrtn_a_forward.1} parent=11 // pred_fallthru
        _
    $region12: #{pidrtn_a_forward.1} parent=5 // pred_fallthru
      _
    %p503 = scmp.lt.s32.totalorder %s24, 2
    // Predicated region
    $region73: #{pidrtn_a_forward.1} parent=5 // pred_check
      %p504 = pneg %p503
    $region74: #{pidrtn_a_forward.1} parent=5 // pred_check_branch
      %506 = sbr.rel (%p504) target = $region76
    $region75: #{pidrtn_a_forward.1} parent=5 // pred_region
      // Predicated region
      $region77: #{pidrtn_a_forward.1} parent=75 // pred_check
        %p507 = pneg %p65
      $region78: #{pidrtn_a_forward.1} parent=75 // pred_check_branch
        %509 = sbr.rel (%p507) target = $region80
      $region79: #{pidrtn_a_forward.1} parent=75 // pred_region
        %p510 = scmp.lt.s32.totalorder %s24, 1
        %s511 = scalar_select %p510, %s24, 1
        %s512 = smul.addr %s511, 2
        %s513 = smul.addr %s512, 4
        %s514 = scalar_lea.vmem %s1, %s513
      $region80: #{pidrtn_a_forward.1} parent=75 // pred_fallthru
        _
      // Predicated region
      $region81: #{pidrtn_a_forward.1} parent=75 // pred_check
        %p515 = pneg %p91
      $region82: #{pidrtn_a_forward.1} parent=75 // pred_check_branch
        %517 = sbr.rel (%p515) target = $region84
      $region83: #{pidrtn_a_forward.1} parent=75 // pred_region
        %p518 = scmp.lt.s32.totalorder %s24, 1
        %s519 = scalar_select %p518, %s24, 1
        %s520 = smul.addr %s519, 2
        %s521 = smul.addr %s520, 4
        %s522 = scalar_lea.vmem %s2, %s521
      $region84: #{pidrtn_a_forward.1} parent=75 // pred_fallthru
        _
      // Predicated region
      $region85: #{pidrtn_a_forward.1} parent=75 // pred_check
        %p523 = pneg %p117
      $region86: #{pidrtn_a_forward.1} parent=75 // pred_check_branch
        %525 = sbr.rel (%p523) target = $region88
      $region87: #{pidrtn_a_forward.1} parent=75 // pred_region
        %p526 = scmp.lt.s32.totalorder %s24, 1
        %s527 = scalar_select %p526, %s24, 1
        %s528 = smul.addr %s527, 2
        %s529 = scalar_lea.vmem %s3, %s528
      $region88: #{pidrtn_a_forward.1} parent=75 // pred_fallthru
        _
    $region76: #{pidrtn_a_forward.1} parent=5 // pred_fallthru
      _
    %p530 = scmp.le.s32.totalorder 1, %s24
    %p531 = scmp.lt.s32.totalorder %s24, 3
    %p532 = pnand %p530, %p531
    %p533 = pneg %p532
    // Predicated region
    $region89: #{pidrtn_a_forward.1} parent=5 // pred_check
      _
    $region90: #{pidrtn_a_forward.1} parent=5 // pred_check_branch
      %535 = sbr.rel (%p532) target = $region92
    $region91: #{pidrtn_a_forward.1} parent=5 // pred_region
      %s536 = ssub.s32 %s24, 1
      %p537 = pneg %p45
      %p538 = pneg %p42
      %p539 = scmp.lt.s32.totalorder %s29, 1
      %s540 = scalar_select %p539, %s29, 1
      %s541 = smul.addr %s540, 2
      %s542 = smul.addr %s541, 4
      %s543 = scalar_lea.vmem %s1, %s542
      %p544 = pneg %p71
      %p545 = pneg %p68
      %p546 = scmp.lt.s32.totalorder %s29, 1
      %s547 = scalar_select %p546, %s29, 1
      %s548 = smul.addr %s547, 2
      %s549 = smul.addr %s548, 4
      %s550 = scalar_lea.vmem %s2, %s549
      %p551 = pneg %p97
      %p552 = pneg %p94
      %p553 = scmp.lt.s32.totalorder %s29, 1
      %s554 = scalar_select %p553, %s29, 1
      %s555 = smul.addr %s554, 2
      %s556 = scalar_lea.vmem %s3, %s555
      %p557 = pneg %p123
      %p558 = pneg %p120
      %p559 = pneg %p144
      %p560 = pneg %p141
      %p561 = pneg %p165
      %p562 = pneg %p162
      %p563 = pneg %p186
      %p564 = pneg %p183
      %p565 = pneg %p207
      %p566 = pneg %p204
      %p567 = pneg %p228
      %p568 = pneg %p225
      %p569 = pneg %p249
      %p570 = pneg %p246
      %p571 = pneg %p270
      %p572 = pneg %p267
      %p573 = pneg %p291
      %p574 = pneg %p288
      %p575 = pneg %p312
      %p576 = pneg %p309
      %p577 = pneg %p333
      %p578 = pneg %p330
      %p579 = pneg %p354
      %p580 = pneg %p351
      %p581 = pneg %p375
      %p582 = pneg %p372
      %p583 = pneg %p396
      %p584 = pneg %p393
      %p585 = pneg %p417
      %p586 = pneg %p414
      %p587 = pneg %p443
      %p588 = pneg %p440
      %p589 = scmp.lt.s32.totalorder %s29, 1
      %s590 = scalar_select %p589, %s29, 1
      %s591 = smul.addr %s590, 2
      %s592 = smul.addr %s591, 4
      %s593 = scalar_lea.vmem %s18, %s592
      %p594 = scmp.lt.s32.totalorder %s29, 1
      %s595 = scalar_select %p594, %s29, 1
      %s596 = smul.addr %s595, 2
      %s597 = smul.addr %s596, 4
      %s598 = scalar_lea.vmem %s1, %s597
      %p599 = scmp.lt.s32.totalorder %s29, 1
      %s600 = scalar_select %p599, %s29, 1
      %s601 = smul.addr %s600, 2
      %s602 = smul.addr %s601, 4
      %s603 = scalar_lea.vmem %s2, %s602
      %p604 = scmp.lt.s32.totalorder %s29, 1
      %s605 = scalar_select %p604, %s29, 1
      %s606 = smul.addr %s605, 2
      %s607 = scalar_lea.vmem %s3, %s606
      %p608 = scmp.lt.s32.totalorder %s29, 1
      %s609 = scalar_select %p608, %s29, 1
      %s610 = smul.addr %s609, 2
      %s611 = smul.addr %s610, 4
      %s612 = scalar_lea.vmem %s18, %s611
      %v613 = vld [vmem:[%s0] ss:$2 sm:$0x3]
      %s614 = scalar_lea.vmem %s0, 1
      %v615 = vld [vmem:[%s614] ss:$2 sm:$0x3]
      %v616 = vadd.f32 %v613, -1.0
      %vm617 = vcmp.ge.f32.partialorder %v616, 0.0
      %vm618 = vcmp.le.f32.partialorder %v616, 15.0
      %vm619 = vmand %vm617, %vm618
      %v620 = vadd.f32 %v615, -1.0
      %vm621 = vcmp.ge.f32.partialorder %v620, 0.0
      %vm622 = vmand %vm619, %vm621
      %vm623 = vcmp.le.f32.partialorder %v620, 15.0
      %vm624 = vmand %vm622, %vm623
      %v625 = vadd.f32 %v613, 0.0
      %vm626 = vcmp.ge.f32.partialorder %v625, 0.0
      %vm627 = vcmp.le.f32.partialorder %v625, 15.0
      %vm628 = vmand %vm626, %vm627
      %vm629 = vmand %vm628, %vm621
      %vm630 = vmand %vm629, %vm623
      %v631 = vadd.f32 %v613, 1.0
      %vm632 = vcmp.ge.f32.partialorder %v631, 0.0
      %vm633 = vcmp.le.f32.partialorder %v631, 15.0
      %vm634 = vmand %vm632, %vm633
      %vm635 = vmand %vm634, %vm621
      %vm636 = vmand %vm635, %vm623
      %v637 = vadd.f32 %v615, 0.0
      %vm638 = vcmp.ge.f32.partialorder %v637, 0.0
      %vm639 = vmand %vm619, %vm638
      %vm640 = vcmp.le.f32.partialorder %v637, 15.0
      %vm641 = vmand %vm639, %vm640
      %vm642 = vmand %vm634, %vm638
      %vm643 = vmand %vm642, %vm640
      %v644 = vadd.f32 %v615, 1.0
      %vm645 = vcmp.ge.f32.partialorder %v644, 0.0
      %vm646 = vmand %vm619, %vm645
      %vm647 = vcmp.le.f32.partialorder %v644, 15.0
      %vm648 = vmand %vm646, %vm647
      %vm649 = vmand %vm628, %vm645
      %vm650 = vmand %vm649, %vm647
      %vm651 = vmand %vm634, %vm645
      %vm652 = vmand %vm651, %vm647
      %v653 = vld [vmem:[%s598] sm:$0xff]
      %v654 = vld [vmem:[%s4] sm:$0xff]
      %v655 = vld [vmem:[%s4 + $0x8] sm:$0xff]
      %v656 = vld [vmem:[%s4 + $0x10] sm:$0xff]
      %v657 = vld [vmem:[%s4 + $0x18] sm:$0xff]
      %659 = vst [vmem:[#allocation1] ss:$2 sm:$0xff] %v653
      %v660 = vld.sshfl [vmem:[#allocation1] sm:$0xff pattern:$0x75316420]
      %v661 = vld.sshfl [vmem:[#allocation1 + $0x8] sm:$0xff pattern:$0x75316420]
      %664 = vrot.lane.b32.xlu0 %v660, 17
      %v665 = vpop.permute.xlu0 %664
      %666 = vrot.lane.b32.xlu0 %v661, 17
      %v667 = vpop.permute.xlu0 %666
      %v668 = vlaneseq
      %v669 = vand.u32 %v668, 127
      %vm670 = vcmp.lt.s32.totalorder %v669, 17
      %v671 = vsel %vm670, %v665, %v667
      %v672 = vsel %vm670, %v667, %v665
      %v673 = vsel %vm624, 1, 0
      %v674 = vperm.slane %v673, 0
      %v675 = vperm.slane %v673, 1
      %vm676 = vcmp.eq.s32.totalorder %v674, 1
      %vm677 = vcmp.eq.s32.totalorder %v675, 1
      %v678 = vsel %vm676, %v672, 0.0
      %v679 = vsel %vm677, %v671, 0.0
      %s680 = scalar_lea.vmem %s4, 32
      %v681 = vld [vmem:[%s680] sm:$0xff]
      %v682 = vld [vmem:[%s680 + $0x8] sm:$0xff]
      %v683 = vld [vmem:[%s680 + $0x10] sm:$0xff]
      %v684 = vld [vmem:[%s680 + $0x18] sm:$0xff]
      %685 = vst [vmem:[#allocation1] ss:$2 sm:$0xff] %v653
      %v686 = vld.sshfl [vmem:[#allocation1] sm:$0xff pattern:$0x75316420]
      %v687 = vld.sshfl [vmem:[#allocation1 + $0x8] sm:$0xff pattern:$0x75316420]
      %690 = vrot.lane.b32.xlu0 %v686, 16
      %v691 = vpop.permute.xlu0 %690
      %692 = vrot.lane.b32.xlu0 %v687, 16
      %v693 = vpop.permute.xlu0 %692
      %vm694 = vcmp.lt.s32.totalorder %v669, 16
      %v695 = vsel %vm694, %v691, %v693
      %v696 = vsel %vm694, %v693, %v691
      %v697 = vsel %vm630, 1, 0
      %v698 = vperm.slane %v697, 0
      %v699 = vperm.slane %v697, 1
      %vm700 = vcmp.eq.s32.totalorder %v698, 1
      %vm701 = vcmp.eq.s32.totalorder %v699, 1
      %v702 = vsel %vm700, %v696, 0.0
      %v703 = vsel %vm701, %v695, 0.0
      %vm704 = vcmask 31744
      %v706 = vsel %vm704, %v681, 0
      %v709 = vsel %vm704, %v682, 0
      %v712 = vsel %vm704, %v683, 0
      %v715 = vsel %vm704, %v684, 0
      %vm717 = vcmask 1043456
      %v719 = vsel %vm717, %v702, 0
      %v722 = vsel %vm717, %v703, 0
      %724 = vmatpush.msra.mxu0 0.0
      %725 = vmatpush.msra.mxu0 0.0
      %726 = vmatpush.msra.mxu0 0.0
      %727 = vmatpush.msra.mxu0 0.0
      %728 = vmatpush.msra.mxu0 0.0
      %729 = vmatpush.msra.mxu0 0.0
      %730 = vmatpush.msra.mxu0 0.0
      %731 = vmatpush.msra.mxu0 0.0
      %732 = vmatpush.msra.mxu0 0.0
      %733 = vmatpush.msra.mxu0 0.0
      %734 = vmatpush.msra.mxu0 0.0
      %735 = vmatpush.msra.mxu0 0.0
      %736 = vmatpush.msra.mxu0 0.0
      %737 = vmatpush.msra.mxu0 0.0
      %738 = vmatpush.msra.mxu0 0.0
      %739 = vmatpush.msra.mxu0 %v719
      %740 = vmatmul.f32.gmra.mxu0 %v706
      %v741 = vpop.f32.mrf.mxu0
      %v742 = vadd.f32 0.0, %v741
      %743 = vmatmul.f32.gmra.mxu0 %v709
      %v744 = vpop.f32.mrf.mxu0
      %v745 = vadd.f32 0.0, %v744
      %746 = vmatmul.f32.gmra.mxu0 %v712
      %v747 = vpop.f32.mrf.mxu0
      %v748 = vadd.f32 0.0, %v747
      %749 = vmatmul.f32.gmra.mxu0 %v715
      %v750 = vpop.f32.mrf.mxu0
      %v751 = vadd.f32 0.0, %v750
      %752 = vdwg.mxu0
      %753 = vmatpush.msra.mxu0 0.0
      %754 = vmatpush.msra.mxu0 0.0
      %755 = vmatpush.msra.mxu0 0.0
      %756 = vmatpush.msra.mxu0 0.0
      %757 = vmatpush.msra.mxu0 0.0
      %758 = vmatpush.msra.mxu0 0.0
      %759 = vmatpush.msra.mxu0 0.0
      %760 = vmatpush.msra.mxu0 0.0
      %761 = vmatpush.msra.mxu0 0.0
      %762 = vmatpush.msra.mxu0 0.0
      %763 = vmatpush.msra.mxu0 0.0
      %764 = vmatpush.msra.mxu0 0.0
      %765 = vmatpush.msra.mxu0 0.0
      %766 = vmatpush.msra.mxu0 0.0
      %767 = vmatpush.msra.mxu0 0.0
      %768 = vmatpush.msra.mxu0 %v722
      %769 = vmatmul.f32.gmra.mxu0 %v706
      %v770 = vpop.f32.mrf.mxu0
      %v771 = vadd.f32 0.0, %v770
      %772 = vmatmul.f32.gmra.mxu0 %v709
      %v773 = vpop.f32.mrf.mxu0
      %v774 = vadd.f32 0.0, %v773
      %775 = vmatmul.f32.gmra.mxu0 %v712
      %v776 = vpop.f32.mrf.mxu0
      %v777 = vadd.f32 0.0, %v776
      %778 = vmatmul.f32.gmra.mxu0 %v715
      %v779 = vpop.f32.mrf.mxu0
      %v780 = vadd.f32 0.0, %v779
      %781 = vdwg.mxu0
      %v783 = vsel %vm704, %v654, 0
      %v786 = vsel %vm704, %v655, 0
      %v789 = vsel %vm704, %v656, 0
      %v792 = vsel %vm704, %v657, 0
      %v795 = vsel %vm717, %v678, 0
      %v798 = vsel %vm717, %v679, 0
      %800 = vmatpush.msra.mxu0 0.0
      %801 = vmatpush.msra.mxu0 0.0
      %802 = vmatpush.msra.mxu0 0.0
      %803 = vmatpush.msra.mxu0 0.0
      %804 = vmatpush.msra.mxu0 0.0
      %805 = vmatpush.msra.mxu0 0.0
      %806 = vmatpush.msra.mxu0 0.0
      %807 = vmatpush.msra.mxu0 0.0
      %808 = vmatpush.msra.mxu0 0.0
      %809 = vmatpush.msra.mxu0 0.0
      %810 = vmatpush.msra.mxu0 0.0
      %811 = vmatpush.msra.mxu0 0.0
      %812 = vmatpush.msra.mxu0 0.0
      %813 = vmatpush.msra.mxu0 0.0
      %814 = vmatpush.msra.mxu0 0.0
      %815 = vmatpush.msra.mxu0 %v795
      %816 = vmatmul.f32.gmra.mxu0 %v783
      %v817 = vpop.f32.mrf.mxu0
      %v818 = vadd.f32 %v742, %v817
      %819 = vmatmul.f32.gmra.mxu0 %v786
      %v820 = vpop.f32.mrf.mxu0
      %v821 = vadd.f32 %v745, %v820
      %822 = vmatmul.f32.gmra.mxu0 %v789
      %v823 = vpop.f32.mrf.mxu0
      %v824 = vadd.f32 %v748, %v823
      %825 = vmatmul.f32.gmra.mxu0 %v792
      %v826 = vpop.f32.mrf.mxu0
      %v827 = vadd.f32 %v751, %v826
      %828 = vdwg.mxu0
      %829 = vmatpush.msra.mxu0 0.0
      %830 = vmatpush.msra.mxu0 0.0
      %831 = vmatpush.msra.mxu0 0.0
      %832 = vmatpush.msra.mxu0 0.0
      %833 = vmatpush.msra.mxu0 0.0
      %834 = vmatpush.msra.mxu0 0.0
      %835 = vmatpush.msra.mxu0 0.0
      %836 = vmatpush.msra.mxu0 0.0
      %837 = vmatpush.msra.mxu0 0.0
      %838 = vmatpush.msra.mxu0 0.0
      %839 = vmatpush.msra.mxu0 0.0
      %840 = vmatpush.msra.mxu0 0.0
      %841 = vmatpush.msra.mxu0 0.0
      %842 = vmatpush.msra.mxu0 0.0
      %843 = vmatpush.msra.mxu0 0.0
      %844 = vmatpush.msra.mxu0 %v798
      %845 = vmatmul.f32.gmra.mxu0 %v783
      %v846 = vpop.f32.mrf.mxu0
      %v847 = vadd.f32 %v771, %v846
      %848 = vmatmul.f32.gmra.mxu0 %v786
      %v849 = vpop.f32.mrf.mxu0
      %v850 = vadd.f32 %v774, %v849
      %851 = vmatmul.f32.gmra.mxu0 %v789
      %v852 = vpop.f32.mrf.mxu0
      %v853 = vadd.f32 %v777, %v852
      %854 = vmatmul.f32.gmra.mxu0 %v792
      %v855 = vpop.f32.mrf.mxu0
      %v856 = vadd.f32 %v780, %v855
      %857 = vdwg.mxu0
      %s858 = scalar_lea.vmem %s4, 64
      %v859 = vld [vmem:[%s858] sm:$0xff]
      %v860 = vld [vmem:[%s858 + $0x8] sm:$0xff]
      %v861 = vld [vmem:[%s858 + $0x10] sm:$0xff]
      %v862 = vld [vmem:[%s858 + $0x18] sm:$0xff]
      %863 = vst [vmem:[#allocation1] ss:$2 sm:$0xff] %v653
      %v864 = vld.sshfl [vmem:[#allocation1] sm:$0xff pattern:$0x75316420]
      %v865 = vld.sshfl [vmem:[#allocation1 + $0x8] sm:$0xff pattern:$0x75316420]
      %868 = vrot.lane.b32.xlu0 %v864, 15
      %v869 = vpop.permute.xlu0 %868
      %870 = vrot.lane.b32.xlu0 %v865, 15
      %v871 = vpop.permute.xlu0 %870
      %vm872 = vcmp.lt.s32.totalorder %v669, 15
      %v873 = vsel %vm872, %v869, %v871
      %v874 = vsel %vm872, %v871, %v869
      %v875 = vsel %vm636, 1, 0
      %v876 = vperm.slane %v875, 0
      %v877 = vperm.slane %v875, 1
      %vm878 = vcmp.eq.s32.totalorder %v876, 1
      %vm879 = vcmp.eq.s32.totalorder %v877, 1
      %v880 = vsel %vm878, %v874, 0.0
      %v881 = vsel %vm879, %v873, 0.0
      %v883 = vsel %vm704, %v859, 0
      %v886 = vsel %vm704, %v860, 0
      %v889 = vsel %vm704, %v861, 0
      %v892 = vsel %vm704, %v862, 0
      %v895 = vsel %vm717, %v880, 0
      %v898 = vsel %vm717, %v881, 0
      %900 = vmatpush.msra.mxu0 0.0
      %901 = vmatpush.msra.mxu0 0.0
      %902 = vmatpush.msra.mxu0 0.0
      %903 = vmatpush.msra.mxu0 0.0
      %904 = vmatpush.msra.mxu0 0.0
      %905 = vmatpush.msra.mxu0 0.0
      %906 = vmatpush.msra.mxu0 0.0
      %907 = vmatpush.msra.mxu0 0.0
      %908 = vmatpush.msra.mxu0 0.0
      %909 = vmatpush.msra.mxu0 0.0
      %910 = vmatpush.msra.mxu0 0.0
      %911 = vmatpush.msra.mxu0 0.0
      %912 = vmatpush.msra.mxu0 0.0
      %913 = vmatpush.msra.mxu0 0.0
      %914 = vmatpush.msra.mxu0 0.0
      %915 = vmatpush.msra.mxu0 %v895
      %916 = vmatmul.f32.gmra.mxu0 %v883
      %v917 = vpop.f32.mrf.mxu0
      %v918 = vadd.f32 0.0, %v917
      %919 = vmatmul.f32.gmra.mxu0 %v886
      %v920 = vpop.f32.mrf.mxu0
      %v921 = vadd.f32 0.0, %v920
      %922 = vmatmul.f32.gmra.mxu0 %v889
      %v923 = vpop.f32.mrf.mxu0
      %v924 = vadd.f32 0.0, %v923
      %925 = vmatmul.f32.gmra.mxu0 %v892
      %v926 = vpop.f32.mrf.mxu0
      %v927 = vadd.f32 0.0, %v926
      %928 = vdwg.mxu0
      %929 = vmatpush.msra.mxu0 0.0
      %930 = vmatpush.msra.mxu0 0.0
      %931 = vmatpush.msra.mxu0 0.0
      %932 = vmatpush.msra.mxu0 0.0
      %933 = vmatpush.msra.mxu0 0.0
      %934 = vmatpush.msra.mxu0 0.0
      %935 = vmatpush.msra.mxu0 0.0
      %936 = vmatpush.msra.mxu0 0.0
      %937 = vmatpush.msra.mxu0 0.0
      %938 = vmatpush.msra.mxu0 0.0
      %939 = vmatpush.msra.mxu0 0.0
      %940 = vmatpush.msra.mxu0 0.0
      %941 = vmatpush.msra.mxu0 0.0
      %942 = vmatpush.msra.mxu0 0.0
      %943 = vmatpush.msra.mxu0 0.0
      %944 = vmatpush.msra.mxu0 %v898
      %945 = vmatmul.f32.gmra.mxu0 %v883
      %v946 = vpop.f32.mrf.mxu0
      %v947 = vadd.f32 0.0, %v946
      %948 = vmatmul.f32.gmra.mxu0 %v886
      %v949 = vpop.f32.mrf.mxu0
      %v950 = vadd.f32 0.0, %v949
      %951 = vmatmul.f32.gmra.mxu0 %v889
      %v952 = vpop.f32.mrf.mxu0
      %v953 = vadd.f32 0.0, %v952
      %954 = vmatmul.f32.gmra.mxu0 %v892
      %v955 = vpop.f32.mrf.mxu0
      %v956 = vadd.f32 0.0, %v955
      %957 = vdwg.mxu0
      %v958 = vadd.f32 %v818, %v918
      %v959 = vadd.f32 %v847, %v947
      %v960 = vadd.f32 %v821, %v921
      %v961 = vadd.f32 %v850, %v950
      %v962 = vadd.f32 %v824, %v924
      %v963 = vadd.f32 %v853, %v953
      %v964 = vadd.f32 %v827, %v927
      %v965 = vadd.f32 %v856, %v956
      %s966 = scalar_lea.vmem %s4, 96
      %v967 = vld [vmem:[%s966] sm:$0xff]
      %v968 = vld [vmem:[%s966 + $0x8] sm:$0xff]
      %v969 = vld [vmem:[%s966 + $0x10] sm:$0xff]
      %v970 = vld [vmem:[%s966 + $0x18] sm:$0xff]
      %971 = vst [vmem:[#allocation1] ss:$2 sm:$0xff] %v653
      %v972 = vld.sshfl [vmem:[#allocation1] sm:$0xff pattern:$0x75316420]
      %v973 = vld.sshfl [vmem:[#allocation1 + $0x8] sm:$0xff pattern:$0x75316420]
      %976 = vrot.lane.b32.xlu0 %v972, 1
      %v977 = vpop.permute.xlu0 %976
      %978 = vrot.lane.b32.xlu0 %v973, 1
      %v979 = vpop.permute.xlu0 %978
      %vm980 = vcmp.lt.s32.totalorder %v669, 1
      %v981 = vsel %vm980, %v977, %v979
      %v982 = vsel %vm980, %v979, %v977
      %v983 = vsel %vm641, 1, 0
      %v984 = vperm.slane %v983, 0
      %v985 = vperm.slane %v983, 1
      %vm986 = vcmp.eq.s32.totalorder %v984, 1
      %vm987 = vcmp.eq.s32.totalorder %v985, 1
      %v988 = vsel %vm986, %v982, 0.0
      %v989 = vsel %vm987, %v981, 0.0
      %v991 = vsel %vm704, %v967, 0
      %v994 = vsel %vm704, %v968, 0
      %v997 = vsel %vm704, %v969, 0
      %v1000 = vsel %vm704, %v970, 0
      %v1003 = vsel %vm717, %v988, 0
      %v1006 = vsel %vm717, %v989, 0
      %1008 = vmatpush.msra.mxu0 0.0
      %1009 = vmatpush.msra.mxu0 0.0
      %1010 = vmatpush.msra.mxu0 0.0
      %1011 = vmatpush.msra.mxu0 0.0
      %1012 = vmatpush.msra.mxu0 0.0
      %1013 = vmatpush.msra.mxu0 0.0
      %1014 = vmatpush.msra.mxu0 0.0
      %1015 = vmatpush.msra.mxu0 0.0
      %1016 = vmatpush.msra.mxu0 0.0
      %1017 = vmatpush.msra.mxu0 0.0
      %1018 = vmatpush.msra.mxu0 0.0
      %1019 = vmatpush.msra.mxu0 0.0
      %1020 = vmatpush.msra.mxu0 0.0
      %1021 = vmatpush.msra.mxu0 0.0
      %1022 = vmatpush.msra.mxu0 0.0
      %1023 = vmatpush.msra.mxu0 %v1003
      %1024 = vmatmul.f32.gmra.mxu0 %v991
      %v1025 = vpop.f32.mrf.mxu0
      %v1026 = vadd.f32 0.0, %v1025
      %1027 = vmatmul.f32.gmra.mxu0 %v994
      %v1028 = vpop.f32.mrf.mxu0
      %v1029 = vadd.f32 0.0, %v1028
      %1030 = vmatmul.f32.gmra.mxu0 %v997
      %v1031 = vpop.f32.mrf.mxu0
      %v1032 = vadd.f32 0.0, %v1031
      %1033 = vmatmul.f32.gmra.mxu0 %v1000
      %v1034 = vpop.f32.mrf.mxu0
      %v1035 = vadd.f32 0.0, %v1034
      %1036 = vdwg.mxu0
      %1037 = vmatpush.msra.mxu0 0.0
      %1038 = vmatpush.msra.mxu0 0.0
      %1039 = vmatpush.msra.mxu0 0.0
      %1040 = vmatpush.msra.mxu0 0.0
      %1041 = vmatpush.msra.mxu0 0.0
      %1042 = vmatpush.msra.mxu0 0.0
      %1043 = vmatpush.msra.mxu0 0.0
      %1044 = vmatpush.msra.mxu0 0.0
      %1045 = vmatpush.msra.mxu0 0.0
      %1046 = vmatpush.msra.mxu0 0.0
      %1047 = vmatpush.msra.mxu0 0.0
      %1048 = vmatpush.msra.mxu0 0.0
      %1049 = vmatpush.msra.mxu0 0.0
      %1050 = vmatpush.msra.mxu0 0.0
      %1051 = vmatpush.msra.mxu0 0.0
      %1052 = vmatpush.msra.mxu0 %v1006
      %1053 = vmatmul.f32.gmra.mxu0 %v991
      %v1054 = vpop.f32.mrf.mxu0
      %v1055 = vadd.f32 0.0, %v1054
      %1056 = vmatmul.f32.gmra.mxu0 %v994
      %v1057 = vpop.f32.mrf.mxu0
      %v1058 = vadd.f32 0.0, %v1057
      %1059 = vmatmul.f32.gmra.mxu0 %v997
      %v1060 = vpop.f32.mrf.mxu0
      %v1061 = vadd.f32 0.0, %v1060
      %1062 = vmatmul.f32.gmra.mxu0 %v1000
      %v1063 = vpop.f32.mrf.mxu0
      %v1064 = vadd.f32 0.0, %v1063
      %1065 = vdwg.mxu0
      %v1066 = vadd.f32 %v958, %v1026
      %v1067 = vadd.f32 %v959, %v1055
      %v1068 = vadd.f32 %v960, %v1029
      %v1069 = vadd.f32 %v961, %v1058
      %v1070 = vadd.f32 %v962, %v1032
      %v1071 = vadd.f32 %v963, %v1061
      %v1072 = vadd.f32 %v964, %v1035
      %v1073 = vadd.f32 %v965, %v1064
      %s1074 = scalar_lea.vmem %s4, 128
      %v1075 = vld [vmem:[%s1074] sm:$0xff]
      %v1076 = vld [vmem:[%s1074 + $0x8] sm:$0xff]
      %v1077 = vld [vmem:[%s1074 + $0x10] sm:$0xff]
      %v1078 = vld [vmem:[%s1074 + $0x18] sm:$0xff]
      %1079 = vst [vmem:[#allocation1] ss:$2 sm:$0xff] %v653
      %v1080 = vld.sshfl [vmem:[#allocation1] sm:$0xff pattern:$0x75316420]
      %v1081 = vld.sshfl [vmem:[#allocation1 + $0x8] sm:$0xff pattern:$0x75316420]
      %v1083 = vsel %vm704, %v1075, 0
      %v1086 = vsel %vm704, %v1076, 0
      %v1089 = vsel %vm704, %v1077, 0
      %v1092 = vsel %vm704, %v1078, 0
      %v1094 = vsel %vm717, %v1080, 0
      %v1096 = vsel %vm717, %v1081, 0
      %1098 = vmatpush.msra.mxu0 0.0
      %1099 = vmatpush.msra.mxu0 0.0
      %1100 = vmatpush.msra.mxu0 0.0
      %1101 = vmatpush.msra.mxu0 0.0
      %1102 = vmatpush.msra.mxu0 0.0
      %1103 = vmatpush.msra.mxu0 0.0
      %1104 = vmatpush.msra.mxu0 0.0
      %1105 = vmatpush.msra.mxu0 0.0
      %1106 = vmatpush.msra.mxu0 0.0
      %1107 = vmatpush.msra.mxu0 0.0
      %1108 = vmatpush.msra.mxu0 0.0
      %1109 = vmatpush.msra.mxu0 0.0
      %1110 = vmatpush.msra.mxu0 0.0
      %1111 = vmatpush.msra.mxu0 0.0
      %1112 = vmatpush.msra.mxu0 0.0
      %1113 = vmatpush.msra.mxu0 %v1094
      %1114 = vmatmul.f32.gmra.mxu0 %v1083
      %v1115 = vpop.f32.mrf.mxu0
      %v1116 = vadd.f32 0.0, %v1115
      %1117 = vmatmul.f32.gmra.mxu0 %v1086
      %v1118 = vpop.f32.mrf.mxu0
      %v1119 = vadd.f32 0.0, %v1118
      %1120 = vmatmul.f32.gmra.mxu0 %v1089
      %v1121 = vpop.f32.mrf.mxu0
      %v1122 = vadd.f32 0.0, %v1121
      %1123 = vmatmul.f32.gmra.mxu0 %v1092
      %v1124 = vpop.f32.mrf.mxu0
      %v1125 = vadd.f32 0.0, %v1124
      %1126 = vdwg.mxu0
      %1127 = vmatpush.msra.mxu0 0.0
      %1128 = vmatpush.msra.mxu0 0.0
      %1129 = vmatpush.msra.mxu0 0.0
      %1130 = vmatpush.msra.mxu0 0.0
      %1131 = vmatpush.msra.mxu0 0.0
      %1132 = vmatpush.msra.mxu0 0.0
      %1133 = vmatpush.msra.mxu0 0.0
      %1134 = vmatpush.msra.mxu0 0.0
      %1135 = vmatpush.msra.mxu0 0.0
      %1136 = vmatpush.msra.mxu0 0.0
      %1137 = vmatpush.msra.mxu0 0.0
      %1138 = vmatpush.msra.mxu0 0.0
      %1139 = vmatpush.msra.mxu0 0.0
      %1140 = vmatpush.msra.mxu0 0.0
      %1141 = vmatpush.msra.mxu0 0.0
      %1142 = vmatpush.msra.mxu0 %v1096
      %1143 = vmatmul.f32.gmra.mxu0 %v1083
      %v1144 = vpop.f32.mrf.mxu0
      %v1145 = vadd.f32 0.0, %v1144
      %1146 = vmatmul.f32.gmra.mxu0 %v1086
      %v1147 = vpop.f32.mrf.mxu0
      %v1148 = vadd.f32 0.0, %v1147
      %1149 = vmatmul.f32.gmra.mxu0 %v1089
      %v1150 = vpop.f32.mrf.mxu0
      %v1151 = vadd.f32 0.0, %v1150
      %1152 = vmatmul.f32.gmra.mxu0 %v1092
      %v1153 = vpop.f32.mrf.mxu0
      %v1154 = vadd.f32 0.0, %v1153
      %1155 = vdwg.mxu0
      %v1156 = vadd.f32 %v1066, %v1116
      %v1157 = vadd.f32 %v1067, %v1145
      %v1158 = vadd.f32 %v1068, %v1119
      %v1159 = vadd.f32 %v1069, %v1148
      %v1160 = vadd.f32 %v1070, %v1122
      %v1161 = vadd.f32 %v1071, %v1151
      %v1162 = vadd.f32 %v1072, %v1125
      %v1163 = vadd.f32 %v1073, %v1154
      %s1164 = scalar_lea.vmem %s4, 160
      %v1165 = vld [vmem:[%s1164] sm:$0xff]
      %v1166 = vld [vmem:[%s1164 + $0x8] sm:$0xff]
      %v1167 = vld [vmem:[%s1164 + $0x10] sm:$0xff]
      %v1168 = vld [vmem:[%s1164 + $0x18] sm:$0xff]
      %1169 = vst [vmem:[#allocation1] ss:$2 sm:$0xff] %v653
      %v1170 = vld.sshfl [vmem:[#allocation1] sm:$0xff pattern:$0x75316420]
      %v1171 = vld.sshfl [vmem:[#allocation1 + $0x8] sm:$0xff pattern:$0x75316420]
      %1174 = vrot.lane.b32.xlu0 %v1170, 127
      %v1175 = vpop.permute.xlu0 %1174
      %1176 = vrot.lane.b32.xlu0 %v1171, 127
      %v1177 = vpop.permute.xlu0 %1176
      %vm1178 = vcmp.lt.s32.totalorder %v669, 127
      %v1179 = vsel %vm1178, %v1175, %v1177
      %v1180 = vsel %vm1178, %v1177, %v1175
      %v1181 = vsel %vm643, 1, 0
      %v1182 = vperm.slane %v1181, 0
      %v1183 = vperm.slane %v1181, 1
      %vm1184 = vcmp.eq.s32.totalorder %v1182, 1
      %vm1185 = vcmp.eq.s32.totalorder %v1183, 1
      %v1186 = vsel %vm1184, %v1179, 0.0
      %v1187 = vsel %vm1185, %v1180, 0.0
      %v1189 = vsel %vm704, %v1165, 0
      %v1192 = vsel %vm704, %v1166, 0
      %v1195 = vsel %vm704, %v1167, 0
      %v1198 = vsel %vm704, %v1168, 0
      %v1201 = vsel %vm717, %v1186, 0
      %v1204 = vsel %vm717, %v1187, 0
      %1206 = vmatpush.msra.mxu0 0.0
      %1207 = vmatpush.msra.mxu0 0.0
      %1208 = vmatpush.msra.mxu0 0.0
      %1209 = vmatpush.msra.mxu0 0.0
      %1210 = vmatpush.msra.mxu0 0.0
      %1211 = vmatpush.msra.mxu0 0.0
      %1212 = vmatpush.msra.mxu0 0.0
      %1213 = vmatpush.msra.mxu0 0.0
      %1214 = vmatpush.msra.mxu0 0.0
      %1215 = vmatpush.msra.mxu0 0.0
      %1216 = vmatpush.msra.mxu0 0.0
      %1217 = vmatpush.msra.mxu0 0.0
      %1218 = vmatpush.msra.mxu0 0.0
      %1219 = vmatpush.msra.mxu0 0.0
      %1220 = vmatpush.msra.mxu0 0.0
      %1221 = vmatpush.msra.mxu0 %v1201
      %1222 = vmatmul.f32.gmra.mxu0 %v1189
      %v1223 = vpop.f32.mrf.mxu0
      %v1224 = vadd.f32 0.0, %v1223
      %1225 = vmatmul.f32.gmra.mxu0 %v1192
      %v1226 = vpop.f32.mrf.mxu0
      %v1227 = vadd.f32 0.0, %v1226
      %1228 = vmatmul.f32.gmra.mxu0 %v1195
      %v1229 = vpop.f32.mrf.mxu0
      %v1230 = vadd.f32 0.0, %v1229
      %1231 = vmatmul.f32.gmra.mxu0 %v1198
      %v1232 = vpop.f32.mrf.mxu0
      %v1233 = vadd.f32 0.0, %v1232
      %1234 = vdwg.mxu0
      %1235 = vmatpush.msra.mxu0 0.0
      %1236 = vmatpush.msra.mxu0 0.0
      %1237 = vmatpush.msra.mxu0 0.0
      %1238 = vmatpush.msra.mxu0 0.0
      %1239 = vmatpush.msra.mxu0 0.0
      %1240 = vmatpush.msra.mxu0 0.0
      %1241 = vmatpush.msra.mxu0 0.0
      %1242 = vmatpush.msra.mxu0 0.0
      %1243 = vmatpush.msra.mxu0 0.0
      %1244 = vmatpush.msra.mxu0 0.0
      %1245 = vmatpush.msra.mxu0 0.0
      %1246 = vmatpush.msra.mxu0 0.0
      %1247 = vmatpush.msra.mxu0 0.0
      %1248 = vmatpush.msra.mxu0 0.0
      %1249 = vmatpush.msra.mxu0 0.0
      %1250 = vmatpush.msra.mxu0 %v1204
      %1251 = vmatmul.f32.gmra.mxu0 %v1189
      %v1252 = vpop.f32.mrf.mxu0
      %v1253 = vadd.f32 0.0, %v1252
      %1254 = vmatmul.f32.gmra.mxu0 %v1192
      %v1255 = vpop.f32.mrf.mxu0
      %v1256 = vadd.f32 0.0, %v1255
      %1257 = vmatmul.f32.gmra.mxu0 %v1195
      %v1258 = vpop.f32.mrf.mxu0
      %v1259 = vadd.f32 0.0, %v1258
      %1260 = vmatmul.f32.gmra.mxu0 %v1198
      %v1261 = vpop.f32.mrf.mxu0
      %v1262 = vadd.f32 0.0, %v1261
      %1263 = vdwg.mxu0
      %v1264 = vadd.f32 %v1156, %v1224
      %v1265 = vadd.f32 %v1157, %v1253
      %v1266 = vadd.f32 %v1158, %v1227
      %v1267 = vadd.f32 %v1159, %v1256
      %v1268 = vadd.f32 %v1160, %v1230
      %v1269 = vadd.f32 %v1161, %v1259
      %v1270 = vadd.f32 %v1162, %v1233
      %v1271 = vadd.f32 %v1163, %v1262
      %s1272 = scalar_lea.vmem %s4, 192
      %v1273 = vld [vmem:[%s1272] sm:$0xff]
      %v1274 = vld [vmem:[%s1272 + $0x8] sm:$0xff]
      %v1275 = vld [vmem:[%s1272 + $0x10] sm:$0xff]
      %v1276 = vld [vmem:[%s1272 + $0x18] sm:$0xff]
      %1277 = vst [vmem:[#allocation1] ss:$2 sm:$0xff] %v653
      %v1278 = vld.sshfl [vmem:[#allocation1] sm:$0xff pattern:$0x75316420]
      %v1279 = vld.sshfl [vmem:[#allocation1 + $0x8] sm:$0xff pattern:$0x75316420]
      %1282 = vrot.lane.b32.xlu0 %v1278, 113
      %v1283 = vpop.permute.xlu0 %1282
      %1284 = vrot.lane.b32.xlu0 %v1279, 113
      %v1285 = vpop.permute.xlu0 %1284
      %vm1286 = vcmp.lt.s32.totalorder %v669, 113
      %v1287 = vsel %vm1286, %v1283, %v1285
      %v1288 = vsel %vm1286, %v1285, %v1283
      %v1289 = vsel %vm648, 1, 0
      %v1290 = vperm.slane %v1289, 0
      %v1291 = vperm.slane %v1289, 1
      %vm1292 = vcmp.eq.s32.totalorder %v1290, 1
      %vm1293 = vcmp.eq.s32.totalorder %v1291, 1
      %v1294 = vsel %vm1292, %v1287, 0.0
      %v1295 = vsel %vm1293, %v1288, 0.0
      %v1297 = vsel %vm704, %v1273, 0
      %v1300 = vsel %vm704, %v1274, 0
      %v1303 = vsel %vm704, %v1275, 0
      %v1306 = vsel %vm704, %v1276, 0
      %v1309 = vsel %vm717, %v1294, 0
      %v1312 = vsel %vm717, %v1295, 0
      %1314 = vmatpush.msra.mxu0 0.0
      %1315 = vmatpush.msra.mxu0 0.0
      %1316 = vmatpush.msra.mxu0 0.0
      %1317 = vmatpush.msra.mxu0 0.0
      %1318 = vmatpush.msra.mxu0 0.0
      %1319 = vmatpush.msra.mxu0 0.0
      %1320 = vmatpush.msra.mxu0 0.0
      %1321 = vmatpush.msra.mxu0 0.0
      %1322 = vmatpush.msra.mxu0 0.0
      %1323 = vmatpush.msra.mxu0 0.0
      %1324 = vmatpush.msra.mxu0 0.0
      %1325 = vmatpush.msra.mxu0 0.0
      %1326 = vmatpush.msra.mxu0 0.0
      %1327 = vmatpush.msra.mxu0 0.0
      %1328 = vmatpush.msra.mxu0 0.0
      %1329 = vmatpush.msra.mxu0 %v1309
      %1330 = vmatmul.f32.gmra.mxu0 %v1297
      %v1331 = vpop.f32.mrf.mxu0
      %v1332 = vadd.f32 0.0, %v1331
      %1333 = vmatmul.f32.gmra.mxu0 %v1300
      %v1334 = vpop.f32.mrf.mxu0
      %v1335 = vadd.f32 0.0, %v1334
      %1336 = vmatmul.f32.gmra.mxu0 %v1303
      %v1337 = vpop.f32.mrf.mxu0
      %v1338 = vadd.f32 0.0, %v1337
      %1339 = vmatmul.f32.gmra.mxu0 %v1306
      %v1340 = vpop.f32.mrf.mxu0
      %v1341 = vadd.f32 0.0, %v1340
      %1342 = vdwg.mxu0
      %1343 = vmatpush.msra.mxu0 0.0
      %1344 = vmatpush.msra.mxu0 0.0
      %1345 = vmatpush.msra.mxu0 0.0
      %1346 = vmatpush.msra.mxu0 0.0
      %1347 = vmatpush.msra.mxu0 0.0
      %1348 = vmatpush.msra.mxu0 0.0
      %1349 = vmatpush.msra.mxu0 0.0
      %1350 = vmatpush.msra.mxu0 0.0
      %1351 = vmatpush.msra.mxu0 0.0
      %1352 = vmatpush.msra.mxu0 0.0
      %1353 = vmatpush.msra.mxu0 0.0
      %1354 = vmatpush.msra.mxu0 0.0
      %1355 = vmatpush.msra.mxu0 0.0
      %1356 = vmatpush.msra.mxu0 0.0
      %1357 = vmatpush.msra.mxu0 0.0
      %1358 = vmatpush.msra.mxu0 %v1312
      %1359 = vmatmul.f32.gmra.mxu0 %v1297
      %v1360 = vpop.f32.mrf.mxu0
      %v1361 = vadd.f32 0.0, %v1360
      %1362 = vmatmul.f32.gmra.mxu0 %v1300
      %v1363 = vpop.f32.mrf.mxu0
      %v1364 = vadd.f32 0.0, %v1363
      %1365 = vmatmul.f32.gmra.mxu0 %v1303
      %v1366 = vpop.f32.mrf.mxu0
      %v1367 = vadd.f32 0.0, %v1366
      %1368 = vmatmul.f32.gmra.mxu0 %v1306
      %v1369 = vpop.f32.mrf.mxu0
      %v1370 = vadd.f32 0.0, %v1369
      %1371 = vdwg.mxu0
      %v1372 = vadd.f32 %v1264, %v1332
      %v1373 = vadd.f32 %v1265, %v1361
      %v1374 = vadd.f32 %v1266, %v1335
      %v1375 = vadd.f32 %v1267, %v1364
      %v1376 = vadd.f32 %v1268, %v1338
      %v1377 = vadd.f32 %v1269, %v1367
      %v1378 = vadd.f32 %v1270, %v1341
      %v1379 = vadd.f32 %v1271, %v1370
      %s1380 = scalar_lea.vmem %s4, 224
      %v1381 = vld [vmem:[%s1380] sm:$0xff]
      %v1382 = vld [vmem:[%s1380 + $0x8] sm:$0xff]
      %v1383 = vld [vmem:[%s1380 + $0x10] sm:$0xff]
      %v1384 = vld [vmem:[%s1380 + $0x18] sm:$0xff]
      %1385 = vst [vmem:[#allocation1] ss:$2 sm:$0xff] %v653
      %v1386 = vld.sshfl [vmem:[#allocation1] sm:$0xff pattern:$0x75316420]
      %v1387 = vld.sshfl [vmem:[#allocation1 + $0x8] sm:$0xff pattern:$0x75316420]
      %1390 = vrot.lane.b32.xlu0 %v1386, 112
      %v1391 = vpop.permute.xlu0 %1390
      %1392 = vrot.lane.b32.xlu0 %v1387, 112
      %v1393 = vpop.permute.xlu0 %1392
      %vm1394 = vcmp.lt.s32.totalorder %v669, 112
      %v1395 = vsel %vm1394, %v1391, %v1393
      %v1396 = vsel %vm1394, %v1393, %v1391
      %v1397 = vsel %vm650, 1, 0
      %v1398 = vperm.slane %v1397, 0
      %v1399 = vperm.slane %v1397, 1
      %vm1400 = vcmp.eq.s32.totalorder %v1398, 1
      %vm1401 = vcmp.eq.s32.totalorder %v1399, 1
      %v1402 = vsel %vm1400, %v1395, 0.0
      %v1403 = vsel %vm1401, %v1396, 0.0
      %v1405 = vsel %vm704, %v1381, 0
      %v1408 = vsel %vm704, %v1382, 0
      %v1411 = vsel %vm704, %v1383, 0
      %v1414 = vsel %vm704, %v1384, 0
      %v1417 = vsel %vm717, %v1402, 0
      %v1420 = vsel %vm717, %v1403, 0
      %1422 = vmatpush.msra.mxu0 0.0
      %1423 = vmatpush.msra.mxu0 0.0
      %1424 = vmatpush.msra.mxu0 0.0
      %1425 = vmatpush.msra.mxu0 0.0
      %1426 = vmatpush.msra.mxu0 0.0
      %1427 = vmatpush.msra.mxu0 0.0
      %1428 = vmatpush.msra.mxu0 0.0
      %1429 = vmatpush.msra.mxu0 0.0
      %1430 = vmatpush.msra.mxu0 0.0
      %1431 = vmatpush.msra.mxu0 0.0
      %1432 = vmatpush.msra.mxu0 0.0
      %1433 = vmatpush.msra.mxu0 0.0
      %1434 = vmatpush.msra.mxu0 0.0
      %1435 = vmatpush.msra.mxu0 0.0
      %1436 = vmatpush.msra.mxu0 0.0
      %1437 = vmatpush.msra.mxu0 %v1417
      %1438 = vmatmul.f32.gmra.mxu0 %v1405
      %v1439 = vpop.f32.mrf.mxu0
      %v1440 = vadd.f32 0.0, %v1439
      %1441 = vmatmul.f32.gmra.mxu0 %v1408
      %v1442 = vpop.f32.mrf.mxu0
      %v1443 = vadd.f32 0.0, %v1442
      %1444 = vmatmul.f32.gmra.mxu0 %v1411
      %v1445 = vpop.f32.mrf.mxu0
      %v1446 = vadd.f32 0.0, %v1445
      %1447 = vmatmul.f32.gmra.mxu0 %v1414
      %v1448 = vpop.f32.mrf.mxu0
      %v1449 = vadd.f32 0.0, %v1448
      %1450 = vdwg.mxu0
      %1451 = vmatpush.msra.mxu0 0.0
      %1452 = vmatpush.msra.mxu0 0.0
      %1453 = vmatpush.msra.mxu0 0.0
      %1454 = vmatpush.msra.mxu0 0.0
      %1455 = vmatpush.msra.mxu0 0.0
      %1456 = vmatpush.msra.mxu0 0.0
      %1457 = vmatpush.msra.mxu0 0.0
      %1458 = vmatpush.msra.mxu0 0.0
      %1459 = vmatpush.msra.mxu0 0.0
      %1460 = vmatpush.msra.mxu0 0.0
      %1461 = vmatpush.msra.mxu0 0.0
      %1462 = vmatpush.msra.mxu0 0.0
      %1463 = vmatpush.msra.mxu0 0.0
      %1464 = vmatpush.msra.mxu0 0.0
      %1465 = vmatpush.msra.mxu0 0.0
      %1466 = vmatpush.msra.mxu0 %v1420
      %1467 = vmatmul.f32.gmra.mxu0 %v1405
      %v1468 = vpop.f32.mrf.mxu0
      %v1469 = vadd.f32 0.0, %v1468
      %1470 = vmatmul.f32.gmra.mxu0 %v1408
      %v1471 = vpop.f32.mrf.mxu0
      %v1472 = vadd.f32 0.0, %v1471
      %1473 = vmatmul.f32.gmra.mxu0 %v1411
      %v1474 = vpop.f32.mrf.mxu0
      %v1475 = vadd.f32 0.0, %v1474
      %1476 = vmatmul.f32.gmra.mxu0 %v1414
      %v1477 = vpop.f32.mrf.mxu0
      %v1478 = vadd.f32 0.0, %v1477
      %1479 = vdwg.mxu0
      %v1480 = vadd.f32 %v1372, %v1440
      %v1481 = vadd.f32 %v1373, %v1469
      %v1482 = vadd.f32 %v1374, %v1443
      %v1483 = vadd.f32 %v1375, %v1472
      %v1484 = vadd.f32 %v1376, %v1446
      %v1485 = vadd.f32 %v1377, %v1475
      %v1486 = vadd.f32 %v1378, %v1449
      %v1487 = vadd.f32 %v1379, %v1478
      %s1488 = scalar_lea.vmem %s4, 256
      %v1489 = vld [vmem:[%s1488] sm:$0xff]
      %v1490 = vld [vmem:[%s1488 + $0x8] sm:$0xff]
      %v1491 = vld [vmem:[%s1488 + $0x10] sm:$0xff]
      %v1492 = vld [vmem:[%s1488 + $0x18] sm:$0xff]
      %1493 = vst [vmem:[#allocation1] ss:$2 sm:$0xff] %v653
      %v1494 = vld.sshfl [vmem:[#allocation1] sm:$0xff pattern:$0x75316420]
      %v1495 = vld.sshfl [vmem:[#allocation1 + $0x8] sm:$0xff pattern:$0x75316420]
      %1498 = vrot.lane.b32.xlu0 %v1494, 111
      %v1499 = vpop.permute.xlu0 %1498
      %1500 = vrot.lane.b32.xlu0 %v1495, 111
      %v1501 = vpop.permute.xlu0 %1500
      %vm1502 = vcmp.lt.s32.totalorder %v669, 111
      %v1503 = vsel %vm1502, %v1499, %v1501
      %v1504 = vsel %vm1502, %v1501, %v1499
      %v1505 = vsel %vm652, 1, 0
      %v1506 = vperm.slane %v1505, 0
      %v1507 = vperm.slane %v1505, 1
      %vm1508 = vcmp.eq.s32.totalorder %v1506, 1
      %vm1509 = vcmp.eq.s32.totalorder %v1507, 1
      %v1510 = vsel %vm1508, %v1503, 0.0
      %v1511 = vsel %vm1509, %v1504, 0.0
      %v1513 = vsel %vm704, %v1489, 0
      %v1516 = vsel %vm704, %v1490, 0
      %v1519 = vsel %vm704, %v1491, 0
      %v1522 = vsel %vm704, %v1492, 0
      %v1525 = vsel %vm717, %v1510, 0
      %v1528 = vsel %vm717, %v1511, 0
      %1530 = vmatpush.msra.mxu0 0.0
      %1531 = vmatpush.msra.mxu0 0.0
      %1532 = vmatpush.msra.mxu0 0.0
      %1533 = vmatpush.msra.mxu0 0.0
      %1534 = vmatpush.msra.mxu0 0.0
      %1535 = vmatpush.msra.mxu0 0.0
      %1536 = vmatpush.msra.mxu0 0.0
      %1537 = vmatpush.msra.mxu0 0.0
      %1538 = vmatpush.msra.mxu0 0.0
      %1539 = vmatpush.msra.mxu0 0.0
      %1540 = vmatpush.msra.mxu0 0.0
      %1541 = vmatpush.msra.mxu0 0.0
      %1542 = vmatpush.msra.mxu0 0.0
      %1543 = vmatpush.msra.mxu0 0.0
      %1544 = vmatpush.msra.mxu0 0.0
      %1545 = vmatpush.msra.mxu0 %v1525
      %1546 = vmatmul.f32.gmra.mxu0 %v1513
      %v1547 = vpop.f32.mrf.mxu0
      %v1548 = vadd.f32 0.0, %v1547
      %1549 = vmatmul.f32.gmra.mxu0 %v1516
      %v1550 = vpop.f32.mrf.mxu0
      %v1551 = vadd.f32 0.0, %v1550
      %1552 = vmatmul.f32.gmra.mxu0 %v1519
      %v1553 = vpop.f32.mrf.mxu0
      %v1554 = vadd.f32 0.0, %v1553
      %1555 = vmatmul.f32.gmra.mxu0 %v1522
      %v1556 = vpop.f32.mrf.mxu0
      %v1557 = vadd.f32 0.0, %v1556
      %1558 = vdwg.mxu0
      %1559 = vmatpush.msra.mxu0 0.0
      %1560 = vmatpush.msra.mxu0 0.0
      %1561 = vmatpush.msra.mxu0 0.0
      %1562 = vmatpush.msra.mxu0 0.0
      %1563 = vmatpush.msra.mxu0 0.0
      %1564 = vmatpush.msra.mxu0 0.0
      %1565 = vmatpush.msra.mxu0 0.0
      %1566 = vmatpush.msra.mxu0 0.0
      %1567 = vmatpush.msra.mxu0 0.0
      %1568 = vmatpush.msra.mxu0 0.0
      %1569 = vmatpush.msra.mxu0 0.0
      %1570 = vmatpush.msra.mxu0 0.0
      %1571 = vmatpush.msra.mxu0 0.0
      %1572 = vmatpush.msra.mxu0 0.0
      %1573 = vmatpush.msra.mxu0 0.0
      %1574 = vmatpush.msra.mxu0 %v1528
      %1575 = vmatmul.f32.gmra.mxu0 %v1513
      %v1576 = vpop.f32.mrf.mxu0
      %v1577 = vadd.f32 0.0, %v1576
      %1578 = vmatmul.f32.gmra.mxu0 %v1516
      %v1579 = vpop.f32.mrf.mxu0
      %v1580 = vadd.f32 0.0, %v1579
      %1581 = vmatmul.f32.gmra.mxu0 %v1519
      %v1582 = vpop.f32.mrf.mxu0
      %v1583 = vadd.f32 0.0, %v1582
      %1584 = vmatmul.f32.gmra.mxu0 %v1522
      %v1585 = vpop.f32.mrf.mxu0
      %v1586 = vadd.f32 0.0, %v1585
      %1587 = vdwg.mxu0
      %v1588 = vadd.f32 %v1480, %v1548
      %v1589 = vadd.f32 %v1481, %v1577
      %v1590 = vadd.f32 %v1482, %v1551
      %v1591 = vadd.f32 %v1483, %v1580
      %v1592 = vadd.f32 %v1484, %v1554
      %v1593 = vadd.f32 %v1485, %v1583
      %v1594 = vadd.f32 %v1486, %v1557
      %v1595 = vadd.f32 %v1487, %v1586
      %v1596 = vld [vmem:[%s5] sm:$0xff]
      %v1597 = vld [vmem:[%s5 + $0x8] sm:$0xff]
      %v1598 = vld [vmem:[%s5 + $0x10] sm:$0xff]
      %v1599 = vld [vmem:[%s5 + $0x18] sm:$0xff]
      %1601 = vset.pattern.permute.xlu0 0
      %1602 = vperm.xlu0 %1601, %v1596
      %v1603 = vpop.permute.xlu0 %1602
      %1606 = vset.pattern.permute.xlu0 0
      %1607 = vperm.xlu0 %1606, %v1597
      %v1608 = vpop.permute.xlu0 %1607
      %1611 = vset.pattern.permute.xlu0 0
      %1612 = vperm.xlu0 %1611, %v1598
      %v1613 = vpop.permute.xlu0 %1612
      %1616 = vset.pattern.permute.xlu0 0
      %1617 = vperm.xlu0 %1616, %v1599
      %v1618 = vpop.permute.xlu0 %1617
      %v1620 = vadd.f32 %v1588, %v1603
      %v1621 = vadd.f32 %v1589, %v1603
      %v1622 = vadd.f32 %v1590, %v1608
      %v1623 = vadd.f32 %v1591, %v1608
      %v1624 = vadd.f32 %v1592, %v1613
      %v1625 = vadd.f32 %v1593, %v1613
      %v1626 = vadd.f32 %v1594, %v1618
      %v1627 = vadd.f32 %v1595, %v1618
      %v1628 = vmax.f32 %v1620, 0.0
      %v1629 = vmax.f32 %v1621, 0.0
      %v1630 = vmax.f32 %v1622, 0.0
      %v1631 = vmax.f32 %v1623, 0.0
      %v1632 = vmax.f32 %v1624, 0.0
      %v1633 = vmax.f32 %v1625, 0.0
      %v1634 = vmax.f32 %v1626, 0.0
      %v1635 = vmax.f32 %v1627, 0.0
      %v1636 = vld [vmem:[%s6] sm:$0xff]
      %v1637 = vld [vmem:[%s6 + $0x8] sm:$0x1]
      %1638 = vrot.lane.b32.xlu0 %v1628, 17
      %v1639 = vpop.permute.xlu0 %1638
      %1640 = vrot.lane.b32.xlu0 %v1630, 17
      %v1641 = vpop.permute.xlu0 %1640
      %1642 = vrot.lane.b32.xlu0 %v1632, 17
      %v1643 = vpop.permute.xlu0 %1642
      %1644 = vrot.lane.b32.xlu0 %v1634, 17
      %v1645 = vpop.permute.xlu0 %1644
      %1646 = vrot.lane.b32.xlu0 %v1629, 17
      %v1647 = vpop.permute.xlu0 %1646
      %1648 = vrot.lane.b32.xlu0 %v1631, 17
      %v1649 = vpop.permute.xlu0 %1648
      %1650 = vrot.lane.b32.xlu0 %v1633, 17
      %v1651 = vpop.permute.xlu0 %1650
      %1652 = vrot.lane.b32.xlu0 %v1635, 17
      %v1653 = vpop.permute.xlu0 %1652
      %v1654 = vsel %vm670, %v1639, %v1647
      %v1655 = vsel %vm670, %v1641, %v1649
      %v1656 = vsel %vm670, %v1643, %v1651
      %v1657 = vsel %vm670, %v1645, %v1653
      %v1658 = vsel %vm670, %v1647, %v1639
      %v1659 = vsel %vm670, %v1649, %v1641
      %v1660 = vsel %vm670, %v1651, %v1643
      %v1661 = vsel %vm670, %v1653, %v1645
      %v1662 = vsel %vm676, %v1658, 0.0
      %v1663 = vsel %vm677, %v1654, 0.0
      %v1664 = vsel %vm676, %v1659, 0.0
      %v1665 = vsel %vm677, %v1655, 0.0
      %v1666 = vsel %vm676, %v1660, 0.0
      %v1667 = vsel %vm677, %v1656, 0.0
      %v1668 = vsel %vm676, %v1661, 0.0
      %v1669 = vsel %vm677, %v1657, 0.0
      %s1670 = scalar_lea.vmem %s6, 16
      %v1671 = vld [vmem:[%s1670] sm:$0xff]
      %v1672 = vld [vmem:[%s1670 + $0x8] sm:$0x1]
      %1673 = vrot.lane.b32.xlu0 %v1628, 16
      %v1674 = vpop.permute.xlu0 %1673
      %1675 = vrot.lane.b32.xlu0 %v1630, 16
      %v1676 = vpop.permute.xlu0 %1675
      %1677 = vrot.lane.b32.xlu0 %v1632, 16
      %v1678 = vpop.permute.xlu0 %1677
      %1679 = vrot.lane.b32.xlu0 %v1634, 16
      %v1680 = vpop.permute.xlu0 %1679
      %1681 = vrot.lane.b32.xlu0 %v1629, 16
      %v1682 = vpop.permute.xlu0 %1681
      %1683 = vrot.lane.b32.xlu0 %v1631, 16
      %v1684 = vpop.permute.xlu0 %1683
      %1685 = vrot.lane.b32.xlu0 %v1633, 16
      %v1686 = vpop.permute.xlu0 %1685
      %1687 = vrot.lane.b32.xlu0 %v1635, 16
      %v1688 = vpop.permute.xlu0 %1687
      %v1689 = vsel %vm694, %v1674, %v1682
      %v1690 = vsel %vm694, %v1676, %v1684
      %v1691 = vsel %vm694, %v1678, %v1686
      %v1692 = vsel %vm694, %v1680, %v1688
      %v1693 = vsel %vm694, %v1682, %v1674
      %v1694 = vsel %vm694, %v1684, %v1676
      %v1695 = vsel %vm694, %v1686, %v1678
      %v1696 = vsel %vm694, %v1688, %v1680
      %v1697 = vsel %vm700, %v1693, 0.0
      %v1698 = vsel %vm701, %v1689, 0.0
      %v1699 = vsel %vm700, %v1694, 0.0
      %v1700 = vsel %vm701, %v1690, 0.0
      %v1701 = vsel %vm700, %v1695, 0.0
      %v1702 = vsel %vm701, %v1691, 0.0
      %v1703 = vsel %vm700, %v1696, 0.0
      %v1704 = vsel %vm701, %v1692, 0.0
      %vm1705 = vcmask 261120
      %v1707 = vsel %vm1705, %v1671, 0
      %v1710 = vsel %vm1705, %v1672, 0
      %1712 = vmatpush.msra.mxu0 0.0
      %1713 = vmatpush.msra.mxu0 0.0
      %1714 = vmatpush.msra.mxu0 0.0
      %1715 = vmatpush.msra.mxu0 0.0
      %1716 = vmatpush.msra.mxu0 0.0
      %1717 = vmatpush.msra.mxu0 0.0
      %1718 = vmatpush.msra.mxu0 0.0
      %1719 = vmatpush.msra.mxu0 0.0
      %1720 = vmatpush.msra.mxu0 0.0
      %1721 = vmatpush.msra.mxu0 0.0
      %1722 = vmatpush.msra.mxu0 0.0
      %1723 = vmatpush.msra.mxu0 0.0
      %1724 = vmatpush.msra.mxu0 %v1703
      %1725 = vmatpush.msra.mxu0 %v1701
      %1726 = vmatpush.msra.mxu0 %v1699
      %1727 = vmatpush.msra.mxu0 %v1697
      %1728 = vmatmul.f32.gmra.mxu0 %v1707
      %v1729 = vpop.f32.mrf.mxu0
      %v1730 = vadd.f32 0.0, %v1729
      %1731 = vmatmul.f32.gmra.mxu0 %v1710
      %v1732 = vpop.f32.mrf.mxu0
      %v1733 = vadd.f32 0.0, %v1732
      %1734 = vdwg.mxu0
      %1735 = vmatpush.msra.mxu0 0.0
      %1736 = vmatpush.msra.mxu0 0.0
      %1737 = vmatpush.msra.mxu0 0.0
      %1738 = vmatpush.msra.mxu0 0.0
      %1739 = vmatpush.msra.mxu0 0.0
      %1740 = vmatpush.msra.mxu0 0.0
      %1741 = vmatpush.msra.mxu0 0.0
      %1742 = vmatpush.msra.mxu0 0.0
      %1743 = vmatpush.msra.mxu0 0.0
      %1744 = vmatpush.msra.mxu0 0.0
      %1745 = vmatpush.msra.mxu0 0.0
      %1746 = vmatpush.msra.mxu0 0.0
      %1747 = vmatpush.msra.mxu0 %v1704
      %1748 = vmatpush.msra.mxu0 %v1702
      %1749 = vmatpush.msra.mxu0 %v1700
      %1750 = vmatpush.msra.mxu0 %v1698
      %1751 = vmatmul.f32.gmra.mxu0 %v1707
      %v1752 = vpop.f32.mrf.mxu0
      %v1753 = vadd.f32 0.0, %v1752
      %1754 = vmatmul.f32.gmra.mxu0 %v1710
      %v1755 = vpop.f32.mrf.mxu0
      %v1756 = vadd.f32 0.0, %v1755
      %1757 = vdwg.mxu0
      %v1759 = vsel %vm1705, %v1636, 0
      %v1762 = vsel %vm1705, %v1637, 0
      %1764 = vmatpush.msra.mxu0 0.0
      %1765 = vmatpush.msra.mxu0 0.0
      %1766 = vmatpush.msra.mxu0 0.0
      %1767 = vmatpush.msra.mxu0 0.0
      %1768 = vmatpush.msra.mxu0 0.0
      %1769 = vmatpush.msra.mxu0 0.0
      %1770 = vmatpush.msra.mxu0 0.0
      %1771 = vmatpush.msra.mxu0 0.0
      %1772 = vmatpush.msra.mxu0 0.0
      %1773 = vmatpush.msra.mxu0 0.0
      %1774 = vmatpush.msra.mxu0 0.0
      %1775 = vmatpush.msra.mxu0 0.0
      %1776 = vmatpush.msra.mxu0 %v1668
      %1777 = vmatpush.msra.mxu0 %v1666
      %1778 = vmatpush.msra.mxu0 %v1664
      %1779 = vmatpush.msra.mxu0 %v1662
      %1780 = vmatmul.f32.gmra.mxu0 %v1759
      %v1781 = vpop.f32.mrf.mxu0
      %v1782 = vadd.f32 %v1730, %v1781
      %1783 = vmatmul.f32.gmra.mxu0 %v1762
      %v1784 = vpop.f32.mrf.mxu0
      %v1785 = vadd.f32 %v1733, %v1784
      %1786 = vdwg.mxu0
      %1787 = vmatpush.msra.mxu0 0.0
      %1788 = vmatpush.msra.mxu0 0.0
      %1789 = vmatpush.msra.mxu0 0.0
      %1790 = vmatpush.msra.mxu0 0.0
      %1791 = vmatpush.msra.mxu0 0.0
      %1792 = vmatpush.msra.mxu0 0.0
      %1793 = vmatpush.msra.mxu0 0.0
      %1794 = vmatpush.msra.mxu0 0.0
      %1795 = vmatpush.msra.mxu0 0.0
      %1796 = vmatpush.msra.mxu0 0.0
      %1797 = vmatpush.msra.mxu0 0.0
      %1798 = vmatpush.msra.mxu0 0.0
      %1799 = vmatpush.msra.mxu0 %v1669
      %1800 = vmatpush.msra.mxu0 %v1667
      %1801 = vmatpush.msra.mxu0 %v1665
      %1802 = vmatpush.msra.mxu0 %v1663
      %1803 = vmatmul.f32.gmra.mxu0 %v1759
      %v1804 = vpop.f32.mrf.mxu0
      %v1805 = vadd.f32 %v1753, %v1804
      %1806 = vmatmul.f32.gmra.mxu0 %v1762
      %v1807 = vpop.f32.mrf.mxu0
      %v1808 = vadd.f32 %v1756, %v1807
      %1809 = vdwg.mxu0
      %s1810 = scalar_lea.vmem %s6, 32
      %v1811 = vld [vmem:[%s1810] sm:$0xff]
      %v1812 = vld [vmem:[%s1810 + $0x8] sm:$0x1]
      %1813 = vrot.lane.b32.xlu0 %v1628, 15
      %v1814 = vpop.permute.xlu0 %1813
      %1815 = vrot.lane.b32.xlu0 %v1630, 15
      %v1816 = vpop.permute.xlu0 %1815
      %1817 = vrot.lane.b32.xlu0 %v1632, 15
      %v1818 = vpop.permute.xlu0 %1817
      %1819 = vrot.lane.b32.xlu0 %v1634, 15
      %v1820 = vpop.permute.xlu0 %1819
      %1821 = vrot.lane.b32.xlu0 %v1629, 15
      %v1822 = vpop.permute.xlu0 %1821
      %1823 = vrot.lane.b32.xlu0 %v1631, 15
      %v1824 = vpop.permute.xlu0 %1823
      %1825 = vrot.lane.b32.xlu0 %v1633, 15
      %v1826 = vpop.permute.xlu0 %1825
      %1827 = vrot.lane.b32.xlu0 %v1635, 15
      %v1828 = vpop.permute.xlu0 %1827
      %v1829 = vsel %vm872, %v1814, %v1822
      %v1830 = vsel %vm872, %v1816, %v1824
      %v1831 = vsel %vm872, %v1818, %v1826
      %v1832 = vsel %vm872, %v1820, %v1828
      %v1833 = vsel %vm872, %v1822, %v1814
      %v1834 = vsel %vm872, %v1824, %v1816
      %v1835 = vsel %vm872, %v1826, %v1818
      %v1836 = vsel %vm872, %v1828, %v1820
      %v1837 = vsel %vm878, %v1833, 0.0
      %v1838 = vsel %vm879, %v1829, 0.0
      %v1839 = vsel %vm878, %v1834, 0.0
      %v1840 = vsel %vm879, %v1830, 0.0
      %v1841 = vsel %vm878, %v1835, 0.0
      %v1842 = vsel %vm879, %v1831, 0.0
      %v1843 = vsel %vm878, %v1836, 0.0
      %v1844 = vsel %vm879, %v1832, 0.0
      %v1846 = vsel %vm1705, %v1811, 0
      %v1849 = vsel %vm1705, %v1812, 0
      %1851 = vmatpush.msra.mxu0 0.0
      %1852 = vmatpush.msra.mxu0 0.0
      %1853 = vmatpush.msra.mxu0 0.0
      %1854 = vmatpush.msra.mxu0 0.0
      %1855 = vmatpush.msra.mxu0 0.0
      %1856 = vmatpush.msra.mxu0 0.0
      %1857 = vmatpush.msra.mxu0 0.0
      %1858 = vmatpush.msra.mxu0 0.0
      %1859 = vmatpush.msra.mxu0 0.0
      %1860 = vmatpush.msra.mxu0 0.0
      %1861 = vmatpush.msra.mxu0 0.0
      %1862 = vmatpush.msra.mxu0 0.0
      %1863 = vmatpush.msra.mxu0 %v1843
      %1864 = vmatpush.msra.mxu0 %v1841
      %1865 = vmatpush.msra.mxu0 %v1839
      %1866 = vmatpush.msra.mxu0 %v1837
      %1867 = vmatmul.f32.gmra.mxu0 %v1846
      %v1868 = vpop.f32.mrf.mxu0
      %v1869 = vadd.f32 0.0, %v1868
      %1870 = vmatmul.f32.gmra.mxu0 %v1849
      %v1871 = vpop.f32.mrf.mxu0
      %v1872 = vadd.f32 0.0, %v1871
      %1873 = vdwg.mxu0
      %1874 = vmatpush.msra.mxu0 0.0
      %1875 = vmatpush.msra.mxu0 0.0
      %1876 = vmatpush.msra.mxu0 0.0
      %1877 = vmatpush.msra.mxu0 0.0
      %1878 = vmatpush.msra.mxu0 0.0
      %1879 = vmatpush.msra.mxu0 0.0
      %1880 = vmatpush.msra.mxu0 0.0
      %1881 = vmatpush.msra.mxu0 0.0
      %1882 = vmatpush.msra.mxu0 0.0
      %1883 = vmatpush.msra.mxu0 0.0
      %1884 = vmatpush.msra.mxu0 0.0
      %1885 = vmatpush.msra.mxu0 0.0
      %1886 = vmatpush.msra.mxu0 %v1844
      %1887 = vmatpush.msra.mxu0 %v1842
      %1888 = vmatpush.msra.mxu0 %v1840
      %1889 = vmatpush.msra.mxu0 %v1838
      %1890 = vmatmul.f32.gmra.mxu0 %v1846
      %v1891 = vpop.f32.mrf.mxu0
      %v1892 = vadd.f32 0.0, %v1891
      %1893 = vmatmul.f32.gmra.mxu0 %v1849
      %v1894 = vpop.f32.mrf.mxu0
      %v1895 = vadd.f32 0.0, %v1894
      %1896 = vdwg.mxu0
      %v1897 = vadd.f32 %v1782, %v1869
      %v1898 = vadd.f32 %v1805, %v1892
      %v1899 = vadd.f32 %v1785, %v1872
      %v1900 = vadd.f32 %v1808, %v1895
      %s1901 = scalar_lea.vmem %s6, 48
      %v1902 = vld [vmem:[%s1901] sm:$0xff]
      %v1903 = vld [vmem:[%s1901 + $0x8] sm:$0x1]
      %1904 = vrot.lane.b32.xlu0 %v1628, 1
      %v1905 = vpop.permute.xlu0 %1904
      %1906 = vrot.lane.b32.xlu0 %v1630, 1
      %v1907 = vpop.permute.xlu0 %1906
      %1908 = vrot.lane.b32.xlu0 %v1632, 1
      %v1909 = vpop.permute.xlu0 %1908
      %1910 = vrot.lane.b32.xlu0 %v1634, 1
      %v1911 = vpop.permute.xlu0 %1910
      %1912 = vrot.lane.b32.xlu0 %v1629, 1
      %v1913 = vpop.permute.xlu0 %1912
      %1914 = vrot.lane.b32.xlu0 %v1631, 1
      %v1915 = vpop.permute.xlu0 %1914
      %1916 = vrot.lane.b32.xlu0 %v1633, 1
      %v1917 = vpop.permute.xlu0 %1916
      %1918 = vrot.lane.b32.xlu0 %v1635, 1
      %v1919 = vpop.permute.xlu0 %1918
      %v1920 = vsel %vm980, %v1905, %v1913
      %v1921 = vsel %vm980, %v1907, %v1915
      %v1922 = vsel %vm980, %v1909, %v1917
      %v1923 = vsel %vm980, %v1911, %v1919
      %v1924 = vsel %vm980, %v1913, %v1905
      %v1925 = vsel %vm980, %v1915, %v1907
      %v1926 = vsel %vm980, %v1917, %v1909
      %v1927 = vsel %vm980, %v1919, %v1911
      %v1928 = vsel %vm986, %v1924, 0.0
      %v1929 = vsel %vm987, %v1920, 0.0
      %v1930 = vsel %vm986, %v1925, 0.0
      %v1931 = vsel %vm987, %v1921, 0.0
      %v1932 = vsel %vm986, %v1926, 0.0
      %v1933 = vsel %vm987, %v1922, 0.0
      %v1934 = vsel %vm986, %v1927, 0.0
      %v1935 = vsel %vm987, %v1923, 0.0
      %v1937 = vsel %vm1705, %v1902, 0
      %v1940 = vsel %vm1705, %v1903, 0
      %1942 = vmatpush.msra.mxu0 0.0
      %1943 = vmatpush.msra.mxu0 0.0
      %1944 = vmatpush.msra.mxu0 0.0
      %1945 = vmatpush.msra.mxu0 0.0
      %1946 = vmatpush.msra.mxu0 0.0
      %1947 = vmatpush.msra.mxu0 0.0
      %1948 = vmatpush.msra.mxu0 0.0
      %1949 = vmatpush.msra.mxu0 0.0
      %1950 = vmatpush.msra.mxu0 0.0
      %1951 = vmatpush.msra.mxu0 0.0
      %1952 = vmatpush.msra.mxu0 0.0
      %1953 = vmatpush.msra.mxu0 0.0
      %1954 = vmatpush.msra.mxu0 %v1934
      %1955 = vmatpush.msra.mxu0 %v1932
      %1956 = vmatpush.msra.mxu0 %v1930
      %1957 = vmatpush.msra.mxu0 %v1928
      %1958 = vmatmul.f32.gmra.mxu0 %v1937
      %v1959 = vpop.f32.mrf.mxu0
      %v1960 = vadd.f32 0.0, %v1959
      %1961 = vmatmul.f32.gmra.mxu0 %v1940
      %v1962 = vpop.f32.mrf.mxu0
      %v1963 = vadd.f32 0.0, %v1962
      %1964 = vdwg.mxu0
      %1965 = vmatpush.msra.mxu0 0.0
      %1966 = vmatpush.msra.mxu0 0.0
      %1967 = vmatpush.msra.mxu0 0.0
      %1968 = vmatpush.msra.mxu0 0.0
      %1969 = vmatpush.msra.mxu0 0.0
      %1970 = vmatpush.msra.mxu0 0.0
      %1971 = vmatpush.msra.mxu0 0.0
      %1972 = vmatpush.msra.mxu0 0.0
      %1973 = vmatpush.msra.mxu0 0.0
      %1974 = vmatpush.msra.mxu0 0.0
      %1975 = vmatpush.msra.mxu0 0.0
      %1976 = vmatpush.msra.mxu0 0.0
      %1977 = vmatpush.msra.mxu0 %v1935
      %1978 = vmatpush.msra.mxu0 %v1933
      %1979 = vmatpush.msra.mxu0 %v1931
      %1980 = vmatpush.msra.mxu0 %v1929
      %1981 = vmatmul.f32.gmra.mxu0 %v1937
      %v1982 = vpop.f32.mrf.mxu0
      %v1983 = vadd.f32 0.0, %v1982
      %1984 = vmatmul.f32.gmra.mxu0 %v1940
      %v1985 = vpop.f32.mrf.mxu0
      %v1986 = vadd.f32 0.0, %v1985
      %1987 = vdwg.mxu0
      %v1988 = vadd.f32 %v1897, %v1960
      %v1989 = vadd.f32 %v1898, %v1983
      %v1990 = vadd.f32 %v1899, %v1963
      %v1991 = vadd.f32 %v1900, %v1986
      %s1992 = scalar_lea.vmem %s6, 64
      %v1993 = vld [vmem:[%s1992] sm:$0xff]
      %v1994 = vld [vmem:[%s1992 + $0x8] sm:$0x1]
      %v1996 = vsel %vm1705, %v1993, 0
      %v1999 = vsel %vm1705, %v1994, 0
      %2001 = vmatpush.msra.mxu0 0.0
      %2002 = vmatpush.msra.mxu0 0.0
      %2003 = vmatpush.msra.mxu0 0.0
      %2004 = vmatpush.msra.mxu0 0.0
      %2005 = vmatpush.msra.mxu0 0.0
      %2006 = vmatpush.msra.mxu0 0.0
      %2007 = vmatpush.msra.mxu0 0.0
      %2008 = vmatpush.msra.mxu0 0.0
      %2009 = vmatpush.msra.mxu0 0.0
      %2010 = vmatpush.msra.mxu0 0.0
      %2011 = vmatpush.msra.mxu0 0.0
      %2012 = vmatpush.msra.mxu0 0.0
      %2013 = vmatpush.msra.mxu0 %v1634
      %2014 = vmatpush.msra.mxu0 %v1632
      %2015 = vmatpush.msra.mxu0 %v1630
      %2016 = vmatpush.msra.mxu0 %v1628
      %2017 = vmatmul.f32.gmra.mxu0 %v1996
      %v2018 = vpop.f32.mrf.mxu0
      %v2019 = vadd.f32 0.0, %v2018
      %2020 = vmatmul.f32.gmra.mxu0 %v1999
      %v2021 = vpop.f32.mrf.mxu0
      %v2022 = vadd.f32 0.0, %v2021
      %2023 = vdwg.mxu0
      %2024 = vmatpush.msra.mxu0 0.0
      %2025 = vmatpush.msra.mxu0 0.0
      %2026 = vmatpush.msra.mxu0 0.0
      %2027 = vmatpush.msra.mxu0 0.0
      %2028 = vmatpush.msra.mxu0 0.0
      %2029 = vmatpush.msra.mxu0 0.0
      %2030 = vmatpush.msra.mxu0 0.0
      %2031 = vmatpush.msra.mxu0 0.0
      %2032 = vmatpush.msra.mxu0 0.0
      %2033 = vmatpush.msra.mxu0 0.0
      %2034 = vmatpush.msra.mxu0 0.0
      %2035 = vmatpush.msra.mxu0 0.0
      %2036 = vmatpush.msra.mxu0 %v1635
      %2037 = vmatpush.msra.mxu0 %v1633
      %2038 = vmatpush.msra.mxu0 %v1631
      %2039 = vmatpush.msra.mxu0 %v1629
      %2040 = vmatmul.f32.gmra.mxu0 %v1996
      %v2041 = vpop.f32.mrf.mxu0
      %v2042 = vadd.f32 0.0, %v2041
      %2043 = vmatmul.f32.gmra.mxu0 %v1999
      %v2044 = vpop.f32.mrf.mxu0
      %v2045 = vadd.f32 0.0, %v2044
      %2046 = vdwg.mxu0
      %v2047 = vadd.f32 %v1988, %v2019
      %v2048 = vadd.f32 %v1989, %v2042
      %v2049 = vadd.f32 %v1990, %v2022
      %v2050 = vadd.f32 %v1991, %v2045
      %s2051 = scalar_lea.vmem %s6, 80
      %v2052 = vld [vmem:[%s2051] sm:$0xff]
      %v2053 = vld [vmem:[%s2051 + $0x8] sm:$0x1]
      %2054 = vrot.lane.b32.xlu0 %v1628, 127
      %v2055 = vpop.permute.xlu0 %2054
      %2056 = vrot.lane.b32.xlu0 %v1630, 127
      %v2057 = vpop.permute.xlu0 %2056
      %2058 = vrot.lane.b32.xlu0 %v1632, 127
      %v2059 = vpop.permute.xlu0 %2058
      %2060 = vrot.lane.b32.xlu0 %v1634, 127
      %v2061 = vpop.permute.xlu0 %2060
      %2062 = vrot.lane.b32.xlu0 %v1629, 127
      %v2063 = vpop.permute.xlu0 %2062
      %2064 = vrot.lane.b32.xlu0 %v1631, 127
      %v2065 = vpop.permute.xlu0 %2064
      %2066 = vrot.lane.b32.xlu0 %v1633, 127
      %v2067 = vpop.permute.xlu0 %2066
      %2068 = vrot.lane.b32.xlu0 %v1635, 127
      %v2069 = vpop.permute.xlu0 %2068
      %v2070 = vsel %vm1178, %v2055, %v2063
      %v2071 = vsel %vm1178, %v2057, %v2065
      %v2072 = vsel %vm1178, %v2059, %v2067
      %v2073 = vsel %vm1178, %v2061, %v2069
      %v2074 = vsel %vm1178, %v2063, %v2055
      %v2075 = vsel %vm1178, %v2065, %v2057
      %v2076 = vsel %vm1178, %v2067, %v2059
      %v2077 = vsel %vm1178, %v2069, %v2061
      %v2078 = vsel %vm1184, %v2070, 0.0
      %v2079 = vsel %vm1185, %v2074, 0.0
      %v2080 = vsel %vm1184, %v2071, 0.0
      %v2081 = vsel %vm1185, %v2075, 0.0
      %v2082 = vsel %vm1184, %v2072, 0.0
      %v2083 = vsel %vm1185, %v2076, 0.0
      %v2084 = vsel %vm1184, %v2073, 0.0
      %v2085 = vsel %vm1185, %v2077, 0.0
      %v2087 = vsel %vm1705, %v2052, 0
      %v2090 = vsel %vm1705, %v2053, 0
      %2092 = vmatpush.msra.mxu0 0.0
      %2093 = vmatpush.msra.mxu0 0.0
      %2094 = vmatpush.msra.mxu0 0.0
      %2095 = vmatpush.msra.mxu0 0.0
      %2096 = vmatpush.msra.mxu0 0.0
      %2097 = vmatpush.msra.mxu0 0.0
      %2098 = vmatpush.msra.mxu0 0.0
      %2099 = vmatpush.msra.mxu0 0.0
      %2100 = vmatpush.msra.mxu0 0.0
      %2101 = vmatpush.msra.mxu0 0.0
      %2102 = vmatpush.msra.mxu0 0.0
      %2103 = vmatpush.msra.mxu0 0.0
      %2104 = vmatpush.msra.mxu0 %v2084
      %2105 = vmatpush.msra.mxu0 %v2082
      %2106 = vmatpush.msra.mxu0 %v2080
      %2107 = vmatpush.msra.mxu0 %v2078
      %2108 = vmatmul.f32.gmra.mxu0 %v2087
      %v2109 = vpop.f32.mrf.mxu0
      %v2110 = vadd.f32 0.0, %v2109
      %2111 = vmatmul.f32.gmra.mxu0 %v2090
      %v2112 = vpop.f32.mrf.mxu0
      %v2113 = vadd.f32 0.0, %v2112
      %2114 = vdwg.mxu0
      %2115 = vmatpush.msra.mxu0 0.0
      %2116 = vmatpush.msra.mxu0 0.0
      %2117 = vmatpush.msra.mxu0 0.0
      %2118 = vmatpush.msra.mxu0 0.0
      %2119 = vmatpush.msra.mxu0 0.0
      %2120 = vmatpush.msra.mxu0 0.0
      %2121 = vmatpush.msra.mxu0 0.0
      %2122 = vmatpush.msra.mxu0 0.0
      %2123 = vmatpush.msra.mxu0 0.0
      %2124 = vmatpush.msra.mxu0 0.0
      %2125 = vmatpush.msra.mxu0 0.0
      %2126 = vmatpush.msra.mxu0 0.0
      %2127 = vmatpush.msra.mxu0 %v2085
      %2128 = vmatpush.msra.mxu0 %v2083
      %2129 = vmatpush.msra.mxu0 %v2081
      %2130 = vmatpush.msra.mxu0 %v2079
      %2131 = vmatmul.f32.gmra.mxu0 %v2087
      %v2132 = vpop.f32.mrf.mxu0
      %v2133 = vadd.f32 0.0, %v2132
      %2134 = vmatmul.f32.gmra.mxu0 %v2090
      %v2135 = vpop.f32.mrf.mxu0
      %v2136 = vadd.f32 0.0, %v2135
      %2137 = vdwg.mxu0
      %v2138 = vadd.f32 %v2047, %v2110
      %v2139 = vadd.f32 %v2048, %v2133
      %v2140 = vadd.f32 %v2049, %v2113
      %v2141 = vadd.f32 %v2050, %v2136
      %s2142 = scalar_lea.vmem %s6, 96
      %v2143 = vld [vmem:[%s2142] sm:$0xff]
      %v2144 = vld [vmem:[%s2142 + $0x8] sm:$0x1]
      %2145 = vrot.lane.b32.xlu0 %v1628, 113
      %v2146 = vpop.permute.xlu0 %2145
      %2147 = vrot.lane.b32.xlu0 %v1630, 113
      %v2148 = vpop.permute.xlu0 %2147
      %2149 = vrot.lane.b32.xlu0 %v1632, 113
      %v2150 = vpop.permute.xlu0 %2149
      %2151 = vrot.lane.b32.xlu0 %v1634, 113
      %v2152 = vpop.permute.xlu0 %2151
      %2153 = vrot.lane.b32.xlu0 %v1629, 113
      %v2154 = vpop.permute.xlu0 %2153
      %2155 = vrot.lane.b32.xlu0 %v1631, 113
      %v2156 = vpop.permute.xlu0 %2155
      %2157 = vrot.lane.b32.xlu0 %v1633, 113
      %v2158 = vpop.permute.xlu0 %2157
      %2159 = vrot.lane.b32.xlu0 %v1635, 113
      %v2160 = vpop.permute.xlu0 %2159
      %v2161 = vsel %vm1286, %v2146, %v2154
      %v2162 = vsel %vm1286, %v2148, %v2156
      %v2163 = vsel %vm1286, %v2150, %v2158
      %v2164 = vsel %vm1286, %v2152, %v2160
      %v2165 = vsel %vm1286, %v2154, %v2146
      %v2166 = vsel %vm1286, %v2156, %v2148
      %v2167 = vsel %vm1286, %v2158, %v2150
      %v2168 = vsel %vm1286, %v2160, %v2152
      %v2169 = vsel %vm1292, %v2161, 0.0
      %v2170 = vsel %vm1293, %v2165, 0.0
      %v2171 = vsel %vm1292, %v2162, 0.0
      %v2172 = vsel %vm1293, %v2166, 0.0
      %v2173 = vsel %vm1292, %v2163, 0.0
      %v2174 = vsel %vm1293, %v2167, 0.0
      %v2175 = vsel %vm1292, %v2164, 0.0
      %v2176 = vsel %vm1293, %v2168, 0.0
      %v2178 = vsel %vm1705, %v2143, 0
      %v2181 = vsel %vm1705, %v2144, 0
      %2183 = vmatpush.msra.mxu0 0.0
      %2184 = vmatpush.msra.mxu0 0.0
      %2185 = vmatpush.msra.mxu0 0.0
      %2186 = vmatpush.msra.mxu0 0.0
      %2187 = vmatpush.msra.mxu0 0.0
      %2188 = vmatpush.msra.mxu0 0.0
      %2189 = vmatpush.msra.mxu0 0.0
      %2190 = vmatpush.msra.mxu0 0.0
      %2191 = vmatpush.msra.mxu0 0.0
      %2192 = vmatpush.msra.mxu0 0.0
      %2193 = vmatpush.msra.mxu0 0.0
      %2194 = vmatpush.msra.mxu0 0.0
      %2195 = vmatpush.msra.mxu0 %v2175
      %2196 = vmatpush.msra.mxu0 %v2173
      %2197 = vmatpush.msra.mxu0 %v2171
      %2198 = vmatpush.msra.mxu0 %v2169
      %2199 = vmatmul.f32.gmra.mxu0 %v2178
      %v2200 = vpop.f32.mrf.mxu0
      %v2201 = vadd.f32 0.0, %v2200
      %2202 = vmatmul.f32.gmra.mxu0 %v2181
      %v2203 = vpop.f32.mrf.mxu0
      %v2204 = vadd.f32 0.0, %v2203
      %2205 = vdwg.mxu0
      %2206 = vmatpush.msra.mxu0 0.0
      %2207 = vmatpush.msra.mxu0 0.0
      %2208 = vmatpush.msra.mxu0 0.0
      %2209 = vmatpush.msra.mxu0 0.0
      %2210 = vmatpush.msra.mxu0 0.0
      %2211 = vmatpush.msra.mxu0 0.0
      %2212 = vmatpush.msra.mxu0 0.0
      %2213 = vmatpush.msra.mxu0 0.0
      %2214 = vmatpush.msra.mxu0 0.0
      %2215 = vmatpush.msra.mxu0 0.0
      %2216 = vmatpush.msra.mxu0 0.0
      %2217 = vmatpush.msra.mxu0 0.0
      %2218 = vmatpush.msra.mxu0 %v2176
      %2219 = vmatpush.msra.mxu0 %v2174
      %2220 = vmatpush.msra.mxu0 %v2172
      %2221 = vmatpush.msra.mxu0 %v2170
      %2222 = vmatmul.f32.gmra.mxu0 %v2178
      %v2223 = vpop.f32.mrf.mxu0
      %v2224 = vadd.f32 0.0, %v2223
      %2225 = vmatmul.f32.gmra.mxu0 %v2181
      %v2226 = vpop.f32.mrf.mxu0
      %v2227 = vadd.f32 0.0, %v2226
      %2228 = vdwg.mxu0
      %v2229 = vadd.f32 %v2138, %v2201
      %v2230 = vadd.f32 %v2139, %v2224
      %v2231 = vadd.f32 %v2140, %v2204
      %v2232 = vadd.f32 %v2141, %v2227
      %s2233 = scalar_lea.vmem %s6, 112
      %v2234 = vld [vmem:[%s2233] sm:$0xff]
      %v2235 = vld [vmem:[%s2233 + $0x8] sm:$0x1]
      %2236 = vrot.lane.b32.xlu0 %v1628, 112
      %v2237 = vpop.permute.xlu0 %2236
      %2238 = vrot.lane.b32.xlu0 %v1630, 112
      %v2239 = vpop.permute.xlu0 %2238
      %2240 = vrot.lane.b32.xlu0 %v1632, 112
      %v2241 = vpop.permute.xlu0 %2240
      %2242 = vrot.lane.b32.xlu0 %v1634, 112
      %v2243 = vpop.permute.xlu0 %2242
      %2244 = vrot.lane.b32.xlu0 %v1629, 112
      %v2245 = vpop.permute.xlu0 %2244
      %2246 = vrot.lane.b32.xlu0 %v1631, 112
      %v2247 = vpop.permute.xlu0 %2246
      %2248 = vrot.lane.b32.xlu0 %v1633, 112
      %v2249 = vpop.permute.xlu0 %2248
      %2250 = vrot.lane.b32.xlu0 %v1635, 112
      %v2251 = vpop.permute.xlu0 %2250
      %v2252 = vsel %vm1394, %v2237, %v2245
      %v2253 = vsel %vm1394, %v2239, %v2247
      %v2254 = vsel %vm1394, %v2241, %v2249
      %v2255 = vsel %vm1394, %v2243, %v2251
      %v2256 = vsel %vm1394, %v2245, %v2237
      %v2257 = vsel %vm1394, %v2247, %v2239
      %v2258 = vsel %vm1394, %v2249, %v2241
      %v2259 = vsel %vm1394, %v2251, %v2243
      %v2260 = vsel %vm1400, %v2252, 0.0
      %v2261 = vsel %vm1401, %v2256, 0.0
      %v2262 = vsel %vm1400, %v2253, 0.0
      %v2263 = vsel %vm1401, %v2257, 0.0
      %v2264 = vsel %vm1400, %v2254, 0.0
      %v2265 = vsel %vm1401, %v2258, 0.0
      %v2266 = vsel %vm1400, %v2255, 0.0
      %v2267 = vsel %vm1401, %v2259, 0.0
      %v2269 = vsel %vm1705, %v2234, 0
      %v2272 = vsel %vm1705, %v2235, 0
      %2274 = vmatpush.msra.mxu0 0.0
      %2275 = vmatpush.msra.mxu0 0.0
      %2276 = vmatpush.msra.mxu0 0.0
      %2277 = vmatpush.msra.mxu0 0.0
      %2278 = vmatpush.msra.mxu0 0.0
      %2279 = vmatpush.msra.mxu0 0.0
      %2280 = vmatpush.msra.mxu0 0.0
      %2281 = vmatpush.msra.mxu0 0.0
      %2282 = vmatpush.msra.mxu0 0.0
      %2283 = vmatpush.msra.mxu0 0.0
      %2284 = vmatpush.msra.mxu0 0.0
      %2285 = vmatpush.msra.mxu0 0.0
      %2286 = vmatpush.msra.mxu0 %v2266
      %2287 = vmatpush.msra.mxu0 %v2264
      %2288 = vmatpush.msra.mxu0 %v2262
      %2289 = vmatpush.msra.mxu0 %v2260
      %2290 = vmatmul.f32.gmra.mxu0 %v2269
      %v2291 = vpop.f32.mrf.mxu0
      %v2292 = vadd.f32 0.0, %v2291
      %2293 = vmatmul.f32.gmra.mxu0 %v2272
      %v2294 = vpop.f32.mrf.mxu0
      %v2295 = vadd.f32 0.0, %v2294
      %2296 = vdwg.mxu0
      %2297 = vmatpush.msra.mxu0 0.0
      %2298 = vmatpush.msra.mxu0 0.0
      %2299 = vmatpush.msra.mxu0 0.0
      %2300 = vmatpush.msra.mxu0 0.0
      %2301 = vmatpush.msra.mxu0 0.0
      %2302 = vmatpush.msra.mxu0 0.0
      %2303 = vmatpush.msra.mxu0 0.0
      %2304 = vmatpush.msra.mxu0 0.0
      %2305 = vmatpush.msra.mxu0 0.0
      %2306 = vmatpush.msra.mxu0 0.0
      %2307 = vmatpush.msra.mxu0 0.0
      %2308 = vmatpush.msra.mxu0 0.0
      %2309 = vmatpush.msra.mxu0 %v2267
      %2310 = vmatpush.msra.mxu0 %v2265
      %2311 = vmatpush.msra.mxu0 %v2263
      %2312 = vmatpush.msra.mxu0 %v2261
      %2313 = vmatmul.f32.gmra.mxu0 %v2269
      %v2314 = vpop.f32.mrf.mxu0
      %v2315 = vadd.f32 0.0, %v2314
      %2316 = vmatmul.f32.gmra.mxu0 %v2272
      %v2317 = vpop.f32.mrf.mxu0
      %v2318 = vadd.f32 0.0, %v2317
      %2319 = vdwg.mxu0
      %v2320 = vadd.f32 %v2229, %v2292
      %v2321 = vadd.f32 %v2230, %v2315
      %v2322 = vadd.f32 %v2231, %v2295
      %v2323 = vadd.f32 %v2232, %v2318
      %s2324 = scalar_lea.vmem %s6, 128
      %v2325 = vld [vmem:[%s2324] sm:$0xff]
      %v2326 = vld [vmem:[%s2324 + $0x8] sm:$0x1]
      %2327 = vrot.lane.b32.xlu0 %v1628, 111
      %v2328 = vpop.permute.xlu0 %2327
      %2329 = vrot.lane.b32.xlu0 %v1630, 111
      %v2330 = vpop.permute.xlu0 %2329
      %2331 = vrot.lane.b32.xlu0 %v1632, 111
      %v2332 = vpop.permute.xlu0 %2331
      %2333 = vrot.lane.b32.xlu0 %v1634, 111
      %v2334 = vpop.permute.xlu0 %2333
      %2335 = vrot.lane.b32.xlu0 %v1629, 111
      %v2336 = vpop.permute.xlu0 %2335
      %2337 = vrot.lane.b32.xlu0 %v1631, 111
      %v2338 = vpop.permute.xlu0 %2337
      %2339 = vrot.lane.b32.xlu0 %v1633, 111
      %v2340 = vpop.permute.xlu0 %2339
      %2341 = vrot.lane.b32.xlu0 %v1635, 111
      %v2342 = vpop.permute.xlu0 %2341
      %v2343 = vsel %vm1502, %v2328, %v2336
      %v2344 = vsel %vm1502, %v2330, %v2338
      %v2345 = vsel %vm1502, %v2332, %v2340
      %v2346 = vsel %vm1502, %v2334, %v2342
      %v2347 = vsel %vm1502, %v2336, %v2328
      %v2348 = vsel %vm1502, %v2338, %v2330
      %v2349 = vsel %vm1502, %v2340, %v2332
      %v2350 = vsel %vm1502, %v2342, %v2334
      %v2351 = vsel %vm1508, %v2343, 0.0
      %v2352 = vsel %vm1509, %v2347, 0.0
      %v2353 = vsel %vm1508, %v2344, 0.0
      %v2354 = vsel %vm1509, %v2348, 0.0
      %v2355 = vsel %vm1508, %v2345, 0.0
      %v2356 = vsel %vm1509, %v2349, 0.0
      %v2357 = vsel %vm1508, %v2346, 0.0
      %v2358 = vsel %vm1509, %v2350, 0.0
      %v2360 = vsel %vm1705, %v2325, 0
      %v2363 = vsel %vm1705, %v2326, 0
      %2365 = vmatpush.msra.mxu0 0.0
      %2366 = vmatpush.msra.mxu0 0.0
      %2367 = vmatpush.msra.mxu0 0.0
      %2368 = vmatpush.msra.mxu0 0.0
      %2369 = vmatpush.msra.mxu0 0.0
      %2370 = vmatpush.msra.mxu0 0.0
      %2371 = vmatpush.msra.mxu0 0.0
      %2372 = vmatpush.msra.mxu0 0.0
      %2373 = vmatpush.msra.mxu0 0.0
      %2374 = vmatpush.msra.mxu0 0.0
      %2375 = vmatpush.msra.mxu0 0.0
      %2376 = vmatpush.msra.mxu0 0.0
      %2377 = vmatpush.msra.mxu0 %v2357
      %2378 = vmatpush.msra.mxu0 %v2355
      %2379 = vmatpush.msra.mxu0 %v2353
      %2380 = vmatpush.msra.mxu0 %v2351
      %2381 = vmatmul.f32.gmra.mxu0 %v2360
      %v2382 = vpop.f32.mrf.mxu0
      %v2383 = vadd.f32 0.0, %v2382
      %2384 = vmatmul.f32.gmra.mxu0 %v2363
      %v2385 = vpop.f32.mrf.mxu0
      %v2386 = vadd.f32 0.0, %v2385
      %2387 = vdwg.mxu0
      %2388 = vmatpush.msra.mxu0 0.0
      %2389 = vmatpush.msra.mxu0 0.0
      %2390 = vmatpush.msra.mxu0 0.0
      %2391 = vmatpush.msra.mxu0 0.0
      %2392 = vmatpush.msra.mxu0 0.0
      %2393 = vmatpush.msra.mxu0 0.0
      %2394 = vmatpush.msra.mxu0 0.0
      %2395 = vmatpush.msra.mxu0 0.0
      %2396 = vmatpush.msra.mxu0 0.0
      %2397 = vmatpush.msra.mxu0 0.0
      %2398 = vmatpush.msra.mxu0 0.0
      %2399 = vmatpush.msra.mxu0 0.0
      %2400 = vmatpush.msra.mxu0 %v2358
      %2401 = vmatpush.msra.mxu0 %v2356
      %2402 = vmatpush.msra.mxu0 %v2354
      %2403 = vmatpush.msra.mxu0 %v2352
      %2404 = vmatmul.f32.gmra.mxu0 %v2360
      %v2405 = vpop.f32.mrf.mxu0
      %v2406 = vadd.f32 0.0, %v2405
      %2407 = vmatmul.f32.gmra.mxu0 %v2363
      %v2408 = vpop.f32.mrf.mxu0
      %v2409 = vadd.f32 0.0, %v2408
      %2410 = vdwg.mxu0
      %v2411 = vadd.f32 %v2320, %v2383
      %v2412 = vadd.f32 %v2321, %v2406
      %v2413 = vadd.f32 %v2322, %v2386
      %v2414 = vadd.f32 %v2323, %v2409
      %v2415 = vld [vmem:[%s7] sm:$0xff]
      %v2416 = vld [vmem:[%s7 + $0x8] sm:$0x1]
      %2418 = vset.pattern.permute.xlu0 0
      %2419 = vperm.xlu0 %2418, %v2415
      %v2420 = vpop.permute.xlu0 %2419
      %2423 = vset.pattern.permute.xlu0 0
      %2424 = vperm.xlu0 %2423, %v2416
      %v2425 = vpop.permute.xlu0 %2424
      %v2427 = vadd.f32 %v2411, %v2420
      %v2428 = vadd.f32 %v2412, %v2420
      %v2429 = vadd.f32 %v2413, %v2425
      %v2430 = vadd.f32 %v2414, %v2425
      %v2431 = vlaneseq
      %v2432 = vshrl.u32 %v2431, 7
      %v2433 = vadd.s32 %v2432, 8
      %v2434 = vcvt.s32.f32 %v2432
      %v2435 = vcvt.s32.f32 %v2433
      %2438 = vst [vmem:[#allocation1] sm:$0xff] %v2427
      %2439 = vst [vmem:[#allocation1 + $0x9] sm:$0xff] %v2428
      %s2440 = scalar_lea.vmem [#allocation1], 3
      %v2441 = vld [vmem:[%s2440] ss:$9 sm:$0xff]
      %v2443 = vadd.f32 %v613, %v2441
      %2444 = vst [vmem:[#allocation1] sm:$0xff] %v2427
      %2445 = vst [vmem:[#allocation1 + $0x9] sm:$0xff] %v2428
      %s2446 = scalar_lea.vmem [#allocation1], 6
      %v2447 = vld [vmem:[%s2446] ss:$9 sm:$0xff]
      %v2449 = vadd.f32 %v615, %v2447
      %v2450 = vfloor.f32 %v2443
      %v2451 = vfloor.f32 %v2449
      %v2452 = vsub.f32 %v2443, %v2450
      %v2453 = vsub.f32 %v2449, %v2451
      %v2454 = vsub.f32 1.0, %v2452
      %v2455 = vsub.f32 1.0, %v2453
      %vm2456 = vcmp.ge.f32.partialorder %v2450, 0.0
      %vm2457 = vcmp.le.f32.partialorder %v2450, 15.0
      %vm2458 = vmand %vm2456, %vm2457
      %v2459 = vsel %vm2458, %v2454, 0.0
      %vm2460 = vcmp.ge.f32.partialorder %v2450, -1.0
      %vm2461 = vcmp.le.f32.partialorder %v2450, 14.0
      %vm2462 = vmand %vm2460, %vm2461
      %v2463 = vsel %vm2462, %v2452, 0.0
      %vm2464 = vcmp.ge.f32.partialorder %v2451, 0.0
      %vm2465 = vcmp.le.f32.partialorder %v2451, 15.0
      %vm2466 = vmand %vm2464, %vm2465
      %v2467 = vsel %vm2466, %v2455, 0.0
      %vm2468 = vcmp.ge.f32.partialorder %v2451, -1.0
      %vm2469 = vcmp.le.f32.partialorder %v2451, 14.0
      %vm2470 = vmand %vm2468, %vm2469
      %v2471 = vsel %vm2470, %v2453, 0.0
      %v2473 = vperm.slane %v2450, 0
      %v2474 = vperm.slane %v2450, 1
      %vm2477 = vcmp.eq.f32.partialorder %v2434, %v2473
      %vm2478 = vcmp.eq.f32.partialorder %v2434, %v2474
      %vm2479 = vcmp.eq.f32.partialorder %v2435, %v2473
      %vm2480 = vcmp.eq.f32.partialorder %v2435, %v2474
      %v2482 = vperm.slane %v2459, 0
      %v2483 = vperm.slane %v2459, 1
      %v2486 = vsel %vm2477, %v2482, 0.0
      %v2487 = vsel %vm2478, %v2483, 0.0
      %v2488 = vsel %vm2479, %v2482, 0.0
      %v2489 = vsel %vm2480, %v2483, 0.0
      %v2490 = vadd.f32 %v2450, 1.0
      %v2492 = vperm.slane %v2490, 0
      %v2493 = vperm.slane %v2490, 1
      %vm2496 = vcmp.eq.f32.partialorder %v2434, %v2492
      %vm2497 = vcmp.eq.f32.partialorder %v2434, %v2493
      %vm2498 = vcmp.eq.f32.partialorder %v2435, %v2492
      %vm2499 = vcmp.eq.f32.partialorder %v2435, %v2493
      %v2501 = vperm.slane %v2463, 0
      %v2502 = vperm.slane %v2463, 1
      %v2505 = vsel %vm2496, %v2501, 0.0
      %v2506 = vsel %vm2497, %v2502, 0.0
      %v2507 = vsel %vm2498, %v2501, 0.0
      %v2508 = vsel %vm2499, %v2502, 0.0
      %v2509 = vadd.f32 %v2486, %v2505
      %v2510 = vadd.f32 %v2487, %v2506
      %v2511 = vadd.f32 %v2488, %v2507
      %v2512 = vadd.f32 %v2489, %v2508
      %v2514 = vperm.slane %v2451, 0
      %v2515 = vperm.slane %v2451, 1
      %vm2518 = vcmp.eq.f32.partialorder %v2434, %v2514
      %vm2519 = vcmp.eq.f32.partialorder %v2434, %v2515
      %vm2520 = vcmp.eq.f32.partialorder %v2435, %v2514
      %vm2521 = vcmp.eq.f32.partialorder %v2435, %v2515
      %v2523 = vperm.slane %v2467, 0
      %v2524 = vperm.slane %v2467, 1
      %v2527 = vsel %vm2518, %v2523, 0.0
      %v2528 = vsel %vm2519, %v2524, 0.0
      %v2529 = vsel %vm2520, %v2523, 0.0
      %v2530 = vsel %vm2521, %v2524, 0.0
      %v2531 = vadd.f32 %v2451, 1.0
      %v2533 = vperm.slane %v2531, 0
      %v2534 = vperm.slane %v2531, 1
      %vm2537 = vcmp.eq.f32.partialorder %v2434, %v2533
      %vm2538 = vcmp.eq.f32.partialorder %v2434, %v2534
      %vm2539 = vcmp.eq.f32.partialorder %v2435, %v2533
      %vm2540 = vcmp.eq.f32.partialorder %v2435, %v2534
      %v2542 = vperm.slane %v2471, 0
      %v2543 = vperm.slane %v2471, 1
      %v2546 = vsel %vm2537, %v2542, 0.0
      %v2547 = vsel %vm2538, %v2543, 0.0
      %v2548 = vsel %vm2539, %v2542, 0.0
      %v2549 = vsel %vm2540, %v2543, 0.0
      %v2550 = vadd.f32 %v2527, %v2546
      %v2551 = vadd.f32 %v2528, %v2547
      %v2552 = vadd.f32 %v2529, %v2548
      %v2553 = vadd.f32 %v2530, %v2549
      %2554 = vst [vmem:[#allocation1] sm:$0xff] %v2427
      %2555 = vst [vmem:[#allocation1 + $0x9] sm:$0xff] %v2428
      %s2556 = scalar_lea.vmem [#allocation1], 4
      %v2557 = vld [vmem:[%s2556] ss:$9 sm:$0xff]
      %v2559 = vadd.f32 %v613, %v2557
      %2560 = vst [vmem:[#allocation1] sm:$0xff] %v2427
      %2561 = vst [vmem:[#allocation1 + $0x9] sm:$0xff] %v2428
      %s2562 = scalar_lea.vmem [#allocation1], 7
      %v2563 = vld [vmem:[%s2562] ss:$9 sm:$0xff]
      %v2565 = vadd.f32 %v615, %v2563
      %v2566 = vfloor.f32 %v2559
      %v2567 = vfloor.f32 %v2565
      %v2568 = vsub.f32 %v2559, %v2566
      %v2569 = vsub.f32 %v2565, %v2567
      %v2570 = vsub.f32 1.0, %v2568
      %v2571 = vsub.f32 1.0, %v2569
      %vm2572 = vcmp.ge.f32.partialorder %v2566, 0.0
      %vm2573 = vcmp.le.f32.partialorder %v2566, 15.0
      %vm2574 = vmand %vm2572, %vm2573
      %v2575 = vsel %vm2574, %v2570, 0.0
      %vm2576 = vcmp.ge.f32.partialorder %v2566, -1.0
      %vm2577 = vcmp.le.f32.partialorder %v2566, 14.0
      %vm2578 = vmand %vm2576, %vm2577
      %v2579 = vsel %vm2578, %v2568, 0.0
      %vm2580 = vcmp.ge.f32.partialorder %v2567, 0.0
      %vm2581 = vcmp.le.f32.partialorder %v2567, 15.0
      %vm2582 = vmand %vm2580, %vm2581
      %v2583 = vsel %vm2582, %v2571, 0.0
      %vm2584 = vcmp.ge.f32.partialorder %v2567, -1.0
      %vm2585 = vcmp.le.f32.partialorder %v2567, 14.0
      %vm2586 = vmand %vm2584, %vm2585
      %v2587 = vsel %vm2586, %v2569, 0.0
      %v2589 = vperm.slane %v2566, 0
      %v2590 = vperm.slane %v2566, 1
      %vm2593 = vcmp.eq.f32.partialorder %v2434, %v2589
      %vm2594 = vcmp.eq.f32.partialorder %v2434, %v2590
      %vm2595 = vcmp.eq.f32.partialorder %v2435, %v2589
      %vm2596 = vcmp.eq.f32.partialorder %v2435, %v2590
      %v2598 = vperm.slane %v2575, 0
      %v2599 = vperm.slane %v2575, 1
      %v2602 = vsel %vm2593, %v2598, 0.0
      %v2603 = vsel %vm2594, %v2599, 0.0
      %v2604 = vsel %vm2595, %v2598, 0.0
      %v2605 = vsel %vm2596, %v2599, 0.0
      %v2606 = vadd.f32 %v2566, 1.0
      %v2608 = vperm.slane %v2606, 0
      %v2609 = vperm.slane %v2606, 1
      %vm2612 = vcmp.eq.f32.partialorder %v2434, %v2608
      %vm2613 = vcmp.eq.f32.partialorder %v2434, %v2609
      %vm2614 = vcmp.eq.f32.partialorder %v2435, %v2608
      %vm2615 = vcmp.eq.f32.partialorder %v2435, %v2609
      %v2617 = vperm.slane %v2579, 0
      %v2618 = vperm.slane %v2579, 1
      %v2621 = vsel %vm2612, %v2617, 0.0
      %v2622 = vsel %vm2613, %v2618, 0.0
      %v2623 = vsel %vm2614, %v2617, 0.0
      %v2624 = vsel %vm2615, %v2618, 0.0
      %v2625 = vadd.f32 %v2602, %v2621
      %v2626 = vadd.f32 %v2603, %v2622
      %v2627 = vadd.f32 %v2604, %v2623
      %v2628 = vadd.f32 %v2605, %v2624
      %v2630 = vperm.slane %v2567, 0
      %v2631 = vperm.slane %v2567, 1
      %vm2634 = vcmp.eq.f32.partialorder %v2434, %v2630
      %vm2635 = vcmp.eq.f32.partialorder %v2434, %v2631
      %vm2636 = vcmp.eq.f32.partialorder %v2435, %v2630
      %vm2637 = vcmp.eq.f32.partialorder %v2435, %v2631
      %v2639 = vperm.slane %v2583, 0
      %v2640 = vperm.slane %v2583, 1
      %v2643 = vsel %vm2634, %v2639, 0.0
      %v2644 = vsel %vm2635, %v2640, 0.0
      %v2645 = vsel %vm2636, %v2639, 0.0
      %v2646 = vsel %vm2637, %v2640, 0.0
      %v2647 = vadd.f32 %v2567, 1.0
      %v2649 = vperm.slane %v2647, 0
      %v2650 = vperm.slane %v2647, 1
      %vm2653 = vcmp.eq.f32.partialorder %v2434, %v2649
      %vm2654 = vcmp.eq.f32.partialorder %v2434, %v2650
      %vm2655 = vcmp.eq.f32.partialorder %v2435, %v2649
      %vm2656 = vcmp.eq.f32.partialorder %v2435, %v2650
      %v2658 = vperm.slane %v2587, 0
      %v2659 = vperm.slane %v2587, 1
      %v2662 = vsel %vm2653, %v2658, 0.0
      %v2663 = vsel %vm2654, %v2659, 0.0
      %v2664 = vsel %vm2655, %v2658, 0.0
      %v2665 = vsel %vm2656, %v2659, 0.0
      %v2666 = vadd.f32 %v2643, %v2662
      %v2667 = vadd.f32 %v2644, %v2663
      %v2668 = vadd.f32 %v2645, %v2664
      %v2669 = vadd.f32 %v2646, %v2665
      %2670 = vst [vmem:[#allocation1] sm:$0xff] %v2427
      %2671 = vst [vmem:[#allocation1 + $0x9] sm:$0xff] %v2428
      %s2672 = scalar_lea.vmem [#allocation1], 5
      %v2673 = vld [vmem:[%s2672] ss:$9 sm:$0xff]
      %v2675 = vadd.f32 %v613, %v2673
      %v2678 = vrot.slane %v2430, 7
      %vm2679 = vcmask 1040384
      %v2680 = vsel %vm2679, %v2429, %v2678
      %v2682 = vadd.f32 %v615, %v2680
      %v2683 = vfloor.f32 %v2675
      %v2684 = vfloor.f32 %v2682
      %v2685 = vsub.f32 %v2675, %v2683
      %v2686 = vsub.f32 %v2682, %v2684
      %v2687 = vsub.f32 1.0, %v2685
      %v2688 = vsub.f32 1.0, %v2686
      %vm2689 = vcmp.ge.f32.partialorder %v2683, 0.0
      %vm2690 = vcmp.le.f32.partialorder %v2683, 15.0
      %vm2691 = vmand %vm2689, %vm2690
      %v2692 = vsel %vm2691, %v2687, 0.0
      %vm2693 = vcmp.ge.f32.partialorder %v2683, -1.0
      %vm2694 = vcmp.le.f32.partialorder %v2683, 14.0
      %vm2695 = vmand %vm2693, %vm2694
      %v2696 = vsel %vm2695, %v2685, 0.0
      %vm2697 = vcmp.ge.f32.partialorder %v2684, 0.0
      %vm2698 = vcmp.le.f32.partialorder %v2684, 15.0
      %vm2699 = vmand %vm2697, %vm2698
      %v2700 = vsel %vm2699, %v2688, 0.0
      %vm2701 = vcmp.ge.f32.partialorder %v2684, -1.0
      %vm2702 = vcmp.le.f32.partialorder %v2684, 14.0
      %vm2703 = vmand %vm2701, %vm2702
      %v2704 = vsel %vm2703, %v2686, 0.0
      %v2706 = vperm.slane %v2683, 0
      %v2707 = vperm.slane %v2683, 1
      %vm2710 = vcmp.eq.f32.partialorder %v2434, %v2706
      %vm2711 = vcmp.eq.f32.partialorder %v2434, %v2707
      %vm2712 = vcmp.eq.f32.partialorder %v2435, %v2706
      %vm2713 = vcmp.eq.f32.partialorder %v2435, %v2707
      %v2715 = vperm.slane %v2692, 0
      %v2716 = vperm.slane %v2692, 1
      %v2719 = vsel %vm2710, %v2715, 0.0
      %v2720 = vsel %vm2711, %v2716, 0.0
      %v2721 = vsel %vm2712, %v2715, 0.0
      %v2722 = vsel %vm2713, %v2716, 0.0
      %v2723 = vadd.f32 %v2683, 1.0
      %v2725 = vperm.slane %v2723, 0
      %v2726 = vperm.slane %v2723, 1
      %vm2729 = vcmp.eq.f32.partialorder %v2434, %v2725
      %vm2730 = vcmp.eq.f32.partialorder %v2434, %v2726
      %vm2731 = vcmp.eq.f32.partialorder %v2435, %v2725
      %vm2732 = vcmp.eq.f32.partialorder %v2435, %v2726
      %v2734 = vperm.slane %v2696, 0
      %v2735 = vperm.slane %v2696, 1
      %v2738 = vsel %vm2729, %v2734, 0.0
      %v2739 = vsel %vm2730, %v2735, 0.0
      %v2740 = vsel %vm2731, %v2734, 0.0
      %v2741 = vsel %vm2732, %v2735, 0.0
      %v2742 = vadd.f32 %v2719, %v2738
      %v2743 = vadd.f32 %v2720, %v2739
      %v2744 = vadd.f32 %v2721, %v2740
      %v2745 = vadd.f32 %v2722, %v2741
      %v2747 = vperm.slane %v2684, 0
      %v2748 = vperm.slane %v2684, 1
      %vm2751 = vcmp.eq.f32.partialorder %v2434, %v2747
      %vm2752 = vcmp.eq.f32.partialorder %v2434, %v2748
      %vm2753 = vcmp.eq.f32.partialorder %v2435, %v2747
      %vm2754 = vcmp.eq.f32.partialorder %v2435, %v2748
      %v2756 = vperm.slane %v2700, 0
      %v2757 = vperm.slane %v2700, 1
      %v2760 = vsel %vm2751, %v2756, 0.0
      %v2761 = vsel %vm2752, %v2757, 0.0
      %v2762 = vsel %vm2753, %v2756, 0.0
      %v2763 = vsel %vm2754, %v2757, 0.0
      %v2764 = vadd.f32 %v2684, 1.0
      %v2766 = vperm.slane %v2764, 0
      %v2767 = vperm.slane %v2764, 1
      %vm2770 = vcmp.eq.f32.partialorder %v2434, %v2766
      %vm2771 = vcmp.eq.f32.partialorder %v2434, %v2767
      %vm2772 = vcmp.eq.f32.partialorder %v2435, %v2766
      %vm2773 = vcmp.eq.f32.partialorder %v2435, %v2767
      %v2775 = vperm.slane %v2704, 0
      %v2776 = vperm.slane %v2704, 1
      %v2779 = vsel %vm2770, %v2775, 0.0
      %v2780 = vsel %vm2771, %v2776, 0.0
      %v2781 = vsel %vm2772, %v2775, 0.0
      %v2782 = vsel %vm2773, %v2776, 0.0
      %v2783 = vadd.f32 %v2760, %v2779
      %v2784 = vadd.f32 %v2761, %v2780
      %v2785 = vadd.f32 %v2762, %v2781
      %v2786 = vadd.f32 %v2763, %v2782
      %v2787 = vld [vmem:[%s603] sm:$0x77]
      %v2788 = vld [vmem:[%s607] sm:$0x3]
      %v2790 = vperm.slane %v2788, 0
      %2791 = vrot.lane.b32.xlu0 %v2790, 112
      %v2792 = vpop.permute.xlu0 %2791
      %2794 = vrot.lane.b32.xlu0 %v2790, 96
      %v2795 = vpop.permute.xlu0 %2794
      %2797 = vrot.lane.b32.xlu0 %v2790, 80
      %v2798 = vpop.permute.xlu0 %2797
      %2800 = vrot.lane.b32.xlu0 %v2790, 64
      %v2801 = vpop.permute.xlu0 %2800
      %2803 = vrot.lane.b32.xlu0 %v2790, 48
      %v2804 = vpop.permute.xlu0 %2803
      %2806 = vrot.lane.b32.xlu0 %v2790, 32
      %v2807 = vpop.permute.xlu0 %2806
      %2809 = vrot.lane.b32.xlu0 %v2790, 16
      %v2810 = vpop.permute.xlu0 %2809
      %v2812 = vperm.slane %v2788, 1
      %2814 = vrot.lane.b32.xlu0 %v2812, 112
      %v2815 = vpop.permute.xlu0 %2814
      %2817 = vrot.lane.b32.xlu0 %v2812, 96
      %v2818 = vpop.permute.xlu0 %2817
      %2820 = vrot.lane.b32.xlu0 %v2812, 80
      %v2821 = vpop.permute.xlu0 %2820
      %2823 = vrot.lane.b32.xlu0 %v2812, 64
      %v2824 = vpop.permute.xlu0 %2823
      %2826 = vrot.lane.b32.xlu0 %v2812, 48
      %v2827 = vpop.permute.xlu0 %2826
      %2829 = vrot.lane.b32.xlu0 %v2812, 32
      %v2830 = vpop.permute.xlu0 %2829
      %2832 = vrot.lane.b32.xlu0 %v2812, 16
      %v2833 = vpop.permute.xlu0 %2832
      %v2835 = vsel %vm2679, %v2788, %v2792
      %vm2836 = vcmask 1041408
      %v2837 = vsel %vm2836, %v2835, %v2795
      %vm2838 = vcmask 1042432
      %v2839 = vsel %vm2838, %v2837, %v2798
      %v2840 = vsel %vm717, %v2839, %v2801
      %vm2841 = vcmask 1044480
      %v2842 = vsel %vm2841, %v2840, %v2804
      %vm2843 = vcmask 1045504
      %v2844 = vsel %vm2843, %v2842, %v2807
      %vm2845 = vcmask 1046528
      %v2846 = vsel %vm2845, %v2844, %v2810
      %v2847 = vsel %vm2679, %v2812, %v2815
      %v2848 = vsel %vm2836, %v2847, %v2818
      %v2849 = vsel %vm2838, %v2848, %v2821
      %v2850 = vsel %vm717, %v2849, %v2824
      %v2851 = vsel %vm2841, %v2850, %v2827
      %v2852 = vsel %vm2843, %v2851, %v2830
      %v2853 = vsel %vm2845, %v2852, %v2833
      %vm2854 = vcmask 130048
      %v2856 = vsel %vm2854, %v2846, 0
      %v2859 = vsel %vm2854, %v2853, 0
      %2861 = vmatpush.msra.mxu0 0.0
      %2862 = vmatpush.msra.mxu0 0.0
      %2863 = vmatpush.msra.mxu0 0.0
      %2864 = vmatpush.msra.mxu0 0.0
      %2865 = vmatpush.msra.mxu0 0.0
      %2866 = vmatpush.msra.mxu0 0.0
      %2867 = vmatpush.msra.mxu0 0.0
      %2868 = vmatpush.msra.mxu0 0.0
      %2869 = vmatpush.msra.mxu0 0.0
      %2870 = vmatpush.msra.mxu0 0.0
      %2871 = vmatpush.msra.mxu0 0.0
      %2872 = vmatpush.msra.mxu0 0.0
      %2873 = vmatpush.msra.mxu0 0.0
      %2874 = vmatpush.msra.mxu0 0.0
      %2875 = vmatpush.msra.mxu0 %v2511
      %2876 = vmatpush.msra.mxu0 %v2509
      %2877 = vmatmul.f32.gmra.mxu0 %v2856
      %v2878 = vpop.f32.mrf.mxu0
      %v2879 = vadd.f32 0.0, %v2878
      %2880 = vmatmul.f32.gmra.mxu0 %v2859
      %v2881 = vpop.f32.mrf.mxu0
      %v2882 = vadd.f32 0.0, %v2881
      %2883 = vdwg.mxu0
      %2884 = vmatpush.msra.mxu0 0.0
      %2885 = vmatpush.msra.mxu0 0.0
      %2886 = vmatpush.msra.mxu0 0.0
      %2887 = vmatpush.msra.mxu0 0.0
      %2888 = vmatpush.msra.mxu0 0.0
      %2889 = vmatpush.msra.mxu0 0.0
      %2890 = vmatpush.msra.mxu0 0.0
      %2891 = vmatpush.msra.mxu0 0.0
      %2892 = vmatpush.msra.mxu0 0.0
      %2893 = vmatpush.msra.mxu0 0.0
      %2894 = vmatpush.msra.mxu0 0.0
      %2895 = vmatpush.msra.mxu0 0.0
      %2896 = vmatpush.msra.mxu0 0.0
      %2897 = vmatpush.msra.mxu0 0.0
      %2898 = vmatpush.msra.mxu0 %v2512
      %2899 = vmatpush.msra.mxu0 %v2510
      %2900 = vmatmul.f32.gmra.mxu0 %v2856
      %v2901 = vpop.f32.mrf.mxu0
      %v2902 = vadd.f32 0.0, %v2901
      %2903 = vmatmul.f32.gmra.mxu0 %v2859
      %v2904 = vpop.f32.mrf.mxu0
      %v2905 = vadd.f32 0.0, %v2904
      %2906 = vdwg.mxu0
      %v2907 = vmul.f32 %v2550, %v2879
      %v2908 = vmul.f32 %v2551, %v2902
      %v2909 = vmul.f32 %v2552, %v2882
      %v2910 = vmul.f32 %v2553, %v2905
      %v2911 = vadd.f32 %v2907, %v2909
      %v2912 = vrot.slane %v2911, 4
      %v2913 = vadd.f32 %v2911, %v2912
      %v2914 = vrot.slane %v2913, 2
      %v2915 = vadd.f32 %v2913, %v2914
      %v2916 = vrot.slane %v2915, 1
      %v2917 = vadd.f32 %v2915, %v2916
      %v2918 = vadd.f32 %v2908, %v2910
      %v2919 = vrot.slane %v2918, 4
      %v2920 = vadd.f32 %v2918, %v2919
      %v2921 = vrot.slane %v2920, 2
      %v2922 = vadd.f32 %v2920, %v2921
      %v2923 = vrot.slane %v2922, 1
      %v2924 = vadd.f32 %v2922, %v2923
      %v2925 = vmul.f32 %v2427, 20.0
      %v2926 = vmul.f32 %v2428, 20.0
      %v2927 = vadd.f32 %v2917, %v2925
      %v2928 = vadd.f32 %v2924, %v2926
      %v2929 = vsub.f32 %v2927, 10.0
      %v2930 = vsub.f32 %v2928, 10.0
      %v2932 = vadd.f32 %v2929, %v2790
      %v2933 = vadd.f32 %v2930, %v2812
      %v2934 = vld [vmem:[%s8] sm:$0x1]
      %2935 = vrot.lane.b32.xlu0 %v2932, 17
      %v2936 = vpop.permute.xlu0 %2935
      %2937 = vrot.lane.b32.xlu0 %v2933, 17
      %v2938 = vpop.permute.xlu0 %2937
      %v2939 = vsel %vm670, %v2936, %v2938
      %v2940 = vsel %vm670, %v2938, %v2936
      %v2943 = vrot.slane %v2939, 7
      %v2944 = vsel %vm2679, %v2940, %v2943
      %v2946 = vsel %vm624, %v2944, 0.0
      %2948 = vset.pattern.permute.xlu0 0
      %2949 = vperm.xlu0 %2948, %v2934
      %v2950 = vpop.permute.xlu0 %2949
      %v2953 = vperm.slane %v2946, 0
      %v2954 = vperm.slane %v2946, 1
      %v2957 = vmul.f32 %v2950, %v2953
      %v2958 = vmul.f32 %v2950, %v2954
      %v2959 = vld [vmem:[%s8 + $0x1] sm:$0x1]
      %v2961 = vperm.slane %v2787, 0
      %v2962 = vperm.slane %v2787, 4
      %2965 = vrot.lane.b32.xlu0 %v2961, 17
      %v2966 = vpop.permute.xlu0 %2965
      %2967 = vrot.lane.b32.xlu0 %v2962, 17
      %v2968 = vpop.permute.xlu0 %2967
      %v2969 = vsel %vm670, %v2966, %v2968
      %v2970 = vsel %vm670, %v2968, %v2966
      %v2973 = vrot.slane %v2969, 7
      %v2974 = vsel %vm2679, %v2970, %v2973
      %v2976 = vsel %vm624, %v2974, 0.0
      %2978 = vset.pattern.permute.xlu0 0
      %2979 = vperm.xlu0 %2978, %v2959
      %v2980 = vpop.permute.xlu0 %2979
      %v2983 = vperm.slane %v2976, 0
      %v2984 = vperm.slane %v2976, 1
      %v2987 = vmul.f32 %v2980, %v2983
      %v2988 = vmul.f32 %v2980, %v2984
      %v2989 = vadd.f32 %v2957, %v2987
      %v2990 = vadd.f32 %v2958, %v2988
      %v2991 = vld [vmem:[%s8 + $0x2] sm:$0x1]
      %2992 = vrot.lane.b32.xlu0 %v2932, 16
      %v2993 = vpop.permute.xlu0 %2992
      %2994 = vrot.lane.b32.xlu0 %v2933, 16
      %v2995 = vpop.permute.xlu0 %2994
      %v2996 = vsel %vm694, %v2993, %v2995
      %v2997 = vsel %vm694, %v2995, %v2993
      %v3000 = vrot.slane %v2996, 7
      %v3001 = vsel %vm2679, %v2997, %v3000
      %v3003 = vsel %vm630, %v3001, 0.0
      %3005 = vset.pattern.permute.xlu0 0
      %3006 = vperm.xlu0 %3005, %v2991
      %v3007 = vpop.permute.xlu0 %3006
      %v3010 = vperm.slane %v3003, 0
      %v3011 = vperm.slane %v3003, 1
      %v3014 = vmul.f32 %v3007, %v3010
      %v3015 = vmul.f32 %v3007, %v3011
      %v3016 = vld [vmem:[%s8 + $0x3] sm:$0x1]
      %3017 = vrot.lane.b32.xlu0 %v2961, 16
      %v3018 = vpop.permute.xlu0 %3017
      %3019 = vrot.lane.b32.xlu0 %v2962, 16
      %v3020 = vpop.permute.xlu0 %3019
      %v3021 = vsel %vm694, %v3018, %v3020
      %v3022 = vsel %vm694, %v3020, %v3018
      %v3025 = vrot.slane %v3021, 7
      %v3026 = vsel %vm2679, %v3022, %v3025
      %v3028 = vsel %vm630, %v3026, 0.0
      %3030 = vset.pattern.permute.xlu0 0
      %3031 = vperm.xlu0 %3030, %v3016
      %v3032 = vpop.permute.xlu0 %3031
      %v3035 = vperm.slane %v3028, 0
      %v3036 = vperm.slane %v3028, 1
      %v3039 = vmul.f32 %v3032, %v3035
      %v3040 = vmul.f32 %v3032, %v3036
      %v3041 = vadd.f32 %v3014, %v3039
      %v3042 = vadd.f32 %v3015, %v3040
      %v3043 = vadd.f32 %v2989, %v3041
      %v3044 = vadd.f32 %v2990, %v3042
      %v3045 = vld [vmem:[%s8 + $0x4] sm:$0x1]
      %3046 = vrot.lane.b32.xlu0 %v2932, 15
      %v3047 = vpop.permute.xlu0 %3046
      %3048 = vrot.lane.b32.xlu0 %v2933, 15
      %v3049 = vpop.permute.xlu0 %3048
      %v3050 = vsel %vm872, %v3047, %v3049
      %v3051 = vsel %vm872, %v3049, %v3047
      %v3054 = vrot.slane %v3050, 7
      %v3055 = vsel %vm2679, %v3051, %v3054
      %v3057 = vsel %vm636, %v3055, 0.0
      %3059 = vset.pattern.permute.xlu0 0
      %3060 = vperm.xlu0 %3059, %v3045
      %v3061 = vpop.permute.xlu0 %3060
      %v3064 = vperm.slane %v3057, 0
      %v3065 = vperm.slane %v3057, 1
      %v3068 = vmul.f32 %v3061, %v3064
      %v3069 = vmul.f32 %v3061, %v3065
      %v3070 = vld [vmem:[%s8 + $0x5] sm:$0x1]
      %3071 = vrot.lane.b32.xlu0 %v2961, 15
      %v3072 = vpop.permute.xlu0 %3071
      %3073 = vrot.lane.b32.xlu0 %v2962, 15
      %v3074 = vpop.permute.xlu0 %3073
      %v3075 = vsel %vm872, %v3072, %v3074
      %v3076 = vsel %vm872, %v3074, %v3072
      %v3079 = vrot.slane %v3075, 7
      %v3080 = vsel %vm2679, %v3076, %v3079
      %v3082 = vsel %vm636, %v3080, 0.0
      %3084 = vset.pattern.permute.xlu0 0
      %3085 = vperm.xlu0 %3084, %v3070
      %v3086 = vpop.permute.xlu0 %3085
      %v3089 = vperm.slane %v3082, 0
      %v3090 = vperm.slane %v3082, 1
      %v3093 = vmul.f32 %v3086, %v3089
      %v3094 = vmul.f32 %v3086, %v3090
      %v3095 = vadd.f32 %v3068, %v3093
      %v3096 = vadd.f32 %v3069, %v3094
      %v3097 = vadd.f32 %v3043, %v3095
      %v3098 = vadd.f32 %v3044, %v3096
      %v3099 = vld [vmem:[%s8 + $0x6] sm:$0x1]
      %3100 = vrot.lane.b32.xlu0 %v2932, 1
      %v3101 = vpop.permute.xlu0 %3100
      %3102 = vrot.lane.b32.xlu0 %v2933, 1
      %v3103 = vpop.permute.xlu0 %3102
      %v3104 = vsel %vm980, %v3101, %v3103
      %v3105 = vsel %vm980, %v3103, %v3101
      %v3108 = vrot.slane %v3104, 7
      %v3109 = vsel %vm2679, %v3105, %v3108
      %v3111 = vsel %vm641, %v3109, 0.0
      %3113 = vset.pattern.permute.xlu0 0
      %3114 = vperm.xlu0 %3113, %v3099
      %v3115 = vpop.permute.xlu0 %3114
      %v3118 = vperm.slane %v3111, 0
      %v3119 = vperm.slane %v3111, 1
      %v3122 = vmul.f32 %v3115, %v3118
      %v3123 = vmul.f32 %v3115, %v3119
      %v3124 = vld [vmem:[%s8 + $0x7] sm:$0x1]
      %3125 = vrot.lane.b32.xlu0 %v2961, 1
      %v3126 = vpop.permute.xlu0 %3125
      %3127 = vrot.lane.b32.xlu0 %v2962, 1
      %v3128 = vpop.permute.xlu0 %3127
      %v3129 = vsel %vm980, %v3126, %v3128
      %v3130 = vsel %vm980, %v3128, %v3126
      %v3133 = vrot.slane %v3129, 7
      %v3134 = vsel %vm2679, %v3130, %v3133
      %v3136 = vsel %vm641, %v3134, 0.0
      %3138 = vset.pattern.permute.xlu0 0
      %3139 = vperm.xlu0 %3138, %v3124
      %v3140 = vpop.permute.xlu0 %3139
      %v3143 = vperm.slane %v3136, 0
      %v3144 = vperm.slane %v3136, 1
      %v3147 = vmul.f32 %v3140, %v3143
      %v3148 = vmul.f32 %v3140, %v3144
      %v3149 = vadd.f32 %v3122, %v3147
      %v3150 = vadd.f32 %v3123, %v3148
      %v3151 = vadd.f32 %v3097, %v3149
      %v3152 = vadd.f32 %v3098, %v3150
      %v3153 = vld [vmem:[%s8 + $0x8] sm:$0x1]
      %3155 = vset.pattern.permute.xlu0 0
      %3156 = vperm.xlu0 %3155, %v3153
      %v3157 = vpop.permute.xlu0 %3156
      %v3159 = vmul.f32 %v3157, %v2932
      %v3160 = vmul.f32 %v3157, %v2933
      %v3161 = vld [vmem:[%s8 + $0x9] sm:$0x1]
      %3163 = vset.pattern.permute.xlu0 0
      %3164 = vperm.xlu0 %3163, %v3161
      %v3165 = vpop.permute.xlu0 %3164
      %v3167 = vmul.f32 %v3165, %v2961
      %v3168 = vmul.f32 %v3165, %v2962
      %v3169 = vadd.f32 %v3159, %v3167
      %v3170 = vadd.f32 %v3160, %v3168
      %v3171 = vadd.f32 %v3151, %v3169
      %v3172 = vadd.f32 %v3152, %v3170
      %v3173 = vld [vmem:[%s8 + $0xa] sm:$0x1]
      %3174 = vrot.lane.b32.xlu0 %v2932, 127
      %v3175 = vpop.permute.xlu0 %3174
      %3176 = vrot.lane.b32.xlu0 %v2933, 127
      %v3177 = vpop.permute.xlu0 %3176
      %v3178 = vsel %vm1178, %v3175, %v3177
      %v3179 = vsel %vm1178, %v3177, %v3175
      %v3182 = vrot.slane %v3179, 7
      %v3183 = vsel %vm2679, %v3178, %v3182
      %v3185 = vsel %vm643, %v3183, 0.0
      %3187 = vset.pattern.permute.xlu0 0
      %3188 = vperm.xlu0 %3187, %v3173
      %v3189 = vpop.permute.xlu0 %3188
      %v3192 = vperm.slane %v3185, 0
      %v3193 = vperm.slane %v3185, 1
      %v3196 = vmul.f32 %v3189, %v3192
      %v3197 = vmul.f32 %v3189, %v3193
      %v3198 = vld [vmem:[%s8 + $0xb] sm:$0x1]
      %3199 = vrot.lane.b32.xlu0 %v2961, 127
      %v3200 = vpop.permute.xlu0 %3199
      %3201 = vrot.lane.b32.xlu0 %v2962, 127
      %v3202 = vpop.permute.xlu0 %3201
      %v3203 = vsel %vm1178, %v3200, %v3202
      %v3204 = vsel %vm1178, %v3202, %v3200
      %v3207 = vrot.slane %v3204, 7
      %v3208 = vsel %vm2679, %v3203, %v3207
      %v3210 = vsel %vm643, %v3208, 0.0
      %3212 = vset.pattern.permute.xlu0 0
      %3213 = vperm.xlu0 %3212, %v3198
      %v3214 = vpop.permute.xlu0 %3213
      %v3217 = vperm.slane %v3210, 0
      %v3218 = vperm.slane %v3210, 1
      %v3221 = vmul.f32 %v3214, %v3217
      %v3222 = vmul.f32 %v3214, %v3218
      %v3223 = vadd.f32 %v3196, %v3221
      %v3224 = vadd.f32 %v3197, %v3222
      %v3225 = vadd.f32 %v3171, %v3223
      %v3226 = vadd.f32 %v3172, %v3224
      %v3227 = vld [vmem:[%s8 + $0xc] sm:$0x1]
      %3228 = vrot.lane.b32.xlu0 %v2932, 113
      %v3229 = vpop.permute.xlu0 %3228
      %3230 = vrot.lane.b32.xlu0 %v2933, 113
      %v3231 = vpop.permute.xlu0 %3230
      %v3232 = vsel %vm1286, %v3229, %v3231
      %v3233 = vsel %vm1286, %v3231, %v3229
      %v3236 = vrot.slane %v3233, 7
      %v3237 = vsel %vm2679, %v3232, %v3236
      %v3239 = vsel %vm648, %v3237, 0.0
      %3241 = vset.pattern.permute.xlu0 0
      %3242 = vperm.xlu0 %3241, %v3227
      %v3243 = vpop.permute.xlu0 %3242
      %v3246 = vperm.slane %v3239, 0
      %v3247 = vperm.slane %v3239, 1
      %v3250 = vmul.f32 %v3243, %v3246
      %v3251 = vmul.f32 %v3243, %v3247
      %v3252 = vld [vmem:[%s8 + $0xd] sm:$0x1]
      %3253 = vrot.lane.b32.xlu0 %v2961, 113
      %v3254 = vpop.permute.xlu0 %3253
      %3255 = vrot.lane.b32.xlu0 %v2962, 113
      %v3256 = vpop.permute.xlu0 %3255
      %v3257 = vsel %vm1286, %v3254, %v3256
      %v3258 = vsel %vm1286, %v3256, %v3254
      %v3261 = vrot.slane %v3258, 7
      %v3262 = vsel %vm2679, %v3257, %v3261
      %v3264 = vsel %vm648, %v3262, 0.0
      %3266 = vset.pattern.permute.xlu0 0
      %3267 = vperm.xlu0 %3266, %v3252
      %v3268 = vpop.permute.xlu0 %3267
      %v3271 = vperm.slane %v3264, 0
      %v3272 = vperm.slane %v3264, 1
      %v3275 = vmul.f32 %v3268, %v3271
      %v3276 = vmul.f32 %v3268, %v3272
      %v3277 = vadd.f32 %v3250, %v3275
      %v3278 = vadd.f32 %v3251, %v3276
      %v3279 = vadd.f32 %v3225, %v3277
      %v3280 = vadd.f32 %v3226, %v3278
      %v3281 = vld [vmem:[%s8 + $0xe] sm:$0x1]
      %3282 = vrot.lane.b32.xlu0 %v2932, 112
      %v3283 = vpop.permute.xlu0 %3282
      %3284 = vrot.lane.b32.xlu0 %v2933, 112
      %v3285 = vpop.permute.xlu0 %3284
      %v3286 = vsel %vm1394, %v3283, %v3285
      %v3287 = vsel %vm1394, %v3285, %v3283
      %v3290 = vrot.slane %v3287, 7
      %v3291 = vsel %vm2679, %v3286, %v3290
      %v3293 = vsel %vm650, %v3291, 0.0
      %3295 = vset.pattern.permute.xlu0 0
      %3296 = vperm.xlu0 %3295, %v3281
      %v3297 = vpop.permute.xlu0 %3296
      %v3300 = vperm.slane %v3293, 0
      %v3301 = vperm.slane %v3293, 1
      %v3304 = vmul.f32 %v3297, %v3300
      %v3305 = vmul.f32 %v3297, %v3301
      %v3306 = vld [vmem:[%s8 + $0xf] sm:$0x1]
      %3307 = vrot.lane.b32.xlu0 %v2961, 112
      %v3308 = vpop.permute.xlu0 %3307
      %3309 = vrot.lane.b32.xlu0 %v2962, 112
      %v3310 = vpop.permute.xlu0 %3309
      %v3311 = vsel %vm1394, %v3308, %v3310
      %v3312 = vsel %vm1394, %v3310, %v3308
      %v3315 = vrot.slane %v3312, 7
      %v3316 = vsel %vm2679, %v3311, %v3315
      %v3318 = vsel %vm650, %v3316, 0.0
      %3320 = vset.pattern.permute.xlu0 0
      %3321 = vperm.xlu0 %3320, %v3306
      %v3322 = vpop.permute.xlu0 %3321
      %v3325 = vperm.slane %v3318, 0
      %v3326 = vperm.slane %v3318, 1
      %v3329 = vmul.f32 %v3322, %v3325
      %v3330 = vmul.f32 %v3322, %v3326
      %v3331 = vadd.f32 %v3304, %v3329
      %v3332 = vadd.f32 %v3305, %v3330
      %v3333 = vadd.f32 %v3279, %v3331
      %v3334 = vadd.f32 %v3280, %v3332
      %v3335 = vld [vmem:[%s8 + $0x10] sm:$0x1]
      %3336 = vrot.lane.b32.xlu0 %v2932, 111
      %v3337 = vpop.permute.xlu0 %3336
      %3338 = vrot.lane.b32.xlu0 %v2933, 111
      %v3339 = vpop.permute.xlu0 %3338
      %v3340 = vsel %vm1502, %v3337, %v3339
      %v3341 = vsel %vm1502, %v3339, %v3337
      %v3344 = vrot.slane %v3341, 7
      %v3345 = vsel %vm2679, %v3340, %v3344
      %v3347 = vsel %vm652, %v3345, 0.0
      %3349 = vset.pattern.permute.xlu0 0
      %3350 = vperm.xlu0 %3349, %v3335
      %v3351 = vpop.permute.xlu0 %3350
      %v3354 = vperm.slane %v3347, 0
      %v3355 = vperm.slane %v3347, 1
      %v3358 = vmul.f32 %v3351, %v3354
      %v3359 = vmul.f32 %v3351, %v3355
      %v3360 = vld [vmem:[%s8 + $0x11] sm:$0x1]
      %3361 = vrot.lane.b32.xlu0 %v2961, 111
      %v3362 = vpop.permute.xlu0 %3361
      %3363 = vrot.lane.b32.xlu0 %v2962, 111
      %v3364 = vpop.permute.xlu0 %3363
      %v3365 = vsel %vm1502, %v3362, %v3364
      %v3366 = vsel %vm1502, %v3364, %v3362
      %v3369 = vrot.slane %v3366, 7
      %v3370 = vsel %vm2679, %v3365, %v3369
      %v3372 = vsel %vm652, %v3370, 0.0
      %3374 = vset.pattern.permute.xlu0 0
      %3375 = vperm.xlu0 %3374, %v3360
      %v3376 = vpop.permute.xlu0 %3375
      %v3379 = vperm.slane %v3372, 0
      %v3380 = vperm.slane %v3372, 1
      %v3383 = vmul.f32 %v3376, %v3379
      %v3384 = vmul.f32 %v3376, %v3380
      %v3385 = vadd.f32 %v3358, %v3383
      %v3386 = vadd.f32 %v3359, %v3384
      %v3387 = vadd.f32 %v3333, %v3385
      %v3388 = vadd.f32 %v3334, %v3386
      %v3389 = vld [vmem:[%s9] sm:$0x1]
      %3391 = vset.pattern.permute.xlu0 0
      %3392 = vperm.xlu0 %3391, %v3389
      %v3393 = vpop.permute.xlu0 %3392
      %v3395 = vadd.f32 %v3387, %v3393
      %v3396 = vadd.f32 %v3388, %v3393
      %v3398 = vrot.slane %v3395, 7
      %3399 = vrot.lane.b32.xlu0 %v3398, 112
      %v3400 = vpop.permute.xlu0 %3399
      %v3402 = vrot.slane %v3395, 6
      %3403 = vrot.lane.b32.xlu0 %v3402, 96
      %v3404 = vpop.permute.xlu0 %3403
      %v3406 = vrot.slane %v3395, 5
      %3407 = vrot.lane.b32.xlu0 %v3406, 80
      %v3408 = vpop.permute.xlu0 %3407
      %v3410 = vrot.slane %v3395, 4
      %3411 = vrot.lane.b32.xlu0 %v3410, 64
      %v3412 = vpop.permute.xlu0 %3411
      %v3414 = vrot.slane %v3395, 3
      %3415 = vrot.lane.b32.xlu0 %v3414, 48
      %v3416 = vpop.permute.xlu0 %3415
      %v3418 = vrot.slane %v3395, 2
      %3419 = vrot.lane.b32.xlu0 %v3418, 32
      %v3420 = vpop.permute.xlu0 %3419
      %v3422 = vrot.slane %v3395, 1
      %3423 = vrot.lane.b32.xlu0 %v3422, 16
      %v3424 = vpop.permute.xlu0 %3423
      %v3427 = vrot.slane %v3396, 7
      %3428 = vrot.lane.b32.xlu0 %v3427, 112
      %v3429 = vpop.permute.xlu0 %3428
      %v3431 = vrot.slane %v3396, 6
      %3432 = vrot.lane.b32.xlu0 %v3431, 96
      %v3433 = vpop.permute.xlu0 %3432
      %v3435 = vrot.slane %v3396, 5
      %3436 = vrot.lane.b32.xlu0 %v3435, 80
      %v3437 = vpop.permute.xlu0 %3436
      %v3439 = vrot.slane %v3396, 4
      %3440 = vrot.lane.b32.xlu0 %v3439, 64
      %v3441 = vpop.permute.xlu0 %3440
      %v3443 = vrot.slane %v3396, 3
      %3444 = vrot.lane.b32.xlu0 %v3443, 48
      %v3445 = vpop.permute.xlu0 %3444
      %v3447 = vrot.slane %v3396, 2
      %3448 = vrot.lane.b32.xlu0 %v3447, 32
      %v3449 = vpop.permute.xlu0 %3448
      %v3451 = vrot.slane %v3396, 1
      %3452 = vrot.lane.b32.xlu0 %v3451, 16
      %v3453 = vpop.permute.xlu0 %3452
      %v3455 = vsel %vm2679, %v3395, %v3400
      %v3456 = vsel %vm2836, %v3455, %v3404
      %v3457 = vsel %vm2838, %v3456, %v3408
      %v3458 = vsel %vm717, %v3457, %v3412
      %v3459 = vsel %vm2841, %v3458, %v3416
      %v3460 = vsel %vm2843, %v3459, %v3420
      %v3461 = vsel %vm2845, %v3460, %v3424
      %v3462 = vsel %vm2679, %v3396, %v3429
      %v3463 = vsel %vm2836, %v3462, %v3433
      %v3464 = vsel %vm2838, %v3463, %v3437
      %v3465 = vsel %vm717, %v3464, %v3441
      %v3466 = vsel %vm2841, %v3465, %v3445
      %v3467 = vsel %vm2843, %v3466, %v3449
      %v3468 = vsel %vm2845, %v3467, %v3453
      %v3470 = vsel %vm2854, %v3461, 0
      %v3473 = vsel %vm2854, %v3468, 0
      %3475 = vmatpush.msra.mxu0 0.0
      %3476 = vmatpush.msra.mxu0 0.0
      %3477 = vmatpush.msra.mxu0 0.0
      %3478 = vmatpush.msra.mxu0 0.0
      %3479 = vmatpush.msra.mxu0 0.0
      %3480 = vmatpush.msra.mxu0 0.0
      %3481 = vmatpush.msra.mxu0 0.0
      %3482 = vmatpush.msra.mxu0 0.0
      %3483 = vmatpush.msra.mxu0 0.0
      %3484 = vmatpush.msra.mxu0 0.0
      %3485 = vmatpush.msra.mxu0 0.0
      %3486 = vmatpush.msra.mxu0 0.0
      %3487 = vmatpush.msra.mxu0 0.0
      %3488 = vmatpush.msra.mxu0 0.0
      %3489 = vmatpush.msra.mxu0 %v2627
      %3490 = vmatpush.msra.mxu0 %v2625
      %3491 = vmatmul.f32.gmra.mxu0 %v3470
      %v3492 = vpop.f32.mrf.mxu0
      %v3493 = vadd.f32 0.0, %v3492
      %3494 = vmatmul.f32.gmra.mxu0 %v3473
      %v3495 = vpop.f32.mrf.mxu0
      %v3496 = vadd.f32 0.0, %v3495
      %3497 = vdwg.mxu0
      %3498 = vmatpush.msra.mxu0 0.0
      %3499 = vmatpush.msra.mxu0 0.0
      %3500 = vmatpush.msra.mxu0 0.0
      %3501 = vmatpush.msra.mxu0 0.0
      %3502 = vmatpush.msra.mxu0 0.0
      %3503 = vmatpush.msra.mxu0 0.0
      %3504 = vmatpush.msra.mxu0 0.0
      %3505 = vmatpush.msra.mxu0 0.0
      %3506 = vmatpush.msra.mxu0 0.0
      %3507 = vmatpush.msra.mxu0 0.0
      %3508 = vmatpush.msra.mxu0 0.0
      %3509 = vmatpush.msra.mxu0 0.0
      %3510 = vmatpush.msra.mxu0 0.0
      %3511 = vmatpush.msra.mxu0 0.0
      %3512 = vmatpush.msra.mxu0 %v2628
      %3513 = vmatpush.msra.mxu0 %v2626
      %3514 = vmatmul.f32.gmra.mxu0 %v3470
      %v3515 = vpop.f32.mrf.mxu0
      %v3516 = vadd.f32 0.0, %v3515
      %3517 = vmatmul.f32.gmra.mxu0 %v3473
      %v3518 = vpop.f32.mrf.mxu0
      %v3519 = vadd.f32 0.0, %v3518
      %3520 = vdwg.mxu0
      %v3521 = vmul.f32 %v2666, %v3493
      %v3522 = vmul.f32 %v2667, %v3516
      %v3523 = vmul.f32 %v2668, %v3496
      %v3524 = vmul.f32 %v2669, %v3519
      %v3525 = vadd.f32 %v3521, %v3523
      %v3526 = vrot.slane %v3525, 4
      %v3527 = vadd.f32 %v3525, %v3526
      %v3528 = vrot.slane %v3527, 2
      %v3529 = vadd.f32 %v3527, %v3528
      %v3530 = vrot.slane %v3529, 1
      %v3531 = vadd.f32 %v3529, %v3530
      %v3532 = vadd.f32 %v3522, %v3524
      %v3533 = vrot.slane %v3532, 4
      %v3534 = vadd.f32 %v3532, %v3533
      %v3535 = vrot.slane %v3534, 2
      %v3536 = vadd.f32 %v3534, %v3535
      %v3537 = vrot.slane %v3536, 1
      %v3538 = vadd.f32 %v3536, %v3537
      %v3539 = vadd.f32 %v3531, %v2925
      %v3540 = vadd.f32 %v3538, %v2926
      %v3541 = vsub.f32 %v3539, 10.0
      %v3542 = vsub.f32 %v3540, 10.0
      %v3545 = vadd.f32 %v3541, %v3398
      %v3546 = vadd.f32 %v3542, %v3427
      %v3547 = vld [vmem:[%s8 + $0x12] sm:$0x1]
      %v3550 = vrot.slane %v3545, 1
      %v3551 = vrot.slane %v3546, 1
      %3554 = vrot.lane.b32.xlu0 %v3550, 17
      %v3555 = vpop.permute.xlu0 %3554
      %3556 = vrot.lane.b32.xlu0 %v3551, 17
      %v3557 = vpop.permute.xlu0 %3556
      %v3558 = vsel %vm670, %v3555, %v3557
      %v3559 = vsel %vm670, %v3557, %v3555
      %v3562 = vrot.slane %v3558, 7
      %v3563 = vsel %vm2679, %v3559, %v3562
      %v3565 = vsel %vm624, %v3563, 0.0
      %3567 = vset.pattern.permute.xlu0 0
      %3568 = vperm.xlu0 %3567, %v3547
      %v3569 = vpop.permute.xlu0 %3568
      %v3572 = vperm.slane %v3565, 0
      %v3573 = vperm.slane %v3565, 1
      %v3576 = vmul.f32 %v3569, %v3572
      %v3577 = vmul.f32 %v3569, %v3573
      %v3578 = vld [vmem:[%s8 + $0x13] sm:$0x1]
      %v3579 = vperm.slane %v2787, 1
      %v3580 = vperm.slane %v2787, 5
      %3583 = vrot.lane.b32.xlu0 %v3579, 17
      %v3584 = vpop.permute.xlu0 %3583
      %3585 = vrot.lane.b32.xlu0 %v3580, 17
      %v3586 = vpop.permute.xlu0 %3585
      %v3587 = vsel %vm670, %v3584, %v3586
      %v3588 = vsel %vm670, %v3586, %v3584
      %v3591 = vrot.slane %v3587, 7
      %v3592 = vsel %vm2679, %v3588, %v3591
      %v3594 = vsel %vm624, %v3592, 0.0
      %3596 = vset.pattern.permute.xlu0 0
      %3597 = vperm.xlu0 %3596, %v3578
      %v3598 = vpop.permute.xlu0 %3597
      %v3601 = vperm.slane %v3594, 0
      %v3602 = vperm.slane %v3594, 1
      %v3605 = vmul.f32 %v3598, %v3601
      %v3606 = vmul.f32 %v3598, %v3602
      %v3607 = vadd.f32 %v3576, %v3605
      %v3608 = vadd.f32 %v3577, %v3606
      %v3609 = vld [vmem:[%s8 + $0x14] sm:$0x1]
      %3610 = vrot.lane.b32.xlu0 %v3550, 16
      %v3611 = vpop.permute.xlu0 %3610
      %3612 = vrot.lane.b32.xlu0 %v3551, 16
      %v3613 = vpop.permute.xlu0 %3612
      %v3614 = vsel %vm694, %v3611, %v3613
      %v3615 = vsel %vm694, %v3613, %v3611
      %v3618 = vrot.slane %v3614, 7
      %v3619 = vsel %vm2679, %v3615, %v3618
      %v3621 = vsel %vm630, %v3619, 0.0
      %3623 = vset.pattern.permute.xlu0 0
      %3624 = vperm.xlu0 %3623, %v3609
      %v3625 = vpop.permute.xlu0 %3624
      %v3628 = vperm.slane %v3621, 0
      %v3629 = vperm.slane %v3621, 1
      %v3632 = vmul.f32 %v3625, %v3628
      %v3633 = vmul.f32 %v3625, %v3629
      %v3634 = vld [vmem:[%s8 + $0x15] sm:$0x1]
      %3635 = vrot.lane.b32.xlu0 %v3579, 16
      %v3636 = vpop.permute.xlu0 %3635
      %3637 = vrot.lane.b32.xlu0 %v3580, 16
      %v3638 = vpop.permute.xlu0 %3637
      %v3639 = vsel %vm694, %v3636, %v3638
      %v3640 = vsel %vm694, %v3638, %v3636
      %v3643 = vrot.slane %v3639, 7
      %v3644 = vsel %vm2679, %v3640, %v3643
      %v3646 = vsel %vm630, %v3644, 0.0
      %3648 = vset.pattern.permute.xlu0 0
      %3649 = vperm.xlu0 %3648, %v3634
      %v3650 = vpop.permute.xlu0 %3649
      %v3653 = vperm.slane %v3646, 0
      %v3654 = vperm.slane %v3646, 1
      %v3657 = vmul.f32 %v3650, %v3653
      %v3658 = vmul.f32 %v3650, %v3654
      %v3659 = vadd.f32 %v3632, %v3657
      %v3660 = vadd.f32 %v3633, %v3658
      %v3661 = vadd.f32 %v3607, %v3659
      %v3662 = vadd.f32 %v3608, %v3660
      %v3663 = vld [vmem:[%s8 + $0x16] sm:$0x1]
      %3664 = vrot.lane.b32.xlu0 %v3550, 15
      %v3665 = vpop.permute.xlu0 %3664
      %3666 = vrot.lane.b32.xlu0 %v3551, 15
      %v3667 = vpop.permute.xlu0 %3666
      %v3668 = vsel %vm872, %v3665, %v3667
      %v3669 = vsel %vm872, %v3667, %v3665
      %v3672 = vrot.slane %v3668, 7
      %v3673 = vsel %vm2679, %v3669, %v3672
      %v3675 = vsel %vm636, %v3673, 0.0
      %3677 = vset.pattern.permute.xlu0 0
      %3678 = vperm.xlu0 %3677, %v3663
      %v3679 = vpop.permute.xlu0 %3678
      %v3682 = vperm.slane %v3675, 0
      %v3683 = vperm.slane %v3675, 1
      %v3686 = vmul.f32 %v3679, %v3682
      %v3687 = vmul.f32 %v3679, %v3683
      %v3688 = vld [vmem:[%s8 + $0x17] sm:$0x1]
      %3689 = vrot.lane.b32.xlu0 %v3579, 15
      %v3690 = vpop.permute.xlu0 %3689
      %3691 = vrot.lane.b32.xlu0 %v3580, 15
      %v3692 = vpop.permute.xlu0 %3691
      %v3693 = vsel %vm872, %v3690, %v3692
      %v3694 = vsel %vm872, %v3692, %v3690
      %v3697 = vrot.slane %v3693, 7
      %v3698 = vsel %vm2679, %v3694, %v3697
      %v3700 = vsel %vm636, %v3698, 0.0
      %3702 = vset.pattern.permute.xlu0 0
      %3703 = vperm.xlu0 %3702, %v3688
      %v3704 = vpop.permute.xlu0 %3703
      %v3707 = vperm.slane %v3700, 0
      %v3708 = vperm.slane %v3700, 1
      %v3711 = vmul.f32 %v3704, %v3707
      %v3712 = vmul.f32 %v3704, %v3708
      %v3713 = vadd.f32 %v3686, %v3711
      %v3714 = vadd.f32 %v3687, %v3712
      %v3715 = vadd.f32 %v3661, %v3713
      %v3716 = vadd.f32 %v3662, %v3714
      %v3717 = vld [vmem:[%s8 + $0x18] sm:$0x1]
      %3718 = vrot.lane.b32.xlu0 %v3550, 1
      %v3719 = vpop.permute.xlu0 %3718
      %3720 = vrot.lane.b32.xlu0 %v3551, 1
      %v3721 = vpop.permute.xlu0 %3720
      %v3722 = vsel %vm980, %v3719, %v3721
      %v3723 = vsel %vm980, %v3721, %v3719
      %v3726 = vrot.slane %v3722, 7
      %v3727 = vsel %vm2679, %v3723, %v3726
      %v3729 = vsel %vm641, %v3727, 0.0
      %3731 = vset.pattern.permute.xlu0 0
      %3732 = vperm.xlu0 %3731, %v3717
      %v3733 = vpop.permute.xlu0 %3732
      %v3736 = vperm.slane %v3729, 0
      %v3737 = vperm.slane %v3729, 1
      %v3740 = vmul.f32 %v3733, %v3736
      %v3741 = vmul.f32 %v3733, %v3737
      %v3742 = vld [vmem:[%s8 + $0x19] sm:$0x1]
      %3743 = vrot.lane.b32.xlu0 %v3579, 1
      %v3744 = vpop.permute.xlu0 %3743
      %3745 = vrot.lane.b32.xlu0 %v3580, 1
      %v3746 = vpop.permute.xlu0 %3745
      %v3747 = vsel %vm980, %v3744, %v3746
      %v3748 = vsel %vm980, %v3746, %v3744
      %v3751 = vrot.slane %v3747, 7
      %v3752 = vsel %vm2679, %v3748, %v3751
      %v3754 = vsel %vm641, %v3752, 0.0
      %3756 = vset.pattern.permute.xlu0 0
      %3757 = vperm.xlu0 %3756, %v3742
      %v3758 = vpop.permute.xlu0 %3757
      %v3761 = vperm.slane %v3754, 0
      %v3762 = vperm.slane %v3754, 1
      %v3765 = vmul.f32 %v3758, %v3761
      %v3766 = vmul.f32 %v3758, %v3762
      %v3767 = vadd.f32 %v3740, %v3765
      %v3768 = vadd.f32 %v3741, %v3766
      %v3769 = vadd.f32 %v3715, %v3767
      %v3770 = vadd.f32 %v3716, %v3768
      %v3771 = vld [vmem:[%s8 + $0x1a] sm:$0x1]
      %3773 = vset.pattern.permute.xlu0 0
      %3774 = vperm.xlu0 %3773, %v3771
      %v3775 = vpop.permute.xlu0 %3774
      %v3777 = vmul.f32 %v3775, %v3550
      %v3778 = vmul.f32 %v3775, %v3551
      %v3779 = vld [vmem:[%s8 + $0x1b] sm:$0x1]
      %3781 = vset.pattern.permute.xlu0 0
      %3782 = vperm.xlu0 %3781, %v3779
      %v3783 = vpop.permute.xlu0 %3782
      %v3785 = vmul.f32 %v3783, %v3579
      %v3786 = vmul.f32 %v3783, %v3580
      %v3787 = vadd.f32 %v3777, %v3785
      %v3788 = vadd.f32 %v3778, %v3786
      %v3789 = vadd.f32 %v3769, %v3787
      %v3790 = vadd.f32 %v3770, %v3788
      %v3791 = vld [vmem:[%s8 + $0x1c] sm:$0x1]
      %3792 = vrot.lane.b32.xlu0 %v3550, 127
      %v3793 = vpop.permute.xlu0 %3792
      %3794 = vrot.lane.b32.xlu0 %v3551, 127
      %v3795 = vpop.permute.xlu0 %3794
      %v3796 = vsel %vm1178, %v3793, %v3795
      %v3797 = vsel %vm1178, %v3795, %v3793
      %v3800 = vrot.slane %v3797, 7
      %v3801 = vsel %vm2679, %v3796, %v3800
      %v3803 = vsel %vm643, %v3801, 0.0
      %3805 = vset.pattern.permute.xlu0 0
      %3806 = vperm.xlu0 %3805, %v3791
      %v3807 = vpop.permute.xlu0 %3806
      %v3810 = vperm.slane %v3803, 0
      %v3811 = vperm.slane %v3803, 1
      %v3814 = vmul.f32 %v3807, %v3810
      %v3815 = vmul.f32 %v3807, %v3811
      %v3816 = vld [vmem:[%s8 + $0x1d] sm:$0x1]
      %3817 = vrot.lane.b32.xlu0 %v3579, 127
      %v3818 = vpop.permute.xlu0 %3817
      %3819 = vrot.lane.b32.xlu0 %v3580, 127
      %v3820 = vpop.permute.xlu0 %3819
      %v3821 = vsel %vm1178, %v3818, %v3820
      %v3822 = vsel %vm1178, %v3820, %v3818
      %v3825 = vrot.slane %v3822, 7
      %v3826 = vsel %vm2679, %v3821, %v3825
      %v3828 = vsel %vm643, %v3826, 0.0
      %3830 = vset.pattern.permute.xlu0 0
      %3831 = vperm.xlu0 %3830, %v3816
      %v3832 = vpop.permute.xlu0 %3831
      %v3835 = vperm.slane %v3828, 0
      %v3836 = vperm.slane %v3828, 1
      %v3839 = vmul.f32 %v3832, %v3835
      %v3840 = vmul.f32 %v3832, %v3836
      %v3841 = vadd.f32 %v3814, %v3839
      %v3842 = vadd.f32 %v3815, %v3840
      %v3843 = vadd.f32 %v3789, %v3841
      %v3844 = vadd.f32 %v3790, %v3842
      %v3845 = vld [vmem:[%s8 + $0x1e] sm:$0x1]
      %3846 = vrot.lane.b32.xlu0 %v3550, 113
      %v3847 = vpop.permute.xlu0 %3846
      %3848 = vrot.lane.b32.xlu0 %v3551, 113
      %v3849 = vpop.permute.xlu0 %3848
      %v3850 = vsel %vm1286, %v3847, %v3849
      %v3851 = vsel %vm1286, %v3849, %v3847
      %v3854 = vrot.slane %v3851, 7
      %v3855 = vsel %vm2679, %v3850, %v3854
      %v3857 = vsel %vm648, %v3855, 0.0
      %3859 = vset.pattern.permute.xlu0 0
      %3860 = vperm.xlu0 %3859, %v3845
      %v3861 = vpop.permute.xlu0 %3860
      %v3864 = vperm.slane %v3857, 0
      %v3865 = vperm.slane %v3857, 1
      %v3868 = vmul.f32 %v3861, %v3864
      %v3869 = vmul.f32 %v3861, %v3865
      %v3870 = vld [vmem:[%s8 + $0x1f] sm:$0x1]
      %3871 = vrot.lane.b32.xlu0 %v3579, 113
      %v3872 = vpop.permute.xlu0 %3871
      %3873 = vrot.lane.b32.xlu0 %v3580, 113
      %v3874 = vpop.permute.xlu0 %3873
      %v3875 = vsel %vm1286, %v3872, %v3874
      %v3876 = vsel %vm1286, %v3874, %v3872
      %v3879 = vrot.slane %v3876, 7
      %v3880 = vsel %vm2679, %v3875, %v3879
      %v3882 = vsel %vm648, %v3880, 0.0
      %3884 = vset.pattern.permute.xlu0 0
      %3885 = vperm.xlu0 %3884, %v3870
      %v3886 = vpop.permute.xlu0 %3885
      %v3889 = vperm.slane %v3882, 0
      %v3890 = vperm.slane %v3882, 1
      %v3893 = vmul.f32 %v3886, %v3889
      %v3894 = vmul.f32 %v3886, %v3890
      %v3895 = vadd.f32 %v3868, %v3893
      %v3896 = vadd.f32 %v3869, %v3894
      %v3897 = vadd.f32 %v3843, %v3895
      %v3898 = vadd.f32 %v3844, %v3896
      %v3899 = vld [vmem:[%s8 + $0x20] sm:$0x1]
      %3900 = vrot.lane.b32.xlu0 %v3550, 112
      %v3901 = vpop.permute.xlu0 %3900
      %3902 = vrot.lane.b32.xlu0 %v3551, 112
      %v3903 = vpop.permute.xlu0 %3902
      %v3904 = vsel %vm1394, %v3901, %v3903
      %v3905 = vsel %vm1394, %v3903, %v3901
      %v3908 = vrot.slane %v3905, 7
      %v3909 = vsel %vm2679, %v3904, %v3908
      %v3911 = vsel %vm650, %v3909, 0.0
      %3913 = vset.pattern.permute.xlu0 0
      %3914 = vperm.xlu0 %3913, %v3899
      %v3915 = vpop.permute.xlu0 %3914
      %v3918 = vperm.slane %v3911, 0
      %v3919 = vperm.slane %v3911, 1
      %v3922 = vmul.f32 %v3915, %v3918
      %v3923 = vmul.f32 %v3915, %v3919
      %v3924 = vld [vmem:[%s8 + $0x21] sm:$0x1]
      %3925 = vrot.lane.b32.xlu0 %v3579, 112
      %v3926 = vpop.permute.xlu0 %3925
      %3927 = vrot.lane.b32.xlu0 %v3580, 112
      %v3928 = vpop.permute.xlu0 %3927
      %v3929 = vsel %vm1394, %v3926, %v3928
      %v3930 = vsel %vm1394, %v3928, %v3926
      %v3933 = vrot.slane %v3930, 7
      %v3934 = vsel %vm2679, %v3929, %v3933
      %v3936 = vsel %vm650, %v3934, 0.0
      %3938 = vset.pattern.permute.xlu0 0
      %3939 = vperm.xlu0 %3938, %v3924
      %v3940 = vpop.permute.xlu0 %3939
      %v3943 = vperm.slane %v3936, 0
      %v3944 = vperm.slane %v3936, 1
      %v3947 = vmul.f32 %v3940, %v3943
      %v3948 = vmul.f32 %v3940, %v3944
      %v3949 = vadd.f32 %v3922, %v3947
      %v3950 = vadd.f32 %v3923, %v3948
      %v3951 = vadd.f32 %v3897, %v3949
      %v3952 = vadd.f32 %v3898, %v3950
      %v3953 = vld [vmem:[%s8 + $0x22] sm:$0x1]
      %3954 = vrot.lane.b32.xlu0 %v3550, 111
      %v3955 = vpop.permute.xlu0 %3954
      %3956 = vrot.lane.b32.xlu0 %v3551, 111
      %v3957 = vpop.permute.xlu0 %3956
      %v3958 = vsel %vm1502, %v3955, %v3957
      %v3959 = vsel %vm1502, %v3957, %v3955
      %v3962 = vrot.slane %v3959, 7
      %v3963 = vsel %vm2679, %v3958, %v3962
      %v3965 = vsel %vm652, %v3963, 0.0
      %3967 = vset.pattern.permute.xlu0 0
      %3968 = vperm.xlu0 %3967, %v3953
      %v3969 = vpop.permute.xlu0 %3968
      %v3972 = vperm.slane %v3965, 0
      %v3973 = vperm.slane %v3965, 1
      %v3976 = vmul.f32 %v3969, %v3972
      %v3977 = vmul.f32 %v3969, %v3973
      %v3978 = vld [vmem:[%s8 + $0x23] sm:$0x1]
      %3979 = vrot.lane.b32.xlu0 %v3579, 111
      %v3980 = vpop.permute.xlu0 %3979
      %3981 = vrot.lane.b32.xlu0 %v3580, 111
      %v3982 = vpop.permute.xlu0 %3981
      %v3983 = vsel %vm1502, %v3980, %v3982
      %v3984 = vsel %vm1502, %v3982, %v3980
      %v3987 = vrot.slane %v3984, 7
      %v3988 = vsel %vm2679, %v3983, %v3987
      %v3990 = vsel %vm652, %v3988, 0.0
      %3992 = vset.pattern.permute.xlu0 0
      %3993 = vperm.xlu0 %3992, %v3978
      %v3994 = vpop.permute.xlu0 %3993
      %v3997 = vperm.slane %v3990, 0
      %v3998 = vperm.slane %v3990, 1
      %v4001 = vmul.f32 %v3994, %v3997
      %v4002 = vmul.f32 %v3994, %v3998
      %v4003 = vadd.f32 %v3976, %v4001
      %v4004 = vadd.f32 %v3977, %v4002
      %v4005 = vadd.f32 %v3951, %v4003
      %v4006 = vadd.f32 %v3952, %v4004
      %v4007 = vld [vmem:[%s9 + $0x1] sm:$0x1]
      %4009 = vset.pattern.permute.xlu0 0
      %4010 = vperm.xlu0 %4009, %v4007
      %v4011 = vpop.permute.xlu0 %4010
      %v4013 = vadd.f32 %v4005, %v4011
      %v4014 = vadd.f32 %v4006, %v4011
      %v4016 = vrot.slane %v4013, 7
      %4017 = vrot.lane.b32.xlu0 %v4016, 112
      %v4018 = vpop.permute.xlu0 %4017
      %v4020 = vrot.slane %v4013, 6
      %4021 = vrot.lane.b32.xlu0 %v4020, 96
      %v4022 = vpop.permute.xlu0 %4021
      %v4024 = vrot.slane %v4013, 5
      %4025 = vrot.lane.b32.xlu0 %v4024, 80
      %v4026 = vpop.permute.xlu0 %4025
      %v4028 = vrot.slane %v4013, 4
      %4029 = vrot.lane.b32.xlu0 %v4028, 64
      %v4030 = vpop.permute.xlu0 %4029
      %v4032 = vrot.slane %v4013, 3
      %4033 = vrot.lane.b32.xlu0 %v4032, 48
      %v4034 = vpop.permute.xlu0 %4033
      %v4036 = vrot.slane %v4013, 2
      %4037 = vrot.lane.b32.xlu0 %v4036, 32
      %v4038 = vpop.permute.xlu0 %4037
      %v4040 = vrot.slane %v4013, 1
      %4041 = vrot.lane.b32.xlu0 %v4040, 16
      %v4042 = vpop.permute.xlu0 %4041
      %v4045 = vrot.slane %v4014, 7
      %4046 = vrot.lane.b32.xlu0 %v4045, 112
      %v4047 = vpop.permute.xlu0 %4046
      %v4049 = vrot.slane %v4014, 6
      %4050 = vrot.lane.b32.xlu0 %v4049, 96
      %v4051 = vpop.permute.xlu0 %4050
      %v4053 = vrot.slane %v4014, 5
      %4054 = vrot.lane.b32.xlu0 %v4053, 80
      %v4055 = vpop.permute.xlu0 %4054
      %v4057 = vrot.slane %v4014, 4
      %4058 = vrot.lane.b32.xlu0 %v4057, 64
      %v4059 = vpop.permute.xlu0 %4058
      %v4061 = vrot.slane %v4014, 3
      %4062 = vrot.lane.b32.xlu0 %v4061, 48
      %v4063 = vpop.permute.xlu0 %4062
      %v4065 = vrot.slane %v4014, 2
      %4066 = vrot.lane.b32.xlu0 %v4065, 32
      %v4067 = vpop.permute.xlu0 %4066
      %v4069 = vrot.slane %v4014, 1
      %4070 = vrot.lane.b32.xlu0 %v4069, 16
      %v4071 = vpop.permute.xlu0 %4070
      %v4073 = vsel %vm2679, %v4013, %v4018
      %v4074 = vsel %vm2836, %v4073, %v4022
      %v4075 = vsel %vm2838, %v4074, %v4026
      %v4076 = vsel %vm717, %v4075, %v4030
      %v4077 = vsel %vm2841, %v4076, %v4034
      %v4078 = vsel %vm2843, %v4077, %v4038
      %v4079 = vsel %vm2845, %v4078, %v4042
      %v4080 = vsel %vm2679, %v4014, %v4047
      %v4081 = vsel %vm2836, %v4080, %v4051
      %v4082 = vsel %vm2838, %v4081, %v4055
      %v4083 = vsel %vm717, %v4082, %v4059
      %v4084 = vsel %vm2841, %v4083, %v4063
      %v4085 = vsel %vm2843, %v4084, %v4067
      %v4086 = vsel %vm2845, %v4085, %v4071
      %v4088 = vsel %vm2854, %v4079, 0
      %v4091 = vsel %vm2854, %v4086, 0
      %4093 = vmatpush.msra.mxu0 0.0
      %4094 = vmatpush.msra.mxu0 0.0
      %4095 = vmatpush.msra.mxu0 0.0
      %4096 = vmatpush.msra.mxu0 0.0
      %4097 = vmatpush.msra.mxu0 0.0
      %4098 = vmatpush.msra.mxu0 0.0
      %4099 = vmatpush.msra.mxu0 0.0
      %4100 = vmatpush.msra.mxu0 0.0
      %4101 = vmatpush.msra.mxu0 0.0
      %4102 = vmatpush.msra.mxu0 0.0
      %4103 = vmatpush.msra.mxu0 0.0
      %4104 = vmatpush.msra.mxu0 0.0
      %4105 = vmatpush.msra.mxu0 0.0
      %4106 = vmatpush.msra.mxu0 0.0
      %4107 = vmatpush.msra.mxu0 %v2744
      %4108 = vmatpush.msra.mxu0 %v2742
      %4109 = vmatmul.f32.gmra.mxu0 %v4088
      %v4110 = vpop.f32.mrf.mxu0
      %v4111 = vadd.f32 0.0, %v4110
      %4112 = vmatmul.f32.gmra.mxu0 %v4091
      %v4113 = vpop.f32.mrf.mxu0
      %v4114 = vadd.f32 0.0, %v4113
      %4115 = vdwg.mxu0
      %4116 = vmatpush.msra.mxu0 0.0
      %4117 = vmatpush.msra.mxu0 0.0
      %4118 = vmatpush.msra.mxu0 0.0
      %4119 = vmatpush.msra.mxu0 0.0
      %4120 = vmatpush.msra.mxu0 0.0
      %4121 = vmatpush.msra.mxu0 0.0
      %4122 = vmatpush.msra.mxu0 0.0
      %4123 = vmatpush.msra.mxu0 0.0
      %4124 = vmatpush.msra.mxu0 0.0
      %4125 = vmatpush.msra.mxu0 0.0
      %4126 = vmatpush.msra.mxu0 0.0
      %4127 = vmatpush.msra.mxu0 0.0
      %4128 = vmatpush.msra.mxu0 0.0
      %4129 = vmatpush.msra.mxu0 0.0
      %4130 = vmatpush.msra.mxu0 %v2745
      %4131 = vmatpush.msra.mxu0 %v2743
      %4132 = vmatmul.f32.gmra.mxu0 %v4088
      %v4133 = vpop.f32.mrf.mxu0
      %v4134 = vadd.f32 0.0, %v4133
      %4135 = vmatmul.f32.gmra.mxu0 %v4091
      %v4136 = vpop.f32.mrf.mxu0
      %v4137 = vadd.f32 0.0, %v4136
      %4138 = vdwg.mxu0
      %v4139 = vmul.f32 %v2783, %v4111
      %v4140 = vmul.f32 %v2784, %v4134
      %v4141 = vmul.f32 %v2785, %v4114
      %v4142 = vmul.f32 %v2786, %v4137
      %v4143 = vadd.f32 %v4139, %v4141
      %v4144 = vrot.slane %v4143, 4
      %v4145 = vadd.f32 %v4143, %v4144
      %v4146 = vrot.slane %v4145, 2
      %v4147 = vadd.f32 %v4145, %v4146
      %v4148 = vrot.slane %v4147, 1
      %v4149 = vadd.f32 %v4147, %v4148
      %v4150 = vadd.f32 %v4140, %v4142
      %v4151 = vrot.slane %v4150, 4
      %v4152 = vadd.f32 %v4150, %v4151
      %v4153 = vrot.slane %v4152, 2
      %v4154 = vadd.f32 %v4152, %v4153
      %v4155 = vrot.slane %v4154, 1
      %v4156 = vadd.f32 %v4154, %v4155
      %v4157 = vadd.f32 %v4149, %v2925
      %v4158 = vadd.f32 %v4156, %v2926
      %v4159 = vsub.f32 %v4157, 10.0
      %v4160 = vsub.f32 %v4158, 10.0
      %v4163 = vadd.f32 %v4159, %v4020
      %v4164 = vadd.f32 %v4160, %v4049
      %v4165 = vld [vmem:[%s8 + $0x24] sm:$0x1]
      %v4168 = vrot.slane %v4163, 2
      %v4169 = vrot.slane %v4164, 2
      %4172 = vrot.lane.b32.xlu0 %v4168, 17
      %v4173 = vpop.permute.xlu0 %4172
      %4174 = vrot.lane.b32.xlu0 %v4169, 17
      %v4175 = vpop.permute.xlu0 %4174
      %v4176 = vsel %vm670, %v4173, %v4175
      %v4177 = vsel %vm670, %v4175, %v4173
      %v4180 = vrot.slane %v4176, 7
      %v4181 = vsel %vm2679, %v4177, %v4180
      %v4183 = vsel %vm624, %v4181, 0.0
      %4185 = vset.pattern.permute.xlu0 0
      %4186 = vperm.xlu0 %4185, %v4165
      %v4187 = vpop.permute.xlu0 %4186
      %v4190 = vperm.slane %v4183, 0
      %v4191 = vperm.slane %v4183, 1
      %v4194 = vmul.f32 %v4187, %v4190
      %v4195 = vmul.f32 %v4187, %v4191
      %v4196 = vld [vmem:[%s8 + $0x25] sm:$0x1]
      %v4197 = vperm.slane %v2787, 2
      %v4198 = vperm.slane %v2787, 6
      %4201 = vrot.lane.b32.xlu0 %v4197, 17
      %v4202 = vpop.permute.xlu0 %4201
      %4203 = vrot.lane.b32.xlu0 %v4198, 17
      %v4204 = vpop.permute.xlu0 %4203
      %v4205 = vsel %vm670, %v4202, %v4204
      %v4206 = vsel %vm670, %v4204, %v4202
      %v4209 = vrot.slane %v4205, 7
      %v4210 = vsel %vm2679, %v4206, %v4209
      %v4212 = vsel %vm624, %v4210, 0.0
      %4214 = vset.pattern.permute.xlu0 0
      %4215 = vperm.xlu0 %4214, %v4196
      %v4216 = vpop.permute.xlu0 %4215
      %v4219 = vperm.slane %v4212, 0
      %v4220 = vperm.slane %v4212, 1
      %v4223 = vmul.f32 %v4216, %v4219
      %v4224 = vmul.f32 %v4216, %v4220
      %v4225 = vadd.f32 %v4194, %v4223
      %v4226 = vadd.f32 %v4195, %v4224
      %v4227 = vld [vmem:[%s8 + $0x26] sm:$0x1]
      %4228 = vrot.lane.b32.xlu0 %v4168, 16
      %v4229 = vpop.permute.xlu0 %4228
      %4230 = vrot.lane.b32.xlu0 %v4169, 16
      %v4231 = vpop.permute.xlu0 %4230
      %v4232 = vsel %vm694, %v4229, %v4231
      %v4233 = vsel %vm694, %v4231, %v4229
      %v4236 = vrot.slane %v4232, 7
      %v4237 = vsel %vm2679, %v4233, %v4236
      %v4239 = vsel %vm630, %v4237, 0.0
      %4241 = vset.pattern.permute.xlu0 0
      %4242 = vperm.xlu0 %4241, %v4227
      %v4243 = vpop.permute.xlu0 %4242
      %v4246 = vperm.slane %v4239, 0
      %v4247 = vperm.slane %v4239, 1
      %v4250 = vmul.f32 %v4243, %v4246
      %v4251 = vmul.f32 %v4243, %v4247
      %v4252 = vld [vmem:[%s8 + $0x27] sm:$0x1]
      %4253 = vrot.lane.b32.xlu0 %v4197, 16
      %v4254 = vpop.permute.xlu0 %4253
      %4255 = vrot.lane.b32.xlu0 %v4198, 16
      %v4256 = vpop.permute.xlu0 %4255
      %v4257 = vsel %vm694, %v4254, %v4256
      %v4258 = vsel %vm694, %v4256, %v4254
      %v4261 = vrot.slane %v4257, 7
      %v4262 = vsel %vm2679, %v4258, %v4261
      %v4264 = vsel %vm630, %v4262, 0.0
      %4266 = vset.pattern.permute.xlu0 0
      %4267 = vperm.xlu0 %4266, %v4252
      %v4268 = vpop.permute.xlu0 %4267
      %v4271 = vperm.slane %v4264, 0
      %v4272 = vperm.slane %v4264, 1
      %v4275 = vmul.f32 %v4268, %v4271
      %v4276 = vmul.f32 %v4268, %v4272
      %v4277 = vadd.f32 %v4250, %v4275
      %v4278 = vadd.f32 %v4251, %v4276
      %v4279 = vadd.f32 %v4225, %v4277
      %v4280 = vadd.f32 %v4226, %v4278
      %v4281 = vld [vmem:[%s8 + $0x28] sm:$0x1]
      %4282 = vrot.lane.b32.xlu0 %v4168, 15
      %v4283 = vpop.permute.xlu0 %4282
      %4284 = vrot.lane.b32.xlu0 %v4169, 15
      %v4285 = vpop.permute.xlu0 %4284
      %v4286 = vsel %vm872, %v4283, %v4285
      %v4287 = vsel %vm872, %v4285, %v4283
      %v4290 = vrot.slane %v4286, 7
      %v4291 = vsel %vm2679, %v4287, %v4290
      %v4293 = vsel %vm636, %v4291, 0.0
      %4295 = vset.pattern.permute.xlu0 0
      %4296 = vperm.xlu0 %4295, %v4281
      %v4297 = vpop.permute.xlu0 %4296
      %v4300 = vperm.slane %v4293, 0
      %v4301 = vperm.slane %v4293, 1
      %v4304 = vmul.f32 %v4297, %v4300
      %v4305 = vmul.f32 %v4297, %v4301
      %v4306 = vld [vmem:[%s8 + $0x29] sm:$0x1]
      %4307 = vrot.lane.b32.xlu0 %v4197, 15
      %v4308 = vpop.permute.xlu0 %4307
      %4309 = vrot.lane.b32.xlu0 %v4198, 15
      %v4310 = vpop.permute.xlu0 %4309
      %v4311 = vsel %vm872, %v4308, %v4310
      %v4312 = vsel %vm872, %v4310, %v4308
      %v4315 = vrot.slane %v4311, 7
      %v4316 = vsel %vm2679, %v4312, %v4315
      %v4318 = vsel %vm636, %v4316, 0.0
      %4320 = vset.pattern.permute.xlu0 0
      %4321 = vperm.xlu0 %4320, %v4306
      %v4322 = vpop.permute.xlu0 %4321
      %v4325 = vperm.slane %v4318, 0
      %v4326 = vperm.slane %v4318, 1
      %v4329 = vmul.f32 %v4322, %v4325
      %v4330 = vmul.f32 %v4322, %v4326
      %v4331 = vadd.f32 %v4304, %v4329
      %v4332 = vadd.f32 %v4305, %v4330
      %v4333 = vadd.f32 %v4279, %v4331
      %v4334 = vadd.f32 %v4280, %v4332
      %v4335 = vld [vmem:[%s8 + $0x2a] sm:$0x1]
      %4336 = vrot.lane.b32.xlu0 %v4168, 1
      %v4337 = vpop.permute.xlu0 %4336
      %4338 = vrot.lane.b32.xlu0 %v4169, 1
      %v4339 = vpop.permute.xlu0 %4338
      %v4340 = vsel %vm980, %v4337, %v4339
      %v4341 = vsel %vm980, %v4339, %v4337
      %v4344 = vrot.slane %v4340, 7
      %v4345 = vsel %vm2679, %v4341, %v4344
      %v4347 = vsel %vm641, %v4345, 0.0
      %4349 = vset.pattern.permute.xlu0 0
      %4350 = vperm.xlu0 %4349, %v4335
      %v4351 = vpop.permute.xlu0 %4350
      %v4354 = vperm.slane %v4347, 0
      %v4355 = vperm.slane %v4347, 1
      %v4358 = vmul.f32 %v4351, %v4354
      %v4359 = vmul.f32 %v4351, %v4355
      %v4360 = vld [vmem:[%s8 + $0x2b] sm:$0x1]
      %4361 = vrot.lane.b32.xlu0 %v4197, 1
      %v4362 = vpop.permute.xlu0 %4361
      %4363 = vrot.lane.b32.xlu0 %v4198, 1
      %v4364 = vpop.permute.xlu0 %4363
      %v4365 = vsel %vm980, %v4362, %v4364
      %v4366 = vsel %vm980, %v4364, %v4362
      %v4369 = vrot.slane %v4365, 7
      %v4370 = vsel %vm2679, %v4366, %v4369
      %v4372 = vsel %vm641, %v4370, 0.0
      %4374 = vset.pattern.permute.xlu0 0
      %4375 = vperm.xlu0 %4374, %v4360
      %v4376 = vpop.permute.xlu0 %4375
      %v4379 = vperm.slane %v4372, 0
      %v4380 = vperm.slane %v4372, 1
      %v4383 = vmul.f32 %v4376, %v4379
      %v4384 = vmul.f32 %v4376, %v4380
      %v4385 = vadd.f32 %v4358, %v4383
      %v4386 = vadd.f32 %v4359, %v4384
      %v4387 = vadd.f32 %v4333, %v4385
      %v4388 = vadd.f32 %v4334, %v4386
      %v4389 = vld [vmem:[%s8 + $0x2c] sm:$0x1]
      %4391 = vset.pattern.permute.xlu0 0
      %4392 = vperm.xlu0 %4391, %v4389
      %v4393 = vpop.permute.xlu0 %4392
      %v4395 = vmul.f32 %v4393, %v4168
      %v4396 = vmul.f32 %v4393, %v4169
      %v4397 = vld [vmem:[%s8 + $0x2d] sm:$0x1]
      %4399 = vset.pattern.permute.xlu0 0
      %4400 = vperm.xlu0 %4399, %v4397
      %v4401 = vpop.permute.xlu0 %4400
      %v4403 = vmul.f32 %v4401, %v4197
      %v4404 = vmul.f32 %v4401, %v4198
      %v4405 = vadd.f32 %v4395, %v4403
      %v4406 = vadd.f32 %v4396, %v4404
      %v4407 = vadd.f32 %v4387, %v4405
      %v4408 = vadd.f32 %v4388, %v4406
      %v4409 = vld [vmem:[%s8 + $0x2e] sm:$0x1]
      %4410 = vrot.lane.b32.xlu0 %v4168, 127
      %v4411 = vpop.permute.xlu0 %4410
      %4412 = vrot.lane.b32.xlu0 %v4169, 127
      %v4413 = vpop.permute.xlu0 %4412
      %v4414 = vsel %vm1178, %v4411, %v4413
      %v4415 = vsel %vm1178, %v4413, %v4411
      %v4418 = vrot.slane %v4415, 7
      %v4419 = vsel %vm2679, %v4414, %v4418
      %v4421 = vsel %vm643, %v4419, 0.0
      %4423 = vset.pattern.permute.xlu0 0
      %4424 = vperm.xlu0 %4423, %v4409
      %v4425 = vpop.permute.xlu0 %4424
      %v4428 = vperm.slane %v4421, 0
      %v4429 = vperm.slane %v4421, 1
      %v4432 = vmul.f32 %v4425, %v4428
      %v4433 = vmul.f32 %v4425, %v4429
      %v4434 = vld [vmem:[%s8 + $0x2f] sm:$0x1]
      %4435 = vrot.lane.b32.xlu0 %v4197, 127
      %v4436 = vpop.permute.xlu0 %4435
      %4437 = vrot.lane.b32.xlu0 %v4198, 127
      %v4438 = vpop.permute.xlu0 %4437
      %v4439 = vsel %vm1178, %v4436, %v4438
      %v4440 = vsel %vm1178, %v4438, %v4436
      %v4443 = vrot.slane %v4440, 7
      %v4444 = vsel %vm2679, %v4439, %v4443
      %v4446 = vsel %vm643, %v4444, 0.0
      %4448 = vset.pattern.permute.xlu0 0
      %4449 = vperm.xlu0 %4448, %v4434
      %v4450 = vpop.permute.xlu0 %4449
      %v4453 = vperm.slane %v4446, 0
      %v4454 = vperm.slane %v4446, 1
      %v4457 = vmul.f32 %v4450, %v4453
      %v4458 = vmul.f32 %v4450, %v4454
      %v4459 = vadd.f32 %v4432, %v4457
      %v4460 = vadd.f32 %v4433, %v4458
      %v4461 = vadd.f32 %v4407, %v4459
      %v4462 = vadd.f32 %v4408, %v4460
      %v4463 = vld [vmem:[%s8 + $0x30] sm:$0x1]
      %4464 = vrot.lane.b32.xlu0 %v4168, 113
      %v4465 = vpop.permute.xlu0 %4464
      %4466 = vrot.lane.b32.xlu0 %v4169, 113
      %v4467 = vpop.permute.xlu0 %4466
      %v4468 = vsel %vm1286, %v4465, %v4467
      %v4469 = vsel %vm1286, %v4467, %v4465
      %v4472 = vrot.slane %v4469, 7
      %v4473 = vsel %vm2679, %v4468, %v4472
      %v4475 = vsel %vm648, %v4473, 0.0
      %4477 = vset.pattern.permute.xlu0 0
      %4478 = vperm.xlu0 %4477, %v4463
      %v4479 = vpop.permute.xlu0 %4478
      %v4482 = vperm.slane %v4475, 0
      %v4483 = vperm.slane %v4475, 1
      %v4486 = vmul.f32 %v4479, %v4482
      %v4487 = vmul.f32 %v4479, %v4483
      %v4488 = vld [vmem:[%s8 + $0x31] sm:$0x1]
      %4489 = vrot.lane.b32.xlu0 %v4197, 113
      %v4490 = vpop.permute.xlu0 %4489
      %4491 = vrot.lane.b32.xlu0 %v4198, 113
      %v4492 = vpop.permute.xlu0 %4491
      %v4493 = vsel %vm1286, %v4490, %v4492
      %v4494 = vsel %vm1286, %v4492, %v4490
      %v4497 = vrot.slane %v4494, 7
      %v4498 = vsel %vm2679, %v4493, %v4497
      %v4500 = vsel %vm648, %v4498, 0.0
      %4502 = vset.pattern.permute.xlu0 0
      %4503 = vperm.xlu0 %4502, %v4488
      %v4504 = vpop.permute.xlu0 %4503
      %v4507 = vperm.slane %v4500, 0
      %v4508 = vperm.slane %v4500, 1
      %v4511 = vmul.f32 %v4504, %v4507
      %v4512 = vmul.f32 %v4504, %v4508
      %v4513 = vadd.f32 %v4486, %v4511
      %v4514 = vadd.f32 %v4487, %v4512
      %v4515 = vadd.f32 %v4461, %v4513
      %v4516 = vadd.f32 %v4462, %v4514
      %v4517 = vld [vmem:[%s8 + $0x32] sm:$0x1]
      %4518 = vrot.lane.b32.xlu0 %v4168, 112
      %v4519 = vpop.permute.xlu0 %4518
      %4520 = vrot.lane.b32.xlu0 %v4169, 112
      %v4521 = vpop.permute.xlu0 %4520
      %v4522 = vsel %vm1394, %v4519, %v4521
      %v4523 = vsel %vm1394, %v4521, %v4519
      %v4526 = vrot.slane %v4523, 7
      %v4527 = vsel %vm2679, %v4522, %v4526
      %v4529 = vsel %vm650, %v4527, 0.0
      %4531 = vset.pattern.permute.xlu0 0
      %4532 = vperm.xlu0 %4531, %v4517
      %v4533 = vpop.permute.xlu0 %4532
      %v4536 = vperm.slane %v4529, 0
      %v4537 = vperm.slane %v4529, 1
      %v4540 = vmul.f32 %v4533, %v4536
      %v4541 = vmul.f32 %v4533, %v4537
      %v4542 = vld [vmem:[%s8 + $0x33] sm:$0x1]
      %4543 = vrot.lane.b32.xlu0 %v4197, 112
      %v4544 = vpop.permute.xlu0 %4543
      %4545 = vrot.lane.b32.xlu0 %v4198, 112
      %v4546 = vpop.permute.xlu0 %4545
      %v4547 = vsel %vm1394, %v4544, %v4546
      %v4548 = vsel %vm1394, %v4546, %v4544
      %v4551 = vrot.slane %v4548, 7
      %v4552 = vsel %vm2679, %v4547, %v4551
      %v4554 = vsel %vm650, %v4552, 0.0
      %4556 = vset.pattern.permute.xlu0 0
      %4557 = vperm.xlu0 %4556, %v4542
      %v4558 = vpop.permute.xlu0 %4557
      %v4561 = vperm.slane %v4554, 0
      %v4562 = vperm.slane %v4554, 1
      %v4565 = vmul.f32 %v4558, %v4561
      %v4566 = vmul.f32 %v4558, %v4562
      %v4567 = vadd.f32 %v4540, %v4565
      %v4568 = vadd.f32 %v4541, %v4566
      %v4569 = vadd.f32 %v4515, %v4567
      %v4570 = vadd.f32 %v4516, %v4568
      %v4571 = vld [vmem:[%s8 + $0x34] sm:$0x1]
      %4572 = vrot.lane.b32.xlu0 %v4168, 111
      %v4573 = vpop.permute.xlu0 %4572
      %4574 = vrot.lane.b32.xlu0 %v4169, 111
      %v4575 = vpop.permute.xlu0 %4574
      %v4576 = vsel %vm1502, %v4573, %v4575
      %v4577 = vsel %vm1502, %v4575, %v4573
      %v4580 = vrot.slane %v4577, 7
      %v4581 = vsel %vm2679, %v4576, %v4580
      %v4583 = vsel %vm652, %v4581, 0.0
      %4585 = vset.pattern.permute.xlu0 0
      %4586 = vperm.xlu0 %4585, %v4571
      %v4587 = vpop.permute.xlu0 %4586
      %v4590 = vperm.slane %v4583, 0
      %v4591 = vperm.slane %v4583, 1
      %v4594 = vmul.f32 %v4587, %v4590
      %v4595 = vmul.f32 %v4587, %v4591
      %v4596 = vld [vmem:[%s8 + $0x35] sm:$0x1]
      %4597 = vrot.lane.b32.xlu0 %v4197, 111
      %v4598 = vpop.permute.xlu0 %4597
      %4599 = vrot.lane.b32.xlu0 %v4198, 111
      %v4600 = vpop.permute.xlu0 %4599
      %v4601 = vsel %vm1502, %v4598, %v4600
      %v4602 = vsel %vm1502, %v4600, %v4598
      %v4605 = vrot.slane %v4602, 7
      %v4606 = vsel %vm2679, %v4601, %v4605
      %v4608 = vsel %vm652, %v4606, 0.0
      %4610 = vset.pattern.permute.xlu0 0
      %4611 = vperm.xlu0 %4610, %v4596
      %v4612 = vpop.permute.xlu0 %4611
      %v4615 = vperm.slane %v4608, 0
      %v4616 = vperm.slane %v4608, 1
      %v4619 = vmul.f32 %v4612, %v4615
      %v4620 = vmul.f32 %v4612, %v4616
      %v4621 = vadd.f32 %v4594, %v4619
      %v4622 = vadd.f32 %v4595, %v4620
      %v4623 = vadd.f32 %v4569, %v4621
      %v4624 = vadd.f32 %v4570, %v4622
      %v4625 = vld [vmem:[%s9 + $0x2] sm:$0x1]
      %4627 = vset.pattern.permute.xlu0 0
      %4628 = vperm.xlu0 %4627, %v4625
      %v4629 = vpop.permute.xlu0 %4628
      %v4631 = vadd.f32 %v4623, %v4629
      %v4632 = vadd.f32 %v4624, %v4629
      %v4637 = vrot.slane %v4631, 6
      %v4638 = vrot.slane %v4632, 6
      %v4641 = vsel %vm2679, %v3395, %v4016
      %v4642 = vsel %vm2679, %v3396, %v4045
      %v4643 = vsel %vm2836, %v4641, %v4637
      %v4644 = vsel %vm2836, %v4642, %v4638
      %v4645 = vld [vmem:[%s10] sm:$0x7]
      %4646 = vrot.lane.b32.xlu0 %v4643, 17
      %v4647 = vpop.permute.xlu0 %4646
      %4648 = vrot.lane.b32.xlu0 %v4644, 17
      %v4649 = vpop.permute.xlu0 %4648
      %v4650 = vsel %vm670, %v4647, %v4649
      %v4651 = vsel %vm670, %v4649, %v4647
      %v4652 = vsel %vm676, %v4651, 0.0
      %v4653 = vsel %vm677, %v4650, 0.0
      %s4654 = scalar_lea.vmem %s10, 4
      %v4655 = vld [vmem:[%s4654] sm:$0x7]
      %4656 = vrot.lane.b32.xlu0 %v4643, 16
      %v4657 = vpop.permute.xlu0 %4656
      %4658 = vrot.lane.b32.xlu0 %v4644, 16
      %v4659 = vpop.permute.xlu0 %4658
      %v4660 = vsel %vm694, %v4657, %v4659
      %v4661 = vsel %vm694, %v4659, %v4657
      %v4662 = vsel %vm700, %v4661, 0.0
      %v4663 = vsel %vm701, %v4660, 0.0
      %vm4664 = vcmask 23552
      %v4666 = vsel %vm4664, %v4655, 0
      %v4669 = vsel %vm2838, %v4662, 0
      %v4672 = vsel %vm2838, %v4663, 0
      %4674 = vmatpush.msra.mxu0 0.0
      %4675 = vmatpush.msra.mxu0 0.0
      %4676 = vmatpush.msra.mxu0 0.0
      %4677 = vmatpush.msra.mxu0 0.0
      %4678 = vmatpush.msra.mxu0 0.0
      %4679 = vmatpush.msra.mxu0 0.0
      %4680 = vmatpush.msra.mxu0 0.0
      %4681 = vmatpush.msra.mxu0 0.0
      %4682 = vmatpush.msra.mxu0 0.0
      %4683 = vmatpush.msra.mxu0 0.0
      %4684 = vmatpush.msra.mxu0 0.0
      %4685 = vmatpush.msra.mxu0 0.0
      %4686 = vmatpush.msra.mxu0 0.0
      %4687 = vmatpush.msra.mxu0 0.0
      %4688 = vmatpush.msra.mxu0 0.0
      %4689 = vmatpush.msra.mxu0 %v4669
      %4690 = vmatmul.f32.gmra.mxu0 %v4666
      %v4691 = vpop.f32.mrf.mxu0
      %v4692 = vadd.f32 0.0, %v4691
      %4693 = vdwg.mxu0
      %4694 = vmatpush.msra.mxu0 0.0
      %4695 = vmatpush.msra.mxu0 0.0
      %4696 = vmatpush.msra.mxu0 0.0
      %4697 = vmatpush.msra.mxu0 0.0
      %4698 = vmatpush.msra.mxu0 0.0
      %4699 = vmatpush.msra.mxu0 0.0
      %4700 = vmatpush.msra.mxu0 0.0
      %4701 = vmatpush.msra.mxu0 0.0
      %4702 = vmatpush.msra.mxu0 0.0
      %4703 = vmatpush.msra.mxu0 0.0
      %4704 = vmatpush.msra.mxu0 0.0
      %4705 = vmatpush.msra.mxu0 0.0
      %4706 = vmatpush.msra.mxu0 0.0
      %4707 = vmatpush.msra.mxu0 0.0
      %4708 = vmatpush.msra.mxu0 0.0
      %4709 = vmatpush.msra.mxu0 %v4672
      %4710 = vmatmul.f32.gmra.mxu0 %v4666
      %v4711 = vpop.f32.mrf.mxu0
      %v4712 = vadd.f32 0.0, %v4711
      %4713 = vdwg.mxu0
      %v4715 = vsel %vm4664, %v4645, 0
      %v4718 = vsel %vm2838, %v4652, 0
      %v4721 = vsel %vm2838, %v4653, 0
      %4723 = vmatpush.msra.mxu0 0.0
      %4724 = vmatpush.msra.mxu0 0.0
      %4725 = vmatpush.msra.mxu0 0.0
      %4726 = vmatpush.msra.mxu0 0.0
      %4727 = vmatpush.msra.mxu0 0.0
      %4728 = vmatpush.msra.mxu0 0.0
      %4729 = vmatpush.msra.mxu0 0.0
      %4730 = vmatpush.msra.mxu0 0.0
      %4731 = vmatpush.msra.mxu0 0.0
      %4732 = vmatpush.msra.mxu0 0.0
      %4733 = vmatpush.msra.mxu0 0.0
      %4734 = vmatpush.msra.mxu0 0.0
      %4735 = vmatpush.msra.mxu0 0.0
      %4736 = vmatpush.msra.mxu0 0.0
      %4737 = vmatpush.msra.mxu0 0.0
      %4738 = vmatpush.msra.mxu0 %v4718
      %4739 = vmatmul.f32.gmra.mxu0 %v4715
      %v4740 = vpop.f32.mrf.mxu0
      %v4741 = vadd.f32 %v4692, %v4740
      %4742 = vdwg.mxu0
      %4743 = vmatpush.msra.mxu0 0.0
      %4744 = vmatpush.msra.mxu0 0.0
      %4745 = vmatpush.msra.mxu0 0.0
      %4746 = vmatpush.msra.mxu0 0.0
      %4747 = vmatpush.msra.mxu0 0.0
      %4748 = vmatpush.msra.mxu0 0.0
      %4749 = vmatpush.msra.mxu0 0.0
      %4750 = vmatpush.msra.mxu0 0.0
      %4751 = vmatpush.msra.mxu0 0.0
      %4752 = vmatpush.msra.mxu0 0.0
      %4753 = vmatpush.msra.mxu0 0.0
      %4754 = vmatpush.msra.mxu0 0.0
      %4755 = vmatpush.msra.mxu0 0.0
      %4756 = vmatpush.msra.mxu0 0.0
      %4757 = vmatpush.msra.mxu0 0.0
      %4758 = vmatpush.msra.mxu0 %v4721
      %4759 = vmatmul.f32.gmra.mxu0 %v4715
      %v4760 = vpop.f32.mrf.mxu0
      %v4761 = vadd.f32 %v4712, %v4760
      %4762 = vdwg.mxu0
      %s4763 = scalar_lea.vmem %s10, 8
      %v4764 = vld [vmem:[%s4763] sm:$0x7]
      %4765 = vrot.lane.b32.xlu0 %v4643, 15
      %v4766 = vpop.permute.xlu0 %4765
      %4767 = vrot.lane.b32.xlu0 %v4644, 15
      %v4768 = vpop.permute.xlu0 %4767
      %v4769 = vsel %vm872, %v4766, %v4768
      %v4770 = vsel %vm872, %v4768, %v4766
      %v4771 = vsel %vm878, %v4770, 0.0
      %v4772 = vsel %vm879, %v4769, 0.0
      %v4774 = vsel %vm4664, %v4764, 0
      %v4777 = vsel %vm2838, %v4771, 0
      %v4780 = vsel %vm2838, %v4772, 0
      %4782 = vmatpush.msra.mxu0 0.0
      %4783 = vmatpush.msra.mxu0 0.0
      %4784 = vmatpush.msra.mxu0 0.0
      %4785 = vmatpush.msra.mxu0 0.0
      %4786 = vmatpush.msra.mxu0 0.0
      %4787 = vmatpush.msra.mxu0 0.0
      %4788 = vmatpush.msra.mxu0 0.0
      %4789 = vmatpush.msra.mxu0 0.0
      %4790 = vmatpush.msra.mxu0 0.0
      %4791 = vmatpush.msra.mxu0 0.0
      %4792 = vmatpush.msra.mxu0 0.0
      %4793 = vmatpush.msra.mxu0 0.0
      %4794 = vmatpush.msra.mxu0 0.0
      %4795 = vmatpush.msra.mxu0 0.0
      %4796 = vmatpush.msra.mxu0 0.0
      %4797 = vmatpush.msra.mxu0 %v4777
      %4798 = vmatmul.f32.gmra.mxu0 %v4774
      %v4799 = vpop.f32.mrf.mxu0
      %v4800 = vadd.f32 0.0, %v4799
      %4801 = vdwg.mxu0
      %4802 = vmatpush.msra.mxu0 0.0
      %4803 = vmatpush.msra.mxu0 0.0
      %4804 = vmatpush.msra.mxu0 0.0
      %4805 = vmatpush.msra.mxu0 0.0
      %4806 = vmatpush.msra.mxu0 0.0
      %4807 = vmatpush.msra.mxu0 0.0
      %4808 = vmatpush.msra.mxu0 0.0
      %4809 = vmatpush.msra.mxu0 0.0
      %4810 = vmatpush.msra.mxu0 0.0
      %4811 = vmatpush.msra.mxu0 0.0
      %4812 = vmatpush.msra.mxu0 0.0
      %4813 = vmatpush.msra.mxu0 0.0
      %4814 = vmatpush.msra.mxu0 0.0
      %4815 = vmatpush.msra.mxu0 0.0
      %4816 = vmatpush.msra.mxu0 0.0
      %4817 = vmatpush.msra.mxu0 %v4780
      %4818 = vmatmul.f32.gmra.mxu0 %v4774
      %v4819 = vpop.f32.mrf.mxu0
      %v4820 = vadd.f32 0.0, %v4819
      %4821 = vdwg.mxu0
      %v4822 = vadd.f32 %v4741, %v4800
      %v4823 = vadd.f32 %v4761, %v4820
      %s4824 = scalar_lea.vmem %s10, 12
      %v4825 = vld [vmem:[%s4824] sm:$0x7]
      %4826 = vrot.lane.b32.xlu0 %v4643, 1
      %v4827 = vpop.permute.xlu0 %4826
      %4828 = vrot.lane.b32.xlu0 %v4644, 1
      %v4829 = vpop.permute.xlu0 %4828
      %v4830 = vsel %vm980, %v4827, %v4829
      %v4831 = vsel %vm980, %v4829, %v4827
      %v4832 = vsel %vm986, %v4831, 0.0
      %v4833 = vsel %vm987, %v4830, 0.0
      %v4835 = vsel %vm4664, %v4825, 0
      %v4838 = vsel %vm2838, %v4832, 0
      %v4841 = vsel %vm2838, %v4833, 0
      %4843 = vmatpush.msra.mxu0 0.0
      %4844 = vmatpush.msra.mxu0 0.0
      %4845 = vmatpush.msra.mxu0 0.0
      %4846 = vmatpush.msra.mxu0 0.0
      %4847 = vmatpush.msra.mxu0 0.0
      %4848 = vmatpush.msra.mxu0 0.0
      %4849 = vmatpush.msra.mxu0 0.0
      %4850 = vmatpush.msra.mxu0 0.0
      %4851 = vmatpush.msra.mxu0 0.0
      %4852 = vmatpush.msra.mxu0 0.0
      %4853 = vmatpush.msra.mxu0 0.0
      %4854 = vmatpush.msra.mxu0 0.0
      %4855 = vmatpush.msra.mxu0 0.0
      %4856 = vmatpush.msra.mxu0 0.0
      %4857 = vmatpush.msra.mxu0 0.0
      %4858 = vmatpush.msra.mxu0 %v4838
      %4859 = vmatmul.f32.gmra.mxu0 %v4835
      %v4860 = vpop.f32.mrf.mxu0
      %v4861 = vadd.f32 0.0, %v4860
      %4862 = vdwg.mxu0
      %4863 = vmatpush.msra.mxu0 0.0
      %4864 = vmatpush.msra.mxu0 0.0
      %4865 = vmatpush.msra.mxu0 0.0
      %4866 = vmatpush.msra.mxu0 0.0
      %4867 = vmatpush.msra.mxu0 0.0
      %4868 = vmatpush.msra.mxu0 0.0
      %4869 = vmatpush.msra.mxu0 0.0
      %4870 = vmatpush.msra.mxu0 0.0
      %4871 = vmatpush.msra.mxu0 0.0
      %4872 = vmatpush.msra.mxu0 0.0
      %4873 = vmatpush.msra.mxu0 0.0
      %4874 = vmatpush.msra.mxu0 0.0
      %4875 = vmatpush.msra.mxu0 0.0
      %4876 = vmatpush.msra.mxu0 0.0
      %4877 = vmatpush.msra.mxu0 0.0
      %4878 = vmatpush.msra.mxu0 %v4841
      %4879 = vmatmul.f32.gmra.mxu0 %v4835
      %v4880 = vpop.f32.mrf.mxu0
      %v4881 = vadd.f32 0.0, %v4880
      %4882 = vdwg.mxu0
      %v4883 = vadd.f32 %v4822, %v4861
      %v4884 = vadd.f32 %v4823, %v4881
      %s4885 = scalar_lea.vmem %s10, 16
      %v4886 = vld [vmem:[%s4885] sm:$0x7]
      %v4888 = vsel %vm4664, %v4886, 0
      %v4891 = vsel %vm2838, %v4643, 0
      %v4894 = vsel %vm2838, %v4644, 0
      %4896 = vmatpush.msra.mxu0 0.0
      %4897 = vmatpush.msra.mxu0 0.0
      %4898 = vmatpush.msra.mxu0 0.0
      %4899 = vmatpush.msra.mxu0 0.0
      %4900 = vmatpush.msra.mxu0 0.0
      %4901 = vmatpush.msra.mxu0 0.0
      %4902 = vmatpush.msra.mxu0 0.0
      %4903 = vmatpush.msra.mxu0 0.0
      %4904 = vmatpush.msra.mxu0 0.0
      %4905 = vmatpush.msra.mxu0 0.0
      %4906 = vmatpush.msra.mxu0 0.0
      %4907 = vmatpush.msra.mxu0 0.0
      %4908 = vmatpush.msra.mxu0 0.0
      %4909 = vmatpush.msra.mxu0 0.0
      %4910 = vmatpush.msra.mxu0 0.0
      %4911 = vmatpush.msra.mxu0 %v4891
      %4912 = vmatmul.f32.gmra.mxu0 %v4888
      %v4913 = vpop.f32.mrf.mxu0
      %v4914 = vadd.f32 0.0, %v4913
      %4915 = vdwg.mxu0
      %4916 = vmatpush.msra.mxu0 0.0
      %4917 = vmatpush.msra.mxu0 0.0
      %4918 = vmatpush.msra.mxu0 0.0
      %4919 = vmatpush.msra.mxu0 0.0
      %4920 = vmatpush.msra.mxu0 0.0
      %4921 = vmatpush.msra.mxu0 0.0
      %4922 = vmatpush.msra.mxu0 0.0
      %4923 = vmatpush.msra.mxu0 0.0
      %4924 = vmatpush.msra.mxu0 0.0
      %4925 = vmatpush.msra.mxu0 0.0
      %4926 = vmatpush.msra.mxu0 0.0
      %4927 = vmatpush.msra.mxu0 0.0
      %4928 = vmatpush.msra.mxu0 0.0
      %4929 = vmatpush.msra.mxu0 0.0
      %4930 = vmatpush.msra.mxu0 0.0
      %4931 = vmatpush.msra.mxu0 %v4894
      %4932 = vmatmul.f32.gmra.mxu0 %v4888
      %v4933 = vpop.f32.mrf.mxu0
      %v4934 = vadd.f32 0.0, %v4933
      %4935 = vdwg.mxu0
      %v4936 = vadd.f32 %v4883, %v4914
      %v4937 = vadd.f32 %v4884, %v4934
      %s4938 = scalar_lea.vmem %s10, 20
      %v4939 = vld [vmem:[%s4938] sm:$0x7]
      %4940 = vrot.lane.b32.xlu0 %v4643, 127
      %v4941 = vpop.permute.xlu0 %4940
      %4942 = vrot.lane.b32.xlu0 %v4644, 127
      %v4943 = vpop.permute.xlu0 %4942
      %v4944 = vsel %vm1178, %v4941, %v4943
      %v4945 = vsel %vm1178, %v4943, %v4941
      %v4946 = vsel %vm1184, %v4944, 0.0
      %v4947 = vsel %vm1185, %v4945, 0.0
      %v4949 = vsel %vm4664, %v4939, 0
      %v4952 = vsel %vm2838, %v4946, 0
      %v4955 = vsel %vm2838, %v4947, 0
      %4957 = vmatpush.msra.mxu0 0.0
      %4958 = vmatpush.msra.mxu0 0.0
      %4959 = vmatpush.msra.mxu0 0.0
      %4960 = vmatpush.msra.mxu0 0.0
      %4961 = vmatpush.msra.mxu0 0.0
      %4962 = vmatpush.msra.mxu0 0.0
      %4963 = vmatpush.msra.mxu0 0.0
      %4964 = vmatpush.msra.mxu0 0.0
      %4965 = vmatpush.msra.mxu0 0.0
      %4966 = vmatpush.msra.mxu0 0.0
      %4967 = vmatpush.msra.mxu0 0.0
      %4968 = vmatpush.msra.mxu0 0.0
      %4969 = vmatpush.msra.mxu0 0.0
      %4970 = vmatpush.msra.mxu0 0.0
      %4971 = vmatpush.msra.mxu0 0.0
      %4972 = vmatpush.msra.mxu0 %v4952
      %4973 = vmatmul.f32.gmra.mxu0 %v4949
      %v4974 = vpop.f32.mrf.mxu0
      %v4975 = vadd.f32 0.0, %v4974
      %4976 = vdwg.mxu0
      %4977 = vmatpush.msra.mxu0 0.0
      %4978 = vmatpush.msra.mxu0 0.0
      %4979 = vmatpush.msra.mxu0 0.0
      %4980 = vmatpush.msra.mxu0 0.0
      %4981 = vmatpush.msra.mxu0 0.0
      %4982 = vmatpush.msra.mxu0 0.0
      %4983 = vmatpush.msra.mxu0 0.0
      %4984 = vmatpush.msra.mxu0 0.0
      %4985 = vmatpush.msra.mxu0 0.0
      %4986 = vmatpush.msra.mxu0 0.0
      %4987 = vmatpush.msra.mxu0 0.0
      %4988 = vmatpush.msra.mxu0 0.0
      %4989 = vmatpush.msra.mxu0 0.0
      %4990 = vmatpush.msra.mxu0 0.0
      %4991 = vmatpush.msra.mxu0 0.0
      %4992 = vmatpush.msra.mxu0 %v4955
      %4993 = vmatmul.f32.gmra.mxu0 %v4949
      %v4994 = vpop.f32.mrf.mxu0
      %v4995 = vadd.f32 0.0, %v4994
      %4996 = vdwg.mxu0
      %v4997 = vadd.f32 %v4936, %v4975
      %v4998 = vadd.f32 %v4937, %v4995
      %s4999 = scalar_lea.vmem %s10, 24
      %v5000 = vld [vmem:[%s4999] sm:$0x7]
      %5001 = vrot.lane.b32.xlu0 %v4643, 113
      %v5002 = vpop.permute.xlu0 %5001
      %5003 = vrot.lane.b32.xlu0 %v4644, 113
      %v5004 = vpop.permute.xlu0 %5003
      %v5005 = vsel %vm1286, %v5002, %v5004
      %v5006 = vsel %vm1286, %v5004, %v5002
      %v5007 = vsel %vm1292, %v5005, 0.0
      %v5008 = vsel %vm1293, %v5006, 0.0
      %v5010 = vsel %vm4664, %v5000, 0
      %v5013 = vsel %vm2838, %v5007, 0
      %v5016 = vsel %vm2838, %v5008, 0
      %5018 = vmatpush.msra.mxu0 0.0
      %5019 = vmatpush.msra.mxu0 0.0
      %5020 = vmatpush.msra.mxu0 0.0
      %5021 = vmatpush.msra.mxu0 0.0
      %5022 = vmatpush.msra.mxu0 0.0
      %5023 = vmatpush.msra.mxu0 0.0
      %5024 = vmatpush.msra.mxu0 0.0
      %5025 = vmatpush.msra.mxu0 0.0
      %5026 = vmatpush.msra.mxu0 0.0
      %5027 = vmatpush.msra.mxu0 0.0
      %5028 = vmatpush.msra.mxu0 0.0
      %5029 = vmatpush.msra.mxu0 0.0
      %5030 = vmatpush.msra.mxu0 0.0
      %5031 = vmatpush.msra.mxu0 0.0
      %5032 = vmatpush.msra.mxu0 0.0
      %5033 = vmatpush.msra.mxu0 %v5013
      %5034 = vmatmul.f32.gmra.mxu0 %v5010
      %v5035 = vpop.f32.mrf.mxu0
      %v5036 = vadd.f32 0.0, %v5035
      %5037 = vdwg.mxu0
      %5038 = vmatpush.msra.mxu0 0.0
      %5039 = vmatpush.msra.mxu0 0.0
      %5040 = vmatpush.msra.mxu0 0.0
      %5041 = vmatpush.msra.mxu0 0.0
      %5042 = vmatpush.msra.mxu0 0.0
      %5043 = vmatpush.msra.mxu0 0.0
      %5044 = vmatpush.msra.mxu0 0.0
      %5045 = vmatpush.msra.mxu0 0.0
      %5046 = vmatpush.msra.mxu0 0.0
      %5047 = vmatpush.msra.mxu0 0.0
      %5048 = vmatpush.msra.mxu0 0.0
      %5049 = vmatpush.msra.mxu0 0.0
      %5050 = vmatpush.msra.mxu0 0.0
      %5051 = vmatpush.msra.mxu0 0.0
      %5052 = vmatpush.msra.mxu0 0.0
      %5053 = vmatpush.msra.mxu0 %v5016
      %5054 = vmatmul.f32.gmra.mxu0 %v5010
      %v5055 = vpop.f32.mrf.mxu0
      %v5056 = vadd.f32 0.0, %v5055
      %5057 = vdwg.mxu0
      %v5058 = vadd.f32 %v4997, %v5036
      %v5059 = vadd.f32 %v4998, %v5056
      %s5060 = scalar_lea.vmem %s10, 28
      %v5061 = vld [vmem:[%s5060] sm:$0x7]
      %5062 = vrot.lane.b32.xlu0 %v4643, 112
      %v5063 = vpop.permute.xlu0 %5062
      %5064 = vrot.lane.b32.xlu0 %v4644, 112
      %v5065 = vpop.permute.xlu0 %5064
      %v5066 = vsel %vm1394, %v5063, %v5065
      %v5067 = vsel %vm1394, %v5065, %v5063
      %v5068 = vsel %vm1400, %v5066, 0.0
      %v5069 = vsel %vm1401, %v5067, 0.0
      %v5071 = vsel %vm4664, %v5061, 0
      %v5074 = vsel %vm2838, %v5068, 0
      %v5077 = vsel %vm2838, %v5069, 0
      %5079 = vmatpush.msra.mxu0 0.0
      %5080 = vmatpush.msra.mxu0 0.0
      %5081 = vmatpush.msra.mxu0 0.0
      %5082 = vmatpush.msra.mxu0 0.0
      %5083 = vmatpush.msra.mxu0 0.0
      %5084 = vmatpush.msra.mxu0 0.0
      %5085 = vmatpush.msra.mxu0 0.0
      %5086 = vmatpush.msra.mxu0 0.0
      %5087 = vmatpush.msra.mxu0 0.0
      %5088 = vmatpush.msra.mxu0 0.0
      %5089 = vmatpush.msra.mxu0 0.0
      %5090 = vmatpush.msra.mxu0 0.0
      %5091 = vmatpush.msra.mxu0 0.0
      %5092 = vmatpush.msra.mxu0 0.0
      %5093 = vmatpush.msra.mxu0 0.0
      %5094 = vmatpush.msra.mxu0 %v5074
      %5095 = vmatmul.f32.gmra.mxu0 %v5071
      %v5096 = vpop.f32.mrf.mxu0
      %v5097 = vadd.f32 0.0, %v5096
      %5098 = vdwg.mxu0
      %5099 = vmatpush.msra.mxu0 0.0
      %5100 = vmatpush.msra.mxu0 0.0
      %5101 = vmatpush.msra.mxu0 0.0
      %5102 = vmatpush.msra.mxu0 0.0
      %5103 = vmatpush.msra.mxu0 0.0
      %5104 = vmatpush.msra.mxu0 0.0
      %5105 = vmatpush.msra.mxu0 0.0
      %5106 = vmatpush.msra.mxu0 0.0
      %5107 = vmatpush.msra.mxu0 0.0
      %5108 = vmatpush.msra.mxu0 0.0
      %5109 = vmatpush.msra.mxu0 0.0
      %5110 = vmatpush.msra.mxu0 0.0
      %5111 = vmatpush.msra.mxu0 0.0
      %5112 = vmatpush.msra.mxu0 0.0
      %5113 = vmatpush.msra.mxu0 0.0
      %5114 = vmatpush.msra.mxu0 %v5077
      %5115 = vmatmul.f32.gmra.mxu0 %v5071
      %v5116 = vpop.f32.mrf.mxu0
      %v5117 = vadd.f32 0.0, %v5116
      %5118 = vdwg.mxu0
      %v5119 = vadd.f32 %v5058, %v5097
      %v5120 = vadd.f32 %v5059, %v5117
      %s5121 = scalar_lea.vmem %s10, 32
      %v5122 = vld [vmem:[%s5121] sm:$0x7]
      %5123 = vrot.lane.b32.xlu0 %v4643, 111
      %v5124 = vpop.permute.xlu0 %5123
      %5125 = vrot.lane.b32.xlu0 %v4644, 111
      %v5126 = vpop.permute.xlu0 %5125
      %v5127 = vsel %vm1502, %v5124, %v5126
      %v5128 = vsel %vm1502, %v5126, %v5124
      %v5129 = vsel %vm1508, %v5127, 0.0
      %v5130 = vsel %vm1509, %v5128, 0.0
      %v5132 = vsel %vm4664, %v5122, 0
      %v5135 = vsel %vm2838, %v5129, 0
      %v5138 = vsel %vm2838, %v5130, 0
      %5140 = vmatpush.msra.mxu0 0.0
      %5141 = vmatpush.msra.mxu0 0.0
      %5142 = vmatpush.msra.mxu0 0.0
      %5143 = vmatpush.msra.mxu0 0.0
      %5144 = vmatpush.msra.mxu0 0.0
      %5145 = vmatpush.msra.mxu0 0.0
      %5146 = vmatpush.msra.mxu0 0.0
      %5147 = vmatpush.msra.mxu0 0.0
      %5148 = vmatpush.msra.mxu0 0.0
      %5149 = vmatpush.msra.mxu0 0.0
      %5150 = vmatpush.msra.mxu0 0.0
      %5151 = vmatpush.msra.mxu0 0.0
      %5152 = vmatpush.msra.mxu0 0.0
      %5153 = vmatpush.msra.mxu0 0.0
      %5154 = vmatpush.msra.mxu0 0.0
      %5155 = vmatpush.msra.mxu0 %v5135
      %5156 = vmatmul.f32.gmra.mxu0 %v5132
      %v5157 = vpop.f32.mrf.mxu0
      %v5158 = vadd.f32 0.0, %v5157
      %5159 = vdwg.mxu0
      %5160 = vmatpush.msra.mxu0 0.0
      %5161 = vmatpush.msra.mxu0 0.0
      %5162 = vmatpush.msra.mxu0 0.0
      %5163 = vmatpush.msra.mxu0 0.0
      %5164 = vmatpush.msra.mxu0 0.0
      %5165 = vmatpush.msra.mxu0 0.0
      %5166 = vmatpush.msra.mxu0 0.0
      %5167 = vmatpush.msra.mxu0 0.0
      %5168 = vmatpush.msra.mxu0 0.0
      %5169 = vmatpush.msra.mxu0 0.0
      %5170 = vmatpush.msra.mxu0 0.0
      %5171 = vmatpush.msra.mxu0 0.0
      %5172 = vmatpush.msra.mxu0 0.0
      %5173 = vmatpush.msra.mxu0 0.0
      %5174 = vmatpush.msra.mxu0 0.0
      %5175 = vmatpush.msra.mxu0 %v5138
      %5176 = vmatmul.f32.gmra.mxu0 %v5132
      %v5177 = vpop.f32.mrf.mxu0
      %v5178 = vadd.f32 0.0, %v5177
      %5179 = vdwg.mxu0
      %v5180 = vadd.f32 %v5119, %v5158
      %v5181 = vadd.f32 %v5120, %v5178
      %v5182 = vld [vmem:[%s11] sm:$0x7]
      %5184 = vset.pattern.permute.xlu0 0
      %5185 = vperm.xlu0 %5184, %v5182
      %v5186 = vpop.permute.xlu0 %5185
      %v5188 = vadd.f32 %v5180, %v5186
      %v5189 = vadd.f32 %v5181, %v5186
      %v5190 = vmax.f32 %v5188, 0.0
      %v5191 = vmax.f32 %v5189, 0.0
      %v5192 = vld [vmem:[%s12] sm:$0x7]
      %5193 = vrot.lane.b32.xlu0 %v5190, 17
      %v5194 = vpop.permute.xlu0 %5193
      %5195 = vrot.lane.b32.xlu0 %v5191, 17
      %v5196 = vpop.permute.xlu0 %5195
      %v5197 = vsel %vm670, %v5194, %v5196
      %v5198 = vsel %vm670, %v5196, %v5194
      %v5199 = vsel %vm676, %v5198, 0.0
      %v5200 = vsel %vm677, %v5197, 0.0
      %s5201 = scalar_lea.vmem %s12, 4
      %v5202 = vld [vmem:[%s5201] sm:$0x7]
      %5203 = vrot.lane.b32.xlu0 %v5190, 16
      %v5204 = vpop.permute.xlu0 %5203
      %5205 = vrot.lane.b32.xlu0 %v5191, 16
      %v5206 = vpop.permute.xlu0 %5205
      %v5207 = vsel %vm694, %v5204, %v5206
      %v5208 = vsel %vm694, %v5206, %v5204
      %v5209 = vsel %vm700, %v5208, 0.0
      %v5210 = vsel %vm701, %v5207, 0.0
      %v5212 = vsel %vm4664, %v5202, 0
      %v5215 = vsel %vm2838, %v5209, 0
      %v5218 = vsel %vm2838, %v5210, 0
      %5220 = vmatpush.msra.mxu0 0.0
      %5221 = vmatpush.msra.mxu0 0.0
      %5222 = vmatpush.msra.mxu0 0.0
      %5223 = vmatpush.msra.mxu0 0.0
      %5224 = vmatpush.msra.mxu0 0.0
      %5225 = vmatpush.msra.mxu0 0.0
      %5226 = vmatpush.msra.mxu0 0.0
      %5227 = vmatpush.msra.mxu0 0.0
      %5228 = vmatpush.msra.mxu0 0.0
      %5229 = vmatpush.msra.mxu0 0.0
      %5230 = vmatpush.msra.mxu0 0.0
      %5231 = vmatpush.msra.mxu0 0.0
      %5232 = vmatpush.msra.mxu0 0.0
      %5233 = vmatpush.msra.mxu0 0.0
      %5234 = vmatpush.msra.mxu0 0.0
      %5235 = vmatpush.msra.mxu0 %v5215
      %5236 = vmatmul.f32.gmra.mxu0 %v5212
      %v5237 = vpop.f32.mrf.mxu0
      %v5238 = vadd.f32 0.0, %v5237
      %5239 = vdwg.mxu0
      %5240 = vmatpush.msra.mxu0 0.0
      %5241 = vmatpush.msra.mxu0 0.0
      %5242 = vmatpush.msra.mxu0 0.0
      %5243 = vmatpush.msra.mxu0 0.0
      %5244 = vmatpush.msra.mxu0 0.0
      %5245 = vmatpush.msra.mxu0 0.0
      %5246 = vmatpush.msra.mxu0 0.0
      %5247 = vmatpush.msra.mxu0 0.0
      %5248 = vmatpush.msra.mxu0 0.0
      %5249 = vmatpush.msra.mxu0 0.0
      %5250 = vmatpush.msra.mxu0 0.0
      %5251 = vmatpush.msra.mxu0 0.0
      %5252 = vmatpush.msra.mxu0 0.0
      %5253 = vmatpush.msra.mxu0 0.0
      %5254 = vmatpush.msra.mxu0 0.0
      %5255 = vmatpush.msra.mxu0 %v5218
      %5256 = vmatmul.f32.gmra.mxu0 %v5212
      %v5257 = vpop.f32.mrf.mxu0
      %v5258 = vadd.f32 0.0, %v5257
      %5259 = vdwg.mxu0
      %v5261 = vsel %vm4664, %v5192, 0
      %v5264 = vsel %vm2838, %v5199, 0
      %v5267 = vsel %vm2838, %v5200, 0
      %5269 = vmatpush.msra.mxu0 0.0
      %5270 = vmatpush.msra.mxu0 0.0
      %5271 = vmatpush.msra.mxu0 0.0
      %5272 = vmatpush.msra.mxu0 0.0
      %5273 = vmatpush.msra.mxu0 0.0
      %5274 = vmatpush.msra.mxu0 0.0
      %5275 = vmatpush.msra.mxu0 0.0
      %5276 = vmatpush.msra.mxu0 0.0
      %5277 = vmatpush.msra.mxu0 0.0
      %5278 = vmatpush.msra.mxu0 0.0
      %5279 = vmatpush.msra.mxu0 0.0
      %5280 = vmatpush.msra.mxu0 0.0
      %5281 = vmatpush.msra.mxu0 0.0
      %5282 = vmatpush.msra.mxu0 0.0
      %5283 = vmatpush.msra.mxu0 0.0
      %5284 = vmatpush.msra.mxu0 %v5264
      %5285 = vmatmul.f32.gmra.mxu0 %v5261
      %v5286 = vpop.f32.mrf.mxu0
      %v5287 = vadd.f32 %v5238, %v5286
      %5288 = vdwg.mxu0
      %5289 = vmatpush.msra.mxu0 0.0
      %5290 = vmatpush.msra.mxu0 0.0
      %5291 = vmatpush.msra.mxu0 0.0
      %5292 = vmatpush.msra.mxu0 0.0
      %5293 = vmatpush.msra.mxu0 0.0
      %5294 = vmatpush.msra.mxu0 0.0
      %5295 = vmatpush.msra.mxu0 0.0
      %5296 = vmatpush.msra.mxu0 0.0
      %5297 = vmatpush.msra.mxu0 0.0
      %5298 = vmatpush.msra.mxu0 0.0
      %5299 = vmatpush.msra.mxu0 0.0
      %5300 = vmatpush.msra.mxu0 0.0
      %5301 = vmatpush.msra.mxu0 0.0
      %5302 = vmatpush.msra.mxu0 0.0
      %5303 = vmatpush.msra.mxu0 0.0
      %5304 = vmatpush.msra.mxu0 %v5267
      %5305 = vmatmul.f32.gmra.mxu0 %v5261
      %v5306 = vpop.f32.mrf.mxu0
      %v5307 = vadd.f32 %v5258, %v5306
      %5308 = vdwg.mxu0
      %s5309 = scalar_lea.vmem %s12, 8
      %v5310 = vld [vmem:[%s5309] sm:$0x7]
      %5311 = vrot.lane.b32.xlu0 %v5190, 15
      %v5312 = vpop.permute.xlu0 %5311
      %5313 = vrot.lane.b32.xlu0 %v5191, 15
      %v5314 = vpop.permute.xlu0 %5313
      %v5315 = vsel %vm872, %v5312, %v5314
      %v5316 = vsel %vm872, %v5314, %v5312
      %v5317 = vsel %vm878, %v5316, 0.0
      %v5318 = vsel %vm879, %v5315, 0.0
      %v5320 = vsel %vm4664, %v5310, 0
      %v5323 = vsel %vm2838, %v5317, 0
      %v5326 = vsel %vm2838, %v5318, 0
      %5328 = vmatpush.msra.mxu0 0.0
      %5329 = vmatpush.msra.mxu0 0.0
      %5330 = vmatpush.msra.mxu0 0.0
      %5331 = vmatpush.msra.mxu0 0.0
      %5332 = vmatpush.msra.mxu0 0.0
      %5333 = vmatpush.msra.mxu0 0.0
      %5334 = vmatpush.msra.mxu0 0.0
      %5335 = vmatpush.msra.mxu0 0.0
      %5336 = vmatpush.msra.mxu0 0.0
      %5337 = vmatpush.msra.mxu0 0.0
      %5338 = vmatpush.msra.mxu0 0.0
      %5339 = vmatpush.msra.mxu0 0.0
      %5340 = vmatpush.msra.mxu0 0.0
      %5341 = vmatpush.msra.mxu0 0.0
      %5342 = vmatpush.msra.mxu0 0.0
      %5343 = vmatpush.msra.mxu0 %v5323
      %5344 = vmatmul.f32.gmra.mxu0 %v5320
      %v5345 = vpop.f32.mrf.mxu0
      %v5346 = vadd.f32 0.0, %v5345
      %5347 = vdwg.mxu0
      %5348 = vmatpush.msra.mxu0 0.0
      %5349 = vmatpush.msra.mxu0 0.0
      %5350 = vmatpush.msra.mxu0 0.0
      %5351 = vmatpush.msra.mxu0 0.0
      %5352 = vmatpush.msra.mxu0 0.0
      %5353 = vmatpush.msra.mxu0 0.0
      %5354 = vmatpush.msra.mxu0 0.0
      %5355 = vmatpush.msra.mxu0 0.0
      %5356 = vmatpush.msra.mxu0 0.0
      %5357 = vmatpush.msra.mxu0 0.0
      %5358 = vmatpush.msra.mxu0 0.0
      %5359 = vmatpush.msra.mxu0 0.0
      %5360 = vmatpush.msra.mxu0 0.0
      %5361 = vmatpush.msra.mxu0 0.0
      %5362 = vmatpush.msra.mxu0 0.0
      %5363 = vmatpush.msra.mxu0 %v5326
      %5364 = vmatmul.f32.gmra.mxu0 %v5320
      %v5365 = vpop.f32.mrf.mxu0
      %v5366 = vadd.f32 0.0, %v5365
      %5367 = vdwg.mxu0
      %v5368 = vadd.f32 %v5287, %v5346
      %v5369 = vadd.f32 %v5307, %v5366
      %s5370 = scalar_lea.vmem %s12, 12
      %v5371 = vld [vmem:[%s5370] sm:$0x7]
      %5372 = vrot.lane.b32.xlu0 %v5190, 1
      %v5373 = vpop.permute.xlu0 %5372
      %5374 = vrot.lane.b32.xlu0 %v5191, 1
      %v5375 = vpop.permute.xlu0 %5374
      %v5376 = vsel %vm980, %v5373, %v5375
      %v5377 = vsel %vm980, %v5375, %v5373
      %v5378 = vsel %vm986, %v5377, 0.0
      %v5379 = vsel %vm987, %v5376, 0.0
      %v5381 = vsel %vm4664, %v5371, 0
      %v5384 = vsel %vm2838, %v5378, 0
      %v5387 = vsel %vm2838, %v5379, 0
      %5389 = vmatpush.msra.mxu0 0.0
      %5390 = vmatpush.msra.mxu0 0.0
      %5391 = vmatpush.msra.mxu0 0.0
      %5392 = vmatpush.msra.mxu0 0.0
      %5393 = vmatpush.msra.mxu0 0.0
      %5394 = vmatpush.msra.mxu0 0.0
      %5395 = vmatpush.msra.mxu0 0.0
      %5396 = vmatpush.msra.mxu0 0.0
      %5397 = vmatpush.msra.mxu0 0.0
      %5398 = vmatpush.msra.mxu0 0.0
      %5399 = vmatpush.msra.mxu0 0.0
      %5400 = vmatpush.msra.mxu0 0.0
      %5401 = vmatpush.msra.mxu0 0.0
      %5402 = vmatpush.msra.mxu0 0.0
      %5403 = vmatpush.msra.mxu0 0.0
      %5404 = vmatpush.msra.mxu0 %v5384
      %5405 = vmatmul.f32.gmra.mxu0 %v5381
      %v5406 = vpop.f32.mrf.mxu0
      %v5407 = vadd.f32 0.0, %v5406
      %5408 = vdwg.mxu0
      %5409 = vmatpush.msra.mxu0 0.0
      %5410 = vmatpush.msra.mxu0 0.0
      %5411 = vmatpush.msra.mxu0 0.0
      %5412 = vmatpush.msra.mxu0 0.0
      %5413 = vmatpush.msra.mxu0 0.0
      %5414 = vmatpush.msra.mxu0 0.0
      %5415 = vmatpush.msra.mxu0 0.0
      %5416 = vmatpush.msra.mxu0 0.0
      %5417 = vmatpush.msra.mxu0 0.0
      %5418 = vmatpush.msra.mxu0 0.0
      %5419 = vmatpush.msra.mxu0 0.0
      %5420 = vmatpush.msra.mxu0 0.0
      %5421 = vmatpush.msra.mxu0 0.0
      %5422 = vmatpush.msra.mxu0 0.0
      %5423 = vmatpush.msra.mxu0 0.0
      %5424 = vmatpush.msra.mxu0 %v5387
      %5425 = vmatmul.f32.gmra.mxu0 %v5381
      %v5426 = vpop.f32.mrf.mxu0
      %v5427 = vadd.f32 0.0, %v5426
      %5428 = vdwg.mxu0
      %v5429 = vadd.f32 %v5368, %v5407
      %v5430 = vadd.f32 %v5369, %v5427
      %s5431 = scalar_lea.vmem %s12, 16
      %v5432 = vld [vmem:[%s5431] sm:$0x7]
      %v5434 = vsel %vm4664, %v5432, 0
      %v5437 = vsel %vm2838, %v5190, 0
      %v5440 = vsel %vm2838, %v5191, 0
      %5442 = vmatpush.msra.mxu0 0.0
      %5443 = vmatpush.msra.mxu0 0.0
      %5444 = vmatpush.msra.mxu0 0.0
      %5445 = vmatpush.msra.mxu0 0.0
      %5446 = vmatpush.msra.mxu0 0.0
      %5447 = vmatpush.msra.mxu0 0.0
      %5448 = vmatpush.msra.mxu0 0.0
      %5449 = vmatpush.msra.mxu0 0.0
      %5450 = vmatpush.msra.mxu0 0.0
      %5451 = vmatpush.msra.mxu0 0.0
      %5452 = vmatpush.msra.mxu0 0.0
      %5453 = vmatpush.msra.mxu0 0.0
      %5454 = vmatpush.msra.mxu0 0.0
      %5455 = vmatpush.msra.mxu0 0.0
      %5456 = vmatpush.msra.mxu0 0.0
      %5457 = vmatpush.msra.mxu0 %v5437
      %5458 = vmatmul.f32.gmra.mxu0 %v5434
      %v5459 = vpop.f32.mrf.mxu0
      %v5460 = vadd.f32 0.0, %v5459
      %5461 = vdwg.mxu0
      %5462 = vmatpush.msra.mxu0 0.0
      %5463 = vmatpush.msra.mxu0 0.0
      %5464 = vmatpush.msra.mxu0 0.0
      %5465 = vmatpush.msra.mxu0 0.0
      %5466 = vmatpush.msra.mxu0 0.0
      %5467 = vmatpush.msra.mxu0 0.0
      %5468 = vmatpush.msra.mxu0 0.0
      %5469 = vmatpush.msra.mxu0 0.0
      %5470 = vmatpush.msra.mxu0 0.0
      %5471 = vmatpush.msra.mxu0 0.0
      %5472 = vmatpush.msra.mxu0 0.0
      %5473 = vmatpush.msra.mxu0 0.0
      %5474 = vmatpush.msra.mxu0 0.0
      %5475 = vmatpush.msra.mxu0 0.0
      %5476 = vmatpush.msra.mxu0 0.0
      %5477 = vmatpush.msra.mxu0 %v5440
      %5478 = vmatmul.f32.gmra.mxu0 %v5434
      %v5479 = vpop.f32.mrf.mxu0
      %v5480 = vadd.f32 0.0, %v5479
      %5481 = vdwg.mxu0
      %v5482 = vadd.f32 %v5429, %v5460
      %v5483 = vadd.f32 %v5430, %v5480
      %s5484 = scalar_lea.vmem %s12, 20
      %v5485 = vld [vmem:[%s5484] sm:$0x7]
      %5486 = vrot.lane.b32.xlu0 %v5190, 127
      %v5487 = vpop.permute.xlu0 %5486
      %5488 = vrot.lane.b32.xlu0 %v5191, 127
      %v5489 = vpop.permute.xlu0 %5488
      %v5490 = vsel %vm1178, %v5487, %v5489
      %v5491 = vsel %vm1178, %v5489, %v5487
      %v5492 = vsel %vm1184, %v5490, 0.0
      %v5493 = vsel %vm1185, %v5491, 0.0
      %v5495 = vsel %vm4664, %v5485, 0
      %v5498 = vsel %vm2838, %v5492, 0
      %v5501 = vsel %vm2838, %v5493, 0
      %5503 = vmatpush.msra.mxu0 0.0
      %5504 = vmatpush.msra.mxu0 0.0
      %5505 = vmatpush.msra.mxu0 0.0
      %5506 = vmatpush.msra.mxu0 0.0
      %5507 = vmatpush.msra.mxu0 0.0
      %5508 = vmatpush.msra.mxu0 0.0
      %5509 = vmatpush.msra.mxu0 0.0
      %5510 = vmatpush.msra.mxu0 0.0
      %5511 = vmatpush.msra.mxu0 0.0
      %5512 = vmatpush.msra.mxu0 0.0
      %5513 = vmatpush.msra.mxu0 0.0
      %5514 = vmatpush.msra.mxu0 0.0
      %5515 = vmatpush.msra.mxu0 0.0
      %5516 = vmatpush.msra.mxu0 0.0
      %5517 = vmatpush.msra.mxu0 0.0
      %5518 = vmatpush.msra.mxu0 %v5498
      %5519 = vmatmul.f32.gmra.mxu0 %v5495
      %v5520 = vpop.f32.mrf.mxu0
      %v5521 = vadd.f32 0.0, %v5520
      %5522 = vdwg.mxu0
      %5523 = vmatpush.msra.mxu0 0.0
      %5524 = vmatpush.msra.mxu0 0.0
      %5525 = vmatpush.msra.mxu0 0.0
      %5526 = vmatpush.msra.mxu0 0.0
      %5527 = vmatpush.msra.mxu0 0.0
      %5528 = vmatpush.msra.mxu0 0.0
      %5529 = vmatpush.msra.mxu0 0.0
      %5530 = vmatpush.msra.mxu0 0.0
      %5531 = vmatpush.msra.mxu0 0.0
      %5532 = vmatpush.msra.mxu0 0.0
      %5533 = vmatpush.msra.mxu0 0.0
      %5534 = vmatpush.msra.mxu0 0.0
      %5535 = vmatpush.msra.mxu0 0.0
      %5536 = vmatpush.msra.mxu0 0.0
      %5537 = vmatpush.msra.mxu0 0.0
      %5538 = vmatpush.msra.mxu0 %v5501
      %5539 = vmatmul.f32.gmra.mxu0 %v5495
      %v5540 = vpop.f32.mrf.mxu0
      %v5541 = vadd.f32 0.0, %v5540
      %5542 = vdwg.mxu0
      %v5543 = vadd.f32 %v5482, %v5521
      %v5544 = vadd.f32 %v5483, %v5541
      %s5545 = scalar_lea.vmem %s12, 24
      %v5546 = vld [vmem:[%s5545] sm:$0x7]
      %5547 = vrot.lane.b32.xlu0 %v5190, 113
      %v5548 = vpop.permute.xlu0 %5547
      %5549 = vrot.lane.b32.xlu0 %v5191, 113
      %v5550 = vpop.permute.xlu0 %5549
      %v5551 = vsel %vm1286, %v5548, %v5550
      %v5552 = vsel %vm1286, %v5550, %v5548
      %v5553 = vsel %vm1292, %v5551, 0.0
      %v5554 = vsel %vm1293, %v5552, 0.0
      %v5556 = vsel %vm4664, %v5546, 0
      %v5559 = vsel %vm2838, %v5553, 0
      %v5562 = vsel %vm2838, %v5554, 0
      %5564 = vmatpush.msra.mxu0 0.0
      %5565 = vmatpush.msra.mxu0 0.0
      %5566 = vmatpush.msra.mxu0 0.0
      %5567 = vmatpush.msra.mxu0 0.0
      %5568 = vmatpush.msra.mxu0 0.0
      %5569 = vmatpush.msra.mxu0 0.0
      %5570 = vmatpush.msra.mxu0 0.0
      %5571 = vmatpush.msra.mxu0 0.0
      %5572 = vmatpush.msra.mxu0 0.0
      %5573 = vmatpush.msra.mxu0 0.0
      %5574 = vmatpush.msra.mxu0 0.0
      %5575 = vmatpush.msra.mxu0 0.0
      %5576 = vmatpush.msra.mxu0 0.0
      %5577 = vmatpush.msra.mxu0 0.0
      %5578 = vmatpush.msra.mxu0 0.0
      %5579 = vmatpush.msra.mxu0 %v5559
      %5580 = vmatmul.f32.gmra.mxu0 %v5556
      %v5581 = vpop.f32.mrf.mxu0
      %v5582 = vadd.f32 0.0, %v5581
      %5583 = vdwg.mxu0
      %5584 = vmatpush.msra.mxu0 0.0
      %5585 = vmatpush.msra.mxu0 0.0
      %5586 = vmatpush.msra.mxu0 0.0
      %5587 = vmatpush.msra.mxu0 0.0
      %5588 = vmatpush.msra.mxu0 0.0
      %5589 = vmatpush.msra.mxu0 0.0
      %5590 = vmatpush.msra.mxu0 0.0
      %5591 = vmatpush.msra.mxu0 0.0
      %5592 = vmatpush.msra.mxu0 0.0
      %5593 = vmatpush.msra.mxu0 0.0
      %5594 = vmatpush.msra.mxu0 0.0
      %5595 = vmatpush.msra.mxu0 0.0
      %5596 = vmatpush.msra.mxu0 0.0
      %5597 = vmatpush.msra.mxu0 0.0
      %5598 = vmatpush.msra.mxu0 0.0
      %5599 = vmatpush.msra.mxu0 %v5562
      %5600 = vmatmul.f32.gmra.mxu0 %v5556
      %v5601 = vpop.f32.mrf.mxu0
      %v5602 = vadd.f32 0.0, %v5601
      %5603 = vdwg.mxu0
      %v5604 = vadd.f32 %v5543, %v5582
      %v5605 = vadd.f32 %v5544, %v5602
      %s5606 = scalar_lea.vmem %s12, 28
      %v5607 = vld [vmem:[%s5606] sm:$0x7]
      %5608 = vrot.lane.b32.xlu0 %v5190, 112
      %v5609 = vpop.permute.xlu0 %5608
      %5610 = vrot.lane.b32.xlu0 %v5191, 112
      %v5611 = vpop.permute.xlu0 %5610
      %v5612 = vsel %vm1394, %v5609, %v5611
      %v5613 = vsel %vm1394, %v5611, %v5609
      %v5614 = vsel %vm1400, %v5612, 0.0
      %v5615 = vsel %vm1401, %v5613, 0.0
      %v5617 = vsel %vm4664, %v5607, 0
      %v5620 = vsel %vm2838, %v5614, 0
      %v5623 = vsel %vm2838, %v5615, 0
      %5625 = vmatpush.msra.mxu0 0.0
      %5626 = vmatpush.msra.mxu0 0.0
      %5627 = vmatpush.msra.mxu0 0.0
      %5628 = vmatpush.msra.mxu0 0.0
      %5629 = vmatpush.msra.mxu0 0.0
      %5630 = vmatpush.msra.mxu0 0.0
      %5631 = vmatpush.msra.mxu0 0.0
      %5632 = vmatpush.msra.mxu0 0.0
      %5633 = vmatpush.msra.mxu0 0.0
      %5634 = vmatpush.msra.mxu0 0.0
      %5635 = vmatpush.msra.mxu0 0.0
      %5636 = vmatpush.msra.mxu0 0.0
      %5637 = vmatpush.msra.mxu0 0.0
      %5638 = vmatpush.msra.mxu0 0.0
      %5639 = vmatpush.msra.mxu0 0.0
      %5640 = vmatpush.msra.mxu0 %v5620
      %5641 = vmatmul.f32.gmra.mxu0 %v5617
      %v5642 = vpop.f32.mrf.mxu0
      %v5643 = vadd.f32 0.0, %v5642
      %5644 = vdwg.mxu0
      %5645 = vmatpush.msra.mxu0 0.0
      %5646 = vmatpush.msra.mxu0 0.0
      %5647 = vmatpush.msra.mxu0 0.0
      %5648 = vmatpush.msra.mxu0 0.0
      %5649 = vmatpush.msra.mxu0 0.0
      %5650 = vmatpush.msra.mxu0 0.0
      %5651 = vmatpush.msra.mxu0 0.0
      %5652 = vmatpush.msra.mxu0 0.0
      %5653 = vmatpush.msra.mxu0 0.0
      %5654 = vmatpush.msra.mxu0 0.0
      %5655 = vmatpush.msra.mxu0 0.0
      %5656 = vmatpush.msra.mxu0 0.0
      %5657 = vmatpush.msra.mxu0 0.0
      %5658 = vmatpush.msra.mxu0 0.0
      %5659 = vmatpush.msra.mxu0 0.0
      %5660 = vmatpush.msra.mxu0 %v5623
      %5661 = vmatmul.f32.gmra.mxu0 %v5617
      %v5662 = vpop.f32.mrf.mxu0
      %v5663 = vadd.f32 0.0, %v5662
      %5664 = vdwg.mxu0
      %v5665 = vadd.f32 %v5604, %v5643
      %v5666 = vadd.f32 %v5605, %v5663
      %s5667 = scalar_lea.vmem %s12, 32
      %v5668 = vld [vmem:[%s5667] sm:$0x7]
      %5669 = vrot.lane.b32.xlu0 %v5190, 111
      %v5670 = vpop.permute.xlu0 %5669
      %5671 = vrot.lane.b32.xlu0 %v5191, 111
      %v5672 = vpop.permute.xlu0 %5671
      %v5673 = vsel %vm1502, %v5670, %v5672
      %v5674 = vsel %vm1502, %v5672, %v5670
      %v5675 = vsel %vm1508, %v5673, 0.0
      %v5676 = vsel %vm1509, %v5674, 0.0
      %v5678 = vsel %vm4664, %v5668, 0
      %v5681 = vsel %vm2838, %v5675, 0
      %v5684 = vsel %vm2838, %v5676, 0
      %5686 = vmatpush.msra.mxu0 0.0
      %5687 = vmatpush.msra.mxu0 0.0
      %5688 = vmatpush.msra.mxu0 0.0
      %5689 = vmatpush.msra.mxu0 0.0
      %5690 = vmatpush.msra.mxu0 0.0
      %5691 = vmatpush.msra.mxu0 0.0
      %5692 = vmatpush.msra.mxu0 0.0
      %5693 = vmatpush.msra.mxu0 0.0
      %5694 = vmatpush.msra.mxu0 0.0
      %5695 = vmatpush.msra.mxu0 0.0
      %5696 = vmatpush.msra.mxu0 0.0
      %5697 = vmatpush.msra.mxu0 0.0
      %5698 = vmatpush.msra.mxu0 0.0
      %5699 = vmatpush.msra.mxu0 0.0
      %5700 = vmatpush.msra.mxu0 0.0
      %5701 = vmatpush.msra.mxu0 %v5681
      %5702 = vmatmul.f32.gmra.mxu0 %v5678
      %v5703 = vpop.f32.mrf.mxu0
      %v5704 = vadd.f32 0.0, %v5703
      %5705 = vdwg.mxu0
      %5706 = vmatpush.msra.mxu0 0.0
      %5707 = vmatpush.msra.mxu0 0.0
      %5708 = vmatpush.msra.mxu0 0.0
      %5709 = vmatpush.msra.mxu0 0.0
      %5710 = vmatpush.msra.mxu0 0.0
      %5711 = vmatpush.msra.mxu0 0.0
      %5712 = vmatpush.msra.mxu0 0.0
      %5713 = vmatpush.msra.mxu0 0.0
      %5714 = vmatpush.msra.mxu0 0.0
      %5715 = vmatpush.msra.mxu0 0.0
      %5716 = vmatpush.msra.mxu0 0.0
      %5717 = vmatpush.msra.mxu0 0.0
      %5718 = vmatpush.msra.mxu0 0.0
      %5719 = vmatpush.msra.mxu0 0.0
      %5720 = vmatpush.msra.mxu0 0.0
      %5721 = vmatpush.msra.mxu0 %v5684
      %5722 = vmatmul.f32.gmra.mxu0 %v5678
      %v5723 = vpop.f32.mrf.mxu0
      %v5724 = vadd.f32 0.0, %v5723
      %5725 = vdwg.mxu0
      %v5726 = vadd.f32 %v5665, %v5704
      %v5727 = vadd.f32 %v5666, %v5724
      %v5728 = vld [vmem:[%s13] sm:$0x7]
      %5730 = vset.pattern.permute.xlu0 0
      %5731 = vperm.xlu0 %5730, %v5728
      %v5732 = vpop.permute.xlu0 %5731
      %v5734 = vadd.f32 %v5726, %v5732
      %v5735 = vadd.f32 %v5727, %v5732
      %v5736 = vld [vmem:[%s14] sm:$0xff]
      %v5737 = vld [vmem:[%s14 + $0x8] sm:$0xff]
      %v5738 = vld [vmem:[%s14 + $0x10] sm:$0xff]
      %v5739 = vld [vmem:[%s14 + $0x18] sm:$0xff]
      %5740 = vrot.lane.b32.xlu0 %v5734, 17
      %v5741 = vpop.permute.xlu0 %5740
      %5742 = vrot.lane.b32.xlu0 %v5735, 17
      %v5743 = vpop.permute.xlu0 %5742
      %v5744 = vsel %vm670, %v5741, %v5743
      %v5745 = vsel %vm670, %v5743, %v5741
      %v5746 = vsel %vm676, %v5745, 0.0
      %v5747 = vsel %vm677, %v5744, 0.0
      %s5748 = scalar_lea.vmem %s14, 32
      %v5749 = vld [vmem:[%s5748] sm:$0xff]
      %v5750 = vld [vmem:[%s5748 + $0x8] sm:$0xff]
      %v5751 = vld [vmem:[%s5748 + $0x10] sm:$0xff]
      %v5752 = vld [vmem:[%s5748 + $0x18] sm:$0xff]
      %5753 = vrot.lane.b32.xlu0 %v5734, 16
      %v5754 = vpop.permute.xlu0 %5753
      %5755 = vrot.lane.b32.xlu0 %v5735, 16
      %v5756 = vpop.permute.xlu0 %5755
      %v5757 = vsel %vm694, %v5754, %v5756
      %v5758 = vsel %vm694, %v5756, %v5754
      %v5759 = vsel %vm700, %v5758, 0.0
      %v5760 = vsel %vm701, %v5757, 0.0
      %v5762 = vsel %vm4664, %v5749, 0
      %v5765 = vsel %vm4664, %v5750, 0
      %v5768 = vsel %vm4664, %v5751, 0
      %v5771 = vsel %vm4664, %v5752, 0
      %v5774 = vsel %vm2838, %v5759, 0
      %v5777 = vsel %vm2838, %v5760, 0
      %5779 = vmatpush.msra.mxu0 0.0
      %5780 = vmatpush.msra.mxu0 0.0
      %5781 = vmatpush.msra.mxu0 0.0
      %5782 = vmatpush.msra.mxu0 0.0
      %5783 = vmatpush.msra.mxu0 0.0
      %5784 = vmatpush.msra.mxu0 0.0
      %5785 = vmatpush.msra.mxu0 0.0
      %5786 = vmatpush.msra.mxu0 0.0
      %5787 = vmatpush.msra.mxu0 0.0
      %5788 = vmatpush.msra.mxu0 0.0
      %5789 = vmatpush.msra.mxu0 0.0
      %5790 = vmatpush.msra.mxu0 0.0
      %5791 = vmatpush.msra.mxu0 0.0
      %5792 = vmatpush.msra.mxu0 0.0
      %5793 = vmatpush.msra.mxu0 0.0
      %5794 = vmatpush.msra.mxu0 %v5774
      %5795 = vmatmul.f32.gmra.mxu0 %v5762
      %v5796 = vpop.f32.mrf.mxu0
      %v5797 = vadd.f32 0.0, %v5796
      %5798 = vmatmul.f32.gmra.mxu0 %v5765
      %v5799 = vpop.f32.mrf.mxu0
      %v5800 = vadd.f32 0.0, %v5799
      %5801 = vmatmul.f32.gmra.mxu0 %v5768
      %v5802 = vpop.f32.mrf.mxu0
      %v5803 = vadd.f32 0.0, %v5802
      %5804 = vmatmul.f32.gmra.mxu0 %v5771
      %v5805 = vpop.f32.mrf.mxu0
      %v5806 = vadd.f32 0.0, %v5805
      %5807 = vdwg.mxu0
      %5808 = vmatpush.msra.mxu0 0.0
      %5809 = vmatpush.msra.mxu0 0.0
      %5810 = vmatpush.msra.mxu0 0.0
      %5811 = vmatpush.msra.mxu0 0.0
      %5812 = vmatpush.msra.mxu0 0.0
      %5813 = vmatpush.msra.mxu0 0.0
      %5814 = vmatpush.msra.mxu0 0.0
      %5815 = vmatpush.msra.mxu0 0.0
      %5816 = vmatpush.msra.mxu0 0.0
      %5817 = vmatpush.msra.mxu0 0.0
      %5818 = vmatpush.msra.mxu0 0.0
      %5819 = vmatpush.msra.mxu0 0.0
      %5820 = vmatpush.msra.mxu0 0.0
      %5821 = vmatpush.msra.mxu0 0.0
      %5822 = vmatpush.msra.mxu0 0.0
      %5823 = vmatpush.msra.mxu0 %v5777
      %5824 = vmatmul.f32.gmra.mxu0 %v5762
      %v5825 = vpop.f32.mrf.mxu0
      %v5826 = vadd.f32 0.0, %v5825
      %5827 = vmatmul.f32.gmra.mxu0 %v5765
      %v5828 = vpop.f32.mrf.mxu0
      %v5829 = vadd.f32 0.0, %v5828
      %5830 = vmatmul.f32.gmra.mxu0 %v5768
      %v5831 = vpop.f32.mrf.mxu0
      %v5832 = vadd.f32 0.0, %v5831
      %5833 = vmatmul.f32.gmra.mxu0 %v5771
      %v5834 = vpop.f32.mrf.mxu0
      %v5835 = vadd.f32 0.0, %v5834
      %5836 = vdwg.mxu0
      %v5838 = vsel %vm4664, %v5736, 0
      %v5841 = vsel %vm4664, %v5737, 0
      %v5844 = vsel %vm4664, %v5738, 0
      %v5847 = vsel %vm4664, %v5739, 0
      %v5850 = vsel %vm2838, %v5746, 0
      %v5853 = vsel %vm2838, %v5747, 0
      %5855 = vmatpush.msra.mxu0 0.0
      %5856 = vmatpush.msra.mxu0 0.0
      %5857 = vmatpush.msra.mxu0 0.0
      %5858 = vmatpush.msra.mxu0 0.0
      %5859 = vmatpush.msra.mxu0 0.0
      %5860 = vmatpush.msra.mxu0 0.0
      %5861 = vmatpush.msra.mxu0 0.0
      %5862 = vmatpush.msra.mxu0 0.0
      %5863 = vmatpush.msra.mxu0 0.0
      %5864 = vmatpush.msra.mxu0 0.0
      %5865 = vmatpush.msra.mxu0 0.0
      %5866 = vmatpush.msra.mxu0 0.0
      %5867 = vmatpush.msra.mxu0 0.0
      %5868 = vmatpush.msra.mxu0 0.0
      %5869 = vmatpush.msra.mxu0 0.0
      %5870 = vmatpush.msra.mxu0 %v5850
      %5871 = vmatmul.f32.gmra.mxu0 %v5838
      %v5872 = vpop.f32.mrf.mxu0
      %v5873 = vadd.f32 %v5797, %v5872
      %5874 = vmatmul.f32.gmra.mxu0 %v5841
      %v5875 = vpop.f32.mrf.mxu0
      %v5876 = vadd.f32 %v5800, %v5875
      %5877 = vmatmul.f32.gmra.mxu0 %v5844
      %v5878 = vpop.f32.mrf.mxu0
      %v5879 = vadd.f32 %v5803, %v5878
      %5880 = vmatmul.f32.gmra.mxu0 %v5847
      %v5881 = vpop.f32.mrf.mxu0
      %v5882 = vadd.f32 %v5806, %v5881
      %5883 = vdwg.mxu0
      %5884 = vmatpush.msra.mxu0 0.0
      %5885 = vmatpush.msra.mxu0 0.0
      %5886 = vmatpush.msra.mxu0 0.0
      %5887 = vmatpush.msra.mxu0 0.0
      %5888 = vmatpush.msra.mxu0 0.0
      %5889 = vmatpush.msra.mxu0 0.0
      %5890 = vmatpush.msra.mxu0 0.0
      %5891 = vmatpush.msra.mxu0 0.0
      %5892 = vmatpush.msra.mxu0 0.0
      %5893 = vmatpush.msra.mxu0 0.0
      %5894 = vmatpush.msra.mxu0 0.0
      %5895 = vmatpush.msra.mxu0 0.0
      %5896 = vmatpush.msra.mxu0 0.0
      %5897 = vmatpush.msra.mxu0 0.0
      %5898 = vmatpush.msra.mxu0 0.0
      %5899 = vmatpush.msra.mxu0 %v5853
      %5900 = vmatmul.f32.gmra.mxu0 %v5838
      %v5901 = vpop.f32.mrf.mxu0
      %v5902 = vadd.f32 %v5826, %v5901
      %5903 = vmatmul.f32.gmra.mxu0 %v5841
      %v5904 = vpop.f32.mrf.mxu0
      %v5905 = vadd.f32 %v5829, %v5904
      %5906 = vmatmul.f32.gmra.mxu0 %v5844
      %v5907 = vpop.f32.mrf.mxu0
      %v5908 = vadd.f32 %v5832, %v5907
      %5909 = vmatmul.f32.gmra.mxu0 %v5847
      %v5910 = vpop.f32.mrf.mxu0
      %v5911 = vadd.f32 %v5835, %v5910
      %5912 = vdwg.mxu0
      %s5913 = scalar_lea.vmem %s14, 64
      %v5914 = vld [vmem:[%s5913] sm:$0xff]
      %v5915 = vld [vmem:[%s5913 + $0x8] sm:$0xff]
      %v5916 = vld [vmem:[%s5913 + $0x10] sm:$0xff]
      %v5917 = vld [vmem:[%s5913 + $0x18] sm:$0xff]
      %5918 = vrot.lane.b32.xlu0 %v5734, 15
      %v5919 = vpop.permute.xlu0 %5918
      %5920 = vrot.lane.b32.xlu0 %v5735, 15
      %v5921 = vpop.permute.xlu0 %5920
      %v5922 = vsel %vm872, %v5919, %v5921
      %v5923 = vsel %vm872, %v5921, %v5919
      %v5924 = vsel %vm878, %v5923, 0.0
      %v5925 = vsel %vm879, %v5922, 0.0
      %v5927 = vsel %vm4664, %v5914, 0
      %v5930 = vsel %vm4664, %v5915, 0
      %v5933 = vsel %vm4664, %v5916, 0
      %v5936 = vsel %vm4664, %v5917, 0
      %v5939 = vsel %vm2838, %v5924, 0
      %v5942 = vsel %vm2838, %v5925, 0
      %5944 = vmatpush.msra.mxu0 0.0
      %5945 = vmatpush.msra.mxu0 0.0
      %5946 = vmatpush.msra.mxu0 0.0
      %5947 = vmatpush.msra.mxu0 0.0
      %5948 = vmatpush.msra.mxu0 0.0
      %5949 = vmatpush.msra.mxu0 0.0
      %5950 = vmatpush.msra.mxu0 0.0
      %5951 = vmatpush.msra.mxu0 0.0
      %5952 = vmatpush.msra.mxu0 0.0
      %5953 = vmatpush.msra.mxu0 0.0
      %5954 = vmatpush.msra.mxu0 0.0
      %5955 = vmatpush.msra.mxu0 0.0
      %5956 = vmatpush.msra.mxu0 0.0
      %5957 = vmatpush.msra.mxu0 0.0
      %5958 = vmatpush.msra.mxu0 0.0
      %5959 = vmatpush.msra.mxu0 %v5939
      %5960 = vmatmul.f32.gmra.mxu0 %v5927
      %v5961 = vpop.f32.mrf.mxu0
      %v5962 = vadd.f32 0.0, %v5961
      %5963 = vmatmul.f32.gmra.mxu0 %v5930
      %v5964 = vpop.f32.mrf.mxu0
      %v5965 = vadd.f32 0.0, %v5964
      %5966 = vmatmul.f32.gmra.mxu0 %v5933
      %v5967 = vpop.f32.mrf.mxu0
      %v5968 = vadd.f32 0.0, %v5967
      %5969 = vmatmul.f32.gmra.mxu0 %v5936
      %v5970 = vpop.f32.mrf.mxu0
      %v5971 = vadd.f32 0.0, %v5970
      %5972 = vdwg.mxu0
      %5973 = vmatpush.msra.mxu0 0.0
      %5974 = vmatpush.msra.mxu0 0.0
      %5975 = vmatpush.msra.mxu0 0.0
      %5976 = vmatpush.msra.mxu0 0.0
      %5977 = vmatpush.msra.mxu0 0.0
      %5978 = vmatpush.msra.mxu0 0.0
      %5979 = vmatpush.msra.mxu0 0.0
      %5980 = vmatpush.msra.mxu0 0.0
      %5981 = vmatpush.msra.mxu0 0.0
      %5982 = vmatpush.msra.mxu0 0.0
      %5983 = vmatpush.msra.mxu0 0.0
      %5984 = vmatpush.msra.mxu0 0.0
      %5985 = vmatpush.msra.mxu0 0.0
      %5986 = vmatpush.msra.mxu0 0.0
      %5987 = vmatpush.msra.mxu0 0.0
      %5988 = vmatpush.msra.mxu0 %v5942
      %5989 = vmatmul.f32.gmra.mxu0 %v5927
      %v5990 = vpop.f32.mrf.mxu0
      %v5991 = vadd.f32 0.0, %v5990
      %5992 = vmatmul.f32.gmra.mxu0 %v5930
      %v5993 = vpop.f32.mrf.mxu0
      %v5994 = vadd.f32 0.0, %v5993
      %5995 = vmatmul.f32.gmra.mxu0 %v5933
      %v5996 = vpop.f32.mrf.mxu0
      %v5997 = vadd.f32 0.0, %v5996
      %5998 = vmatmul.f32.gmra.mxu0 %v5936
      %v5999 = vpop.f32.mrf.mxu0
      %v6000 = vadd.f32 0.0, %v5999
      %6001 = vdwg.mxu0
      %v6002 = vadd.f32 %v5873, %v5962
      %v6003 = vadd.f32 %v5902, %v5991
      %v6004 = vadd.f32 %v5876, %v5965
      %v6005 = vadd.f32 %v5905, %v5994
      %v6006 = vadd.f32 %v5879, %v5968
      %v6007 = vadd.f32 %v5908, %v5997
      %v6008 = vadd.f32 %v5882, %v5971
      %v6009 = vadd.f32 %v5911, %v6000
      %s6010 = scalar_lea.vmem %s14, 96
      %v6011 = vld [vmem:[%s6010] sm:$0xff]
      %v6012 = vld [vmem:[%s6010 + $0x8] sm:$0xff]
      %v6013 = vld [vmem:[%s6010 + $0x10] sm:$0xff]
      %v6014 = vld [vmem:[%s6010 + $0x18] sm:$0xff]
      %6015 = vrot.lane.b32.xlu0 %v5734, 1
      %v6016 = vpop.permute.xlu0 %6015
      %6017 = vrot.lane.b32.xlu0 %v5735, 1
      %v6018 = vpop.permute.xlu0 %6017
      %v6019 = vsel %vm980, %v6016, %v6018
      %v6020 = vsel %vm980, %v6018, %v6016
      %v6021 = vsel %vm986, %v6020, 0.0
      %v6022 = vsel %vm987, %v6019, 0.0
      %v6024 = vsel %vm4664, %v6011, 0
      %v6027 = vsel %vm4664, %v6012, 0
      %v6030 = vsel %vm4664, %v6013, 0
      %v6033 = vsel %vm4664, %v6014, 0
      %v6036 = vsel %vm2838, %v6021, 0
      %v6039 = vsel %vm2838, %v6022, 0
      %6041 = vmatpush.msra.mxu0 0.0
      %6042 = vmatpush.msra.mxu0 0.0
      %6043 = vmatpush.msra.mxu0 0.0
      %6044 = vmatpush.msra.mxu0 0.0
      %6045 = vmatpush.msra.mxu0 0.0
      %6046 = vmatpush.msra.mxu0 0.0
      %6047 = vmatpush.msra.mxu0 0.0
      %6048 = vmatpush.msra.mxu0 0.0
      %6049 = vmatpush.msra.mxu0 0.0
      %6050 = vmatpush.msra.mxu0 0.0
      %6051 = vmatpush.msra.mxu0 0.0
      %6052 = vmatpush.msra.mxu0 0.0
      %6053 = vmatpush.msra.mxu0 0.0
      %6054 = vmatpush.msra.mxu0 0.0
      %6055 = vmatpush.msra.mxu0 0.0
      %6056 = vmatpush.msra.mxu0 %v6036
      %6057 = vmatmul.f32.gmra.mxu0 %v6024
      %v6058 = vpop.f32.mrf.mxu0
      %v6059 = vadd.f32 0.0, %v6058
      %6060 = vmatmul.f32.gmra.mxu0 %v6027
      %v6061 = vpop.f32.mrf.mxu0
      %v6062 = vadd.f32 0.0, %v6061
      %6063 = vmatmul.f32.gmra.mxu0 %v6030
      %v6064 = vpop.f32.mrf.mxu0
      %v6065 = vadd.f32 0.0, %v6064
      %6066 = vmatmul.f32.gmra.mxu0 %v6033
      %v6067 = vpop.f32.mrf.mxu0
      %v6068 = vadd.f32 0.0, %v6067
      %6069 = vdwg.mxu0
      %6070 = vmatpush.msra.mxu0 0.0
      %6071 = vmatpush.msra.mxu0 0.0
      %6072 = vmatpush.msra.mxu0 0.0
      %6073 = vmatpush.msra.mxu0 0.0
      %6074 = vmatpush.msra.mxu0 0.0
      %6075 = vmatpush.msra.mxu0 0.0
      %6076 = vmatpush.msra.mxu0 0.0
      %6077 = vmatpush.msra.mxu0 0.0
      %6078 = vmatpush.msra.mxu0 0.0
      %6079 = vmatpush.msra.mxu0 0.0
      %6080 = vmatpush.msra.mxu0 0.0
      %6081 = vmatpush.msra.mxu0 0.0
      %6082 = vmatpush.msra.mxu0 0.0
      %6083 = vmatpush.msra.mxu0 0.0
      %6084 = vmatpush.msra.mxu0 0.0
      %6085 = vmatpush.msra.mxu0 %v6039
      %6086 = vmatmul.f32.gmra.mxu0 %v6024
      %v6087 = vpop.f32.mrf.mxu0
      %v6088 = vadd.f32 0.0, %v6087
      %6089 = vmatmul.f32.gmra.mxu0 %v6027
      %v6090 = vpop.f32.mrf.mxu0
      %v6091 = vadd.f32 0.0, %v6090
      %6092 = vmatmul.f32.gmra.mxu0 %v6030
      %v6093 = vpop.f32.mrf.mxu0
      %v6094 = vadd.f32 0.0, %v6093
      %6095 = vmatmul.f32.gmra.mxu0 %v6033
      %v6096 = vpop.f32.mrf.mxu0
      %v6097 = vadd.f32 0.0, %v6096
      %6098 = vdwg.mxu0
      %v6099 = vadd.f32 %v6002, %v6059
      %v6100 = vadd.f32 %v6003, %v6088
      %v6101 = vadd.f32 %v6004, %v6062
      %v6102 = vadd.f32 %v6005, %v6091
      %v6103 = vadd.f32 %v6006, %v6065
      %v6104 = vadd.f32 %v6007, %v6094
      %v6105 = vadd.f32 %v6008, %v6068
      %v6106 = vadd.f32 %v6009, %v6097
      %s6107 = scalar_lea.vmem %s14, 128
      %v6108 = vld [vmem:[%s6107] sm:$0xff]
      %v6109 = vld [vmem:[%s6107 + $0x8] sm:$0xff]
      %v6110 = vld [vmem:[%s6107 + $0x10] sm:$0xff]
      %v6111 = vld [vmem:[%s6107 + $0x18] sm:$0xff]
      %v6113 = vsel %vm4664, %v6108, 0
      %v6116 = vsel %vm4664, %v6109, 0
      %v6119 = vsel %vm4664, %v6110, 0
      %v6122 = vsel %vm4664, %v6111, 0
      %v6125 = vsel %vm2838, %v5734, 0
      %v6128 = vsel %vm2838, %v5735, 0
      %6130 = vmatpush.msra.mxu0 0.0
      %6131 = vmatpush.msra.mxu0 0.0
      %6132 = vmatpush.msra.mxu0 0.0
      %6133 = vmatpush.msra.mxu0 0.0
      %6134 = vmatpush.msra.mxu0 0.0
      %6135 = vmatpush.msra.mxu0 0.0
      %6136 = vmatpush.msra.mxu0 0.0
      %6137 = vmatpush.msra.mxu0 0.0
      %6138 = vmatpush.msra.mxu0 0.0
      %6139 = vmatpush.msra.mxu0 0.0
      %6140 = vmatpush.msra.mxu0 0.0
      %6141 = vmatpush.msra.mxu0 0.0
      %6142 = vmatpush.msra.mxu0 0.0
      %6143 = vmatpush.msra.mxu0 0.0
      %6144 = vmatpush.msra.mxu0 0.0
      %6145 = vmatpush.msra.mxu0 %v6125
      %6146 = vmatmul.f32.gmra.mxu0 %v6113
      %v6147 = vpop.f32.mrf.mxu0
      %v6148 = vadd.f32 0.0, %v6147
      %6149 = vmatmul.f32.gmra.mxu0 %v6116
      %v6150 = vpop.f32.mrf.mxu0
      %v6151 = vadd.f32 0.0, %v6150
      %6152 = vmatmul.f32.gmra.mxu0 %v6119
      %v6153 = vpop.f32.mrf.mxu0
      %v6154 = vadd.f32 0.0, %v6153
      %6155 = vmatmul.f32.gmra.mxu0 %v6122
      %v6156 = vpop.f32.mrf.mxu0
      %v6157 = vadd.f32 0.0, %v6156
      %6158 = vdwg.mxu0
      %6159 = vmatpush.msra.mxu0 0.0
      %6160 = vmatpush.msra.mxu0 0.0
      %6161 = vmatpush.msra.mxu0 0.0
      %6162 = vmatpush.msra.mxu0 0.0
      %6163 = vmatpush.msra.mxu0 0.0
      %6164 = vmatpush.msra.mxu0 0.0
      %6165 = vmatpush.msra.mxu0 0.0
      %6166 = vmatpush.msra.mxu0 0.0
      %6167 = vmatpush.msra.mxu0 0.0
      %6168 = vmatpush.msra.mxu0 0.0
      %6169 = vmatpush.msra.mxu0 0.0
      %6170 = vmatpush.msra.mxu0 0.0
      %6171 = vmatpush.msra.mxu0 0.0
      %6172 = vmatpush.msra.mxu0 0.0
      %6173 = vmatpush.msra.mxu0 0.0
      %6174 = vmatpush.msra.mxu0 %v6128
      %6175 = vmatmul.f32.gmra.mxu0 %v6113
      %v6176 = vpop.f32.mrf.mxu0
      %v6177 = vadd.f32 0.0, %v6176
      %6178 = vmatmul.f32.gmra.mxu0 %v6116
      %v6179 = vpop.f32.mrf.mxu0
      %v6180 = vadd.f32 0.0, %v6179
      %6181 = vmatmul.f32.gmra.mxu0 %v6119
      %v6182 = vpop.f32.mrf.mxu0
      %v6183 = vadd.f32 0.0, %v6182
      %6184 = vmatmul.f32.gmra.mxu0 %v6122
      %v6185 = vpop.f32.mrf.mxu0
      %v6186 = vadd.f32 0.0, %v6185
      %6187 = vdwg.mxu0
      %v6188 = vadd.f32 %v6099, %v6148
      %v6189 = vadd.f32 %v6100, %v6177
      %v6190 = vadd.f32 %v6101, %v6151
      %v6191 = vadd.f32 %v6102, %v6180
      %v6192 = vadd.f32 %v6103, %v6154
      %v6193 = vadd.f32 %v6104, %v6183
      %v6194 = vadd.f32 %v6105, %v6157
      %v6195 = vadd.f32 %v6106, %v6186
      %s6196 = scalar_lea.vmem %s14, 160
      %v6197 = vld [vmem:[%s6196] sm:$0xff]
      %v6198 = vld [vmem:[%s6196 + $0x8] sm:$0xff]
      %v6199 = vld [vmem:[%s6196 + $0x10] sm:$0xff]
      %v6200 = vld [vmem:[%s6196 + $0x18] sm:$0xff]
      %6201 = vrot.lane.b32.xlu0 %v5734, 127
      %v6202 = vpop.permute.xlu0 %6201
      %6203 = vrot.lane.b32.xlu0 %v5735, 127
      %v6204 = vpop.permute.xlu0 %6203
      %v6205 = vsel %vm1178, %v6202, %v6204
      %v6206 = vsel %vm1178, %v6204, %v6202
      %v6207 = vsel %vm1184, %v6205, 0.0
      %v6208 = vsel %vm1185, %v6206, 0.0
      %v6210 = vsel %vm4664, %v6197, 0
      %v6213 = vsel %vm4664, %v6198, 0
      %v6216 = vsel %vm4664, %v6199, 0
      %v6219 = vsel %vm4664, %v6200, 0
      %v6222 = vsel %vm2838, %v6207, 0
      %v6225 = vsel %vm2838, %v6208, 0
      %6227 = vmatpush.msra.mxu0 0.0
      %6228 = vmatpush.msra.mxu0 0.0
      %6229 = vmatpush.msra.mxu0 0.0
      %6230 = vmatpush.msra.mxu0 0.0
      %6231 = vmatpush.msra.mxu0 0.0
      %6232 = vmatpush.msra.mxu0 0.0
      %6233 = vmatpush.msra.mxu0 0.0
      %6234 = vmatpush.msra.mxu0 0.0
      %6235 = vmatpush.msra.mxu0 0.0
      %6236 = vmatpush.msra.mxu0 0.0
      %6237 = vmatpush.msra.mxu0 0.0
      %6238 = vmatpush.msra.mxu0 0.0
      %6239 = vmatpush.msra.mxu0 0.0
      %6240 = vmatpush.msra.mxu0 0.0
      %6241 = vmatpush.msra.mxu0 0.0
      %6242 = vmatpush.msra.mxu0 %v6222
      %6243 = vmatmul.f32.gmra.mxu0 %v6210
      %v6244 = vpop.f32.mrf.mxu0
      %v6245 = vadd.f32 0.0, %v6244
      %6246 = vmatmul.f32.gmra.mxu0 %v6213
      %v6247 = vpop.f32.mrf.mxu0
      %v6248 = vadd.f32 0.0, %v6247
      %6249 = vmatmul.f32.gmra.mxu0 %v6216
      %v6250 = vpop.f32.mrf.mxu0
      %v6251 = vadd.f32 0.0, %v6250
      %6252 = vmatmul.f32.gmra.mxu0 %v6219
      %v6253 = vpop.f32.mrf.mxu0
      %v6254 = vadd.f32 0.0, %v6253
      %6255 = vdwg.mxu0
      %6256 = vmatpush.msra.mxu0 0.0
      %6257 = vmatpush.msra.mxu0 0.0
      %6258 = vmatpush.msra.mxu0 0.0
      %6259 = vmatpush.msra.mxu0 0.0
      %6260 = vmatpush.msra.mxu0 0.0
      %6261 = vmatpush.msra.mxu0 0.0
      %6262 = vmatpush.msra.mxu0 0.0
      %6263 = vmatpush.msra.mxu0 0.0
      %6264 = vmatpush.msra.mxu0 0.0
      %6265 = vmatpush.msra.mxu0 0.0
      %6266 = vmatpush.msra.mxu0 0.0
      %6267 = vmatpush.msra.mxu0 0.0
      %6268 = vmatpush.msra.mxu0 0.0
      %6269 = vmatpush.msra.mxu0 0.0
      %6270 = vmatpush.msra.mxu0 0.0
      %6271 = vmatpush.msra.mxu0 %v6225
      %6272 = vmatmul.f32.gmra.mxu0 %v6210
      %v6273 = vpop.f32.mrf.mxu0
      %v6274 = vadd.f32 0.0, %v6273
      %6275 = vmatmul.f32.gmra.mxu0 %v6213
      %v6276 = vpop.f32.mrf.mxu0
      %v6277 = vadd.f32 0.0, %v6276
      %6278 = vmatmul.f32.gmra.mxu0 %v6216
      %v6279 = vpop.f32.mrf.mxu0
      %v6280 = vadd.f32 0.0, %v6279
      %6281 = vmatmul.f32.gmra.mxu0 %v6219
      %v6282 = vpop.f32.mrf.mxu0
      %v6283 = vadd.f32 0.0, %v6282
      %6284 = vdwg.mxu0
      %v6285 = vadd.f32 %v6188, %v6245
      %v6286 = vadd.f32 %v6189, %v6274
      %v6287 = vadd.f32 %v6190, %v6248
      %v6288 = vadd.f32 %v6191, %v6277
      %v6289 = vadd.f32 %v6192, %v6251
      %v6290 = vadd.f32 %v6193, %v6280
      %v6291 = vadd.f32 %v6194, %v6254
      %v6292 = vadd.f32 %v6195, %v6283
      %s6293 = scalar_lea.vmem %s14, 192
      %v6294 = vld [vmem:[%s6293] sm:$0xff]
      %v6295 = vld [vmem:[%s6293 + $0x8] sm:$0xff]
      %v6296 = vld [vmem:[%s6293 + $0x10] sm:$0xff]
      %v6297 = vld [vmem:[%s6293 + $0x18] sm:$0xff]
      %6298 = vrot.lane.b32.xlu0 %v5734, 113
      %v6299 = vpop.permute.xlu0 %6298
      %6300 = vrot.lane.b32.xlu0 %v5735, 113
      %v6301 = vpop.permute.xlu0 %6300
      %v6302 = vsel %vm1286, %v6299, %v6301
      %v6303 = vsel %vm1286, %v6301, %v6299
      %v6304 = vsel %vm1292, %v6302, 0.0
      %v6305 = vsel %vm1293, %v6303, 0.0
      %v6307 = vsel %vm4664, %v6294, 0
      %v6310 = vsel %vm4664, %v6295, 0
      %v6313 = vsel %vm4664, %v6296, 0
      %v6316 = vsel %vm4664, %v6297, 0
      %v6319 = vsel %vm2838, %v6304, 0
      %v6322 = vsel %vm2838, %v6305, 0
      %6324 = vmatpush.msra.mxu0 0.0
      %6325 = vmatpush.msra.mxu0 0.0
      %6326 = vmatpush.msra.mxu0 0.0
      %6327 = vmatpush.msra.mxu0 0.0
      %6328 = vmatpush.msra.mxu0 0.0
      %6329 = vmatpush.msra.mxu0 0.0
      %6330 = vmatpush.msra.mxu0 0.0
      %6331 = vmatpush.msra.mxu0 0.0
      %6332 = vmatpush.msra.mxu0 0.0
      %6333 = vmatpush.msra.mxu0 0.0
      %6334 = vmatpush.msra.mxu0 0.0
      %6335 = vmatpush.msra.mxu0 0.0
      %6336 = vmatpush.msra.mxu0 0.0
      %6337 = vmatpush.msra.mxu0 0.0
      %6338 = vmatpush.msra.mxu0 0.0
      %6339 = vmatpush.msra.mxu0 %v6319
      %6340 = vmatmul.f32.gmra.mxu0 %v6307
      %v6341 = vpop.f32.mrf.mxu0
      %v6342 = vadd.f32 0.0, %v6341
      %6343 = vmatmul.f32.gmra.mxu0 %v6310
      %v6344 = vpop.f32.mrf.mxu0
      %v6345 = vadd.f32 0.0, %v6344
      %6346 = vmatmul.f32.gmra.mxu0 %v6313
      %v6347 = vpop.f32.mrf.mxu0
      %v6348 = vadd.f32 0.0, %v6347
      %6349 = vmatmul.f32.gmra.mxu0 %v6316
      %v6350 = vpop.f32.mrf.mxu0
      %v6351 = vadd.f32 0.0, %v6350
      %6352 = vdwg.mxu0
      %6353 = vmatpush.msra.mxu0 0.0
      %6354 = vmatpush.msra.mxu0 0.0
      %6355 = vmatpush.msra.mxu0 0.0
      %6356 = vmatpush.msra.mxu0 0.0
      %6357 = vmatpush.msra.mxu0 0.0
      %6358 = vmatpush.msra.mxu0 0.0
      %6359 = vmatpush.msra.mxu0 0.0
      %6360 = vmatpush.msra.mxu0 0.0
      %6361 = vmatpush.msra.mxu0 0.0
      %6362 = vmatpush.msra.mxu0 0.0
      %6363 = vmatpush.msra.mxu0 0.0
      %6364 = vmatpush.msra.mxu0 0.0
      %6365 = vmatpush.msra.mxu0 0.0
      %6366 = vmatpush.msra.mxu0 0.0
      %6367 = vmatpush.msra.mxu0 0.0
      %6368 = vmatpush.msra.mxu0 %v6322
      %6369 = vmatmul.f32.gmra.mxu0 %v6307
      %v6370 = vpop.f32.mrf.mxu0
      %v6371 = vadd.f32 0.0, %v6370
      %6372 = vmatmul.f32.gmra.mxu0 %v6310
      %v6373 = vpop.f32.mrf.mxu0
      %v6374 = vadd.f32 0.0, %v6373
      %6375 = vmatmul.f32.gmra.mxu0 %v6313
      %v6376 = vpop.f32.mrf.mxu0
      %v6377 = vadd.f32 0.0, %v6376
      %6378 = vmatmul.f32.gmra.mxu0 %v6316
      %v6379 = vpop.f32.mrf.mxu0
      %v6380 = vadd.f32 0.0, %v6379
      %6381 = vdwg.mxu0
      %v6382 = vadd.f32 %v6285, %v6342
      %v6383 = vadd.f32 %v6286, %v6371
      %v6384 = vadd.f32 %v6287, %v6345
      %v6385 = vadd.f32 %v6288, %v6374
      %v6386 = vadd.f32 %v6289, %v6348
      %v6387 = vadd.f32 %v6290, %v6377
      %v6388 = vadd.f32 %v6291, %v6351
      %v6389 = vadd.f32 %v6292, %v6380
      %s6390 = scalar_lea.vmem %s14, 224
      %v6391 = vld [vmem:[%s6390] sm:$0xff]
      %v6392 = vld [vmem:[%s6390 + $0x8] sm:$0xff]
      %v6393 = vld [vmem:[%s6390 + $0x10] sm:$0xff]
      %v6394 = vld [vmem:[%s6390 + $0x18] sm:$0xff]
      %6395 = vrot.lane.b32.xlu0 %v5734, 112
      %v6396 = vpop.permute.xlu0 %6395
      %6397 = vrot.lane.b32.xlu0 %v5735, 112
      %v6398 = vpop.permute.xlu0 %6397
      %v6399 = vsel %vm1394, %v6396, %v6398
      %v6400 = vsel %vm1394, %v6398, %v6396
      %v6401 = vsel %vm1400, %v6399, 0.0
      %v6402 = vsel %vm1401, %v6400, 0.0
      %v6404 = vsel %vm4664, %v6391, 0
      %v6407 = vsel %vm4664, %v6392, 0
      %v6410 = vsel %vm4664, %v6393, 0
      %v6413 = vsel %vm4664, %v6394, 0
      %v6416 = vsel %vm2838, %v6401, 0
      %v6419 = vsel %vm2838, %v6402, 0
      %6421 = vmatpush.msra.mxu0 0.0
      %6422 = vmatpush.msra.mxu0 0.0
      %6423 = vmatpush.msra.mxu0 0.0
      %6424 = vmatpush.msra.mxu0 0.0
      %6425 = vmatpush.msra.mxu0 0.0
      %6426 = vmatpush.msra.mxu0 0.0
      %6427 = vmatpush.msra.mxu0 0.0
      %6428 = vmatpush.msra.mxu0 0.0
      %6429 = vmatpush.msra.mxu0 0.0
      %6430 = vmatpush.msra.mxu0 0.0
      %6431 = vmatpush.msra.mxu0 0.0
      %6432 = vmatpush.msra.mxu0 0.0
      %6433 = vmatpush.msra.mxu0 0.0
      %6434 = vmatpush.msra.mxu0 0.0
      %6435 = vmatpush.msra.mxu0 0.0
      %6436 = vmatpush.msra.mxu0 %v6416
      %6437 = vmatmul.f32.gmra.mxu0 %v6404
      %v6438 = vpop.f32.mrf.mxu0
      %v6439 = vadd.f32 0.0, %v6438
      %6440 = vmatmul.f32.gmra.mxu0 %v6407
      %v6441 = vpop.f32.mrf.mxu0
      %v6442 = vadd.f32 0.0, %v6441
      %6443 = vmatmul.f32.gmra.mxu0 %v6410
      %v6444 = vpop.f32.mrf.mxu0
      %v6445 = vadd.f32 0.0, %v6444
      %6446 = vmatmul.f32.gmra.mxu0 %v6413
      %v6447 = vpop.f32.mrf.mxu0
      %v6448 = vadd.f32 0.0, %v6447
      %6449 = vdwg.mxu0
      %6450 = vmatpush.msra.mxu0 0.0
      %6451 = vmatpush.msra.mxu0 0.0
      %6452 = vmatpush.msra.mxu0 0.0
      %6453 = vmatpush.msra.mxu0 0.0
      %6454 = vmatpush.msra.mxu0 0.0
      %6455 = vmatpush.msra.mxu0 0.0
      %6456 = vmatpush.msra.mxu0 0.0
      %6457 = vmatpush.msra.mxu0 0.0
      %6458 = vmatpush.msra.mxu0 0.0
      %6459 = vmatpush.msra.mxu0 0.0
      %6460 = vmatpush.msra.mxu0 0.0
      %6461 = vmatpush.msra.mxu0 0.0
      %6462 = vmatpush.msra.mxu0 0.0
      %6463 = vmatpush.msra.mxu0 0.0
      %6464 = vmatpush.msra.mxu0 0.0
      %6465 = vmatpush.msra.mxu0 %v6419
      %6466 = vmatmul.f32.gmra.mxu0 %v6404
      %v6467 = vpop.f32.mrf.mxu0
      %v6468 = vadd.f32 0.0, %v6467
      %6469 = vmatmul.f32.gmra.mxu0 %v6407
      %v6470 = vpop.f32.mrf.mxu0
      %v6471 = vadd.f32 0.0, %v6470
      %6472 = vmatmul.f32.gmra.mxu0 %v6410
      %v6473 = vpop.f32.mrf.mxu0
      %v6474 = vadd.f32 0.0, %v6473
      %6475 = vmatmul.f32.gmra.mxu0 %v6413
      %v6476 = vpop.f32.mrf.mxu0
      %v6477 = vadd.f32 0.0, %v6476
      %6478 = vdwg.mxu0
      %v6479 = vadd.f32 %v6382, %v6439
      %v6480 = vadd.f32 %v6383, %v6468
      %v6481 = vadd.f32 %v6384, %v6442
      %v6482 = vadd.f32 %v6385, %v6471
      %v6483 = vadd.f32 %v6386, %v6445
      %v6484 = vadd.f32 %v6387, %v6474
      %v6485 = vadd.f32 %v6388, %v6448
      %v6486 = vadd.f32 %v6389, %v6477
      %s6487 = scalar_lea.vmem %s14, 256
      %v6488 = vld [vmem:[%s6487] sm:$0xff]
      %v6489 = vld [vmem:[%s6487 + $0x8] sm:$0xff]
      %v6490 = vld [vmem:[%s6487 + $0x10] sm:$0xff]
      %v6491 = vld [vmem:[%s6487 + $0x18] sm:$0xff]
      %6492 = vrot.lane.b32.xlu0 %v5734, 111
      %v6493 = vpop.permute.xlu0 %6492
      %6494 = vrot.lane.b32.xlu0 %v5735, 111
      %v6495 = vpop.permute.xlu0 %6494
      %v6496 = vsel %vm1502, %v6493, %v6495
      %v6497 = vsel %vm1502, %v6495, %v6493
      %v6498 = vsel %vm1508, %v6496, 0.0
      %v6499 = vsel %vm1509, %v6497, 0.0
      %v6501 = vsel %vm4664, %v6488, 0
      %v6504 = vsel %vm4664, %v6489, 0
      %v6507 = vsel %vm4664, %v6490, 0
      %v6510 = vsel %vm4664, %v6491, 0
      %v6513 = vsel %vm2838, %v6498, 0
      %v6516 = vsel %vm2838, %v6499, 0
      %6518 = vmatpush.msra.mxu0 0.0
      %6519 = vmatpush.msra.mxu0 0.0
      %6520 = vmatpush.msra.mxu0 0.0
      %6521 = vmatpush.msra.mxu0 0.0
      %6522 = vmatpush.msra.mxu0 0.0
      %6523 = vmatpush.msra.mxu0 0.0
      %6524 = vmatpush.msra.mxu0 0.0
      %6525 = vmatpush.msra.mxu0 0.0
      %6526 = vmatpush.msra.mxu0 0.0
      %6527 = vmatpush.msra.mxu0 0.0
      %6528 = vmatpush.msra.mxu0 0.0
      %6529 = vmatpush.msra.mxu0 0.0
      %6530 = vmatpush.msra.mxu0 0.0
      %6531 = vmatpush.msra.mxu0 0.0
      %6532 = vmatpush.msra.mxu0 0.0
      %6533 = vmatpush.msra.mxu0 %v6513
      %6534 = vmatmul.f32.gmra.mxu0 %v6501
      %v6535 = vpop.f32.mrf.mxu0
      %v6536 = vadd.f32 0.0, %v6535
      %6537 = vmatmul.f32.gmra.mxu0 %v6504
      %v6538 = vpop.f32.mrf.mxu0
      %v6539 = vadd.f32 0.0, %v6538
      %6540 = vmatmul.f32.gmra.mxu0 %v6507
      %v6541 = vpop.f32.mrf.mxu0
      %v6542 = vadd.f32 0.0, %v6541
      %6543 = vmatmul.f32.gmra.mxu0 %v6510
      %v6544 = vpop.f32.mrf.mxu0
      %v6545 = vadd.f32 0.0, %v6544
      %6546 = vdwg.mxu0
      %6547 = vmatpush.msra.mxu0 0.0
      %6548 = vmatpush.msra.mxu0 0.0
      %6549 = vmatpush.msra.mxu0 0.0
      %6550 = vmatpush.msra.mxu0 0.0
      %6551 = vmatpush.msra.mxu0 0.0
      %6552 = vmatpush.msra.mxu0 0.0
      %6553 = vmatpush.msra.mxu0 0.0
      %6554 = vmatpush.msra.mxu0 0.0
      %6555 = vmatpush.msra.mxu0 0.0
      %6556 = vmatpush.msra.mxu0 0.0
      %6557 = vmatpush.msra.mxu0 0.0
      %6558 = vmatpush.msra.mxu0 0.0
      %6559 = vmatpush.msra.mxu0 0.0
      %6560 = vmatpush.msra.mxu0 0.0
      %6561 = vmatpush.msra.mxu0 0.0
      %6562 = vmatpush.msra.mxu0 %v6516
      %6563 = vmatmul.f32.gmra.mxu0 %v6501
      %v6564 = vpop.f32.mrf.mxu0
      %v6565 = vadd.f32 0.0, %v6564
      %6566 = vmatmul.f32.gmra.mxu0 %v6504
      %v6567 = vpop.f32.mrf.mxu0
      %v6568 = vadd.f32 0.0, %v6567
      %6569 = vmatmul.f32.gmra.mxu0 %v6507
      %v6570 = vpop.f32.mrf.mxu0
      %v6571 = vadd.f32 0.0, %v6570
      %6572 = vmatmul.f32.gmra.mxu0 %v6510
      %v6573 = vpop.f32.mrf.mxu0
      %v6574 = vadd.f32 0.0, %v6573
      %6575 = vdwg.mxu0
      %v6576 = vadd.f32 %v6479, %v6536
      %v6577 = vadd.f32 %v6480, %v6565
      %v6578 = vadd.f32 %v6481, %v6539
      %v6579 = vadd.f32 %v6482, %v6568
      %v6580 = vadd.f32 %v6483, %v6542
      %v6581 = vadd.f32 %v6484, %v6571
      %v6582 = vadd.f32 %v6485, %v6545
      %v6583 = vadd.f32 %v6486, %v6574
      %v6584 = vld [vmem:[%s15] sm:$0xff]
      %v6585 = vld [vmem:[%s15 + $0x8] sm:$0xff]
      %v6586 = vld [vmem:[%s15 + $0x10] sm:$0xff]
      %v6587 = vld [vmem:[%s15 + $0x18] sm:$0xff]
      %6589 = vset.pattern.permute.xlu0 0
      %6590 = vperm.xlu0 %6589, %v6584
      %v6591 = vpop.permute.xlu0 %6590
      %6594 = vset.pattern.permute.xlu0 0
      %6595 = vperm.xlu0 %6594, %v6585
      %v6596 = vpop.permute.xlu0 %6595
      %6599 = vset.pattern.permute.xlu0 0
      %6600 = vperm.xlu0 %6599, %v6586
      %v6601 = vpop.permute.xlu0 %6600
      %6604 = vset.pattern.permute.xlu0 0
      %6605 = vperm.xlu0 %6604, %v6587
      %v6606 = vpop.permute.xlu0 %6605
      %v6608 = vadd.f32 %v6576, %v6591
      %v6609 = vadd.f32 %v6577, %v6591
      %v6610 = vadd.f32 %v6578, %v6596
      %v6611 = vadd.f32 %v6579, %v6596
      %v6612 = vadd.f32 %v6580, %v6601
      %v6613 = vadd.f32 %v6581, %v6601
      %v6614 = vadd.f32 %v6582, %v6606
      %v6615 = vadd.f32 %v6583, %v6606
      %v6616 = vmax.f32 %v6608, 0.0
      %v6617 = vmax.f32 %v6609, 0.0
      %v6618 = vmax.f32 %v6610, 0.0
      %v6619 = vmax.f32 %v6611, 0.0
      %v6620 = vmax.f32 %v6612, 0.0
      %v6621 = vmax.f32 %v6613, 0.0
      %v6622 = vmax.f32 %v6614, 0.0
      %v6623 = vmax.f32 %v6615, 0.0
      %v6624 = vld [vmem:[%s16] sm:$0x7]
      %6625 = vrot.lane.b32.xlu0 %v6616, 17
      %v6626 = vpop.permute.xlu0 %6625
      %6627 = vrot.lane.b32.xlu0 %v6618, 17
      %v6628 = vpop.permute.xlu0 %6627
      %6629 = vrot.lane.b32.xlu0 %v6620, 17
      %v6630 = vpop.permute.xlu0 %6629
      %6631 = vrot.lane.b32.xlu0 %v6622, 17
      %v6632 = vpop.permute.xlu0 %6631
      %6633 = vrot.lane.b32.xlu0 %v6617, 17
      %v6634 = vpop.permute.xlu0 %6633
      %6635 = vrot.lane.b32.xlu0 %v6619, 17
      %v6636 = vpop.permute.xlu0 %6635
      %6637 = vrot.lane.b32.xlu0 %v6621, 17
      %v6638 = vpop.permute.xlu0 %6637
      %6639 = vrot.lane.b32.xlu0 %v6623, 17
      %v6640 = vpop.permute.xlu0 %6639
      %v6641 = vsel %vm670, %v6626, %v6634
      %v6642 = vsel %vm670, %v6628, %v6636
      %v6643 = vsel %vm670, %v6630, %v6638
      %v6644 = vsel %vm670, %v6632, %v6640
      %v6645 = vsel %vm670, %v6634, %v6626
      %v6646 = vsel %vm670, %v6636, %v6628
      %v6647 = vsel %vm670, %v6638, %v6630
      %v6648 = vsel %vm670, %v6640, %v6632
      %v6649 = vsel %vm676, %v6645, 0.0
      %v6650 = vsel %vm677, %v6641, 0.0
      %v6651 = vsel %vm676, %v6646, 0.0
      %v6652 = vsel %vm677, %v6642, 0.0
      %v6653 = vsel %vm676, %v6647, 0.0
      %v6654 = vsel %vm677, %v6643, 0.0
      %v6655 = vsel %vm676, %v6648, 0.0
      %v6656 = vsel %vm677, %v6644, 0.0
      %s6657 = scalar_lea.vmem %s16, 4
      %v6658 = vld [vmem:[%s6657] sm:$0x7]
      %6659 = vrot.lane.b32.xlu0 %v6616, 16
      %v6660 = vpop.permute.xlu0 %6659
      %6661 = vrot.lane.b32.xlu0 %v6618, 16
      %v6662 = vpop.permute.xlu0 %6661
      %6663 = vrot.lane.b32.xlu0 %v6620, 16
      %v6664 = vpop.permute.xlu0 %6663
      %6665 = vrot.lane.b32.xlu0 %v6622, 16
      %v6666 = vpop.permute.xlu0 %6665
      %6667 = vrot.lane.b32.xlu0 %v6617, 16
      %v6668 = vpop.permute.xlu0 %6667
      %6669 = vrot.lane.b32.xlu0 %v6619, 16
      %v6670 = vpop.permute.xlu0 %6669
      %6671 = vrot.lane.b32.xlu0 %v6621, 16
      %v6672 = vpop.permute.xlu0 %6671
      %6673 = vrot.lane.b32.xlu0 %v6623, 16
      %v6674 = vpop.permute.xlu0 %6673
      %v6675 = vsel %vm694, %v6660, %v6668
      %v6676 = vsel %vm694, %v6662, %v6670
      %v6677 = vsel %vm694, %v6664, %v6672
      %v6678 = vsel %vm694, %v6666, %v6674
      %v6679 = vsel %vm694, %v6668, %v6660
      %v6680 = vsel %vm694, %v6670, %v6662
      %v6681 = vsel %vm694, %v6672, %v6664
      %v6682 = vsel %vm694, %v6674, %v6666
      %v6683 = vsel %vm700, %v6679, 0.0
      %v6684 = vsel %vm701, %v6675, 0.0
      %v6685 = vsel %vm700, %v6680, 0.0
      %v6686 = vsel %vm701, %v6676, 0.0
      %v6687 = vsel %vm700, %v6681, 0.0
      %v6688 = vsel %vm701, %v6677, 0.0
      %v6689 = vsel %vm700, %v6682, 0.0
      %v6690 = vsel %vm701, %v6678, 0.0
      %v6692 = vsel %vm1705, %v6658, 0
      %6694 = vmatpush.msra.mxu0 0.0
      %6695 = vmatpush.msra.mxu0 0.0
      %6696 = vmatpush.msra.mxu0 0.0
      %6697 = vmatpush.msra.mxu0 0.0
      %6698 = vmatpush.msra.mxu0 0.0
      %6699 = vmatpush.msra.mxu0 0.0
      %6700 = vmatpush.msra.mxu0 0.0
      %6701 = vmatpush.msra.mxu0 0.0
      %6702 = vmatpush.msra.mxu0 0.0
      %6703 = vmatpush.msra.mxu0 0.0
      %6704 = vmatpush.msra.mxu0 0.0
      %6705 = vmatpush.msra.mxu0 0.0
      %6706 = vmatpush.msra.mxu0 %v6689
      %6707 = vmatpush.msra.mxu0 %v6687
      %6708 = vmatpush.msra.mxu0 %v6685
      %6709 = vmatpush.msra.mxu0 %v6683
      %6710 = vmatmul.f32.gmra.mxu0 %v6692
      %v6711 = vpop.f32.mrf.mxu0
      %v6712 = vadd.f32 0.0, %v6711
      %6713 = vdwg.mxu0
      %6714 = vmatpush.msra.mxu0 0.0
      %6715 = vmatpush.msra.mxu0 0.0
      %6716 = vmatpush.msra.mxu0 0.0
      %6717 = vmatpush.msra.mxu0 0.0
      %6718 = vmatpush.msra.mxu0 0.0
      %6719 = vmatpush.msra.mxu0 0.0
      %6720 = vmatpush.msra.mxu0 0.0
      %6721 = vmatpush.msra.mxu0 0.0
      %6722 = vmatpush.msra.mxu0 0.0
      %6723 = vmatpush.msra.mxu0 0.0
      %6724 = vmatpush.msra.mxu0 0.0
      %6725 = vmatpush.msra.mxu0 0.0
      %6726 = vmatpush.msra.mxu0 %v6690
      %6727 = vmatpush.msra.mxu0 %v6688
      %6728 = vmatpush.msra.mxu0 %v6686
      %6729 = vmatpush.msra.mxu0 %v6684
      %6730 = vmatmul.f32.gmra.mxu0 %v6692
      %v6731 = vpop.f32.mrf.mxu0
      %v6732 = vadd.f32 0.0, %v6731
      %6733 = vdwg.mxu0
      %v6735 = vsel %vm1705, %v6624, 0
      %6737 = vmatpush.msra.mxu0 0.0
      %6738 = vmatpush.msra.mxu0 0.0
      %6739 = vmatpush.msra.mxu0 0.0
      %6740 = vmatpush.msra.mxu0 0.0
      %6741 = vmatpush.msra.mxu0 0.0
      %6742 = vmatpush.msra.mxu0 0.0
      %6743 = vmatpush.msra.mxu0 0.0
      %6744 = vmatpush.msra.mxu0 0.0
      %6745 = vmatpush.msra.mxu0 0.0
      %6746 = vmatpush.msra.mxu0 0.0
      %6747 = vmatpush.msra.mxu0 0.0
      %6748 = vmatpush.msra.mxu0 0.0
      %6749 = vmatpush.msra.mxu0 %v6655
      %6750 = vmatpush.msra.mxu0 %v6653
      %6751 = vmatpush.msra.mxu0 %v6651
      %6752 = vmatpush.msra.mxu0 %v6649
      %6753 = vmatmul.f32.gmra.mxu0 %v6735
      %v6754 = vpop.f32.mrf.mxu0
      %v6755 = vadd.f32 %v6712, %v6754
      %6756 = vdwg.mxu0
      %6757 = vmatpush.msra.mxu0 0.0
      %6758 = vmatpush.msra.mxu0 0.0
      %6759 = vmatpush.msra.mxu0 0.0
      %6760 = vmatpush.msra.mxu0 0.0
      %6761 = vmatpush.msra.mxu0 0.0
      %6762 = vmatpush.msra.mxu0 0.0
      %6763 = vmatpush.msra.mxu0 0.0
      %6764 = vmatpush.msra.mxu0 0.0
      %6765 = vmatpush.msra.mxu0 0.0
      %6766 = vmatpush.msra.mxu0 0.0
      %6767 = vmatpush.msra.mxu0 0.0
      %6768 = vmatpush.msra.mxu0 0.0
      %6769 = vmatpush.msra.mxu0 %v6656
      %6770 = vmatpush.msra.mxu0 %v6654
      %6771 = vmatpush.msra.mxu0 %v6652
      %6772 = vmatpush.msra.mxu0 %v6650
      %6773 = vmatmul.f32.gmra.mxu0 %v6735
      %v6774 = vpop.f32.mrf.mxu0
      %v6775 = vadd.f32 %v6732, %v6774
      %6776 = vdwg.mxu0
      %s6777 = scalar_lea.vmem %s16, 8
      %v6778 = vld [vmem:[%s6777] sm:$0x7]
      %6779 = vrot.lane.b32.xlu0 %v6616, 15
      %v6780 = vpop.permute.xlu0 %6779
      %6781 = vrot.lane.b32.xlu0 %v6618, 15
      %v6782 = vpop.permute.xlu0 %6781
      %6783 = vrot.lane.b32.xlu0 %v6620, 15
      %v6784 = vpop.permute.xlu0 %6783
      %6785 = vrot.lane.b32.xlu0 %v6622, 15
      %v6786 = vpop.permute.xlu0 %6785
      %6787 = vrot.lane.b32.xlu0 %v6617, 15
      %v6788 = vpop.permute.xlu0 %6787
      %6789 = vrot.lane.b32.xlu0 %v6619, 15
      %v6790 = vpop.permute.xlu0 %6789
      %6791 = vrot.lane.b32.xlu0 %v6621, 15
      %v6792 = vpop.permute.xlu0 %6791
      %6793 = vrot.lane.b32.xlu0 %v6623, 15
      %v6794 = vpop.permute.xlu0 %6793
      %v6795 = vsel %vm872, %v6780, %v6788
      %v6796 = vsel %vm872, %v6782, %v6790
      %v6797 = vsel %vm872, %v6784, %v6792
      %v6798 = vsel %vm872, %v6786, %v6794
      %v6799 = vsel %vm872, %v6788, %v6780
      %v6800 = vsel %vm872, %v6790, %v6782
      %v6801 = vsel %vm872, %v6792, %v6784
      %v6802 = vsel %vm872, %v6794, %v6786
      %v6803 = vsel %vm878, %v6799, 0.0
      %v6804 = vsel %vm879, %v6795, 0.0
      %v6805 = vsel %vm878, %v6800, 0.0
      %v6806 = vsel %vm879, %v6796, 0.0
      %v6807 = vsel %vm878, %v6801, 0.0
      %v6808 = vsel %vm879, %v6797, 0.0
      %v6809 = vsel %vm878, %v6802, 0.0
      %v6810 = vsel %vm879, %v6798, 0.0
      %v6812 = vsel %vm1705, %v6778, 0
      %6814 = vmatpush.msra.mxu0 0.0
      %6815 = vmatpush.msra.mxu0 0.0
      %6816 = vmatpush.msra.mxu0 0.0
      %6817 = vmatpush.msra.mxu0 0.0
      %6818 = vmatpush.msra.mxu0 0.0
      %6819 = vmatpush.msra.mxu0 0.0
      %6820 = vmatpush.msra.mxu0 0.0
      %6821 = vmatpush.msra.mxu0 0.0
      %6822 = vmatpush.msra.mxu0 0.0
      %6823 = vmatpush.msra.mxu0 0.0
      %6824 = vmatpush.msra.mxu0 0.0
      %6825 = vmatpush.msra.mxu0 0.0
      %6826 = vmatpush.msra.mxu0 %v6809
      %6827 = vmatpush.msra.mxu0 %v6807
      %6828 = vmatpush.msra.mxu0 %v6805
      %6829 = vmatpush.msra.mxu0 %v6803
      %6830 = vmatmul.f32.gmra.mxu0 %v6812
      %v6831 = vpop.f32.mrf.mxu0
      %v6832 = vadd.f32 0.0, %v6831
      %6833 = vdwg.mxu0
      %6834 = vmatpush.msra.mxu0 0.0
      %6835 = vmatpush.msra.mxu0 0.0
      %6836 = vmatpush.msra.mxu0 0.0
      %6837 = vmatpush.msra.mxu0 0.0
      %6838 = vmatpush.msra.mxu0 0.0
      %6839 = vmatpush.msra.mxu0 0.0
      %6840 = vmatpush.msra.mxu0 0.0
      %6841 = vmatpush.msra.mxu0 0.0
      %6842 = vmatpush.msra.mxu0 0.0
      %6843 = vmatpush.msra.mxu0 0.0
      %6844 = vmatpush.msra.mxu0 0.0
      %6845 = vmatpush.msra.mxu0 0.0
      %6846 = vmatpush.msra.mxu0 %v6810
      %6847 = vmatpush.msra.mxu0 %v6808
      %6848 = vmatpush.msra.mxu0 %v6806
      %6849 = vmatpush.msra.mxu0 %v6804
      %6850 = vmatmul.f32.gmra.mxu0 %v6812
      %v6851 = vpop.f32.mrf.mxu0
      %v6852 = vadd.f32 0.0, %v6851
      %6853 = vdwg.mxu0
      %v6854 = vadd.f32 %v6755, %v6832
      %v6855 = vadd.f32 %v6775, %v6852
      %s6856 = scalar_lea.vmem %s16, 12
      %v6857 = vld [vmem:[%s6856] sm:$0x7]
      %6858 = vrot.lane.b32.xlu0 %v6616, 1
      %v6859 = vpop.permute.xlu0 %6858
      %6860 = vrot.lane.b32.xlu0 %v6618, 1
      %v6861 = vpop.permute.xlu0 %6860
      %6862 = vrot.lane.b32.xlu0 %v6620, 1
      %v6863 = vpop.permute.xlu0 %6862
      %6864 = vrot.lane.b32.xlu0 %v6622, 1
      %v6865 = vpop.permute.xlu0 %6864
      %6866 = vrot.lane.b32.xlu0 %v6617, 1
      %v6867 = vpop.permute.xlu0 %6866
      %6868 = vrot.lane.b32.xlu0 %v6619, 1
      %v6869 = vpop.permute.xlu0 %6868
      %6870 = vrot.lane.b32.xlu0 %v6621, 1
      %v6871 = vpop.permute.xlu0 %6870
      %6872 = vrot.lane.b32.xlu0 %v6623, 1
      %v6873 = vpop.permute.xlu0 %6872
      %v6874 = vsel %vm980, %v6859, %v6867
      %v6875 = vsel %vm980, %v6861, %v6869
      %v6876 = vsel %vm980, %v6863, %v6871
      %v6877 = vsel %vm980, %v6865, %v6873
      %v6878 = vsel %vm980, %v6867, %v6859
      %v6879 = vsel %vm980, %v6869, %v6861
      %v6880 = vsel %vm980, %v6871, %v6863
      %v6881 = vsel %vm980, %v6873, %v6865
      %v6882 = vsel %vm986, %v6878, 0.0
      %v6883 = vsel %vm987, %v6874, 0.0
      %v6884 = vsel %vm986, %v6879, 0.0
      %v6885 = vsel %vm987, %v6875, 0.0
      %v6886 = vsel %vm986, %v6880, 0.0
      %v6887 = vsel %vm987, %v6876, 0.0
      %v6888 = vsel %vm986, %v6881, 0.0
      %v6889 = vsel %vm987, %v6877, 0.0
      %v6891 = vsel %vm1705, %v6857, 0
      %6893 = vmatpush.msra.mxu0 0.0
      %6894 = vmatpush.msra.mxu0 0.0
      %6895 = vmatpush.msra.mxu0 0.0
      %6896 = vmatpush.msra.mxu0 0.0
      %6897 = vmatpush.msra.mxu0 0.0
      %6898 = vmatpush.msra.mxu0 0.0
      %6899 = vmatpush.msra.mxu0 0.0
      %6900 = vmatpush.msra.mxu0 0.0
      %6901 = vmatpush.msra.mxu0 0.0
      %6902 = vmatpush.msra.mxu0 0.0
      %6903 = vmatpush.msra.mxu0 0.0
      %6904 = vmatpush.msra.mxu0 0.0
      %6905 = vmatpush.msra.mxu0 %v6888
      %6906 = vmatpush.msra.mxu0 %v6886
      %6907 = vmatpush.msra.mxu0 %v6884
      %6908 = vmatpush.msra.mxu0 %v6882
      %6909 = vmatmul.f32.gmra.mxu0 %v6891
      %v6910 = vpop.f32.mrf.mxu0
      %v6911 = vadd.f32 0.0, %v6910
      %6912 = vdwg.mxu0
      %6913 = vmatpush.msra.mxu0 0.0
      %6914 = vmatpush.msra.mxu0 0.0
      %6915 = vmatpush.msra.mxu0 0.0
      %6916 = vmatpush.msra.mxu0 0.0
      %6917 = vmatpush.msra.mxu0 0.0
      %6918 = vmatpush.msra.mxu0 0.0
      %6919 = vmatpush.msra.mxu0 0.0
      %6920 = vmatpush.msra.mxu0 0.0
      %6921 = vmatpush.msra.mxu0 0.0
      %6922 = vmatpush.msra.mxu0 0.0
      %6923 = vmatpush.msra.mxu0 0.0
      %6924 = vmatpush.msra.mxu0 0.0
      %6925 = vmatpush.msra.mxu0 %v6889
      %6926 = vmatpush.msra.mxu0 %v6887
      %6927 = vmatpush.msra.mxu0 %v6885
      %6928 = vmatpush.msra.mxu0 %v6883
      %6929 = vmatmul.f32.gmra.mxu0 %v6891
      %v6930 = vpop.f32.mrf.mxu0
      %v6931 = vadd.f32 0.0, %v6930
      %6932 = vdwg.mxu0
      %v6933 = vadd.f32 %v6854, %v6911
      %v6934 = vadd.f32 %v6855, %v6931
      %s6935 = scalar_lea.vmem %s16, 16
      %v6936 = vld [vmem:[%s6935] sm:$0x7]
      %v6938 = vsel %vm1705, %v6936, 0
      %6940 = vmatpush.msra.mxu0 0.0
      %6941 = vmatpush.msra.mxu0 0.0
      %6942 = vmatpush.msra.mxu0 0.0
      %6943 = vmatpush.msra.mxu0 0.0
      %6944 = vmatpush.msra.mxu0 0.0
      %6945 = vmatpush.msra.mxu0 0.0
      %6946 = vmatpush.msra.mxu0 0.0
      %6947 = vmatpush.msra.mxu0 0.0
      %6948 = vmatpush.msra.mxu0 0.0
      %6949 = vmatpush.msra.mxu0 0.0
      %6950 = vmatpush.msra.mxu0 0.0
      %6951 = vmatpush.msra.mxu0 0.0
      %6952 = vmatpush.msra.mxu0 %v6622
      %6953 = vmatpush.msra.mxu0 %v6620
      %6954 = vmatpush.msra.mxu0 %v6618
      %6955 = vmatpush.msra.mxu0 %v6616
      %6956 = vmatmul.f32.gmra.mxu0 %v6938
      %v6957 = vpop.f32.mrf.mxu0
      %v6958 = vadd.f32 0.0, %v6957
      %6959 = vdwg.mxu0
      %6960 = vmatpush.msra.mxu0 0.0
      %6961 = vmatpush.msra.mxu0 0.0
      %6962 = vmatpush.msra.mxu0 0.0
      %6963 = vmatpush.msra.mxu0 0.0
      %6964 = vmatpush.msra.mxu0 0.0
      %6965 = vmatpush.msra.mxu0 0.0
      %6966 = vmatpush.msra.mxu0 0.0
      %6967 = vmatpush.msra.mxu0 0.0
      %6968 = vmatpush.msra.mxu0 0.0
      %6969 = vmatpush.msra.mxu0 0.0
      %6970 = vmatpush.msra.mxu0 0.0
      %6971 = vmatpush.msra.mxu0 0.0
      %6972 = vmatpush.msra.mxu0 %v6623
      %6973 = vmatpush.msra.mxu0 %v6621
      %6974 = vmatpush.msra.mxu0 %v6619
      %6975 = vmatpush.msra.mxu0 %v6617
      %6976 = vmatmul.f32.gmra.mxu0 %v6938
      %v6977 = vpop.f32.mrf.mxu0
      %v6978 = vadd.f32 0.0, %v6977
      %6979 = vdwg.mxu0
      %v6980 = vadd.f32 %v6933, %v6958
      %v6981 = vadd.f32 %v6934, %v6978
      %s6982 = scalar_lea.vmem %s16, 20
      %v6983 = vld [vmem:[%s6982] sm:$0x7]
      %6984 = vrot.lane.b32.xlu0 %v6616, 127
      %v6985 = vpop.permute.xlu0 %6984
      %6986 = vrot.lane.b32.xlu0 %v6618, 127
      %v6987 = vpop.permute.xlu0 %6986
      %6988 = vrot.lane.b32.xlu0 %v6620, 127
      %v6989 = vpop.permute.xlu0 %6988
      %6990 = vrot.lane.b32.xlu0 %v6622, 127
      %v6991 = vpop.permute.xlu0 %6990
      %6992 = vrot.lane.b32.xlu0 %v6617, 127
      %v6993 = vpop.permute.xlu0 %6992
      %6994 = vrot.lane.b32.xlu0 %v6619, 127
      %v6995 = vpop.permute.xlu0 %6994
      %6996 = vrot.lane.b32.xlu0 %v6621, 127
      %v6997 = vpop.permute.xlu0 %6996
      %6998 = vrot.lane.b32.xlu0 %v6623, 127
      %v6999 = vpop.permute.xlu0 %6998
      %v7000 = vsel %vm1178, %v6985, %v6993
      %v7001 = vsel %vm1178, %v6987, %v6995
      %v7002 = vsel %vm1178, %v6989, %v6997
      %v7003 = vsel %vm1178, %v6991, %v6999
      %v7004 = vsel %vm1178, %v6993, %v6985
      %v7005 = vsel %vm1178, %v6995, %v6987
      %v7006 = vsel %vm1178, %v6997, %v6989
      %v7007 = vsel %vm1178, %v6999, %v6991
      %v7008 = vsel %vm1184, %v7000, 0.0
      %v7009 = vsel %vm1185, %v7004, 0.0
      %v7010 = vsel %vm1184, %v7001, 0.0
      %v7011 = vsel %vm1185, %v7005, 0.0
      %v7012 = vsel %vm1184, %v7002, 0.0
      %v7013 = vsel %vm1185, %v7006, 0.0
      %v7014 = vsel %vm1184, %v7003, 0.0
      %v7015 = vsel %vm1185, %v7007, 0.0
      %v7017 = vsel %vm1705, %v6983, 0
      %7019 = vmatpush.msra.mxu0 0.0
      %7020 = vmatpush.msra.mxu0 0.0
      %7021 = vmatpush.msra.mxu0 0.0
      %7022 = vmatpush.msra.mxu0 0.0
      %7023 = vmatpush.msra.mxu0 0.0
      %7024 = vmatpush.msra.mxu0 0.0
      %7025 = vmatpush.msra.mxu0 0.0
      %7026 = vmatpush.msra.mxu0 0.0
      %7027 = vmatpush.msra.mxu0 0.0
      %7028 = vmatpush.msra.mxu0 0.0
      %7029 = vmatpush.msra.mxu0 0.0
      %7030 = vmatpush.msra.mxu0 0.0
      %7031 = vmatpush.msra.mxu0 %v7014
      %7032 = vmatpush.msra.mxu0 %v7012
      %7033 = vmatpush.msra.mxu0 %v7010
      %7034 = vmatpush.msra.mxu0 %v7008
      %7035 = vmatmul.f32.gmra.mxu0 %v7017
      %v7036 = vpop.f32.mrf.mxu0
      %v7037 = vadd.f32 0.0, %v7036
      %7038 = vdwg.mxu0
      %7039 = vmatpush.msra.mxu0 0.0
      %7040 = vmatpush.msra.mxu0 0.0
      %7041 = vmatpush.msra.mxu0 0.0
      %7042 = vmatpush.msra.mxu0 0.0
      %7043 = vmatpush.msra.mxu0 0.0
      %7044 = vmatpush.msra.mxu0 0.0
      %7045 = vmatpush.msra.mxu0 0.0
      %7046 = vmatpush.msra.mxu0 0.0
      %7047 = vmatpush.msra.mxu0 0.0
      %7048 = vmatpush.msra.mxu0 0.0
      %7049 = vmatpush.msra.mxu0 0.0
      %7050 = vmatpush.msra.mxu0 0.0
      %7051 = vmatpush.msra.mxu0 %v7015
      %7052 = vmatpush.msra.mxu0 %v7013
      %7053 = vmatpush.msra.mxu0 %v7011
      %7054 = vmatpush.msra.mxu0 %v7009
      %7055 = vmatmul.f32.gmra.mxu0 %v7017
      %v7056 = vpop.f32.mrf.mxu0
      %v7057 = vadd.f32 0.0, %v7056
      %7058 = vdwg.mxu0
      %v7059 = vadd.f32 %v6980, %v7037
      %v7060 = vadd.f32 %v6981, %v7057
      %s7061 = scalar_lea.vmem %s16, 24
      %v7062 = vld [vmem:[%s7061] sm:$0x7]
      %7063 = vrot.lane.b32.xlu0 %v6616, 113
      %v7064 = vpop.permute.xlu0 %7063
      %7065 = vrot.lane.b32.xlu0 %v6618, 113
      %v7066 = vpop.permute.xlu0 %7065
      %7067 = vrot.lane.b32.xlu0 %v6620, 113
      %v7068 = vpop.permute.xlu0 %7067
      %7069 = vrot.lane.b32.xlu0 %v6622, 113
      %v7070 = vpop.permute.xlu0 %7069
      %7071 = vrot.lane.b32.xlu0 %v6617, 113
      %v7072 = vpop.permute.xlu0 %7071
      %7073 = vrot.lane.b32.xlu0 %v6619, 113
      %v7074 = vpop.permute.xlu0 %7073
      %7075 = vrot.lane.b32.xlu0 %v6621, 113
      %v7076 = vpop.permute.xlu0 %7075
      %7077 = vrot.lane.b32.xlu0 %v6623, 113
      %v7078 = vpop.permute.xlu0 %7077
      %v7079 = vsel %vm1286, %v7064, %v7072
      %v7080 = vsel %vm1286, %v7066, %v7074
      %v7081 = vsel %vm1286, %v7068, %v7076
      %v7082 = vsel %vm1286, %v7070, %v7078
      %v7083 = vsel %vm1286, %v7072, %v7064
      %v7084 = vsel %vm1286, %v7074, %v7066
      %v7085 = vsel %vm1286, %v7076, %v7068
      %v7086 = vsel %vm1286, %v7078, %v7070
      %v7087 = vsel %vm1292, %v7079, 0.0
      %v7088 = vsel %vm1293, %v7083, 0.0
      %v7089 = vsel %vm1292, %v7080, 0.0
      %v7090 = vsel %vm1293, %v7084, 0.0
      %v7091 = vsel %vm1292, %v7081, 0.0
      %v7092 = vsel %vm1293, %v7085, 0.0
      %v7093 = vsel %vm1292, %v7082, 0.0
      %v7094 = vsel %vm1293, %v7086, 0.0
      %v7096 = vsel %vm1705, %v7062, 0
      %7098 = vmatpush.msra.mxu0 0.0
      %7099 = vmatpush.msra.mxu0 0.0
      %7100 = vmatpush.msra.mxu0 0.0
      %7101 = vmatpush.msra.mxu0 0.0
      %7102 = vmatpush.msra.mxu0 0.0
      %7103 = vmatpush.msra.mxu0 0.0
      %7104 = vmatpush.msra.mxu0 0.0
      %7105 = vmatpush.msra.mxu0 0.0
      %7106 = vmatpush.msra.mxu0 0.0
      %7107 = vmatpush.msra.mxu0 0.0
      %7108 = vmatpush.msra.mxu0 0.0
      %7109 = vmatpush.msra.mxu0 0.0
      %7110 = vmatpush.msra.mxu0 %v7093
      %7111 = vmatpush.msra.mxu0 %v7091
      %7112 = vmatpush.msra.mxu0 %v7089
      %7113 = vmatpush.msra.mxu0 %v7087
      %7114 = vmatmul.f32.gmra.mxu0 %v7096
      %v7115 = vpop.f32.mrf.mxu0
      %v7116 = vadd.f32 0.0, %v7115
      %7117 = vdwg.mxu0
      %7118 = vmatpush.msra.mxu0 0.0
      %7119 = vmatpush.msra.mxu0 0.0
      %7120 = vmatpush.msra.mxu0 0.0
      %7121 = vmatpush.msra.mxu0 0.0
      %7122 = vmatpush.msra.mxu0 0.0
      %7123 = vmatpush.msra.mxu0 0.0
      %7124 = vmatpush.msra.mxu0 0.0
      %7125 = vmatpush.msra.mxu0 0.0
      %7126 = vmatpush.msra.mxu0 0.0
      %7127 = vmatpush.msra.mxu0 0.0
      %7128 = vmatpush.msra.mxu0 0.0
      %7129 = vmatpush.msra.mxu0 0.0
      %7130 = vmatpush.msra.mxu0 %v7094
      %7131 = vmatpush.msra.mxu0 %v7092
      %7132 = vmatpush.msra.mxu0 %v7090
      %7133 = vmatpush.msra.mxu0 %v7088
      %7134 = vmatmul.f32.gmra.mxu0 %v7096
      %v7135 = vpop.f32.mrf.mxu0
      %v7136 = vadd.f32 0.0, %v7135
      %7137 = vdwg.mxu0
      %v7138 = vadd.f32 %v7059, %v7116
      %v7139 = vadd.f32 %v7060, %v7136
      %s7140 = scalar_lea.vmem %s16, 28
      %v7141 = vld [vmem:[%s7140] sm:$0x7]
      %7142 = vrot.lane.b32.xlu0 %v6616, 112
      %v7143 = vpop.permute.xlu0 %7142
      %7144 = vrot.lane.b32.xlu0 %v6618, 112
      %v7145 = vpop.permute.xlu0 %7144
      %7146 = vrot.lane.b32.xlu0 %v6620, 112
      %v7147 = vpop.permute.xlu0 %7146
      %7148 = vrot.lane.b32.xlu0 %v6622, 112
      %v7149 = vpop.permute.xlu0 %7148
      %7150 = vrot.lane.b32.xlu0 %v6617, 112
      %v7151 = vpop.permute.xlu0 %7150
      %7152 = vrot.lane.b32.xlu0 %v6619, 112
      %v7153 = vpop.permute.xlu0 %7152
      %7154 = vrot.lane.b32.xlu0 %v6621, 112
      %v7155 = vpop.permute.xlu0 %7154
      %7156 = vrot.lane.b32.xlu0 %v6623, 112
      %v7157 = vpop.permute.xlu0 %7156
      %v7158 = vsel %vm1394, %v7143, %v7151
      %v7159 = vsel %vm1394, %v7145, %v7153
      %v7160 = vsel %vm1394, %v7147, %v7155
      %v7161 = vsel %vm1394, %v7149, %v7157
      %v7162 = vsel %vm1394, %v7151, %v7143
      %v7163 = vsel %vm1394, %v7153, %v7145
      %v7164 = vsel %vm1394, %v7155, %v7147
      %v7165 = vsel %vm1394, %v7157, %v7149
      %v7166 = vsel %vm1400, %v7158, 0.0
      %v7167 = vsel %vm1401, %v7162, 0.0
      %v7168 = vsel %vm1400, %v7159, 0.0
      %v7169 = vsel %vm1401, %v7163, 0.0
      %v7170 = vsel %vm1400, %v7160, 0.0
      %v7171 = vsel %vm1401, %v7164, 0.0
      %v7172 = vsel %vm1400, %v7161, 0.0
      %v7173 = vsel %vm1401, %v7165, 0.0
      %v7175 = vsel %vm1705, %v7141, 0
      %7177 = vmatpush.msra.mxu0 0.0
      %7178 = vmatpush.msra.mxu0 0.0
      %7179 = vmatpush.msra.mxu0 0.0
      %7180 = vmatpush.msra.mxu0 0.0
      %7181 = vmatpush.msra.mxu0 0.0
      %7182 = vmatpush.msra.mxu0 0.0
      %7183 = vmatpush.msra.mxu0 0.0
      %7184 = vmatpush.msra.mxu0 0.0
      %7185 = vmatpush.msra.mxu0 0.0
      %7186 = vmatpush.msra.mxu0 0.0
      %7187 = vmatpush.msra.mxu0 0.0
      %7188 = vmatpush.msra.mxu0 0.0
      %7189 = vmatpush.msra.mxu0 %v7172
      %7190 = vmatpush.msra.mxu0 %v7170
      %7191 = vmatpush.msra.mxu0 %v7168
      %7192 = vmatpush.msra.mxu0 %v7166
      %7193 = vmatmul.f32.gmra.mxu0 %v7175
      %v7194 = vpop.f32.mrf.mxu0
      %v7195 = vadd.f32 0.0, %v7194
      %7196 = vdwg.mxu0
      %7197 = vmatpush.msra.mxu0 0.0
      %7198 = vmatpush.msra.mxu0 0.0
      %7199 = vmatpush.msra.mxu0 0.0
      %7200 = vmatpush.msra.mxu0 0.0
      %7201 = vmatpush.msra.mxu0 0.0
      %7202 = vmatpush.msra.mxu0 0.0
      %7203 = vmatpush.msra.mxu0 0.0
      %7204 = vmatpush.msra.mxu0 0.0
      %7205 = vmatpush.msra.mxu0 0.0
      %7206 = vmatpush.msra.mxu0 0.0
      %7207 = vmatpush.msra.mxu0 0.0
      %7208 = vmatpush.msra.mxu0 0.0
      %7209 = vmatpush.msra.mxu0 %v7173
      %7210 = vmatpush.msra.mxu0 %v7171
      %7211 = vmatpush.msra.mxu0 %v7169
      %7212 = vmatpush.msra.mxu0 %v7167
      %7213 = vmatmul.f32.gmra.mxu0 %v7175
      %v7214 = vpop.f32.mrf.mxu0
      %v7215 = vadd.f32 0.0, %v7214
      %7216 = vdwg.mxu0
      %v7217 = vadd.f32 %v7138, %v7195
      %v7218 = vadd.f32 %v7139, %v7215
      %s7219 = scalar_lea.vmem %s16, 32
      %v7220 = vld [vmem:[%s7219] sm:$0x7]
      %7221 = vrot.lane.b32.xlu0 %v6616, 111
      %v7222 = vpop.permute.xlu0 %7221
      %7223 = vrot.lane.b32.xlu0 %v6618, 111
      %v7224 = vpop.permute.xlu0 %7223
      %7225 = vrot.lane.b32.xlu0 %v6620, 111
      %v7226 = vpop.permute.xlu0 %7225
      %7227 = vrot.lane.b32.xlu0 %v6622, 111
      %v7228 = vpop.permute.xlu0 %7227
      %7229 = vrot.lane.b32.xlu0 %v6617, 111
      %v7230 = vpop.permute.xlu0 %7229
      %7231 = vrot.lane.b32.xlu0 %v6619, 111
      %v7232 = vpop.permute.xlu0 %7231
      %7233 = vrot.lane.b32.xlu0 %v6621, 111
      %v7234 = vpop.permute.xlu0 %7233
      %7235 = vrot.lane.b32.xlu0 %v6623, 111
      %v7236 = vpop.permute.xlu0 %7235
      %v7237 = vsel %vm1502, %v7222, %v7230
      %v7238 = vsel %vm1502, %v7224, %v7232
      %v7239 = vsel %vm1502, %v7226, %v7234
      %v7240 = vsel %vm1502, %v7228, %v7236
      %v7241 = vsel %vm1502, %v7230, %v7222
      %v7242 = vsel %vm1502, %v7232, %v7224
      %v7243 = vsel %vm1502, %v7234, %v7226
      %v7244 = vsel %vm1502, %v7236, %v7228
      %v7245 = vsel %vm1508, %v7237, 0.0
      %v7246 = vsel %vm1509, %v7241, 0.0
      %v7247 = vsel %vm1508, %v7238, 0.0
      %v7248 = vsel %vm1509, %v7242, 0.0
      %v7249 = vsel %vm1508, %v7239, 0.0
      %v7250 = vsel %vm1509, %v7243, 0.0
      %v7251 = vsel %vm1508, %v7240, 0.0
      %v7252 = vsel %vm1509, %v7244, 0.0
      %v7254 = vsel %vm1705, %v7220, 0
      %7256 = vmatpush.msra.mxu0 0.0
      %7257 = vmatpush.msra.mxu0 0.0
      %7258 = vmatpush.msra.mxu0 0.0
      %7259 = vmatpush.msra.mxu0 0.0
      %7260 = vmatpush.msra.mxu0 0.0
      %7261 = vmatpush.msra.mxu0 0.0
      %7262 = vmatpush.msra.mxu0 0.0
      %7263 = vmatpush.msra.mxu0 0.0
      %7264 = vmatpush.msra.mxu0 0.0
      %7265 = vmatpush.msra.mxu0 0.0
      %7266 = vmatpush.msra.mxu0 0.0
      %7267 = vmatpush.msra.mxu0 0.0
      %7268 = vmatpush.msra.mxu0 %v7251
      %7269 = vmatpush.msra.mxu0 %v7249
      %7270 = vmatpush.msra.mxu0 %v7247
      %7271 = vmatpush.msra.mxu0 %v7245
      %7272 = vmatmul.f32.gmra.mxu0 %v7254
      %v7273 = vpop.f32.mrf.mxu0
      %v7274 = vadd.f32 0.0, %v7273
      %7275 = vdwg.mxu0
      %7276 = vmatpush.msra.mxu0 0.0
      %7277 = vmatpush.msra.mxu0 0.0
      %7278 = vmatpush.msra.mxu0 0.0
      %7279 = vmatpush.msra.mxu0 0.0
      %7280 = vmatpush.msra.mxu0 0.0
      %7281 = vmatpush.msra.mxu0 0.0
      %7282 = vmatpush.msra.mxu0 0.0
      %7283 = vmatpush.msra.mxu0 0.0
      %7284 = vmatpush.msra.mxu0 0.0
      %7285 = vmatpush.msra.mxu0 0.0
      %7286 = vmatpush.msra.mxu0 0.0
      %7287 = vmatpush.msra.mxu0 0.0
      %7288 = vmatpush.msra.mxu0 %v7252
      %7289 = vmatpush.msra.mxu0 %v7250
      %7290 = vmatpush.msra.mxu0 %v7248
      %7291 = vmatpush.msra.mxu0 %v7246
      %7292 = vmatmul.f32.gmra.mxu0 %v7254
      %v7293 = vpop.f32.mrf.mxu0
      %v7294 = vadd.f32 0.0, %v7293
      %7295 = vdwg.mxu0
      %v7296 = vadd.f32 %v7217, %v7274
      %v7297 = vadd.f32 %v7218, %v7294
      %v7298 = vld [vmem:[%s17] sm:$0x7]
      %7300 = vset.pattern.permute.xlu0 0
      %7301 = vperm.xlu0 %7300, %v7298
      %v7302 = vpop.permute.xlu0 %7301
      %v7304 = vadd.f32 %v7296, %v7302
      %v7305 = vadd.f32 %v7297, %v7302
      %v7306 = vmax.f32 %v7304, 0.0
      %v7307 = vmax.f32 %v7305, 0.0
      %v7308 = vmin.f32 %v7306, 255.0
      %v7309 = vmin.f32 %v7307, 255.0
      %v7312 = vrot.slane %v7309, 4
      %v7313 = vsel %vm717, %v7308, %v7312
      %7315 = vst [vmem:[%s612] sm:$0x77] %v7313
      %p7316 = scmp.lt.s32.totalorder %s29, 1
      %s7317 = scalar_select %p7316, %s29, 1
      %s7318 = smul.addr %s7317, 2
      %s7319 = smul.addr %s7318, 4
      %s7320 = scalar_lea.vmem %s18, %s7319
      // Predicated region
      $region93: #{pidrtn_a_forward.1} parent=91 // pred_check
        %p7321 = pneg %p440
      $region94: #{pidrtn_a_forward.1} parent=91 // pred_check_branch
        %7323 = sbr.rel (%p7321) target = $region96
      $region95: #{pidrtn_a_forward.1} parent=91 // pred_region
        _
      $region96: #{pidrtn_a_forward.1} parent=91 // pred_fallthru
        _
    $region92: #{pidrtn_a_forward.1} parent=5 // pred_fallthru
      _
    %p7324 = scmp.le.s32.totalorder 2, %s24
    // Predicated region
    $region97: #{pidrtn_a_forward.1} parent=5 // pred_check
      %p7325 = pneg %p7324
    $region98: #{pidrtn_a_forward.1} parent=5 // pred_check_branch
      %7327 = sbr.rel (%p7325) target = $region100
    $region99: #{pidrtn_a_forward.1} parent=5 // pred_region
      %s7328 = ssub.s32 %s24, 2
      // Predicated region
      $region101: #{pidrtn_a_forward.1} parent=99 // pred_check
        %p7329 = pneg %p446
      $region102: #{pidrtn_a_forward.1} parent=99 // pred_check_branch
        %7331 = sbr.rel (%p7329) target = $region104
      $region103: #{pidrtn_a_forward.1} parent=99 // pred_region
        %p7332 = scmp.lt.s32.totalorder %s30, 1
        %s7333 = scalar_select %p7332, %s30, 1
        %s7334 = smul.addr %s7333, 2
        %s7335 = smul.addr %s7334, 4
        %s7336 = scalar_lea.vmem %s18, %s7335
      $region104: #{pidrtn_a_forward.1} parent=99 // pred_fallthru
        _
    $region100: #{pidrtn_a_forward.1} parent=5 // pred_fallthru
      _
  $region6: #{pidrtn_a_forward.1} parent=0 // loop_footer
    %s28 = sadd.s32 1, %s24
  $region7: #{pidrtn_a_forward.1} parent=0 // loop_footer_branch
    %23 = sbr.rel target = $region3
  $region8: #{pidrtn_a_forward.1} parent=0 // loop_exit
    _

</llo_original>
